<compile_context>
chip_gen: v6e
topology: v6e:2x2x1
jax: 0.10.0
libtpu: 0.0.40
codegen_flags: <defaults>
</compile_context>

<pallas_src>
import functools

import jax
import jax.numpy as jnp
import numpy as np
from jax.experimental import pallas as pl
from jax.experimental.pallas import tpu as pltpu

EPS = 1e-5
CP = 128  # padded channel width (lane-dense)


# ----------------------------------------------------------------------------
# Pallas kernels
# ----------------------------------------------------------------------------
def _conv_stage_kernel(a_ref, w_ref, b_ref, g_ref, beta_ref, o_ref, *, eps):
    """Fused conv(matmul) + bias + ReLU + 2x2 maxpool + BatchNorm (batch stats).

    a_ref:   (4, M, K)  -- 4 pool-window im2col candidates, M = N*PH*PW
    w_ref:   (K, Cp)    -- pre-packed conv weight matrix (Cp = 128, lane-dense)
    b/g/beta:(1, Cp)    -- bias / gamma / beta, zero-padded past real channels
    o_ref:   (M, Cp)    -- pooled + normalized NHWC rows, padded channels == 0
    """
    # max over the 4 pool candidates of the raw conv outputs (bias/ReLU commute).
    acc = jnp.dot(a_ref[0], w_ref[...], preferred_element_type=jnp.float32)
    for t in range(1, 4):
        acc = jnp.maximum(
            acc, jnp.dot(a_ref[t], w_ref[...], preferred_element_type=jnp.float32))
    acc = jnp.maximum(acc + b_ref[...], 0.0)            # bias + ReLU (post-pool)

    # BatchNorm over all rows (N*PH*PW) per channel, two-pass variance.
    mean = jnp.mean(acc, axis=0, keepdims=True)
    d = acc - mean
    var = jnp.mean(d * d, axis=0, keepdims=True)
    inv = jax.lax.rsqrt(var + eps)
    o_ref[...] = (d * (inv * g_ref[...]) + beta_ref[...]).astype(o_ref.dtype)


def conv_pool_bn(a, w, b, g, beta, *, eps=EPS):
    """a: (4, M, K) candidates; w: (K, Cp); b/g/beta: (1, Cp) -> (M, Cp)."""
    _, M, K = a.shape
    Kw, Cp = w.shape
    assert K == Kw
    return pl.pallas_call(
        functools.partial(_conv_stage_kernel, eps=eps),
        out_shape=jax.ShapeDtypeStruct((M, Cp), jnp.float32),
        grid=(1,),
        in_specs=[
            pl.BlockSpec((4, M, K), lambda i: (0, 0, 0)),
            pl.BlockSpec((K, Cp), lambda i: (0, 0)),
            pl.BlockSpec((1, Cp), lambda i: (0, 0)),
            pl.BlockSpec((1, Cp), lambda i: (0, 0)),
            pl.BlockSpec((1, Cp), lambda i: (0, 0)),
        ],
        out_specs=pl.BlockSpec((M, Cp), lambda i: (0, 0)),
        compiler_params=pltpu.CompilerParams(
            dimension_semantics=("arbitrary",),
            vmem_limit_bytes=32 * 1024 * 1024,   # safe on v5e/v6e/v7x (<=64 MiB)
        ),
    )(a, w, b, g, beta)


def _fused_fc_kernel(x_ref, w1_ref, b1_ref, w2_ref, b2_ref, w3_ref, b3_ref, o_ref):
    h = jnp.dot(x_ref[...], w1_ref[...], preferred_element_type=jnp.float32) + b1_ref[...]
    h = jnp.maximum(h, 0.0)
    h = jnp.dot(h, w2_ref[...], preferred_element_type=jnp.float32) + b2_ref[...]
    h = jnp.maximum(h, 0.0)
    h = jnp.dot(h, w3_ref[...], preferred_element_type=jnp.float32) + b3_ref[...]
    o_ref[...] = h.astype(o_ref.dtype)


def fused_fc(x, w1, b1, w2, b2, w3, b3):
    """Fused fc1(ReLU)->fc2(ReLU)->fc3 on pre-packed (in,out) weights."""
    B, K1 = x.shape
    C1, C2, C3 = w1.shape[1], w2.shape[1], w3.shape[1]
    return pl.pallas_call(
        _fused_fc_kernel,
        out_shape=jax.ShapeDtypeStruct((B, C3), jnp.float32),
        grid=(1,),
        in_specs=[
            pl.BlockSpec((B, K1), lambda i: (0, 0)),
            pl.BlockSpec((K1, C1), lambda i: (0, 0)),
            pl.BlockSpec((1, C1), lambda i: (0, 0)),
            pl.BlockSpec((C1, C2), lambda i: (0, 0)),
            pl.BlockSpec((1, C2), lambda i: (0, 0)),
            pl.BlockSpec((C2, C3), lambda i: (0, 0)),
            pl.BlockSpec((1, C3), lambda i: (0, 0)),
        ],
        out_specs=pl.BlockSpec((B, C3), lambda i: (0, 0)),
        compiler_params=pltpu.CompilerParams(
            dimension_semantics=("arbitrary",),
            vmem_limit_bytes=32 * 1024 * 1024,
        ),
    )(x, w1, b1, w2, b2, w3, b3)


# ----------------------------------------------------------------------------
# Glue: pool-candidate im2col (XLA slices/concat), channels-last throughout
# ----------------------------------------------------------------------------
def pooled_patches(x, ksize, k_pad=0):
    """x: (N, H, W, C) NHWC.  Valid conv `ksize`, stride 1, then 2x2 maxpool.

    Returns the 4 pool-candidate im2col matrices stacked: (4, N*PH*PW, K*K*C+k_pad),
    feature order (kh, kw, c). Candidate t=(i,j) holds the patch at pre-pool
    position (2*ph+i, 2*pw+j) for each pooled output (n, ph, pw).
    """
    N, H, W, C = x.shape
    OH, OW = H - ksize + 1, W - ksize + 1
    PH, PW = OH // 2, OW // 2
    cols = [x[:, kh:kh + OH, kw:kw + OW, :]
            for kh in range(ksize) for kw in range(ksize)]
    if k_pad:
        cols.append(jnp.zeros((N, OH, OW, k_pad), x.dtype))
    patches = jnp.concatenate(cols, axis=-1)                 # (N, OH, OW, K*K*C+pad)
    feat = ksize * ksize * C + k_pad
    cands = [patches[:, i::2, j::2, :].reshape(N * PH * PW, feat)
             for i in (0, 1) for j in (0, 1)]
    return jnp.stack(cands, axis=0)                          # (4, M, feat)


# ----------------------------------------------------------------------------
# Parameters: raw (PyTorch layout) + one-time packing (hoisted out of forward)
# ----------------------------------------------------------------------------
def init_params(key):
    ks = jax.random.split(key, 12)
    p = {}
    p["w1"] = 0.05 * jax.random.normal(ks[0], (16, 3, 5, 5), jnp.float32)
    p["b1"] = 0.05 * jax.random.normal(ks[1], (16,), jnp.float32)
    p["g1"] = 1.0 + 0.1 * jax.random.normal(ks[2], (16,), jnp.float32)
    p["be1"] = 0.1 * jax.random.normal(ks[3], (16,), jnp.float32)
    p["w2"] = 0.05 * jax.random.normal(ks[4], (32, 16, 5, 5), jnp.float32)
    p["b2"] = 0.05 * jax.random.normal(ks[5], (32,), jnp.float32)
    p["g2"] = 1.0 + 0.1 * jax.random.normal(ks[6], (32,), jnp.float32)
    p["be2"] = 0.1 * jax.random.normal(ks[7], (32,), jnp.float32)
    p["fw1"] = 0.05 * jax.random.normal(ks[8], (120, 32 * 5 * 5), jnp.float32)
    p["fb1"] = 0.05 * jax.random.normal(ks[9], (120,), jnp.float32)
    p["fw2"] = 0.05 * jax.random.normal(ks[10], (84, 120), jnp.float32)
    p["fb2"] = 0.05 * jax.random.normal(ks[11], (84,), jnp.float32)
    p["fw3"] = 0.05 * jax.random.normal(jax.random.fold_in(key, 99), (5, 84), jnp.float32)
    p["fb3"] = 0.05 * jax.random.normal(jax.random.fold_in(key, 100), (5,), jnp.float32)
    return p


def pack_params(p):
    """One-time weight re-layout + zero padding (NOT in the per-forward path).

    All pads are zero so padded channels/features stay exactly zero through
    ReLU / BN / the fused FC stack (zero-preservation invariant).
    """
    pp = {}
    # conv1: OIHW -> (kh,kw,cin,cout) -> (75,16) -> pad to (128, 128)
    w1 = jnp.transpose(p["w1"], (2, 3, 1, 0)).reshape(75, 16)
    pp["w1"] = jnp.pad(w1, ((0, 128 - 75), (0, CP - 16)))
    pp["b1"] = jnp.pad(p["b1"], (0, CP - 16)).reshape(1, CP)
    pp["g1"] = jnp.pad(p["g1"], (0, CP - 16)).reshape(1, CP)
    pp["be1"] = jnp.pad(p["be1"], (0, CP - 16)).reshape(1, CP)
    # conv2: OIHW -> (kh,kw,cin,cout), pad cin 16->128 (stage-1 carries 128-padded
    # channels), flatten -> (3200, 32), pad cout -> (3200, 128)
    w2 = jnp.transpose(p["w2"], (2, 3, 1, 0))                       # (5,5,16,32)
    w2 = jnp.pad(w2, ((0, 0), (0, 0), (0, CP - 16), (0, 0)))        # (5,5,128,32)
    pp["w2"] = jnp.pad(w2.reshape(5 * 5 * CP, 32), ((0, 0), (0, CP - 32)))
    pp["b2"] = jnp.pad(p["b2"], (0, CP - 32)).reshape(1, CP)
    pp["g2"] = jnp.pad(p["g2"], (0, CP - 32)).reshape(1, CP)
    pp["be2"] = jnp.pad(p["be2"], (0, CP - 32)).reshape(1, CP)
    # fc1: reorder PyTorch (c,h,w) flatten to our (h,w,c_pad128) flatten -> (3200,128)
    fw1 = jnp.transpose(p["fw1"].reshape(120, 32, 5, 5), (2, 3, 1, 0))  # (5,5,32,120)
    fw1 = jnp.pad(fw1, ((0, 0), (0, 0), (0, CP - 32), (0, 0)))          # (5,5,128,120)
    pp["fw1"] = jnp.pad(fw1.reshape(5 * 5 * CP, 120), ((0, 0), (0, 128 - 120)))
    pp["fb1"] = jnp.pad(p["fb1"], (0, 128 - 120)).reshape(1, 128)
    pp["fw2"] = jnp.pad(p["fw2"].T, ((0, 128 - 120), (0, 128 - 84)))    # (128,128)
    pp["fb2"] = jnp.pad(p["fb2"], (0, 128 - 84)).reshape(1, 128)
    pp["fw3"] = jnp.pad(p["fw3"].T, ((0, 128 - 84), (0, 128 - 5)))      # (128,128)
    pp["fb3"] = jnp.pad(p["fb3"], (0, 128 - 5)).reshape(1, 128)
    return pp


# ----------------------------------------------------------------------------
# Forward (3 pallas_calls; activations carried 128-channel-padded, lane-dense)
# ----------------------------------------------------------------------------
def forward(x, pp):
    x = jnp.transpose(x, (0, 2, 3, 1))                       # NCHW -> NHWC, once
    N = x.shape[0]
    # stage 1: conv1(5x5,3->16) + ReLU + pool + BN1, fused in one kernel
    a1 = pooled_patches(x, 5, k_pad=128 - 75)                # (4, N*196, 128)
    s1 = conv_pool_bn(a1, pp["w1"], pp["b1"], pp["g1"], pp["be1"])   # (N*196, 128)
    x1 = s1.reshape(N, 14, 14, CP)                           # free reshape; chans 16..127 == 0
    # stage 2: conv2(5x5,16->32) + ReLU + pool + BN2 (input kept 128-padded)
    a2 = pooled_patches(x1, 5)                               # (4, N*25, 3200)
    s2 = conv_pool_bn(a2, pp["w2"], pp["b2"], pp["g2"], pp["be2"])   # (N*25, 128)
    # flatten (h, w, c_pad) order -- free reshape; fc1 weights are packed to match
    x_fc = s2.reshape(N, 25 * CP)                            # (N, 3200)
    out = fused_fc(x_fc, pp["fw1"], pp["fb1"], pp["fw2"], pp["fb2"],
                   pp["fw3"], pp["fb3"])                     # (N, 128)
    return out[:, :5]                                        # single final slice


# ----------------------------------------------------------------------------
# Pure-JAX reference (independent of the Pallas path)
# ----------------------------------------------------------------------------
def forward_ref(x, p):
    def conv(x, w, b):
        y = jax.lax.conv_general_dilated(
            x, w, (1, 1), "VALID", dimension_numbers=("NCHW", "OIHW", "NCHW"))
        return y + b.reshape(1, -1, 1, 1)

    def pool(x):
        N, C, H, W = x.shape
        return x.reshape(N, C, H // 2, 2, W // 2, 2).max(axis=(3, 5))

    def bn(x, g, be, eps=EPS):
        mean = x.mean(axis=(0, 2, 3), keepdims=True)
        var = ((x - mean) ** 2).mean(axis=(0, 2, 3), keepdims=True)
        return (x - mean) * jax.lax.rsqrt(var + eps) * g.reshape(1, -1, 1, 1) \
            + be.reshape(1, -1, 1, 1)

    x = pool(jax.nn.relu(conv(x, p["w1"], p["b1"])))
    x = bn(x, p["g1"], p["be1"])
    x = pool(jax.nn.relu(conv(x, p["w2"], p["b2"])))
    x = bn(x, p["g2"], p["be2"])
    x = x.reshape(x.shape[0], -1)
    x = jax.nn.relu(x @ p["fw1"].T + p["fb1"])
    x = jax.nn.relu(x @ p["fw2"].T + p["fb2"])
    return x @ p["fw3"].T + p["fb3"]


if __name__ == "__main__":
    key = jax.random.PRNGKey(0)
    params = init_params(key)
    packed = pack_params(params)       # hoisted: weight packing runs once, not per forward
    # Input must be 32x32 so 32*5*5 features reach fc1 (as the module requires).
    x = jax.random.normal(jax.random.fold_in(key, 7), (2, 3, 32, 32), jnp.float32)

    out = jax.block_until_ready(jax.jit(forward)(x, packed))
    ref = jax.block_until_ready(jax.jit(forward_ref)(x, params))

    assert out.shape == (2, 5), out.shape
    assert np.all(np.isfinite(np.asarray(out)))
    np.testing.assert_allclose(np.asarray(out), np.asarray(ref), rtol=1e-3, atol=1e-3)
    print("KERNEL_OK")
</pallas_src>

<mosaic_0001>
module attributes {stable_mosaic.version = 11 : i64} {
  func.func @_conv_stage_kernel(%arg0: i32, %arg1: memref<4x392x128xf32, #tpu.memory_space<vmem>>, %arg2: memref<128x128xf32, #tpu.memory_space<vmem>>, %arg3: memref<1x128xf32, #tpu.memory_space<vmem>>, %arg4: memref<1x128xf32, #tpu.memory_space<vmem>>, %arg5: memref<1x128xf32, #tpu.memory_space<vmem>>, %arg6: memref<392x128xf32, #tpu.memory_space<vmem>>) attributes {dimension_semantics = [#tpu.dimension_semantics<arbitrary>], iteration_bounds = array<i64: 1>, scalar_prefetch = 0 : i64, scratch_operands = 0 : i64, tpu.core_type = #tpu.core_type<tc>, window_params = [{pipeline_mode = #tpu.pipeline_mode<synchronous>, transform_indices = @transform_0, window_bounds = array<i64: 4, 392, 128>}, {pipeline_mode = #tpu.pipeline_mode<synchronous>, transform_indices = @transform_1, window_bounds = array<i64: 128, 128>}, {pipeline_mode = #tpu.pipeline_mode<synchronous>, transform_indices = @transform_2, window_bounds = array<i64: 1, 128>}, {pipeline_mode = #tpu.pipeline_mode<synchronous>, transform_indices = @transform_3, window_bounds = array<i64: 1, 128>}, {pipeline_mode = #tpu.pipeline_mode<synchronous>, transform_indices = @transform_4, window_bounds = array<i64: 1, 128>}, {pipeline_mode = #tpu.pipeline_mode<synchronous>, transform_indices = @transform_5, window_bounds = array<i64: 392, 128>}]} {
    %c0 = arith.constant 0 : index
    %c0_0 = arith.constant 0 : index
    %c0_1 = arith.constant 0 : index
    %0 = vector.load %arg1[%c0, %c0_0, %c0_1] : memref<4x392x128xf32, #tpu.memory_space<vmem>>, vector<1x392x128xf32>
    %1 = vector.shape_cast %0 : vector<1x392x128xf32> to vector<392x128xf32>
    %c0_2 = arith.constant 0 : index
    %c0_3 = arith.constant 0 : index
    %2 = vector.load %arg2[%c0_2, %c0_3] : memref<128x128xf32, #tpu.memory_space<vmem>>, vector<128x128xf32>
    %cst = arith.constant dense<0.000000e+00> : vector<392x128xf32>
    %3 = tpu.matmul %1, %2, %cst {dimension_numbers = #tpu.dot_dimension_numbers<[1], [0], [0], [1], [0, 0, 1, 1], [], []>} : vector<392x128xf32>, vector<128x128xf32>, vector<392x128xf32> -> vector<392x128xf32>
    %c1 = arith.constant 1 : index
    %c0_4 = arith.constant 0 : index
    %c0_5 = arith.constant 0 : index
    %4 = vector.load %arg1[%c1, %c0_4, %c0_5] : memref<4x392x128xf32, #tpu.memory_space<vmem>>, vector<1x392x128xf32>
    %5 = vector.shape_cast %4 : vector<1x392x128xf32> to vector<392x128xf32>
    %c0_6 = arith.constant 0 : index
    %c0_7 = arith.constant 0 : index
    %6 = vector.load %arg2[%c0_6, %c0_7] : memref<128x128xf32, #tpu.memory_space<vmem>>, vector<128x128xf32>
    %cst_8 = arith.constant dense<0.000000e+00> : vector<392x128xf32>
    %7 = tpu.matmul %5, %6, %cst_8 {dimension_numbers = #tpu.dot_dimension_numbers<[1], [0], [0], [1], [0, 0, 1, 1], [], []>} : vector<392x128xf32>, vector<128x128xf32>, vector<392x128xf32> -> vector<392x128xf32>
    %8 = arith.maximumf %3, %7 : vector<392x128xf32>
    %c2 = arith.constant 2 : index
    %c0_9 = arith.constant 0 : index
    %c0_10 = arith.constant 0 : index
    %9 = vector.load %arg1[%c2, %c0_9, %c0_10] : memref<4x392x128xf32, #tpu.memory_space<vmem>>, vector<1x392x128xf32>
    %10 = vector.shape_cast %9 : vector<1x392x128xf32> to vector<392x128xf32>
    %c0_11 = arith.constant 0 : index
    %c0_12 = arith.constant 0 : index
    %11 = vector.load %arg2[%c0_11, %c0_12] : memref<128x128xf32, #tpu.memory_space<vmem>>, vector<128x128xf32>
    %cst_13 = arith.constant dense<0.000000e+00> : vector<392x128xf32>
    %12 = tpu.matmul %10, %11, %cst_13 {dimension_numbers = #tpu.dot_dimension_numbers<[1], [0], [0], [1], [0, 0, 1, 1], [], []>} : vector<392x128xf32>, vector<128x128xf32>, vector<392x128xf32> -> vector<392x128xf32>
    %13 = arith.maximumf %8, %12 : vector<392x128xf32>
    %c3 = arith.constant 3 : index
    %c0_14 = arith.constant 0 : index
    %c0_15 = arith.constant 0 : index
    %14 = vector.load %arg1[%c3, %c0_14, %c0_15] : memref<4x392x128xf32, #tpu.memory_space<vmem>>, vector<1x392x128xf32>
    %15 = vector.shape_cast %14 : vector<1x392x128xf32> to vector<392x128xf32>
    %c0_16 = arith.constant 0 : index
    %c0_17 = arith.constant 0 : index
    %16 = vector.load %arg2[%c0_16, %c0_17] : memref<128x128xf32, #tpu.memory_space<vmem>>, vector<128x128xf32>
    %cst_18 = arith.constant dense<0.000000e+00> : vector<392x128xf32>
    %17 = tpu.matmul %15, %16, %cst_18 {dimension_numbers = #tpu.dot_dimension_numbers<[1], [0], [0], [1], [0, 0, 1, 1], [], []>} : vector<392x128xf32>, vector<128x128xf32>, vector<392x128xf32> -> vector<392x128xf32>
    %18 = arith.maximumf %13, %17 : vector<392x128xf32>
    %c0_19 = arith.constant 0 : index
    %c0_20 = arith.constant 0 : index
    %19 = vector.load %arg3[%c0_19, %c0_20] : memref<1x128xf32, #tpu.memory_space<vmem>>, vector<1x128xf32>
    %20 = vector.broadcast %19 : vector<1x128xf32> to vector<392x128xf32>
    %21 = arith.addf %18, %20 : vector<392x128xf32>
    %cst_21 = arith.constant 0.000000e+00 : f32
    %22 = vector.broadcast %cst_21 : f32 to vector<392x128xf32>
    %23 = arith.maximumf %21, %22 : vector<392x128xf32>
    %cst_22 = arith.constant dense<0.000000e+00> : vector<128xf32>
    %24 = vector.multi_reduction <add>, %23, %cst_22 [0] : vector<392x128xf32> to vector<128xf32>
    %25 = vector.shape_cast %24 : vector<128xf32> to vector<1x128xf32>
    %cst_23 = arith.constant 3.920000e+02 : f32
    %26 = vector.broadcast %cst_23 : f32 to vector<1x128xf32>
    %27 = arith.divf %25, %26 : vector<1x128xf32>
    %28 = vector.broadcast %27 : vector<1x128xf32> to vector<392x128xf32>
    %29 = arith.subf %23, %28 : vector<392x128xf32>
    %30 = arith.mulf %29, %29 : vector<392x128xf32>
    %cst_24 = arith.constant dense<0.000000e+00> : vector<128xf32>
    %31 = vector.multi_reduction <add>, %30, %cst_24 [0] : vector<392x128xf32> to vector<128xf32>
    %32 = vector.shape_cast %31 : vector<128xf32> to vector<1x128xf32>
    %cst_25 = arith.constant 3.920000e+02 : f32
    %33 = vector.broadcast %cst_25 : f32 to vector<1x128xf32>
    %34 = arith.divf %32, %33 : vector<1x128xf32>
    %cst_26 = arith.constant 9.99999974E-6 : f32
    %35 = vector.broadcast %cst_26 : f32 to vector<1x128xf32>
    %36 = arith.addf %34, %35 : vector<1x128xf32>
    %37 = math.rsqrt %36 : vector<1x128xf32>
    %c0_27 = arith.constant 0 : index
    %c0_28 = arith.constant 0 : index
    %38 = vector.load %arg4[%c0_27, %c0_28] : memref<1x128xf32, #tpu.memory_space<vmem>>, vector<1x128xf32>
    %39 = arith.mulf %37, %38 : vector<1x128xf32>
    %40 = vector.broadcast %39 : vector<1x128xf32> to vector<392x128xf32>
    %41 = arith.mulf %29, %40 : vector<392x128xf32>
    %c0_29 = arith.constant 0 : index
    %c0_30 = arith.constant 0 : index
    %42 = vector.load %arg5[%c0_29, %c0_30] : memref<1x128xf32, #tpu.memory_space<vmem>>, vector<1x128xf32>
    %43 = vector.broadcast %42 : vector<1x128xf32> to vector<392x128xf32>
    %44 = arith.addf %41, %43 : vector<392x128xf32>
    %c0_31 = arith.constant 0 : index
    %c0_32 = arith.constant 0 : index
    %45 = vector.load %arg6[%c0_31, %c0_32] : memref<392x128xf32, #tpu.memory_space<vmem>>, vector<392x128xf32>
    tpu.vector_store %arg6[%c0_31, %c0_32], %44 {strides = array<i32>} : memref<392x128xf32, #tpu.memory_space<vmem>>, vector<392x128xf32>,
    return
  }
  func.func @transform_0(%arg0: i32) -> (i32, i32, i32) {
    %c0_i32 = arith.constant 0 : i32
    %c0_i32_0 = arith.constant 0 : i32
    %c0_i32_1 = arith.constant 0 : i32
    %c0_i32_2 = arith.constant 0 : i32
    return %c0_i32, %c0_i32_0, %c0_i32_1 : i32, i32, i32
  }
  func.func @transform_1(%arg0: i32) -> (i32, i32) {
    %c0_i32 = arith.constant 0 : i32
    %c0_i32_0 = arith.constant 0 : i32
    %c0_i32_1 = arith.constant 0 : i32
    return %c0_i32, %c0_i32_0 : i32, i32
  }
  func.func @transform_2(%arg0: i32) -> (i32, i32) {
    %c0_i32 = arith.constant 0 : i32
    %c0_i32_0 = arith.constant 0 : i32
    %c0_i32_1 = arith.constant 0 : i32
    return %c0_i32, %c0_i32_0 : i32, i32
  }
  func.func @transform_3(%arg0: i32) -> (i32, i32) {
    %c0_i32 = arith.constant 0 : i32
    %c0_i32_0 = arith.constant 0 : i32
    %c0_i32_1 = arith.constant 0 : i32
    return %c0_i32, %c0_i32_0 : i32, i32
  }
  func.func @transform_4(%arg0: i32) -> (i32, i32) {
    %c0_i32 = arith.constant 0 : i32
    %c0_i32_0 = arith.constant 0 : i32
    %c0_i32_1 = arith.constant 0 : i32
    return %c0_i32, %c0_i32_0 : i32, i32
  }
  func.func @transform_5(%arg0: i32) -> (i32, i32) {
    %c0_i32 = arith.constant 0 : i32
    %c0_i32_0 = arith.constant 0 : i32
    %c0_i32_1 = arith.constant 0 : i32
    return %c0_i32, %c0_i32_0 : i32, i32
  }
}

module attributes {stable_mosaic.version = 11 : i64} {
  func.func @_conv_stage_kernel(%arg0: i32, %arg1: memref<4x50x3200xf32, #tpu.memory_space<vmem>>, %arg2: memref<3200x128xf32, #tpu.memory_space<vmem>>, %arg3: memref<1x128xf32, #tpu.memory_space<vmem>>, %arg4: memref<1x128xf32, #tpu.memory_space<vmem>>, %arg5: memref<1x128xf32, #tpu.memory_space<vmem>>, %arg6: memref<50x128xf32, #tpu.memory_space<vmem>>) attributes {dimension_semantics = [#tpu.dimension_semantics<arbitrary>], iteration_bounds = array<i64: 1>, scalar_prefetch = 0 : i64, scratch_operands = 0 : i64, tpu.core_type = #tpu.core_type<tc>, window_params = [{pipeline_mode = #tpu.pipeline_mode<synchronous>, transform_indices = @transform_0, window_bounds = array<i64: 4, 50, 3200>}, {pipeline_mode = #tpu.pipeline_mode<synchronous>, transform_indices = @transform_1, window_bounds = array<i64: 3200, 128>}, {pipeline_mode = #tpu.pipeline_mode<synchronous>, transform_indices = @transform_2, window_bounds = array<i64: 1, 128>}, {pipeline_mode = #tpu.pipeline_mode<synchronous>, transform_indices = @transform_3, window_bounds = array<i64: 1, 128>}, {pipeline_mode = #tpu.pipeline_mode<synchronous>, transform_indices = @transform_4, window_bounds = array<i64: 1, 128>}, {pipeline_mode = #tpu.pipeline_mode<synchronous>, transform_indices = @transform_5, window_bounds = array<i64: 50, 128>}]} {
    %c0 = arith.constant 0 : index
    %c0_0 = arith.constant 0 : index
    %c0_1 = arith.constant 0 : index
    %0 = vector.load %arg1[%c0, %c0_0, %c0_1] : memref<4x50x3200xf32, #tpu.memory_space<vmem>>, vector<1x50x3200xf32>
    %1 = vector.shape_cast %0 : vector<1x50x3200xf32> to vector<50x3200xf32>
    %c0_2 = arith.constant 0 : index
    %c0_3 = arith.constant 0 : index
    %2 = vector.load %arg2[%c0_2, %c0_3] : memref<3200x128xf32, #tpu.memory_space<vmem>>, vector<3200x128xf32>
    %cst = arith.constant dense<0.000000e+00> : vector<50x128xf32>
    %3 = tpu.matmul %1, %2, %cst {dimension_numbers = #tpu.dot_dimension_numbers<[1], [0], [0], [1], [0, 0, 1, 1], [], []>} : vector<50x3200xf32>, vector<3200x128xf32>, vector<50x128xf32> -> vector<50x128xf32>
    %c1 = arith.constant 1 : index
    %c0_4 = arith.constant 0 : index
    %c0_5 = arith.constant 0 : index
    %4 = vector.load %arg1[%c1, %c0_4, %c0_5] : memref<4x50x3200xf32, #tpu.memory_space<vmem>>, vector<1x50x3200xf32>
    %5 = vector.shape_cast %4 : vector<1x50x3200xf32> to vector<50x3200xf32>
    %c0_6 = arith.constant 0 : index
    %c0_7 = arith.constant 0 : index
    %6 = vector.load %arg2[%c0_6, %c0_7] : memref<3200x128xf32, #tpu.memory_space<vmem>>, vector<3200x128xf32>
    %cst_8 = arith.constant dense<0.000000e+00> : vector<50x128xf32>
    %7 = tpu.matmul %5, %6, %cst_8 {dimension_numbers = #tpu.dot_dimension_numbers<[1], [0], [0], [1], [0, 0, 1, 1], [], []>} : vector<50x3200xf32>, vector<3200x128xf32>, vector<50x128xf32> -> vector<50x128xf32>
    %8 = arith.maximumf %3, %7 : vector<50x128xf32>
    %c2 = arith.constant 2 : index
    %c0_9 = arith.constant 0 : index
    %c0_10 = arith.constant 0 : index
    %9 = vector.load %arg1[%c2, %c0_9, %c0_10] : memref<4x50x3200xf32, #tpu.memory_space<vmem>>, vector<1x50x3200xf32>
    %10 = vector.shape_cast %9 : vector<1x50x3200xf32> to vector<50x3200xf32>
    %c0_11 = arith.constant 0 : index
    %c0_12 = arith.constant 0 : index
    %11 = vector.load %arg2[%c0_11, %c0_12] : memref<3200x128xf32, #tpu.memory_space<vmem>>, vector<3200x128xf32>
    %cst_13 = arith.constant dense<0.000000e+00> : vector<50x128xf32>
    %12 = tpu.matmul %10, %11, %cst_13 {dimension_numbers = #tpu.dot_dimension_numbers<[1], [0], [0], [1], [0, 0, 1, 1], [], []>} : vector<50x3200xf32>, vector<3200x128xf32>, vector<50x128xf32> -> vector<50x128xf32>
    %13 = arith.maximumf %8, %12 : vector<50x128xf32>
    %c3 = arith.constant 3 : index
    %c0_14 = arith.constant 0 : index
    %c0_15 = arith.constant 0 : index
    %14 = vector.load %arg1[%c3, %c0_14, %c0_15] : memref<4x50x3200xf32, #tpu.memory_space<vmem>>, vector<1x50x3200xf32>
    %15 = vector.shape_cast %14 : vector<1x50x3200xf32> to vector<50x3200xf32>
    %c0_16 = arith.constant 0 : index
    %c0_17 = arith.constant 0 : index
    %16 = vector.load %arg2[%c0_16, %c0_17] : memref<3200x128xf32, #tpu.memory_space<vmem>>, vector<3200x128xf32>
    %cst_18 = arith.constant dense<0.000000e+00> : vector<50x128xf32>
    %17 = tpu.matmul %15, %16, %cst_18 {dimension_numbers = #tpu.dot_dimension_numbers<[1], [0], [0], [1], [0, 0, 1, 1], [], []>} : vector<50x3200xf32>, vector<3200x128xf32>, vector<50x128xf32> -> vector<50x128xf32>
    %18 = arith.maximumf %13, %17 : vector<50x128xf32>
    %c0_19 = arith.constant 0 : index
    %c0_20 = arith.constant 0 : index
    %19 = vector.load %arg3[%c0_19, %c0_20] : memref<1x128xf32, #tpu.memory_space<vmem>>, vector<1x128xf32>
    %20 = vector.broadcast %19 : vector<1x128xf32> to vector<50x128xf32>
    %21 = arith.addf %18, %20 : vector<50x128xf32>
    %cst_21 = arith.constant 0.000000e+00 : f32
    %22 = vector.broadcast %cst_21 : f32 to vector<50x128xf32>
    %23 = arith.maximumf %21, %22 : vector<50x128xf32>
    %cst_22 = arith.constant dense<0.000000e+00> : vector<128xf32>
    %24 = vector.multi_reduction <add>, %23, %cst_22 [0] : vector<50x128xf32> to vector<128xf32>
    %25 = vector.shape_cast %24 : vector<128xf32> to vector<1x128xf32>
    %cst_23 = arith.constant 5.000000e+01 : f32
    %26 = vector.broadcast %cst_23 : f32 to vector<1x128xf32>
    %27 = arith.divf %25, %26 : vector<1x128xf32>
    %28 = vector.broadcast %27 : vector<1x128xf32> to vector<50x128xf32>
    %29 = arith.subf %23, %28 : vector<50x128xf32>
    %30 = arith.mulf %29, %29 : vector<50x128xf32>
    %cst_24 = arith.constant dense<0.000000e+00> : vector<128xf32>
    %31 = vector.multi_reduction <add>, %30, %cst_24 [0] : vector<50x128xf32> to vector<128xf32>
    %32 = vector.shape_cast %31 : vector<128xf32> to vector<1x128xf32>
    %cst_25 = arith.constant 5.000000e+01 : f32
    %33 = vector.broadcast %cst_25 : f32 to vector<1x128xf32>
    %34 = arith.divf %32, %33 : vector<1x128xf32>
    %cst_26 = arith.constant 9.99999974E-6 : f32
    %35 = vector.broadcast %cst_26 : f32 to vector<1x128xf32>
    %36 = arith.addf %34, %35 : vector<1x128xf32>
    %37 = math.rsqrt %36 : vector<1x128xf32>
    %c0_27 = arith.constant 0 : index
    %c0_28 = arith.constant 0 : index
    %38 = vector.load %arg4[%c0_27, %c0_28] : memref<1x128xf32, #tpu.memory_space<vmem>>, vector<1x128xf32>
    %39 = arith.mulf %37, %38 : vector<1x128xf32>
    %40 = vector.broadcast %39 : vector<1x128xf32> to vector<50x128xf32>
    %41 = arith.mulf %29, %40 : vector<50x128xf32>
    %c0_29 = arith.constant 0 : index
    %c0_30 = arith.constant 0 : index
    %42 = vector.load %arg5[%c0_29, %c0_30] : memref<1x128xf32, #tpu.memory_space<vmem>>, vector<1x128xf32>
    %43 = vector.broadcast %42 : vector<1x128xf32> to vector<50x128xf32>
    %44 = arith.addf %41, %43 : vector<50x128xf32>
    %c0_31 = arith.constant 0 : index
    %c0_32 = arith.constant 0 : index
    %45 = vector.load %arg6[%c0_31, %c0_32] : memref<50x128xf32, #tpu.memory_space<vmem>>, vector<50x128xf32>
    tpu.vector_store %arg6[%c0_31, %c0_32], %44 {strides = array<i32>} : memref<50x128xf32, #tpu.memory_space<vmem>>, vector<50x128xf32>,
    return
  }
  func.func @transform_0(%arg0: i32) -> (i32, i32, i32) {
    %c0_i32 = arith.constant 0 : i32
    %c0_i32_0 = arith.constant 0 : i32
    %c0_i32_1 = arith.constant 0 : i32
    %c0_i32_2 = arith.constant 0 : i32
    return %c0_i32, %c0_i32_0, %c0_i32_1 : i32, i32, i32
  }
  func.func @transform_1(%arg0: i32) -> (i32, i32) {
    %c0_i32 = arith.constant 0 : i32
    %c0_i32_0 = arith.constant 0 : i32
    %c0_i32_1 = arith.constant 0 : i32
    return %c0_i32, %c0_i32_0 : i32, i32
  }
  func.func @transform_2(%arg0: i32) -> (i32, i32) {
    %c0_i32 = arith.constant 0 : i32
    %c0_i32_0 = arith.constant 0 : i32
    %c0_i32_1 = arith.constant 0 : i32
    return %c0_i32, %c0_i32_0 : i32, i32
  }
  func.func @transform_3(%arg0: i32) -> (i32, i32) {
    %c0_i32 = arith.constant 0 : i32
    %c0_i32_0 = arith.constant 0 : i32
    %c0_i32_1 = arith.constant 0 : i32
    return %c0_i32, %c0_i32_0 : i32, i32
  }
  func.func @transform_4(%arg0: i32) -> (i32, i32) {
    %c0_i32 = arith.constant 0 : i32
    %c0_i32_0 = arith.constant 0 : i32
    %c0_i32_1 = arith.constant 0 : i32
    return %c0_i32, %c0_i32_0 : i32, i32
  }
  func.func @transform_5(%arg0: i32) -> (i32, i32) {
    %c0_i32 = arith.constant 0 : i32
    %c0_i32_0 = arith.constant 0 : i32
    %c0_i32_1 = arith.constant 0 : i32
    return %c0_i32, %c0_i32_0 : i32, i32
  }
}

module attributes {stable_mosaic.version = 11 : i64} {
  func.func @_fused_fc_kernel(%arg0: i32, %arg1: memref<2x3200xf32, #tpu.memory_space<vmem>>, %arg2: memref<3200x128xf32, #tpu.memory_space<vmem>>, %arg3: memref<1x128xf32, #tpu.memory_space<vmem>>, %arg4: memref<128x128xf32, #tpu.memory_space<vmem>>, %arg5: memref<1x128xf32, #tpu.memory_space<vmem>>, %arg6: memref<128x128xf32, #tpu.memory_space<vmem>>, %arg7: memref<1x128xf32, #tpu.memory_space<vmem>>, %arg8: memref<2x128xf32, #tpu.memory_space<vmem>>) attributes {dimension_semantics = [#tpu.dimension_semantics<arbitrary>], iteration_bounds = array<i64: 1>, scalar_prefetch = 0 : i64, scratch_operands = 0 : i64, tpu.core_type = #tpu.core_type<tc>, window_params = [{pipeline_mode = #tpu.pipeline_mode<synchronous>, transform_indices = @transform_0, window_bounds = array<i64: 2, 3200>}, {pipeline_mode = #tpu.pipeline_mode<synchronous>, transform_indices = @transform_1, window_bounds = array<i64: 3200, 128>}, {pipeline_mode = #tpu.pipeline_mode<synchronous>, transform_indices = @transform_2, window_bounds = array<i64: 1, 128>}, {pipeline_mode = #tpu.pipeline_mode<synchronous>, transform_indices = @transform_3, window_bounds = array<i64: 128, 128>}, {pipeline_mode = #tpu.pipeline_mode<synchronous>, transform_indices = @transform_4, window_bounds = array<i64: 1, 128>}, {pipeline_mode = #tpu.pipeline_mode<synchronous>, transform_indices = @transform_5, window_bounds = array<i64: 128, 128>}, {pipeline_mode = #tpu.pipeline_mode<synchronous>, transform_indices = @transform_6, window_bounds = array<i64: 1, 128>}, {pipeline_mode = #tpu.pipeline_mode<synchronous>, transform_indices = @transform_7, window_bounds = array<i64: 2, 128>}]} {
    %c0 = arith.constant 0 : index
    %c0_0 = arith.constant 0 : index
    %0 = vector.load %arg1[%c0, %c0_0] : memref<2x3200xf32, #tpu.memory_space<vmem>>, vector<2x3200xf32>
    %c0_1 = arith.constant 0 : index
    %c0_2 = arith.constant 0 : index
    %1 = vector.load %arg2[%c0_1, %c0_2] : memref<3200x128xf32, #tpu.memory_space<vmem>>, vector<3200x128xf32>
    %cst = arith.constant dense<0.000000e+00> : vector<2x128xf32>
    %2 = tpu.matmul %0, %1, %cst {dimension_numbers = #tpu.dot_dimension_numbers<[1], [0], [0], [1], [0, 0, 1, 1], [], []>} : vector<2x3200xf32>, vector<3200x128xf32>, vector<2x128xf32> -> vector<2x128xf32>
    %c0_3 = arith.constant 0 : index
    %c0_4 = arith.constant 0 : index
    %3 = vector.load %arg3[%c0_3, %c0_4] : memref<1x128xf32, #tpu.memory_space<vmem>>, vector<1x128xf32>
    %4 = vector.broadcast %3 : vector<1x128xf32> to vector<2x128xf32>
    %5 = arith.addf %2, %4 : vector<2x128xf32>
    %cst_5 = arith.constant 0.000000e+00 : f32
    %6 = vector.broadcast %cst_5 : f32 to vector<2x128xf32>
    %7 = arith.maximumf %5, %6 : vector<2x128xf32>
    %c0_6 = arith.constant 0 : index
    %c0_7 = arith.constant 0 : index
    %8 = vector.load %arg4[%c0_6, %c0_7] : memref<128x128xf32, #tpu.memory_space<vmem>>, vector<128x128xf32>
    %cst_8 = arith.constant dense<0.000000e+00> : vector<2x128xf32>
    %9 = tpu.matmul %7, %8, %cst_8 {dimension_numbers = #tpu.dot_dimension_numbers<[1], [0], [0], [1], [0, 0, 1, 1], [], []>} : vector<2x128xf32>, vector<128x128xf32>, vector<2x128xf32> -> vector<2x128xf32>
    %c0_9 = arith.constant 0 : index
    %c0_10 = arith.constant 0 : index
    %10 = vector.load %arg5[%c0_9, %c0_10] : memref<1x128xf32, #tpu.memory_space<vmem>>, vector<1x128xf32>
    %11 = vector.broadcast %10 : vector<1x128xf32> to vector<2x128xf32>
    %12 = arith.addf %9, %11 : vector<2x128xf32>
    %cst_11 = arith.constant 0.000000e+00 : f32
    %13 = vector.broadcast %cst_11 : f32 to vector<2x128xf32>
    %14 = arith.maximumf %12, %13 : vector<2x128xf32>
    %c0_12 = arith.constant 0 : index
    %c0_13 = arith.constant 0 : index
    %15 = vector.load %arg6[%c0_12, %c0_13] : memref<128x128xf32, #tpu.memory_space<vmem>>, vector<128x128xf32>
    %cst_14 = arith.constant dense<0.000000e+00> : vector<2x128xf32>
    %16 = tpu.matmul %14, %15, %cst_14 {dimension_numbers = #tpu.dot_dimension_numbers<[1], [0], [0], [1], [0, 0, 1, 1], [], []>} : vector<2x128xf32>, vector<128x128xf32>, vector<2x128xf32> -> vector<2x128xf32>
    %c0_15 = arith.constant 0 : index
    %c0_16 = arith.constant 0 : index
    %17 = vector.load %arg7[%c0_15, %c0_16] : memref<1x128xf32, #tpu.memory_space<vmem>>, vector<1x128xf32>
    %18 = vector.broadcast %17 : vector<1x128xf32> to vector<2x128xf32>
    %19 = arith.addf %16, %18 : vector<2x128xf32>
    %c0_17 = arith.constant 0 : index
    %c0_18 = arith.constant 0 : index
    %20 = vector.load %arg8[%c0_17, %c0_18] : memref<2x128xf32, #tpu.memory_space<vmem>>, vector<2x128xf32>
    tpu.vector_store %arg8[%c0_17, %c0_18], %19 {strides = array<i32>} : memref<2x128xf32, #tpu.memory_space<vmem>>, vector<2x128xf32>,
    return
  }
  func.func @transform_0(%arg0: i32) -> (i32, i32) {
    %c0_i32 = arith.constant 0 : i32
    %c0_i32_0 = arith.constant 0 : i32
    %c0_i32_1 = arith.constant 0 : i32
    return %c0_i32, %c0_i32_0 : i32, i32
  }
  func.func @transform_1(%arg0: i32) -> (i32, i32) {
    %c0_i32 = arith.constant 0 : i32
    %c0_i32_0 = arith.constant 0 : i32
    %c0_i32_1 = arith.constant 0 : i32
    return %c0_i32, %c0_i32_0 : i32, i32
  }
  func.func @transform_2(%arg0: i32) -> (i32, i32) {
    %c0_i32 = arith.constant 0 : i32
    %c0_i32_0 = arith.constant 0 : i32
    %c0_i32_1 = arith.constant 0 : i32
    return %c0_i32, %c0_i32_0 : i32, i32
  }
  func.func @transform_3(%arg0: i32) -> (i32, i32) {
    %c0_i32 = arith.constant 0 : i32
    %c0_i32_0 = arith.constant 0 : i32
    %c0_i32_1 = arith.constant 0 : i32
    return %c0_i32, %c0_i32_0 : i32, i32
  }
  func.func @transform_4(%arg0: i32) -> (i32, i32) {
    %c0_i32 = arith.constant 0 : i32
    %c0_i32_0 = arith.constant 0 : i32
    %c0_i32_1 = arith.constant 0 : i32
    return %c0_i32, %c0_i32_0 : i32, i32
  }
  func.func @transform_5(%arg0: i32) -> (i32, i32) {
    %c0_i32 = arith.constant 0 : i32
    %c0_i32_0 = arith.constant 0 : i32
    %c0_i32_1 = arith.constant 0 : i32
    return %c0_i32, %c0_i32_0 : i32, i32
  }
  func.func @transform_6(%arg0: i32) -> (i32, i32) {
    %c0_i32 = arith.constant 0 : i32
    %c0_i32_0 = arith.constant 0 : i32
    %c0_i32_1 = arith.constant 0 : i32
    return %c0_i32, %c0_i32_0 : i32, i32
  }
  func.func @transform_7(%arg0: i32) -> (i32, i32) {
    %c0_i32 = arith.constant 0 : i32
    %c0_i32_0 = arith.constant 0 : i32
    %c0_i32_1 = arith.constant 0 : i32
    return %c0_i32, %c0_i32_0 : i32, i32
  }
}

</mosaic_0001>

<llo_original>
// kernel: forward.3
$region0: #{forward.3}
  #allocation0 [shape = 'u32[]', space=smem, size = 0x4, offset = 0x4, fixed_abs, tag = 'smem constant byte address 0x4 - core index']
  #allocation1 [shape = 'u32[144,128]{1,0:T(1,128)}', space=vmem, size = 0x12000, scoped, tag = 'internal scratch']
  %s0 = inlined_call_operand.vmem [shape: f32[4,392,128], index: 0, kind: input, shape index: {}]
  %s1 = inlined_call_operand.vmem [shape: f32[128,128], index: 1, kind: input, shape index: {}]
  %s2 = inlined_call_operand.vmem [shape: f32[1,128], index: 2, kind: input, shape index: {}]
  %s3 = inlined_call_operand.vmem [shape: f32[1,128], index: 3, kind: input, shape index: {}]
  %s4 = inlined_call_operand.vmem [shape: f32[1,128], index: 4, kind: input, shape index: {}]
  %s5 = inlined_call_operand.vmem [shape: f32[392,128], index: 5, kind: output, shape index: {}]
  %s6 = sld [smem:[#allocation0]]
  $region30: #{forward.3} parent=0
    _
  %s8 = ssub.s32 1, %s6
  %s9 = scalar_select 0, %s8, %s6
  // Predicated region
  $region2: #{forward.3} parent=0 // pred_check
    _
  $region3: #{forward.3} parent=0 // pred_check_branch
    %11 = sbr.rel (0) target = $region5
  $region4: #{forward.3} parent=0 // pred_region
    _
  $region5: #{forward.3} parent=0 // pred_fallthru
    _
  // Predicated region
  $region6: #{forward.3} parent=0 // pred_check
    _
  $region7: #{forward.3} parent=0 // pred_check_branch
    %13 = sbr.rel (0) target = $region9
  $region8: #{forward.3} parent=0 // pred_region
    _
  $region9: #{forward.3} parent=0 // pred_fallthru
    _
  // Predicated region
  $region10: #{forward.3} parent=0 // pred_check
    _
  $region11: #{forward.3} parent=0 // pred_check_branch
    %15 = sbr.rel (0) target = $region13
  $region12: #{forward.3} parent=0 // pred_region
    _
  $region13: #{forward.3} parent=0 // pred_fallthru
    _
  // Predicated region
  $region14: #{forward.3} parent=0 // pred_check
    _
  $region15: #{forward.3} parent=0 // pred_check_branch
    %17 = sbr.rel (0) target = $region17
  $region16: #{forward.3} parent=0 // pred_region
    _
  $region17: #{forward.3} parent=0 // pred_fallthru
    _
  // Predicated region
  $region18: #{forward.3} parent=0 // pred_check
    _
  $region19: #{forward.3} parent=0 // pred_check_branch
    %19 = sbr.rel (0) target = $region21
  $region20: #{forward.3} parent=0 // pred_region
    _
  $region21: #{forward.3} parent=0 // pred_fallthru
    _
  %v20 = vld [vmem:[%s0] sm:$0xff]
  %v21 = vld [vmem:[%s0 + $0x8] sm:$0xff]
  %v22 = vld [vmem:[%s0 + $0x10] sm:$0xff]
  %v23 = vld [vmem:[%s0 + $0x18] sm:$0xff]
  %v24 = vld [vmem:[%s0 + $0x20] sm:$0xff]
  %v25 = vld [vmem:[%s0 + $0x28] sm:$0xff]
  %v26 = vld [vmem:[%s0 + $0x30] sm:$0xff]
  %v27 = vld [vmem:[%s0 + $0x38] sm:$0xff]
  %v28 = vld [vmem:[%s0 + $0x40] sm:$0xff]
  %v29 = vld [vmem:[%s0 + $0x48] sm:$0xff]
  %v30 = vld [vmem:[%s0 + $0x50] sm:$0xff]
  %v31 = vld [vmem:[%s0 + $0x58] sm:$0xff]
  %v32 = vld [vmem:[%s0 + $0x60] sm:$0xff]
  %v33 = vld [vmem:[%s0 + $0x68] sm:$0xff]
  %v34 = vld [vmem:[%s0 + $0x70] sm:$0xff]
  %v35 = vld [vmem:[%s0 + $0x78] sm:$0xff]
  %v36 = vld [vmem:[%s0 + $0x80] sm:$0xff]
  %v37 = vld [vmem:[%s0 + $0x88] sm:$0xff]
  %v38 = vld [vmem:[%s0 + $0x90] sm:$0xff]
  %v39 = vld [vmem:[%s0 + $0x98] sm:$0xff]
  %v40 = vld [vmem:[%s0 + $0xa0] sm:$0xff]
  %v41 = vld [vmem:[%s0 + $0xa8] sm:$0xff]
  %v42 = vld [vmem:[%s0 + $0xb0] sm:$0xff]
  %v43 = vld [vmem:[%s0 + $0xb8] sm:$0xff]
  %v44 = vld [vmem:[%s0 + $0xc0] sm:$0xff]
  %v45 = vld [vmem:[%s0 + $0xc8] sm:$0xff]
  %v46 = vld [vmem:[%s0 + $0xd0] sm:$0xff]
  %v47 = vld [vmem:[%s0 + $0xd8] sm:$0xff]
  %v48 = vld [vmem:[%s0 + $0xe0] sm:$0xff]
  %v49 = vld [vmem:[%s0 + $0xe8] sm:$0xff]
  %v50 = vld [vmem:[%s0 + $0xf0] sm:$0xff]
  %v51 = vld [vmem:[%s0 + $0xf8] sm:$0xff]
  %v52 = vld [vmem:[%s0 + $0x100] sm:$0xff]
  %v53 = vld [vmem:[%s0 + $0x108] sm:$0xff]
  %v54 = vld [vmem:[%s0 + $0x110] sm:$0xff]
  %v55 = vld [vmem:[%s0 + $0x118] sm:$0xff]
  %v56 = vld [vmem:[%s0 + $0x120] sm:$0xff]
  %v57 = vld [vmem:[%s0 + $0x128] sm:$0xff]
  %v58 = vld [vmem:[%s0 + $0x130] sm:$0xff]
  %v59 = vld [vmem:[%s0 + $0x138] sm:$0xff]
  %v60 = vld [vmem:[%s0 + $0x140] sm:$0xff]
  %v61 = vld [vmem:[%s0 + $0x148] sm:$0xff]
  %v62 = vld [vmem:[%s0 + $0x150] sm:$0xff]
  %v63 = vld [vmem:[%s0 + $0x158] sm:$0xff]
  %v64 = vld [vmem:[%s0 + $0x160] sm:$0xff]
  %v65 = vld [vmem:[%s0 + $0x168] sm:$0xff]
  %v66 = vld [vmem:[%s0 + $0x170] sm:$0xff]
  %v67 = vld [vmem:[%s0 + $0x178] sm:$0xff]
  %v68 = vld [vmem:[%s0 + $0x180] sm:$0xff]
  %v69 = vld [vmem:[%s1] sm:$0xff]
  %v70 = vld [vmem:[%s1 + $0x8] sm:$0xff]
  %v71 = vld [vmem:[%s1 + $0x10] sm:$0xff]
  %v72 = vld [vmem:[%s1 + $0x18] sm:$0xff]
  %v73 = vld [vmem:[%s1 + $0x20] sm:$0xff]
  %v74 = vld [vmem:[%s1 + $0x28] sm:$0xff]
  %v75 = vld [vmem:[%s1 + $0x30] sm:$0xff]
  %v76 = vld [vmem:[%s1 + $0x38] sm:$0xff]
  %v77 = vld [vmem:[%s1 + $0x40] sm:$0xff]
  %v78 = vld [vmem:[%s1 + $0x48] sm:$0xff]
  %v79 = vld [vmem:[%s1 + $0x50] sm:$0xff]
  %v80 = vld [vmem:[%s1 + $0x58] sm:$0xff]
  %v81 = vld [vmem:[%s1 + $0x60] sm:$0xff]
  %v82 = vld [vmem:[%s1 + $0x68] sm:$0xff]
  %v83 = vld [vmem:[%s1 + $0x70] sm:$0xff]
  %v84 = vld [vmem:[%s1 + $0x78] sm:$0xff]
  %85 = vmatprep.subr.mxu0 0.0
  %86 = vmatpush1.msra.mxu0 %v84
  %87 = vmatprep.subr.mxu0 0.0
  %88 = vmatpush1.msra.mxu0 %v83
  %89 = vmatprep.subr.mxu0 0.0
  %90 = vmatpush1.msra.mxu0 %v82
  %91 = vmatprep.subr.mxu0 0.0
  %92 = vmatpush1.msra.mxu0 %v81
  %93 = vmatprep.subr.mxu0 0.0
  %94 = vmatpush1.msra.mxu0 %v80
  %95 = vmatprep.subr.mxu0 0.0
  %96 = vmatpush1.msra.mxu0 %v79
  %97 = vmatprep.subr.mxu0 0.0
  %98 = vmatpush1.msra.mxu0 %v78
  %99 = vmatprep.subr.mxu0 0.0
  %100 = vmatpush1.msra.mxu0 %v77
  %101 = vmatprep.subr.mxu0 0.0
  %102 = vmatpush1.msra.mxu0 %v76
  %103 = vmatprep.subr.mxu0 0.0
  %104 = vmatpush1.msra.mxu0 %v75
  %105 = vmatprep.subr.mxu0 0.0
  %106 = vmatpush1.msra.mxu0 %v74
  %107 = vmatprep.subr.mxu0 0.0
  %108 = vmatpush1.msra.mxu0 %v73
  %109 = vmatprep.subr.mxu0 0.0
  %110 = vmatpush1.msra.mxu0 %v72
  %111 = vmatprep.subr.mxu0 0.0
  %112 = vmatpush1.msra.mxu0 %v71
  %113 = vmatprep.subr.mxu0 0.0
  %114 = vmatpush1.msra.mxu0 %v70
  %115 = vmatprep.subr.mxu0 0.0
  %116 = vmatpush1.msra.mxu0 %v69
  %117 = vmatprep.subr.mxu0 0.0
  %118 = vmatpush2.msra.mxu0 0.0
  %119 = vmatprep.subr.mxu0 0.0
  %120 = vmatpush2.msra.mxu0 0.0
  %121 = vmatprep.subr.mxu0 0.0
  %122 = vmatpush2.msra.mxu0 0.0
  %123 = vmatprep.subr.mxu0 0.0
  %124 = vmatpush2.msra.mxu0 0.0
  %125 = vmatprep.subr.mxu0 0.0
  %126 = vmatpush2.msra.mxu0 0.0
  %127 = vmatprep.subr.mxu0 0.0
  %128 = vmatpush2.msra.mxu0 0.0
  %129 = vmatprep.subr.mxu0 0.0
  %130 = vmatpush2.msra.mxu0 0.0
  %131 = vmatprep.subr.mxu0 0.0
  %132 = vmatpush2.msra.mxu0 0.0
  %133 = vmatprep.subr.mxu0 0.0
  %134 = vmatpush2.msra.mxu0 0.0
  %135 = vmatprep.subr.mxu0 0.0
  %136 = vmatpush2.msra.mxu0 0.0
  %137 = vmatprep.subr.mxu0 0.0
  %138 = vmatpush2.msra.mxu0 0.0
  %139 = vmatprep.subr.mxu0 0.0
  %140 = vmatpush2.msra.mxu0 0.0
  %141 = vmatprep.subr.mxu0 0.0
  %142 = vmatpush2.msra.mxu0 0.0
  %143 = vmatprep.subr.mxu0 0.0
  %144 = vmatpush2.msra.mxu0 0.0
  %145 = vmatprep.subr.mxu0 0.0
  %146 = vmatpush2.msra.mxu0 0.0
  %147 = vmatprep.subr.mxu0 0.0
  %148 = vmatpush2.msra.mxu0 0.0
  %149 = vmatprep.mubr.f32.mxu0 0.0
  %150 = vmatmul.mubr.f32.gmra.mxu0 %v20
  %v151 = vpop.f32.mrf.mxu0
  %v152 = vadd.f32 0.0, %v151
  %v153 = vpop.f32.mrf.mxu0
  %154 = vmatprep.mubr.f32.mxu0 0.0
  %155 = vmatmul.mubr.f32.gmra.mxu0 %v21
  %v156 = vpop.f32.mrf.mxu0
  %v157 = vadd.f32 0.0, %v156
  %v158 = vpop.f32.mrf.mxu0
  %159 = vmatprep.mubr.f32.mxu0 0.0
  %160 = vmatmul.mubr.f32.gmra.mxu0 %v22
  %v161 = vpop.f32.mrf.mxu0
  %v162 = vadd.f32 0.0, %v161
  %v163 = vpop.f32.mrf.mxu0
  %164 = vmatprep.mubr.f32.mxu0 0.0
  %165 = vmatmul.mubr.f32.gmra.mxu0 %v23
  %v166 = vpop.f32.mrf.mxu0
  %v167 = vadd.f32 0.0, %v166
  %v168 = vpop.f32.mrf.mxu0
  %169 = vmatprep.mubr.f32.mxu0 0.0
  %170 = vmatmul.mubr.f32.gmra.mxu0 %v24
  %v171 = vpop.f32.mrf.mxu0
  %v172 = vadd.f32 0.0, %v171
  %v173 = vpop.f32.mrf.mxu0
  %174 = vmatprep.mubr.f32.mxu0 0.0
  %175 = vmatmul.mubr.f32.gmra.mxu0 %v25
  %v176 = vpop.f32.mrf.mxu0
  %v177 = vadd.f32 0.0, %v176
  %v178 = vpop.f32.mrf.mxu0
  %179 = vmatprep.mubr.f32.mxu0 0.0
  %180 = vmatmul.mubr.f32.gmra.mxu0 %v26
  %v181 = vpop.f32.mrf.mxu0
  %v182 = vadd.f32 0.0, %v181
  %v183 = vpop.f32.mrf.mxu0
  %184 = vmatprep.mubr.f32.mxu0 0.0
  %185 = vmatmul.mubr.f32.gmra.mxu0 %v27
  %v186 = vpop.f32.mrf.mxu0
  %v187 = vadd.f32 0.0, %v186
  %v188 = vpop.f32.mrf.mxu0
  %189 = vmatprep.mubr.f32.mxu0 0.0
  %190 = vmatmul.mubr.f32.gmra.mxu0 %v28
  %v191 = vpop.f32.mrf.mxu0
  %v192 = vadd.f32 0.0, %v191
  %v193 = vpop.f32.mrf.mxu0
  %194 = vmatprep.mubr.f32.mxu0 0.0
  %195 = vmatmul.mubr.f32.gmra.mxu0 %v29
  %v196 = vpop.f32.mrf.mxu0
  %v197 = vadd.f32 0.0, %v196
  %v198 = vpop.f32.mrf.mxu0
  %199 = vmatprep.mubr.f32.mxu0 0.0
  %200 = vmatmul.mubr.f32.gmra.mxu0 %v30
  %v201 = vpop.f32.mrf.mxu0
  %v202 = vadd.f32 0.0, %v201
  %v203 = vpop.f32.mrf.mxu0
  %204 = vmatprep.mubr.f32.mxu0 0.0
  %205 = vmatmul.mubr.f32.gmra.mxu0 %v31
  %v206 = vpop.f32.mrf.mxu0
  %v207 = vadd.f32 0.0, %v206
  %v208 = vpop.f32.mrf.mxu0
  %209 = vmatprep.mubr.f32.mxu0 0.0
  %210 = vmatmul.mubr.f32.gmra.mxu0 %v32
  %v211 = vpop.f32.mrf.mxu0
  %v212 = vadd.f32 0.0, %v211
  %v213 = vpop.f32.mrf.mxu0
  %214 = vmatprep.mubr.f32.mxu0 0.0
  %215 = vmatmul.mubr.f32.gmra.mxu0 %v33
  %v216 = vpop.f32.mrf.mxu0
  %v217 = vadd.f32 0.0, %v216
  %v218 = vpop.f32.mrf.mxu0
  %219 = vmatprep.mubr.f32.mxu0 0.0
  %220 = vmatmul.mubr.f32.gmra.mxu0 %v34
  %v221 = vpop.f32.mrf.mxu0
  %v222 = vadd.f32 0.0, %v221
  %v223 = vpop.f32.mrf.mxu0
  %224 = vmatprep.mubr.f32.mxu0 0.0
  %225 = vmatmul.mubr.f32.gmra.mxu0 %v35
  %v226 = vpop.f32.mrf.mxu0
  %v227 = vadd.f32 0.0, %v226
  %v228 = vpop.f32.mrf.mxu0
  %229 = vmatprep.mubr.f32.mxu0 0.0
  %230 = vmatmul.mubr.f32.gmra.mxu0 %v36
  %v231 = vpop.f32.mrf.mxu0
  %v232 = vadd.f32 0.0, %v231
  %v233 = vpop.f32.mrf.mxu0
  %234 = vmatprep.mubr.f32.mxu0 0.0
  %235 = vmatmul.mubr.f32.gmra.mxu0 %v37
  %v236 = vpop.f32.mrf.mxu0
  %v237 = vadd.f32 0.0, %v236
  %v238 = vpop.f32.mrf.mxu0
  %239 = vmatprep.mubr.f32.mxu0 0.0
  %240 = vmatmul.mubr.f32.gmra.mxu0 %v38
  %v241 = vpop.f32.mrf.mxu0
  %v242 = vadd.f32 0.0, %v241
  %v243 = vpop.f32.mrf.mxu0
  %244 = vmatprep.mubr.f32.mxu0 0.0
  %245 = vmatmul.mubr.f32.gmra.mxu0 %v39
  %v246 = vpop.f32.mrf.mxu0
  %v247 = vadd.f32 0.0, %v246
  %v248 = vpop.f32.mrf.mxu0
  %249 = vmatprep.mubr.f32.mxu0 0.0
  %250 = vmatmul.mubr.f32.gmra.mxu0 %v40
  %v251 = vpop.f32.mrf.mxu0
  %v252 = vadd.f32 0.0, %v251
  %v253 = vpop.f32.mrf.mxu0
  %254 = vmatprep.mubr.f32.mxu0 0.0
  %255 = vmatmul.mubr.f32.gmra.mxu0 %v41
  %v256 = vpop.f32.mrf.mxu0
  %v257 = vadd.f32 0.0, %v256
  %v258 = vpop.f32.mrf.mxu0
  %259 = vmatprep.mubr.f32.mxu0 0.0
  %260 = vmatmul.mubr.f32.gmra.mxu0 %v42
  %v261 = vpop.f32.mrf.mxu0
  %v262 = vadd.f32 0.0, %v261
  %v263 = vpop.f32.mrf.mxu0
  %264 = vmatprep.mubr.f32.mxu0 0.0
  %265 = vmatmul.mubr.f32.gmra.mxu0 %v43
  %v266 = vpop.f32.mrf.mxu0
  %v267 = vadd.f32 0.0, %v266
  %v268 = vpop.f32.mrf.mxu0
  %269 = vmatprep.mubr.f32.mxu0 0.0
  %270 = vmatmul.mubr.f32.gmra.mxu0 %v44
  %v271 = vpop.f32.mrf.mxu0
  %v272 = vadd.f32 0.0, %v271
  %v273 = vpop.f32.mrf.mxu0
  %274 = vmatprep.mubr.f32.mxu0 0.0
  %275 = vmatmul.mubr.f32.gmra.mxu0 %v45
  %v276 = vpop.f32.mrf.mxu0
  %v277 = vadd.f32 0.0, %v276
  %v278 = vpop.f32.mrf.mxu0
  %279 = vmatprep.mubr.f32.mxu0 0.0
  %280 = vmatmul.mubr.f32.gmra.mxu0 %v46
  %v281 = vpop.f32.mrf.mxu0
  %v282 = vadd.f32 0.0, %v281
  %v283 = vpop.f32.mrf.mxu0
  %284 = vmatprep.mubr.f32.mxu0 0.0
  %285 = vmatmul.mubr.f32.gmra.mxu0 %v47
  %v286 = vpop.f32.mrf.mxu0
  %v287 = vadd.f32 0.0, %v286
  %v288 = vpop.f32.mrf.mxu0
  %289 = vmatprep.mubr.f32.mxu0 0.0
  %290 = vmatmul.mubr.f32.gmra.mxu0 %v48
  %v291 = vpop.f32.mrf.mxu0
  %v292 = vadd.f32 0.0, %v291
  %v293 = vpop.f32.mrf.mxu0
  %294 = vmatprep.mubr.f32.mxu0 0.0
  %295 = vmatmul.mubr.f32.gmra.mxu0 %v49
  %v296 = vpop.f32.mrf.mxu0
  %v297 = vadd.f32 0.0, %v296
  %v298 = vpop.f32.mrf.mxu0
  %299 = vmatprep.mubr.f32.mxu0 0.0
  %300 = vmatmul.mubr.f32.gmra.mxu0 %v50
  %v301 = vpop.f32.mrf.mxu0
  %v302 = vadd.f32 0.0, %v301
  %v303 = vpop.f32.mrf.mxu0
  %304 = vmatprep.mubr.f32.mxu0 0.0
  %305 = vmatmul.mubr.f32.gmra.mxu0 %v51
  %v306 = vpop.f32.mrf.mxu0
  %v307 = vadd.f32 0.0, %v306
  %v308 = vpop.f32.mrf.mxu0
  %309 = vmatprep.mubr.f32.mxu0 0.0
  %310 = vmatmul.mubr.f32.gmra.mxu0 %v52
  %v311 = vpop.f32.mrf.mxu0
  %v312 = vadd.f32 0.0, %v311
  %v313 = vpop.f32.mrf.mxu0
  %314 = vmatprep.mubr.f32.mxu0 0.0
  %315 = vmatmul.mubr.f32.gmra.mxu0 %v53
  %v316 = vpop.f32.mrf.mxu0
  %v317 = vadd.f32 0.0, %v316
  %v318 = vpop.f32.mrf.mxu0
  %319 = vmatprep.mubr.f32.mxu0 0.0
  %320 = vmatmul.mubr.f32.gmra.mxu0 %v54
  %v321 = vpop.f32.mrf.mxu0
  %v322 = vadd.f32 0.0, %v321
  %v323 = vpop.f32.mrf.mxu0
  %324 = vmatprep.mubr.f32.mxu0 0.0
  %325 = vmatmul.mubr.f32.gmra.mxu0 %v55
  %v326 = vpop.f32.mrf.mxu0
  %v327 = vadd.f32 0.0, %v326
  %v328 = vpop.f32.mrf.mxu0
  %329 = vmatprep.mubr.f32.mxu0 0.0
  %330 = vmatmul.mubr.f32.gmra.mxu0 %v56
  %v331 = vpop.f32.mrf.mxu0
  %v332 = vadd.f32 0.0, %v331
  %v333 = vpop.f32.mrf.mxu0
  %334 = vmatprep.mubr.f32.mxu0 0.0
  %335 = vmatmul.mubr.f32.gmra.mxu0 %v57
  %v336 = vpop.f32.mrf.mxu0
  %v337 = vadd.f32 0.0, %v336
  %v338 = vpop.f32.mrf.mxu0
  %339 = vmatprep.mubr.f32.mxu0 0.0
  %340 = vmatmul.mubr.f32.gmra.mxu0 %v58
  %v341 = vpop.f32.mrf.mxu0
  %v342 = vadd.f32 0.0, %v341
  %v343 = vpop.f32.mrf.mxu0
  %344 = vmatprep.mubr.f32.mxu0 0.0
  %345 = vmatmul.mubr.f32.gmra.mxu0 %v59
  %v346 = vpop.f32.mrf.mxu0
  %v347 = vadd.f32 0.0, %v346
  %v348 = vpop.f32.mrf.mxu0
  %349 = vmatprep.mubr.f32.mxu0 0.0
  %350 = vmatmul.mubr.f32.gmra.mxu0 %v60
  %v351 = vpop.f32.mrf.mxu0
  %v352 = vadd.f32 0.0, %v351
  %v353 = vpop.f32.mrf.mxu0
  %354 = vmatprep.mubr.f32.mxu0 0.0
  %355 = vmatmul.mubr.f32.gmra.mxu0 %v61
  %v356 = vpop.f32.mrf.mxu0
  %v357 = vadd.f32 0.0, %v356
  %v358 = vpop.f32.mrf.mxu0
  %359 = vmatprep.mubr.f32.mxu0 0.0
  %360 = vmatmul.mubr.f32.gmra.mxu0 %v62
  %v361 = vpop.f32.mrf.mxu0
  %v362 = vadd.f32 0.0, %v361
  %v363 = vpop.f32.mrf.mxu0
  %364 = vmatprep.mubr.f32.mxu0 0.0
  %365 = vmatmul.mubr.f32.gmra.mxu0 %v63
  %v366 = vpop.f32.mrf.mxu0
  %v367 = vadd.f32 0.0, %v366
  %v368 = vpop.f32.mrf.mxu0
  %369 = vmatprep.mubr.f32.mxu0 0.0
  %370 = vmatmul.mubr.f32.gmra.mxu0 %v64
  %v371 = vpop.f32.mrf.mxu0
  %v372 = vadd.f32 0.0, %v371
  %v373 = vpop.f32.mrf.mxu0
  %374 = vmatprep.mubr.f32.mxu0 0.0
  %375 = vmatmul.mubr.f32.gmra.mxu0 %v65
  %v376 = vpop.f32.mrf.mxu0
  %v377 = vadd.f32 0.0, %v376
  %v378 = vpop.f32.mrf.mxu0
  %379 = vmatprep.mubr.f32.mxu0 0.0
  %380 = vmatmul.mubr.f32.gmra.mxu0 %v66
  %v381 = vpop.f32.mrf.mxu0
  %v382 = vadd.f32 0.0, %v381
  %v383 = vpop.f32.mrf.mxu0
  %384 = vmatprep.mubr.f32.mxu0 0.0
  %385 = vmatmul.mubr.f32.gmra.mxu0 %v67
  %v386 = vpop.f32.mrf.mxu0
  %v387 = vadd.f32 0.0, %v386
  %v388 = vpop.f32.mrf.mxu0
  %389 = vmatprep.mubr.f32.mxu0 0.0
  %390 = vmatmul.mubr.f32.gmra.mxu0 %v68
  %v391 = vpop.f32.mrf.mxu0
  %v392 = vadd.f32 0.0, %v391
  %v393 = vpop.f32.mrf.mxu0
  %394 = vdwg.mxu0
  %s395 = scalar_lea.vmem %s0, 392
  %v396 = vld [vmem:[%s395] sm:$0xff]
  %v397 = vld [vmem:[%s395 + $0x8] sm:$0xff]
  %v398 = vld [vmem:[%s395 + $0x10] sm:$0xff]
  %v399 = vld [vmem:[%s395 + $0x18] sm:$0xff]
  %v400 = vld [vmem:[%s395 + $0x20] sm:$0xff]
  %v401 = vld [vmem:[%s395 + $0x28] sm:$0xff]
  %v402 = vld [vmem:[%s395 + $0x30] sm:$0xff]
  %v403 = vld [vmem:[%s395 + $0x38] sm:$0xff]
  %v404 = vld [vmem:[%s395 + $0x40] sm:$0xff]
  %v405 = vld [vmem:[%s395 + $0x48] sm:$0xff]
  %v406 = vld [vmem:[%s395 + $0x50] sm:$0xff]
  %v407 = vld [vmem:[%s395 + $0x58] sm:$0xff]
  %v408 = vld [vmem:[%s395 + $0x60] sm:$0xff]
  %v409 = vld [vmem:[%s395 + $0x68] sm:$0xff]
  %v410 = vld [vmem:[%s395 + $0x70] sm:$0xff]
  %v411 = vld [vmem:[%s395 + $0x78] sm:$0xff]
  %v412 = vld [vmem:[%s395 + $0x80] sm:$0xff]
  %v413 = vld [vmem:[%s395 + $0x88] sm:$0xff]
  %v414 = vld [vmem:[%s395 + $0x90] sm:$0xff]
  %v415 = vld [vmem:[%s395 + $0x98] sm:$0xff]
  %v416 = vld [vmem:[%s395 + $0xa0] sm:$0xff]
  %v417 = vld [vmem:[%s395 + $0xa8] sm:$0xff]
  %v418 = vld [vmem:[%s395 + $0xb0] sm:$0xff]
  %v419 = vld [vmem:[%s395 + $0xb8] sm:$0xff]
  %v420 = vld [vmem:[%s395 + $0xc0] sm:$0xff]
  %v421 = vld [vmem:[%s395 + $0xc8] sm:$0xff]
  %v422 = vld [vmem:[%s395 + $0xd0] sm:$0xff]
  %v423 = vld [vmem:[%s395 + $0xd8] sm:$0xff]
  %v424 = vld [vmem:[%s395 + $0xe0] sm:$0xff]
  %v425 = vld [vmem:[%s395 + $0xe8] sm:$0xff]
  %v426 = vld [vmem:[%s395 + $0xf0] sm:$0xff]
  %v427 = vld [vmem:[%s395 + $0xf8] sm:$0xff]
  %v428 = vld [vmem:[%s395 + $0x100] sm:$0xff]
  %v429 = vld [vmem:[%s395 + $0x108] sm:$0xff]
  %v430 = vld [vmem:[%s395 + $0x110] sm:$0xff]
  %v431 = vld [vmem:[%s395 + $0x118] sm:$0xff]
  %v432 = vld [vmem:[%s395 + $0x120] sm:$0xff]
  %v433 = vld [vmem:[%s395 + $0x128] sm:$0xff]
  %v434 = vld [vmem:[%s395 + $0x130] sm:$0xff]
  %v435 = vld [vmem:[%s395 + $0x138] sm:$0xff]
  %v436 = vld [vmem:[%s395 + $0x140] sm:$0xff]
  %v437 = vld [vmem:[%s395 + $0x148] sm:$0xff]
  %v438 = vld [vmem:[%s395 + $0x150] sm:$0xff]
  %v439 = vld [vmem:[%s395 + $0x158] sm:$0xff]
  %v440 = vld [vmem:[%s395 + $0x160] sm:$0xff]
  %v441 = vld [vmem:[%s395 + $0x168] sm:$0xff]
  %v442 = vld [vmem:[%s395 + $0x170] sm:$0xff]
  %v443 = vld [vmem:[%s395 + $0x178] sm:$0xff]
  %v444 = vld [vmem:[%s395 + $0x180] sm:$0xff]
  %445 = vmatprep.subr.mxu0 0.0
  %446 = vmatpush1.msra.mxu0 %v84
  %447 = vmatprep.subr.mxu0 0.0
  %448 = vmatpush1.msra.mxu0 %v83
  %449 = vmatprep.subr.mxu0 0.0
  %450 = vmatpush1.msra.mxu0 %v82
  %451 = vmatprep.subr.mxu0 0.0
  %452 = vmatpush1.msra.mxu0 %v81
  %453 = vmatprep.subr.mxu0 0.0
  %454 = vmatpush1.msra.mxu0 %v80
  %455 = vmatprep.subr.mxu0 0.0
  %456 = vmatpush1.msra.mxu0 %v79
  %457 = vmatprep.subr.mxu0 0.0
  %458 = vmatpush1.msra.mxu0 %v78
  %459 = vmatprep.subr.mxu0 0.0
  %460 = vmatpush1.msra.mxu0 %v77
  %461 = vmatprep.subr.mxu0 0.0
  %462 = vmatpush1.msra.mxu0 %v76
  %463 = vmatprep.subr.mxu0 0.0
  %464 = vmatpush1.msra.mxu0 %v75
  %465 = vmatprep.subr.mxu0 0.0
  %466 = vmatpush1.msra.mxu0 %v74
  %467 = vmatprep.subr.mxu0 0.0
  %468 = vmatpush1.msra.mxu0 %v73
  %469 = vmatprep.subr.mxu0 0.0
  %470 = vmatpush1.msra.mxu0 %v72
  %471 = vmatprep.subr.mxu0 0.0
  %472 = vmatpush1.msra.mxu0 %v71
  %473 = vmatprep.subr.mxu0 0.0
  %474 = vmatpush1.msra.mxu0 %v70
  %475 = vmatprep.subr.mxu0 0.0
  %476 = vmatpush1.msra.mxu0 %v69
  %477 = vmatprep.subr.mxu0 0.0
  %478 = vmatpush2.msra.mxu0 0.0
  %479 = vmatprep.subr.mxu0 0.0
  %480 = vmatpush2.msra.mxu0 0.0
  %481 = vmatprep.subr.mxu0 0.0
  %482 = vmatpush2.msra.mxu0 0.0
  %483 = vmatprep.subr.mxu0 0.0
  %484 = vmatpush2.msra.mxu0 0.0
  %485 = vmatprep.subr.mxu0 0.0
  %486 = vmatpush2.msra.mxu0 0.0
  %487 = vmatprep.subr.mxu0 0.0
  %488 = vmatpush2.msra.mxu0 0.0
  %489 = vmatprep.subr.mxu0 0.0
  %490 = vmatpush2.msra.mxu0 0.0
  %491 = vmatprep.subr.mxu0 0.0
  %492 = vmatpush2.msra.mxu0 0.0
  %493 = vmatprep.subr.mxu0 0.0
  %494 = vmatpush2.msra.mxu0 0.0
  %495 = vmatprep.subr.mxu0 0.0
  %496 = vmatpush2.msra.mxu0 0.0
  %497 = vmatprep.subr.mxu0 0.0
  %498 = vmatpush2.msra.mxu0 0.0
  %499 = vmatprep.subr.mxu0 0.0
  %500 = vmatpush2.msra.mxu0 0.0
  %501 = vmatprep.subr.mxu0 0.0
  %502 = vmatpush2.msra.mxu0 0.0
  %503 = vmatprep.subr.mxu0 0.0
  %504 = vmatpush2.msra.mxu0 0.0
  %505 = vmatprep.subr.mxu0 0.0
  %506 = vmatpush2.msra.mxu0 0.0
  %507 = vmatprep.subr.mxu0 0.0
  %508 = vmatpush2.msra.mxu0 0.0
  %509 = vmatprep.mubr.f32.mxu0 0.0
  %510 = vmatmul.mubr.f32.gmra.mxu0 %v396
  %v511 = vpop.f32.mrf.mxu0
  %v512 = vadd.f32 0.0, %v511
  %v513 = vpop.f32.mrf.mxu0
  %514 = vmatprep.mubr.f32.mxu0 0.0
  %515 = vmatmul.mubr.f32.gmra.mxu0 %v397
  %v516 = vpop.f32.mrf.mxu0
  %v517 = vadd.f32 0.0, %v516
  %v518 = vpop.f32.mrf.mxu0
  %519 = vmatprep.mubr.f32.mxu0 0.0
  %520 = vmatmul.mubr.f32.gmra.mxu0 %v398
  %v521 = vpop.f32.mrf.mxu0
  %v522 = vadd.f32 0.0, %v521
  %v523 = vpop.f32.mrf.mxu0
  %524 = vmatprep.mubr.f32.mxu0 0.0
  %525 = vmatmul.mubr.f32.gmra.mxu0 %v399
  %v526 = vpop.f32.mrf.mxu0
  %v527 = vadd.f32 0.0, %v526
  %v528 = vpop.f32.mrf.mxu0
  %529 = vmatprep.mubr.f32.mxu0 0.0
  %530 = vmatmul.mubr.f32.gmra.mxu0 %v400
  %v531 = vpop.f32.mrf.mxu0
  %v532 = vadd.f32 0.0, %v531
  %v533 = vpop.f32.mrf.mxu0
  %534 = vmatprep.mubr.f32.mxu0 0.0
  %535 = vmatmul.mubr.f32.gmra.mxu0 %v401
  %v536 = vpop.f32.mrf.mxu0
  %v537 = vadd.f32 0.0, %v536
  %v538 = vpop.f32.mrf.mxu0
  %539 = vmatprep.mubr.f32.mxu0 0.0
  %540 = vmatmul.mubr.f32.gmra.mxu0 %v402
  %v541 = vpop.f32.mrf.mxu0
  %v542 = vadd.f32 0.0, %v541
  %v543 = vpop.f32.mrf.mxu0
  %544 = vmatprep.mubr.f32.mxu0 0.0
  %545 = vmatmul.mubr.f32.gmra.mxu0 %v403
  %v546 = vpop.f32.mrf.mxu0
  %v547 = vadd.f32 0.0, %v546
  %v548 = vpop.f32.mrf.mxu0
  %549 = vmatprep.mubr.f32.mxu0 0.0
  %550 = vmatmul.mubr.f32.gmra.mxu0 %v404
  %v551 = vpop.f32.mrf.mxu0
  %v552 = vadd.f32 0.0, %v551
  %v553 = vpop.f32.mrf.mxu0
  %554 = vmatprep.mubr.f32.mxu0 0.0
  %555 = vmatmul.mubr.f32.gmra.mxu0 %v405
  %v556 = vpop.f32.mrf.mxu0
  %v557 = vadd.f32 0.0, %v556
  %v558 = vpop.f32.mrf.mxu0
  %559 = vmatprep.mubr.f32.mxu0 0.0
  %560 = vmatmul.mubr.f32.gmra.mxu0 %v406
  %v561 = vpop.f32.mrf.mxu0
  %v562 = vadd.f32 0.0, %v561
  %v563 = vpop.f32.mrf.mxu0
  %564 = vmatprep.mubr.f32.mxu0 0.0
  %565 = vmatmul.mubr.f32.gmra.mxu0 %v407
  %v566 = vpop.f32.mrf.mxu0
  %v567 = vadd.f32 0.0, %v566
  %v568 = vpop.f32.mrf.mxu0
  %569 = vmatprep.mubr.f32.mxu0 0.0
  %570 = vmatmul.mubr.f32.gmra.mxu0 %v408
  %v571 = vpop.f32.mrf.mxu0
  %v572 = vadd.f32 0.0, %v571
  %v573 = vpop.f32.mrf.mxu0
  %574 = vmatprep.mubr.f32.mxu0 0.0
  %575 = vmatmul.mubr.f32.gmra.mxu0 %v409
  %v576 = vpop.f32.mrf.mxu0
  %v577 = vadd.f32 0.0, %v576
  %v578 = vpop.f32.mrf.mxu0
  %579 = vmatprep.mubr.f32.mxu0 0.0
  %580 = vmatmul.mubr.f32.gmra.mxu0 %v410
  %v581 = vpop.f32.mrf.mxu0
  %v582 = vadd.f32 0.0, %v581
  %v583 = vpop.f32.mrf.mxu0
  %584 = vmatprep.mubr.f32.mxu0 0.0
  %585 = vmatmul.mubr.f32.gmra.mxu0 %v411
  %v586 = vpop.f32.mrf.mxu0
  %v587 = vadd.f32 0.0, %v586
  %v588 = vpop.f32.mrf.mxu0
  %589 = vmatprep.mubr.f32.mxu0 0.0
  %590 = vmatmul.mubr.f32.gmra.mxu0 %v412
  %v591 = vpop.f32.mrf.mxu0
  %v592 = vadd.f32 0.0, %v591
  %v593 = vpop.f32.mrf.mxu0
  %594 = vmatprep.mubr.f32.mxu0 0.0
  %595 = vmatmul.mubr.f32.gmra.mxu0 %v413
  %v596 = vpop.f32.mrf.mxu0
  %v597 = vadd.f32 0.0, %v596
  %v598 = vpop.f32.mrf.mxu0
  %599 = vmatprep.mubr.f32.mxu0 0.0
  %600 = vmatmul.mubr.f32.gmra.mxu0 %v414
  %v601 = vpop.f32.mrf.mxu0
  %v602 = vadd.f32 0.0, %v601
  %v603 = vpop.f32.mrf.mxu0
  %604 = vmatprep.mubr.f32.mxu0 0.0
  %605 = vmatmul.mubr.f32.gmra.mxu0 %v415
  %v606 = vpop.f32.mrf.mxu0
  %v607 = vadd.f32 0.0, %v606
  %v608 = vpop.f32.mrf.mxu0
  %609 = vmatprep.mubr.f32.mxu0 0.0
  %610 = vmatmul.mubr.f32.gmra.mxu0 %v416
  %v611 = vpop.f32.mrf.mxu0
  %v612 = vadd.f32 0.0, %v611
  %v613 = vpop.f32.mrf.mxu0
  %614 = vmatprep.mubr.f32.mxu0 0.0
  %615 = vmatmul.mubr.f32.gmra.mxu0 %v417
  %v616 = vpop.f32.mrf.mxu0
  %v617 = vadd.f32 0.0, %v616
  %v618 = vpop.f32.mrf.mxu0
  %619 = vmatprep.mubr.f32.mxu0 0.0
  %620 = vmatmul.mubr.f32.gmra.mxu0 %v418
  %v621 = vpop.f32.mrf.mxu0
  %v622 = vadd.f32 0.0, %v621
  %v623 = vpop.f32.mrf.mxu0
  %624 = vmatprep.mubr.f32.mxu0 0.0
  %625 = vmatmul.mubr.f32.gmra.mxu0 %v419
  %v626 = vpop.f32.mrf.mxu0
  %v627 = vadd.f32 0.0, %v626
  %v628 = vpop.f32.mrf.mxu0
  %629 = vmatprep.mubr.f32.mxu0 0.0
  %630 = vmatmul.mubr.f32.gmra.mxu0 %v420
  %v631 = vpop.f32.mrf.mxu0
  %v632 = vadd.f32 0.0, %v631
  %v633 = vpop.f32.mrf.mxu0
  %634 = vmatprep.mubr.f32.mxu0 0.0
  %635 = vmatmul.mubr.f32.gmra.mxu0 %v421
  %v636 = vpop.f32.mrf.mxu0
  %v637 = vadd.f32 0.0, %v636
  %v638 = vpop.f32.mrf.mxu0
  %639 = vmatprep.mubr.f32.mxu0 0.0
  %640 = vmatmul.mubr.f32.gmra.mxu0 %v422
  %v641 = vpop.f32.mrf.mxu0
  %v642 = vadd.f32 0.0, %v641
  %v643 = vpop.f32.mrf.mxu0
  %644 = vmatprep.mubr.f32.mxu0 0.0
  %645 = vmatmul.mubr.f32.gmra.mxu0 %v423
  %v646 = vpop.f32.mrf.mxu0
  %v647 = vadd.f32 0.0, %v646
  %v648 = vpop.f32.mrf.mxu0
  %649 = vmatprep.mubr.f32.mxu0 0.0
  %650 = vmatmul.mubr.f32.gmra.mxu0 %v424
  %v651 = vpop.f32.mrf.mxu0
  %v652 = vadd.f32 0.0, %v651
  %v653 = vpop.f32.mrf.mxu0
  %654 = vmatprep.mubr.f32.mxu0 0.0
  %655 = vmatmul.mubr.f32.gmra.mxu0 %v425
  %v656 = vpop.f32.mrf.mxu0
  %v657 = vadd.f32 0.0, %v656
  %v658 = vpop.f32.mrf.mxu0
  %659 = vmatprep.mubr.f32.mxu0 0.0
  %660 = vmatmul.mubr.f32.gmra.mxu0 %v426
  %v661 = vpop.f32.mrf.mxu0
  %v662 = vadd.f32 0.0, %v661
  %v663 = vpop.f32.mrf.mxu0
  %664 = vmatprep.mubr.f32.mxu0 0.0
  %665 = vmatmul.mubr.f32.gmra.mxu0 %v427
  %v666 = vpop.f32.mrf.mxu0
  %v667 = vadd.f32 0.0, %v666
  %v668 = vpop.f32.mrf.mxu0
  %669 = vmatprep.mubr.f32.mxu0 0.0
  %670 = vmatmul.mubr.f32.gmra.mxu0 %v428
  %v671 = vpop.f32.mrf.mxu0
  %v672 = vadd.f32 0.0, %v671
  %v673 = vpop.f32.mrf.mxu0
  %674 = vmatprep.mubr.f32.mxu0 0.0
  %675 = vmatmul.mubr.f32.gmra.mxu0 %v429
  %v676 = vpop.f32.mrf.mxu0
  %v677 = vadd.f32 0.0, %v676
  %v678 = vpop.f32.mrf.mxu0
  %679 = vmatprep.mubr.f32.mxu0 0.0
  %680 = vmatmul.mubr.f32.gmra.mxu0 %v430
  %v681 = vpop.f32.mrf.mxu0
  %v682 = vadd.f32 0.0, %v681
  %v683 = vpop.f32.mrf.mxu0
  %684 = vmatprep.mubr.f32.mxu0 0.0
  %685 = vmatmul.mubr.f32.gmra.mxu0 %v431
  %v686 = vpop.f32.mrf.mxu0
  %v687 = vadd.f32 0.0, %v686
  %v688 = vpop.f32.mrf.mxu0
  %689 = vmatprep.mubr.f32.mxu0 0.0
  %690 = vmatmul.mubr.f32.gmra.mxu0 %v432
  %v691 = vpop.f32.mrf.mxu0
  %v692 = vadd.f32 0.0, %v691
  %v693 = vpop.f32.mrf.mxu0
  %694 = vmatprep.mubr.f32.mxu0 0.0
  %695 = vmatmul.mubr.f32.gmra.mxu0 %v433
  %v696 = vpop.f32.mrf.mxu0
  %v697 = vadd.f32 0.0, %v696
  %v698 = vpop.f32.mrf.mxu0
  %699 = vmatprep.mubr.f32.mxu0 0.0
  %700 = vmatmul.mubr.f32.gmra.mxu0 %v434
  %v701 = vpop.f32.mrf.mxu0
  %v702 = vadd.f32 0.0, %v701
  %v703 = vpop.f32.mrf.mxu0
  %704 = vmatprep.mubr.f32.mxu0 0.0
  %705 = vmatmul.mubr.f32.gmra.mxu0 %v435
  %v706 = vpop.f32.mrf.mxu0
  %v707 = vadd.f32 0.0, %v706
  %v708 = vpop.f32.mrf.mxu0
  %709 = vmatprep.mubr.f32.mxu0 0.0
  %710 = vmatmul.mubr.f32.gmra.mxu0 %v436
  %v711 = vpop.f32.mrf.mxu0
  %v712 = vadd.f32 0.0, %v711
  %v713 = vpop.f32.mrf.mxu0
  %714 = vmatprep.mubr.f32.mxu0 0.0
  %715 = vmatmul.mubr.f32.gmra.mxu0 %v437
  %v716 = vpop.f32.mrf.mxu0
  %v717 = vadd.f32 0.0, %v716
  %v718 = vpop.f32.mrf.mxu0
  %719 = vmatprep.mubr.f32.mxu0 0.0
  %720 = vmatmul.mubr.f32.gmra.mxu0 %v438
  %v721 = vpop.f32.mrf.mxu0
  %v722 = vadd.f32 0.0, %v721
  %v723 = vpop.f32.mrf.mxu0
  %724 = vmatprep.mubr.f32.mxu0 0.0
  %725 = vmatmul.mubr.f32.gmra.mxu0 %v439
  %v726 = vpop.f32.mrf.mxu0
  %v727 = vadd.f32 0.0, %v726
  %v728 = vpop.f32.mrf.mxu0
  %729 = vmatprep.mubr.f32.mxu0 0.0
  %730 = vmatmul.mubr.f32.gmra.mxu0 %v440
  %v731 = vpop.f32.mrf.mxu0
  %v732 = vadd.f32 0.0, %v731
  %v733 = vpop.f32.mrf.mxu0
  %734 = vmatprep.mubr.f32.mxu0 0.0
  %735 = vmatmul.mubr.f32.gmra.mxu0 %v441
  %v736 = vpop.f32.mrf.mxu0
  %v737 = vadd.f32 0.0, %v736
  %v738 = vpop.f32.mrf.mxu0
  %739 = vmatprep.mubr.f32.mxu0 0.0
  %740 = vmatmul.mubr.f32.gmra.mxu0 %v442
  %v741 = vpop.f32.mrf.mxu0
  %v742 = vadd.f32 0.0, %v741
  %v743 = vpop.f32.mrf.mxu0
  %744 = vmatprep.mubr.f32.mxu0 0.0
  %745 = vmatmul.mubr.f32.gmra.mxu0 %v443
  %v746 = vpop.f32.mrf.mxu0
  %v747 = vadd.f32 0.0, %v746
  %v748 = vpop.f32.mrf.mxu0
  %749 = vmatprep.mubr.f32.mxu0 0.0
  %750 = vmatmul.mubr.f32.gmra.mxu0 %v444
  %v751 = vpop.f32.mrf.mxu0
  %v752 = vadd.f32 0.0, %v751
  %v753 = vpop.f32.mrf.mxu0
  %754 = vdwg.mxu0
  %v755 = vmax.f32 %v152, %v512
  %v756 = vmax.f32 %v157, %v517
  %v757 = vmax.f32 %v162, %v522
  %v758 = vmax.f32 %v167, %v527
  %v759 = vmax.f32 %v172, %v532
  %v760 = vmax.f32 %v177, %v537
  %v761 = vmax.f32 %v182, %v542
  %v762 = vmax.f32 %v187, %v547
  %v763 = vmax.f32 %v192, %v552
  %v764 = vmax.f32 %v197, %v557
  %v765 = vmax.f32 %v202, %v562
  %v766 = vmax.f32 %v207, %v567
  %v767 = vmax.f32 %v212, %v572
  %v768 = vmax.f32 %v217, %v577
  %v769 = vmax.f32 %v222, %v582
  %v770 = vmax.f32 %v227, %v587
  %v771 = vmax.f32 %v232, %v592
  %v772 = vmax.f32 %v237, %v597
  %v773 = vmax.f32 %v242, %v602
  %v774 = vmax.f32 %v247, %v607
  %v775 = vmax.f32 %v252, %v612
  %v776 = vmax.f32 %v257, %v617
  %v777 = vmax.f32 %v262, %v622
  %v778 = vmax.f32 %v267, %v627
  %v779 = vmax.f32 %v272, %v632
  %v780 = vmax.f32 %v277, %v637
  %v781 = vmax.f32 %v282, %v642
  %v782 = vmax.f32 %v287, %v647
  %v783 = vmax.f32 %v292, %v652
  %v784 = vmax.f32 %v297, %v657
  %v785 = vmax.f32 %v302, %v662
  %v786 = vmax.f32 %v307, %v667
  %v787 = vmax.f32 %v312, %v672
  %v788 = vmax.f32 %v317, %v677
  %v789 = vmax.f32 %v322, %v682
  %v790 = vmax.f32 %v327, %v687
  %v791 = vmax.f32 %v332, %v692
  %v792 = vmax.f32 %v337, %v697
  %v793 = vmax.f32 %v342, %v702
  %v794 = vmax.f32 %v347, %v707
  %v795 = vmax.f32 %v352, %v712
  %v796 = vmax.f32 %v357, %v717
  %v797 = vmax.f32 %v362, %v722
  %v798 = vmax.f32 %v367, %v727
  %v799 = vmax.f32 %v372, %v732
  %v800 = vmax.f32 %v377, %v737
  %v801 = vmax.f32 %v382, %v742
  %v802 = vmax.f32 %v387, %v747
  %v803 = vmax.f32 %v392, %v752
  %s804 = scalar_lea.vmem %s0, 784
  %v805 = vld [vmem:[%s804] sm:$0xff]
  %v806 = vld [vmem:[%s804 + $0x8] sm:$0xff]
  %v807 = vld [vmem:[%s804 + $0x10] sm:$0xff]
  %v808 = vld [vmem:[%s804 + $0x18] sm:$0xff]
  %v809 = vld [vmem:[%s804 + $0x20] sm:$0xff]
  %v810 = vld [vmem:[%s804 + $0x28] sm:$0xff]
  %v811 = vld [vmem:[%s804 + $0x30] sm:$0xff]
  %v812 = vld [vmem:[%s804 + $0x38] sm:$0xff]
  %v813 = vld [vmem:[%s804 + $0x40] sm:$0xff]
  %v814 = vld [vmem:[%s804 + $0x48] sm:$0xff]
  %v815 = vld [vmem:[%s804 + $0x50] sm:$0xff]
  %v816 = vld [vmem:[%s804 + $0x58] sm:$0xff]
  %v817 = vld [vmem:[%s804 + $0x60] sm:$0xff]
  %v818 = vld [vmem:[%s804 + $0x68] sm:$0xff]
  %v819 = vld [vmem:[%s804 + $0x70] sm:$0xff]
  %v820 = vld [vmem:[%s804 + $0x78] sm:$0xff]
  %v821 = vld [vmem:[%s804 + $0x80] sm:$0xff]
  %v822 = vld [vmem:[%s804 + $0x88] sm:$0xff]
  %v823 = vld [vmem:[%s804 + $0x90] sm:$0xff]
  %v824 = vld [vmem:[%s804 + $0x98] sm:$0xff]
  %v825 = vld [vmem:[%s804 + $0xa0] sm:$0xff]
  %v826 = vld [vmem:[%s804 + $0xa8] sm:$0xff]
  %v827 = vld [vmem:[%s804 + $0xb0] sm:$0xff]
  %v828 = vld [vmem:[%s804 + $0xb8] sm:$0xff]
  %v829 = vld [vmem:[%s804 + $0xc0] sm:$0xff]
  %v830 = vld [vmem:[%s804 + $0xc8] sm:$0xff]
  %v831 = vld [vmem:[%s804 + $0xd0] sm:$0xff]
  %v832 = vld [vmem:[%s804 + $0xd8] sm:$0xff]
  %v833 = vld [vmem:[%s804 + $0xe0] sm:$0xff]
  %v834 = vld [vmem:[%s804 + $0xe8] sm:$0xff]
  %v835 = vld [vmem:[%s804 + $0xf0] sm:$0xff]
  %v836 = vld [vmem:[%s804 + $0xf8] sm:$0xff]
  %v837 = vld [vmem:[%s804 + $0x100] sm:$0xff]
  %v838 = vld [vmem:[%s804 + $0x108] sm:$0xff]
  %v839 = vld [vmem:[%s804 + $0x110] sm:$0xff]
  %v840 = vld [vmem:[%s804 + $0x118] sm:$0xff]
  %v841 = vld [vmem:[%s804 + $0x120] sm:$0xff]
  %v842 = vld [vmem:[%s804 + $0x128] sm:$0xff]
  %v843 = vld [vmem:[%s804 + $0x130] sm:$0xff]
  %v844 = vld [vmem:[%s804 + $0x138] sm:$0xff]
  %v845 = vld [vmem:[%s804 + $0x140] sm:$0xff]
  %v846 = vld [vmem:[%s804 + $0x148] sm:$0xff]
  %v847 = vld [vmem:[%s804 + $0x150] sm:$0xff]
  %v848 = vld [vmem:[%s804 + $0x158] sm:$0xff]
  %v849 = vld [vmem:[%s804 + $0x160] sm:$0xff]
  %v850 = vld [vmem:[%s804 + $0x168] sm:$0xff]
  %v851 = vld [vmem:[%s804 + $0x170] sm:$0xff]
  %v852 = vld [vmem:[%s804 + $0x178] sm:$0xff]
  %v853 = vld [vmem:[%s804 + $0x180] sm:$0xff]
  %854 = vmatprep.subr.mxu0 0.0
  %855 = vmatpush1.msra.mxu0 %v84
  %856 = vmatprep.subr.mxu0 0.0
  %857 = vmatpush1.msra.mxu0 %v83
  %858 = vmatprep.subr.mxu0 0.0
  %859 = vmatpush1.msra.mxu0 %v82
  %860 = vmatprep.subr.mxu0 0.0
  %861 = vmatpush1.msra.mxu0 %v81
  %862 = vmatprep.subr.mxu0 0.0
  %863 = vmatpush1.msra.mxu0 %v80
  %864 = vmatprep.subr.mxu0 0.0
  %865 = vmatpush1.msra.mxu0 %v79
  %866 = vmatprep.subr.mxu0 0.0
  %867 = vmatpush1.msra.mxu0 %v78
  %868 = vmatprep.subr.mxu0 0.0
  %869 = vmatpush1.msra.mxu0 %v77
  %870 = vmatprep.subr.mxu0 0.0
  %871 = vmatpush1.msra.mxu0 %v76
  %872 = vmatprep.subr.mxu0 0.0
  %873 = vmatpush1.msra.mxu0 %v75
  %874 = vmatprep.subr.mxu0 0.0
  %875 = vmatpush1.msra.mxu0 %v74
  %876 = vmatprep.subr.mxu0 0.0
  %877 = vmatpush1.msra.mxu0 %v73
  %878 = vmatprep.subr.mxu0 0.0
  %879 = vmatpush1.msra.mxu0 %v72
  %880 = vmatprep.subr.mxu0 0.0
  %881 = vmatpush1.msra.mxu0 %v71
  %882 = vmatprep.subr.mxu0 0.0
  %883 = vmatpush1.msra.mxu0 %v70
  %884 = vmatprep.subr.mxu0 0.0
  %885 = vmatpush1.msra.mxu0 %v69
  %886 = vmatprep.subr.mxu0 0.0
  %887 = vmatpush2.msra.mxu0 0.0
  %888 = vmatprep.subr.mxu0 0.0
  %889 = vmatpush2.msra.mxu0 0.0
  %890 = vmatprep.subr.mxu0 0.0
  %891 = vmatpush2.msra.mxu0 0.0
  %892 = vmatprep.subr.mxu0 0.0
  %893 = vmatpush2.msra.mxu0 0.0
  %894 = vmatprep.subr.mxu0 0.0
  %895 = vmatpush2.msra.mxu0 0.0
  %896 = vmatprep.subr.mxu0 0.0
  %897 = vmatpush2.msra.mxu0 0.0
  %898 = vmatprep.subr.mxu0 0.0
  %899 = vmatpush2.msra.mxu0 0.0
  %900 = vmatprep.subr.mxu0 0.0
  %901 = vmatpush2.msra.mxu0 0.0
  %902 = vmatprep.subr.mxu0 0.0
  %903 = vmatpush2.msra.mxu0 0.0
  %904 = vmatprep.subr.mxu0 0.0
  %905 = vmatpush2.msra.mxu0 0.0
  %906 = vmatprep.subr.mxu0 0.0
  %907 = vmatpush2.msra.mxu0 0.0
  %908 = vmatprep.subr.mxu0 0.0
  %909 = vmatpush2.msra.mxu0 0.0
  %910 = vmatprep.subr.mxu0 0.0
  %911 = vmatpush2.msra.mxu0 0.0
  %912 = vmatprep.subr.mxu0 0.0
  %913 = vmatpush2.msra.mxu0 0.0
  %914 = vmatprep.subr.mxu0 0.0
  %915 = vmatpush2.msra.mxu0 0.0
  %916 = vmatprep.subr.mxu0 0.0
  %917 = vmatpush2.msra.mxu0 0.0
  %918 = vmatprep.mubr.f32.mxu0 0.0
  %919 = vmatmul.mubr.f32.gmra.mxu0 %v805
  %v920 = vpop.f32.mrf.mxu0
  %v921 = vadd.f32 0.0, %v920
  %v922 = vpop.f32.mrf.mxu0
  %923 = vmatprep.mubr.f32.mxu0 0.0
  %924 = vmatmul.mubr.f32.gmra.mxu0 %v806
  %v925 = vpop.f32.mrf.mxu0
  %v926 = vadd.f32 0.0, %v925
  %v927 = vpop.f32.mrf.mxu0
  %928 = vmatprep.mubr.f32.mxu0 0.0
  %929 = vmatmul.mubr.f32.gmra.mxu0 %v807
  %v930 = vpop.f32.mrf.mxu0
  %v931 = vadd.f32 0.0, %v930
  %v932 = vpop.f32.mrf.mxu0
  %933 = vmatprep.mubr.f32.mxu0 0.0
  %934 = vmatmul.mubr.f32.gmra.mxu0 %v808
  %v935 = vpop.f32.mrf.mxu0
  %v936 = vadd.f32 0.0, %v935
  %v937 = vpop.f32.mrf.mxu0
  %938 = vmatprep.mubr.f32.mxu0 0.0
  %939 = vmatmul.mubr.f32.gmra.mxu0 %v809
  %v940 = vpop.f32.mrf.mxu0
  %v941 = vadd.f32 0.0, %v940
  %v942 = vpop.f32.mrf.mxu0
  %943 = vmatprep.mubr.f32.mxu0 0.0
  %944 = vmatmul.mubr.f32.gmra.mxu0 %v810
  %v945 = vpop.f32.mrf.mxu0
  %v946 = vadd.f32 0.0, %v945
  %v947 = vpop.f32.mrf.mxu0
  %948 = vmatprep.mubr.f32.mxu0 0.0
  %949 = vmatmul.mubr.f32.gmra.mxu0 %v811
  %v950 = vpop.f32.mrf.mxu0
  %v951 = vadd.f32 0.0, %v950
  %v952 = vpop.f32.mrf.mxu0
  %953 = vmatprep.mubr.f32.mxu0 0.0
  %954 = vmatmul.mubr.f32.gmra.mxu0 %v812
  %v955 = vpop.f32.mrf.mxu0
  %v956 = vadd.f32 0.0, %v955
  %v957 = vpop.f32.mrf.mxu0
  %958 = vmatprep.mubr.f32.mxu0 0.0
  %959 = vmatmul.mubr.f32.gmra.mxu0 %v813
  %v960 = vpop.f32.mrf.mxu0
  %v961 = vadd.f32 0.0, %v960
  %v962 = vpop.f32.mrf.mxu0
  %963 = vmatprep.mubr.f32.mxu0 0.0
  %964 = vmatmul.mubr.f32.gmra.mxu0 %v814
  %v965 = vpop.f32.mrf.mxu0
  %v966 = vadd.f32 0.0, %v965
  %v967 = vpop.f32.mrf.mxu0
  %968 = vmatprep.mubr.f32.mxu0 0.0
  %969 = vmatmul.mubr.f32.gmra.mxu0 %v815
  %v970 = vpop.f32.mrf.mxu0
  %v971 = vadd.f32 0.0, %v970
  %v972 = vpop.f32.mrf.mxu0
  %973 = vmatprep.mubr.f32.mxu0 0.0
  %974 = vmatmul.mubr.f32.gmra.mxu0 %v816
  %v975 = vpop.f32.mrf.mxu0
  %v976 = vadd.f32 0.0, %v975
  %v977 = vpop.f32.mrf.mxu0
  %978 = vmatprep.mubr.f32.mxu0 0.0
  %979 = vmatmul.mubr.f32.gmra.mxu0 %v817
  %v980 = vpop.f32.mrf.mxu0
  %v981 = vadd.f32 0.0, %v980
  %v982 = vpop.f32.mrf.mxu0
  %983 = vmatprep.mubr.f32.mxu0 0.0
  %984 = vmatmul.mubr.f32.gmra.mxu0 %v818
  %v985 = vpop.f32.mrf.mxu0
  %v986 = vadd.f32 0.0, %v985
  %v987 = vpop.f32.mrf.mxu0
  %988 = vmatprep.mubr.f32.mxu0 0.0
  %989 = vmatmul.mubr.f32.gmra.mxu0 %v819
  %v990 = vpop.f32.mrf.mxu0
  %v991 = vadd.f32 0.0, %v990
  %v992 = vpop.f32.mrf.mxu0
  %993 = vmatprep.mubr.f32.mxu0 0.0
  %994 = vmatmul.mubr.f32.gmra.mxu0 %v820
  %v995 = vpop.f32.mrf.mxu0
  %v996 = vadd.f32 0.0, %v995
  %v997 = vpop.f32.mrf.mxu0
  %998 = vmatprep.mubr.f32.mxu0 0.0
  %999 = vmatmul.mubr.f32.gmra.mxu0 %v821
  %v1000 = vpop.f32.mrf.mxu0
  %v1001 = vadd.f32 0.0, %v1000
  %v1002 = vpop.f32.mrf.mxu0
  %1003 = vmatprep.mubr.f32.mxu0 0.0
  %1004 = vmatmul.mubr.f32.gmra.mxu0 %v822
  %v1005 = vpop.f32.mrf.mxu0
  %v1006 = vadd.f32 0.0, %v1005
  %v1007 = vpop.f32.mrf.mxu0
  %1008 = vmatprep.mubr.f32.mxu0 0.0
  %1009 = vmatmul.mubr.f32.gmra.mxu0 %v823
  %v1010 = vpop.f32.mrf.mxu0
  %v1011 = vadd.f32 0.0, %v1010
  %v1012 = vpop.f32.mrf.mxu0
  %1013 = vmatprep.mubr.f32.mxu0 0.0
  %1014 = vmatmul.mubr.f32.gmra.mxu0 %v824
  %v1015 = vpop.f32.mrf.mxu0
  %v1016 = vadd.f32 0.0, %v1015
  %v1017 = vpop.f32.mrf.mxu0
  %1018 = vmatprep.mubr.f32.mxu0 0.0
  %1019 = vmatmul.mubr.f32.gmra.mxu0 %v825
  %v1020 = vpop.f32.mrf.mxu0
  %v1021 = vadd.f32 0.0, %v1020
  %v1022 = vpop.f32.mrf.mxu0
  %1023 = vmatprep.mubr.f32.mxu0 0.0
  %1024 = vmatmul.mubr.f32.gmra.mxu0 %v826
  %v1025 = vpop.f32.mrf.mxu0
  %v1026 = vadd.f32 0.0, %v1025
  %v1027 = vpop.f32.mrf.mxu0
  %1028 = vmatprep.mubr.f32.mxu0 0.0
  %1029 = vmatmul.mubr.f32.gmra.mxu0 %v827
  %v1030 = vpop.f32.mrf.mxu0
  %v1031 = vadd.f32 0.0, %v1030
  %v1032 = vpop.f32.mrf.mxu0
  %1033 = vmatprep.mubr.f32.mxu0 0.0
  %1034 = vmatmul.mubr.f32.gmra.mxu0 %v828
  %v1035 = vpop.f32.mrf.mxu0
  %v1036 = vadd.f32 0.0, %v1035
  %v1037 = vpop.f32.mrf.mxu0
  %1038 = vmatprep.mubr.f32.mxu0 0.0
  %1039 = vmatmul.mubr.f32.gmra.mxu0 %v829
  %v1040 = vpop.f32.mrf.mxu0
  %v1041 = vadd.f32 0.0, %v1040
  %v1042 = vpop.f32.mrf.mxu0
  %1043 = vmatprep.mubr.f32.mxu0 0.0
  %1044 = vmatmul.mubr.f32.gmra.mxu0 %v830
  %v1045 = vpop.f32.mrf.mxu0
  %v1046 = vadd.f32 0.0, %v1045
  %v1047 = vpop.f32.mrf.mxu0
  %1048 = vmatprep.mubr.f32.mxu0 0.0
  %1049 = vmatmul.mubr.f32.gmra.mxu0 %v831
  %v1050 = vpop.f32.mrf.mxu0
  %v1051 = vadd.f32 0.0, %v1050
  %v1052 = vpop.f32.mrf.mxu0
  %1053 = vmatprep.mubr.f32.mxu0 0.0
  %1054 = vmatmul.mubr.f32.gmra.mxu0 %v832
  %v1055 = vpop.f32.mrf.mxu0
  %v1056 = vadd.f32 0.0, %v1055
  %v1057 = vpop.f32.mrf.mxu0
  %1058 = vmatprep.mubr.f32.mxu0 0.0
  %1059 = vmatmul.mubr.f32.gmra.mxu0 %v833
  %v1060 = vpop.f32.mrf.mxu0
  %v1061 = vadd.f32 0.0, %v1060
  %v1062 = vpop.f32.mrf.mxu0
  %1063 = vmatprep.mubr.f32.mxu0 0.0
  %1064 = vmatmul.mubr.f32.gmra.mxu0 %v834
  %v1065 = vpop.f32.mrf.mxu0
  %v1066 = vadd.f32 0.0, %v1065
  %v1067 = vpop.f32.mrf.mxu0
  %1068 = vmatprep.mubr.f32.mxu0 0.0
  %1069 = vmatmul.mubr.f32.gmra.mxu0 %v835
  %v1070 = vpop.f32.mrf.mxu0
  %v1071 = vadd.f32 0.0, %v1070
  %v1072 = vpop.f32.mrf.mxu0
  %1073 = vmatprep.mubr.f32.mxu0 0.0
  %1074 = vmatmul.mubr.f32.gmra.mxu0 %v836
  %v1075 = vpop.f32.mrf.mxu0
  %v1076 = vadd.f32 0.0, %v1075
  %v1077 = vpop.f32.mrf.mxu0
  %1078 = vmatprep.mubr.f32.mxu0 0.0
  %1079 = vmatmul.mubr.f32.gmra.mxu0 %v837
  %v1080 = vpop.f32.mrf.mxu0
  %v1081 = vadd.f32 0.0, %v1080
  %v1082 = vpop.f32.mrf.mxu0
  %1083 = vmatprep.mubr.f32.mxu0 0.0
  %1084 = vmatmul.mubr.f32.gmra.mxu0 %v838
  %v1085 = vpop.f32.mrf.mxu0
  %v1086 = vadd.f32 0.0, %v1085
  %v1087 = vpop.f32.mrf.mxu0
  %1088 = vmatprep.mubr.f32.mxu0 0.0
  %1089 = vmatmul.mubr.f32.gmra.mxu0 %v839
  %v1090 = vpop.f32.mrf.mxu0
  %v1091 = vadd.f32 0.0, %v1090
  %v1092 = vpop.f32.mrf.mxu0
  %1093 = vmatprep.mubr.f32.mxu0 0.0
  %1094 = vmatmul.mubr.f32.gmra.mxu0 %v840
  %v1095 = vpop.f32.mrf.mxu0
  %v1096 = vadd.f32 0.0, %v1095
  %v1097 = vpop.f32.mrf.mxu0
  %1098 = vmatprep.mubr.f32.mxu0 0.0
  %1099 = vmatmul.mubr.f32.gmra.mxu0 %v841
  %v1100 = vpop.f32.mrf.mxu0
  %v1101 = vadd.f32 0.0, %v1100
  %v1102 = vpop.f32.mrf.mxu0
  %1103 = vmatprep.mubr.f32.mxu0 0.0
  %1104 = vmatmul.mubr.f32.gmra.mxu0 %v842
  %v1105 = vpop.f32.mrf.mxu0
  %v1106 = vadd.f32 0.0, %v1105
  %v1107 = vpop.f32.mrf.mxu0
  %1108 = vmatprep.mubr.f32.mxu0 0.0
  %1109 = vmatmul.mubr.f32.gmra.mxu0 %v843
  %v1110 = vpop.f32.mrf.mxu0
  %v1111 = vadd.f32 0.0, %v1110
  %v1112 = vpop.f32.mrf.mxu0
  %1113 = vmatprep.mubr.f32.mxu0 0.0
  %1114 = vmatmul.mubr.f32.gmra.mxu0 %v844
  %v1115 = vpop.f32.mrf.mxu0
  %v1116 = vadd.f32 0.0, %v1115
  %v1117 = vpop.f32.mrf.mxu0
  %1118 = vmatprep.mubr.f32.mxu0 0.0
  %1119 = vmatmul.mubr.f32.gmra.mxu0 %v845
  %v1120 = vpop.f32.mrf.mxu0
  %v1121 = vadd.f32 0.0, %v1120
  %v1122 = vpop.f32.mrf.mxu0
  %1123 = vmatprep.mubr.f32.mxu0 0.0
  %1124 = vmatmul.mubr.f32.gmra.mxu0 %v846
  %v1125 = vpop.f32.mrf.mxu0
  %v1126 = vadd.f32 0.0, %v1125
  %v1127 = vpop.f32.mrf.mxu0
  %1128 = vmatprep.mubr.f32.mxu0 0.0
  %1129 = vmatmul.mubr.f32.gmra.mxu0 %v847
  %v1130 = vpop.f32.mrf.mxu0
  %v1131 = vadd.f32 0.0, %v1130
  %v1132 = vpop.f32.mrf.mxu0
  %1133 = vmatprep.mubr.f32.mxu0 0.0
  %1134 = vmatmul.mubr.f32.gmra.mxu0 %v848
  %v1135 = vpop.f32.mrf.mxu0
  %v1136 = vadd.f32 0.0, %v1135
  %v1137 = vpop.f32.mrf.mxu0
  %1138 = vmatprep.mubr.f32.mxu0 0.0
  %1139 = vmatmul.mubr.f32.gmra.mxu0 %v849
  %v1140 = vpop.f32.mrf.mxu0
  %v1141 = vadd.f32 0.0, %v1140
  %v1142 = vpop.f32.mrf.mxu0
  %1143 = vmatprep.mubr.f32.mxu0 0.0
  %1144 = vmatmul.mubr.f32.gmra.mxu0 %v850
  %v1145 = vpop.f32.mrf.mxu0
  %v1146 = vadd.f32 0.0, %v1145
  %v1147 = vpop.f32.mrf.mxu0
  %1148 = vmatprep.mubr.f32.mxu0 0.0
  %1149 = vmatmul.mubr.f32.gmra.mxu0 %v851
  %v1150 = vpop.f32.mrf.mxu0
  %v1151 = vadd.f32 0.0, %v1150
  %v1152 = vpop.f32.mrf.mxu0
  %1153 = vmatprep.mubr.f32.mxu0 0.0
  %1154 = vmatmul.mubr.f32.gmra.mxu0 %v852
  %v1155 = vpop.f32.mrf.mxu0
  %v1156 = vadd.f32 0.0, %v1155
  %v1157 = vpop.f32.mrf.mxu0
  %1158 = vmatprep.mubr.f32.mxu0 0.0
  %1159 = vmatmul.mubr.f32.gmra.mxu0 %v853
  %v1160 = vpop.f32.mrf.mxu0
  %v1161 = vadd.f32 0.0, %v1160
  %v1162 = vpop.f32.mrf.mxu0
  %1163 = vdwg.mxu0
  %v1164 = vmax.f32 %v755, %v921
  %v1165 = vmax.f32 %v756, %v926
  %v1166 = vmax.f32 %v757, %v931
  %v1167 = vmax.f32 %v758, %v936
  %v1168 = vmax.f32 %v759, %v941
  %v1169 = vmax.f32 %v760, %v946
  %v1170 = vmax.f32 %v761, %v951
  %v1171 = vmax.f32 %v762, %v956
  %v1172 = vmax.f32 %v763, %v961
  %v1173 = vmax.f32 %v764, %v966
  %v1174 = vmax.f32 %v765, %v971
  %v1175 = vmax.f32 %v766, %v976
  %v1176 = vmax.f32 %v767, %v981
  %v1177 = vmax.f32 %v768, %v986
  %v1178 = vmax.f32 %v769, %v991
  %v1179 = vmax.f32 %v770, %v996
  %v1180 = vmax.f32 %v771, %v1001
  %v1181 = vmax.f32 %v772, %v1006
  %v1182 = vmax.f32 %v773, %v1011
  %v1183 = vmax.f32 %v774, %v1016
  %v1184 = vmax.f32 %v775, %v1021
  %v1185 = vmax.f32 %v776, %v1026
  %v1186 = vmax.f32 %v777, %v1031
  %v1187 = vmax.f32 %v778, %v1036
  %v1188 = vmax.f32 %v779, %v1041
  %v1189 = vmax.f32 %v780, %v1046
  %v1190 = vmax.f32 %v781, %v1051
  %v1191 = vmax.f32 %v782, %v1056
  %v1192 = vmax.f32 %v783, %v1061
  %v1193 = vmax.f32 %v784, %v1066
  %v1194 = vmax.f32 %v785, %v1071
  %v1195 = vmax.f32 %v786, %v1076
  %v1196 = vmax.f32 %v787, %v1081
  %v1197 = vmax.f32 %v788, %v1086
  %v1198 = vmax.f32 %v789, %v1091
  %v1199 = vmax.f32 %v790, %v1096
  %v1200 = vmax.f32 %v791, %v1101
  %v1201 = vmax.f32 %v792, %v1106
  %v1202 = vmax.f32 %v793, %v1111
  %v1203 = vmax.f32 %v794, %v1116
  %v1204 = vmax.f32 %v795, %v1121
  %v1205 = vmax.f32 %v796, %v1126
  %v1206 = vmax.f32 %v797, %v1131
  %v1207 = vmax.f32 %v798, %v1136
  %v1208 = vmax.f32 %v799, %v1141
  %v1209 = vmax.f32 %v800, %v1146
  %v1210 = vmax.f32 %v801, %v1151
  %v1211 = vmax.f32 %v802, %v1156
  %v1212 = vmax.f32 %v803, %v1161
  %s1213 = scalar_lea.vmem %s0, 1176
  %v1214 = vld [vmem:[%s1213] sm:$0xff]
  %v1215 = vld [vmem:[%s1213 + $0x8] sm:$0xff]
  %v1216 = vld [vmem:[%s1213 + $0x10] sm:$0xff]
  %v1217 = vld [vmem:[%s1213 + $0x18] sm:$0xff]
  %v1218 = vld [vmem:[%s1213 + $0x20] sm:$0xff]
  %v1219 = vld [vmem:[%s1213 + $0x28] sm:$0xff]
  %v1220 = vld [vmem:[%s1213 + $0x30] sm:$0xff]
  %v1221 = vld [vmem:[%s1213 + $0x38] sm:$0xff]
  %v1222 = vld [vmem:[%s1213 + $0x40] sm:$0xff]
  %v1223 = vld [vmem:[%s1213 + $0x48] sm:$0xff]
  %v1224 = vld [vmem:[%s1213 + $0x50] sm:$0xff]
  %v1225 = vld [vmem:[%s1213 + $0x58] sm:$0xff]
  %v1226 = vld [vmem:[%s1213 + $0x60] sm:$0xff]
  %v1227 = vld [vmem:[%s1213 + $0x68] sm:$0xff]
  %v1228 = vld [vmem:[%s1213 + $0x70] sm:$0xff]
  %v1229 = vld [vmem:[%s1213 + $0x78] sm:$0xff]
  %v1230 = vld [vmem:[%s1213 + $0x80] sm:$0xff]
  %v1231 = vld [vmem:[%s1213 + $0x88] sm:$0xff]
  %v1232 = vld [vmem:[%s1213 + $0x90] sm:$0xff]
  %v1233 = vld [vmem:[%s1213 + $0x98] sm:$0xff]
  %v1234 = vld [vmem:[%s1213 + $0xa0] sm:$0xff]
  %v1235 = vld [vmem:[%s1213 + $0xa8] sm:$0xff]
  %v1236 = vld [vmem:[%s1213 + $0xb0] sm:$0xff]
  %v1237 = vld [vmem:[%s1213 + $0xb8] sm:$0xff]
  %v1238 = vld [vmem:[%s1213 + $0xc0] sm:$0xff]
  %v1239 = vld [vmem:[%s1213 + $0xc8] sm:$0xff]
  %v1240 = vld [vmem:[%s1213 + $0xd0] sm:$0xff]
  %v1241 = vld [vmem:[%s1213 + $0xd8] sm:$0xff]
  %v1242 = vld [vmem:[%s1213 + $0xe0] sm:$0xff]
  %v1243 = vld [vmem:[%s1213 + $0xe8] sm:$0xff]
  %v1244 = vld [vmem:[%s1213 + $0xf0] sm:$0xff]
  %v1245 = vld [vmem:[%s1213 + $0xf8] sm:$0xff]
  %v1246 = vld [vmem:[%s1213 + $0x100] sm:$0xff]
  %v1247 = vld [vmem:[%s1213 + $0x108] sm:$0xff]
  %v1248 = vld [vmem:[%s1213 + $0x110] sm:$0xff]
  %v1249 = vld [vmem:[%s1213 + $0x118] sm:$0xff]
  %v1250 = vld [vmem:[%s1213 + $0x120] sm:$0xff]
  %v1251 = vld [vmem:[%s1213 + $0x128] sm:$0xff]
  %v1252 = vld [vmem:[%s1213 + $0x130] sm:$0xff]
  %v1253 = vld [vmem:[%s1213 + $0x138] sm:$0xff]
  %v1254 = vld [vmem:[%s1213 + $0x140] sm:$0xff]
  %v1255 = vld [vmem:[%s1213 + $0x148] sm:$0xff]
  %v1256 = vld [vmem:[%s1213 + $0x150] sm:$0xff]
  %v1257 = vld [vmem:[%s1213 + $0x158] sm:$0xff]
  %v1258 = vld [vmem:[%s1213 + $0x160] sm:$0xff]
  %v1259 = vld [vmem:[%s1213 + $0x168] sm:$0xff]
  %v1260 = vld [vmem:[%s1213 + $0x170] sm:$0xff]
  %v1261 = vld [vmem:[%s1213 + $0x178] sm:$0xff]
  %v1262 = vld [vmem:[%s1213 + $0x180] sm:$0xff]
  %1263 = vmatprep.subr.mxu0 0.0
  %1264 = vmatpush1.msra.mxu0 %v84
  %1265 = vmatprep.subr.mxu0 0.0
  %1266 = vmatpush1.msra.mxu0 %v83
  %1267 = vmatprep.subr.mxu0 0.0
  %1268 = vmatpush1.msra.mxu0 %v82
  %1269 = vmatprep.subr.mxu0 0.0
  %1270 = vmatpush1.msra.mxu0 %v81
  %1271 = vmatprep.subr.mxu0 0.0
  %1272 = vmatpush1.msra.mxu0 %v80
  %1273 = vmatprep.subr.mxu0 0.0
  %1274 = vmatpush1.msra.mxu0 %v79
  %1275 = vmatprep.subr.mxu0 0.0
  %1276 = vmatpush1.msra.mxu0 %v78
  %1277 = vmatprep.subr.mxu0 0.0
  %1278 = vmatpush1.msra.mxu0 %v77
  %1279 = vmatprep.subr.mxu0 0.0
  %1280 = vmatpush1.msra.mxu0 %v76
  %1281 = vmatprep.subr.mxu0 0.0
  %1282 = vmatpush1.msra.mxu0 %v75
  %1283 = vmatprep.subr.mxu0 0.0
  %1284 = vmatpush1.msra.mxu0 %v74
  %1285 = vmatprep.subr.mxu0 0.0
  %1286 = vmatpush1.msra.mxu0 %v73
  %1287 = vmatprep.subr.mxu0 0.0
  %1288 = vmatpush1.msra.mxu0 %v72
  %1289 = vmatprep.subr.mxu0 0.0
  %1290 = vmatpush1.msra.mxu0 %v71
  %1291 = vmatprep.subr.mxu0 0.0
  %1292 = vmatpush1.msra.mxu0 %v70
  %1293 = vmatprep.subr.mxu0 0.0
  %1294 = vmatpush1.msra.mxu0 %v69
  %1295 = vmatprep.subr.mxu0 0.0
  %1296 = vmatpush2.msra.mxu0 0.0
  %1297 = vmatprep.subr.mxu0 0.0
  %1298 = vmatpush2.msra.mxu0 0.0
  %1299 = vmatprep.subr.mxu0 0.0
  %1300 = vmatpush2.msra.mxu0 0.0
  %1301 = vmatprep.subr.mxu0 0.0
  %1302 = vmatpush2.msra.mxu0 0.0
  %1303 = vmatprep.subr.mxu0 0.0
  %1304 = vmatpush2.msra.mxu0 0.0
  %1305 = vmatprep.subr.mxu0 0.0
  %1306 = vmatpush2.msra.mxu0 0.0
  %1307 = vmatprep.subr.mxu0 0.0
  %1308 = vmatpush2.msra.mxu0 0.0
  %1309 = vmatprep.subr.mxu0 0.0
  %1310 = vmatpush2.msra.mxu0 0.0
  %1311 = vmatprep.subr.mxu0 0.0
  %1312 = vmatpush2.msra.mxu0 0.0
  %1313 = vmatprep.subr.mxu0 0.0
  %1314 = vmatpush2.msra.mxu0 0.0
  %1315 = vmatprep.subr.mxu0 0.0
  %1316 = vmatpush2.msra.mxu0 0.0
  %1317 = vmatprep.subr.mxu0 0.0
  %1318 = vmatpush2.msra.mxu0 0.0
  %1319 = vmatprep.subr.mxu0 0.0
  %1320 = vmatpush2.msra.mxu0 0.0
  %1321 = vmatprep.subr.mxu0 0.0
  %1322 = vmatpush2.msra.mxu0 0.0
  %1323 = vmatprep.subr.mxu0 0.0
  %1324 = vmatpush2.msra.mxu0 0.0
  %1325 = vmatprep.subr.mxu0 0.0
  %1326 = vmatpush2.msra.mxu0 0.0
  %1327 = vmatprep.mubr.f32.mxu0 0.0
  %1328 = vmatmul.mubr.f32.gmra.mxu0 %v1214
  %v1329 = vpop.f32.mrf.mxu0
  %v1330 = vadd.f32 0.0, %v1329
  %v1331 = vpop.f32.mrf.mxu0
  %1332 = vmatprep.mubr.f32.mxu0 0.0
  %1333 = vmatmul.mubr.f32.gmra.mxu0 %v1215
  %v1334 = vpop.f32.mrf.mxu0
  %v1335 = vadd.f32 0.0, %v1334
  %v1336 = vpop.f32.mrf.mxu0
  %1337 = vmatprep.mubr.f32.mxu0 0.0
  %1338 = vmatmul.mubr.f32.gmra.mxu0 %v1216
  %v1339 = vpop.f32.mrf.mxu0
  %v1340 = vadd.f32 0.0, %v1339
  %v1341 = vpop.f32.mrf.mxu0
  %1342 = vmatprep.mubr.f32.mxu0 0.0
  %1343 = vmatmul.mubr.f32.gmra.mxu0 %v1217
  %v1344 = vpop.f32.mrf.mxu0
  %v1345 = vadd.f32 0.0, %v1344
  %v1346 = vpop.f32.mrf.mxu0
  %1347 = vmatprep.mubr.f32.mxu0 0.0
  %1348 = vmatmul.mubr.f32.gmra.mxu0 %v1218
  %v1349 = vpop.f32.mrf.mxu0
  %v1350 = vadd.f32 0.0, %v1349
  %v1351 = vpop.f32.mrf.mxu0
  %1352 = vmatprep.mubr.f32.mxu0 0.0
  %1353 = vmatmul.mubr.f32.gmra.mxu0 %v1219
  %v1354 = vpop.f32.mrf.mxu0
  %v1355 = vadd.f32 0.0, %v1354
  %v1356 = vpop.f32.mrf.mxu0
  %1357 = vmatprep.mubr.f32.mxu0 0.0
  %1358 = vmatmul.mubr.f32.gmra.mxu0 %v1220
  %v1359 = vpop.f32.mrf.mxu0
  %v1360 = vadd.f32 0.0, %v1359
  %v1361 = vpop.f32.mrf.mxu0
  %1362 = vmatprep.mubr.f32.mxu0 0.0
  %1363 = vmatmul.mubr.f32.gmra.mxu0 %v1221
  %v1364 = vpop.f32.mrf.mxu0
  %v1365 = vadd.f32 0.0, %v1364
  %v1366 = vpop.f32.mrf.mxu0
  %1367 = vmatprep.mubr.f32.mxu0 0.0
  %1368 = vmatmul.mubr.f32.gmra.mxu0 %v1222
  %v1369 = vpop.f32.mrf.mxu0
  %v1370 = vadd.f32 0.0, %v1369
  %v1371 = vpop.f32.mrf.mxu0
  %1372 = vmatprep.mubr.f32.mxu0 0.0
  %1373 = vmatmul.mubr.f32.gmra.mxu0 %v1223
  %v1374 = vpop.f32.mrf.mxu0
  %v1375 = vadd.f32 0.0, %v1374
  %v1376 = vpop.f32.mrf.mxu0
  %1377 = vmatprep.mubr.f32.mxu0 0.0
  %1378 = vmatmul.mubr.f32.gmra.mxu0 %v1224
  %v1379 = vpop.f32.mrf.mxu0
  %v1380 = vadd.f32 0.0, %v1379
  %v1381 = vpop.f32.mrf.mxu0
  %1382 = vmatprep.mubr.f32.mxu0 0.0
  %1383 = vmatmul.mubr.f32.gmra.mxu0 %v1225
  %v1384 = vpop.f32.mrf.mxu0
  %v1385 = vadd.f32 0.0, %v1384
  %v1386 = vpop.f32.mrf.mxu0
  %1387 = vmatprep.mubr.f32.mxu0 0.0
  %1388 = vmatmul.mubr.f32.gmra.mxu0 %v1226
  %v1389 = vpop.f32.mrf.mxu0
  %v1390 = vadd.f32 0.0, %v1389
  %v1391 = vpop.f32.mrf.mxu0
  %1392 = vmatprep.mubr.f32.mxu0 0.0
  %1393 = vmatmul.mubr.f32.gmra.mxu0 %v1227
  %v1394 = vpop.f32.mrf.mxu0
  %v1395 = vadd.f32 0.0, %v1394
  %v1396 = vpop.f32.mrf.mxu0
  %1397 = vmatprep.mubr.f32.mxu0 0.0
  %1398 = vmatmul.mubr.f32.gmra.mxu0 %v1228
  %v1399 = vpop.f32.mrf.mxu0
  %v1400 = vadd.f32 0.0, %v1399
  %v1401 = vpop.f32.mrf.mxu0
  %1402 = vmatprep.mubr.f32.mxu0 0.0
  %1403 = vmatmul.mubr.f32.gmra.mxu0 %v1229
  %v1404 = vpop.f32.mrf.mxu0
  %v1405 = vadd.f32 0.0, %v1404
  %v1406 = vpop.f32.mrf.mxu0
  %1407 = vmatprep.mubr.f32.mxu0 0.0
  %1408 = vmatmul.mubr.f32.gmra.mxu0 %v1230
  %v1409 = vpop.f32.mrf.mxu0
  %v1410 = vadd.f32 0.0, %v1409
  %v1411 = vpop.f32.mrf.mxu0
  %1412 = vmatprep.mubr.f32.mxu0 0.0
  %1413 = vmatmul.mubr.f32.gmra.mxu0 %v1231
  %v1414 = vpop.f32.mrf.mxu0
  %v1415 = vadd.f32 0.0, %v1414
  %v1416 = vpop.f32.mrf.mxu0
  %1417 = vmatprep.mubr.f32.mxu0 0.0
  %1418 = vmatmul.mubr.f32.gmra.mxu0 %v1232
  %v1419 = vpop.f32.mrf.mxu0
  %v1420 = vadd.f32 0.0, %v1419
  %v1421 = vpop.f32.mrf.mxu0
  %1422 = vmatprep.mubr.f32.mxu0 0.0
  %1423 = vmatmul.mubr.f32.gmra.mxu0 %v1233
  %v1424 = vpop.f32.mrf.mxu0
  %v1425 = vadd.f32 0.0, %v1424
  %v1426 = vpop.f32.mrf.mxu0
  %1427 = vmatprep.mubr.f32.mxu0 0.0
  %1428 = vmatmul.mubr.f32.gmra.mxu0 %v1234
  %v1429 = vpop.f32.mrf.mxu0
  %v1430 = vadd.f32 0.0, %v1429
  %v1431 = vpop.f32.mrf.mxu0
  %1432 = vmatprep.mubr.f32.mxu0 0.0
  %1433 = vmatmul.mubr.f32.gmra.mxu0 %v1235
  %v1434 = vpop.f32.mrf.mxu0
  %v1435 = vadd.f32 0.0, %v1434
  %v1436 = vpop.f32.mrf.mxu0
  %1437 = vmatprep.mubr.f32.mxu0 0.0
  %1438 = vmatmul.mubr.f32.gmra.mxu0 %v1236
  %v1439 = vpop.f32.mrf.mxu0
  %v1440 = vadd.f32 0.0, %v1439
  %v1441 = vpop.f32.mrf.mxu0
  %1442 = vmatprep.mubr.f32.mxu0 0.0
  %1443 = vmatmul.mubr.f32.gmra.mxu0 %v1237
  %v1444 = vpop.f32.mrf.mxu0
  %v1445 = vadd.f32 0.0, %v1444
  %v1446 = vpop.f32.mrf.mxu0
  %1447 = vmatprep.mubr.f32.mxu0 0.0
  %1448 = vmatmul.mubr.f32.gmra.mxu0 %v1238
  %v1449 = vpop.f32.mrf.mxu0
  %v1450 = vadd.f32 0.0, %v1449
  %v1451 = vpop.f32.mrf.mxu0
  %1452 = vmatprep.mubr.f32.mxu0 0.0
  %1453 = vmatmul.mubr.f32.gmra.mxu0 %v1239
  %v1454 = vpop.f32.mrf.mxu0
  %v1455 = vadd.f32 0.0, %v1454
  %v1456 = vpop.f32.mrf.mxu0
  %1457 = vmatprep.mubr.f32.mxu0 0.0
  %1458 = vmatmul.mubr.f32.gmra.mxu0 %v1240
  %v1459 = vpop.f32.mrf.mxu0
  %v1460 = vadd.f32 0.0, %v1459
  %v1461 = vpop.f32.mrf.mxu0
  %1462 = vmatprep.mubr.f32.mxu0 0.0
  %1463 = vmatmul.mubr.f32.gmra.mxu0 %v1241
  %v1464 = vpop.f32.mrf.mxu0
  %v1465 = vadd.f32 0.0, %v1464
  %v1466 = vpop.f32.mrf.mxu0
  %1467 = vmatprep.mubr.f32.mxu0 0.0
  %1468 = vmatmul.mubr.f32.gmra.mxu0 %v1242
  %v1469 = vpop.f32.mrf.mxu0
  %v1470 = vadd.f32 0.0, %v1469
  %v1471 = vpop.f32.mrf.mxu0
  %1472 = vmatprep.mubr.f32.mxu0 0.0
  %1473 = vmatmul.mubr.f32.gmra.mxu0 %v1243
  %v1474 = vpop.f32.mrf.mxu0
  %v1475 = vadd.f32 0.0, %v1474
  %v1476 = vpop.f32.mrf.mxu0
  %1477 = vmatprep.mubr.f32.mxu0 0.0
  %1478 = vmatmul.mubr.f32.gmra.mxu0 %v1244
  %v1479 = vpop.f32.mrf.mxu0
  %v1480 = vadd.f32 0.0, %v1479
  %v1481 = vpop.f32.mrf.mxu0
  %1482 = vmatprep.mubr.f32.mxu0 0.0
  %1483 = vmatmul.mubr.f32.gmra.mxu0 %v1245
  %v1484 = vpop.f32.mrf.mxu0
  %v1485 = vadd.f32 0.0, %v1484
  %v1486 = vpop.f32.mrf.mxu0
  %1487 = vmatprep.mubr.f32.mxu0 0.0
  %1488 = vmatmul.mubr.f32.gmra.mxu0 %v1246
  %v1489 = vpop.f32.mrf.mxu0
  %v1490 = vadd.f32 0.0, %v1489
  %v1491 = vpop.f32.mrf.mxu0
  %1492 = vmatprep.mubr.f32.mxu0 0.0
  %1493 = vmatmul.mubr.f32.gmra.mxu0 %v1247
  %v1494 = vpop.f32.mrf.mxu0
  %v1495 = vadd.f32 0.0, %v1494
  %v1496 = vpop.f32.mrf.mxu0
  %1497 = vmatprep.mubr.f32.mxu0 0.0
  %1498 = vmatmul.mubr.f32.gmra.mxu0 %v1248
  %v1499 = vpop.f32.mrf.mxu0
  %v1500 = vadd.f32 0.0, %v1499
  %v1501 = vpop.f32.mrf.mxu0
  %1502 = vmatprep.mubr.f32.mxu0 0.0
  %1503 = vmatmul.mubr.f32.gmra.mxu0 %v1249
  %v1504 = vpop.f32.mrf.mxu0
  %v1505 = vadd.f32 0.0, %v1504
  %v1506 = vpop.f32.mrf.mxu0
  %1507 = vmatprep.mubr.f32.mxu0 0.0
  %1508 = vmatmul.mubr.f32.gmra.mxu0 %v1250
  %v1509 = vpop.f32.mrf.mxu0
  %v1510 = vadd.f32 0.0, %v1509
  %v1511 = vpop.f32.mrf.mxu0
  %1512 = vmatprep.mubr.f32.mxu0 0.0
  %1513 = vmatmul.mubr.f32.gmra.mxu0 %v1251
  %v1514 = vpop.f32.mrf.mxu0
  %v1515 = vadd.f32 0.0, %v1514
  %v1516 = vpop.f32.mrf.mxu0
  %1517 = vmatprep.mubr.f32.mxu0 0.0
  %1518 = vmatmul.mubr.f32.gmra.mxu0 %v1252
  %v1519 = vpop.f32.mrf.mxu0
  %v1520 = vadd.f32 0.0, %v1519
  %v1521 = vpop.f32.mrf.mxu0
  %1522 = vmatprep.mubr.f32.mxu0 0.0
  %1523 = vmatmul.mubr.f32.gmra.mxu0 %v1253
  %v1524 = vpop.f32.mrf.mxu0
  %v1525 = vadd.f32 0.0, %v1524
  %v1526 = vpop.f32.mrf.mxu0
  %1527 = vmatprep.mubr.f32.mxu0 0.0
  %1528 = vmatmul.mubr.f32.gmra.mxu0 %v1254
  %v1529 = vpop.f32.mrf.mxu0
  %v1530 = vadd.f32 0.0, %v1529
  %v1531 = vpop.f32.mrf.mxu0
  %1532 = vmatprep.mubr.f32.mxu0 0.0
  %1533 = vmatmul.mubr.f32.gmra.mxu0 %v1255
  %v1534 = vpop.f32.mrf.mxu0
  %v1535 = vadd.f32 0.0, %v1534
  %v1536 = vpop.f32.mrf.mxu0
  %1537 = vmatprep.mubr.f32.mxu0 0.0
  %1538 = vmatmul.mubr.f32.gmra.mxu0 %v1256
  %v1539 = vpop.f32.mrf.mxu0
  %v1540 = vadd.f32 0.0, %v1539
  %v1541 = vpop.f32.mrf.mxu0
  %1542 = vmatprep.mubr.f32.mxu0 0.0
  %1543 = vmatmul.mubr.f32.gmra.mxu0 %v1257
  %v1544 = vpop.f32.mrf.mxu0
  %v1545 = vadd.f32 0.0, %v1544
  %v1546 = vpop.f32.mrf.mxu0
  %1547 = vmatprep.mubr.f32.mxu0 0.0
  %1548 = vmatmul.mubr.f32.gmra.mxu0 %v1258
  %v1549 = vpop.f32.mrf.mxu0
  %v1550 = vadd.f32 0.0, %v1549
  %v1551 = vpop.f32.mrf.mxu0
  %1552 = vmatprep.mubr.f32.mxu0 0.0
  %1553 = vmatmul.mubr.f32.gmra.mxu0 %v1259
  %v1554 = vpop.f32.mrf.mxu0
  %v1555 = vadd.f32 0.0, %v1554
  %v1556 = vpop.f32.mrf.mxu0
  %1557 = vmatprep.mubr.f32.mxu0 0.0
  %1558 = vmatmul.mubr.f32.gmra.mxu0 %v1260
  %v1559 = vpop.f32.mrf.mxu0
  %v1560 = vadd.f32 0.0, %v1559
  %v1561 = vpop.f32.mrf.mxu0
  %1562 = vmatprep.mubr.f32.mxu0 0.0
  %1563 = vmatmul.mubr.f32.gmra.mxu0 %v1261
  %v1564 = vpop.f32.mrf.mxu0
  %v1565 = vadd.f32 0.0, %v1564
  %v1566 = vpop.f32.mrf.mxu0
  %1567 = vmatprep.mubr.f32.mxu0 0.0
  %1568 = vmatmul.mubr.f32.gmra.mxu0 %v1262
  %v1569 = vpop.f32.mrf.mxu0
  %v1570 = vadd.f32 0.0, %v1569
  %v1571 = vpop.f32.mrf.mxu0
  %1572 = vdwg.mxu0
  %v1573 = vmax.f32 %v1164, %v1330
  %v1574 = vmax.f32 %v1165, %v1335
  %v1575 = vmax.f32 %v1166, %v1340
  %v1576 = vmax.f32 %v1167, %v1345
  %v1577 = vmax.f32 %v1168, %v1350
  %v1578 = vmax.f32 %v1169, %v1355
  %v1579 = vmax.f32 %v1170, %v1360
  %v1580 = vmax.f32 %v1171, %v1365
  %v1581 = vmax.f32 %v1172, %v1370
  %v1582 = vmax.f32 %v1173, %v1375
  %v1583 = vmax.f32 %v1174, %v1380
  %v1584 = vmax.f32 %v1175, %v1385
  %v1585 = vmax.f32 %v1176, %v1390
  %v1586 = vmax.f32 %v1177, %v1395
  %v1587 = vmax.f32 %v1178, %v1400
  %v1588 = vmax.f32 %v1179, %v1405
  %v1589 = vmax.f32 %v1180, %v1410
  %v1590 = vmax.f32 %v1181, %v1415
  %v1591 = vmax.f32 %v1182, %v1420
  %v1592 = vmax.f32 %v1183, %v1425
  %v1593 = vmax.f32 %v1184, %v1430
  %v1594 = vmax.f32 %v1185, %v1435
  %v1595 = vmax.f32 %v1186, %v1440
  %v1596 = vmax.f32 %v1187, %v1445
  %v1597 = vmax.f32 %v1188, %v1450
  %v1598 = vmax.f32 %v1189, %v1455
  %v1599 = vmax.f32 %v1190, %v1460
  %v1600 = vmax.f32 %v1191, %v1465
  %v1601 = vmax.f32 %v1192, %v1470
  %v1602 = vmax.f32 %v1193, %v1475
  %v1603 = vmax.f32 %v1194, %v1480
  %v1604 = vmax.f32 %v1195, %v1485
  %v1605 = vmax.f32 %v1196, %v1490
  %v1606 = vmax.f32 %v1197, %v1495
  %v1607 = vmax.f32 %v1198, %v1500
  %v1608 = vmax.f32 %v1199, %v1505
  %v1609 = vmax.f32 %v1200, %v1510
  %v1610 = vmax.f32 %v1201, %v1515
  %v1611 = vmax.f32 %v1202, %v1520
  %v1612 = vmax.f32 %v1203, %v1525
  %v1613 = vmax.f32 %v1204, %v1530
  %v1614 = vmax.f32 %v1205, %v1535
  %v1615 = vmax.f32 %v1206, %v1540
  %v1616 = vmax.f32 %v1207, %v1545
  %v1617 = vmax.f32 %v1208, %v1550
  %v1618 = vmax.f32 %v1209, %v1555
  %v1619 = vmax.f32 %v1210, %v1560
  %v1620 = vmax.f32 %v1211, %v1565
  %v1621 = vmax.f32 %v1212, %v1570
  %v1622 = vld [vmem:[%s2] sm:$0x1]
  %v1624 = vlaneseq
  %v1625 = vshrl.u32 %v1624, 7
  %v1626 = vsub.s32 0, %v1625
  %v1627 = vrot.slane %v1622, %v1626
  %v1629 = vadd.f32 %v1573, %v1627
  %v1630 = vadd.f32 %v1574, %v1627
  %v1631 = vadd.f32 %v1575, %v1627
  %v1632 = vadd.f32 %v1576, %v1627
  %v1633 = vadd.f32 %v1577, %v1627
  %v1634 = vadd.f32 %v1578, %v1627
  %v1635 = vadd.f32 %v1579, %v1627
  %v1636 = vadd.f32 %v1580, %v1627
  %v1637 = vadd.f32 %v1581, %v1627
  %v1638 = vadd.f32 %v1582, %v1627
  %v1639 = vadd.f32 %v1583, %v1627
  %v1640 = vadd.f32 %v1584, %v1627
  %v1641 = vadd.f32 %v1585, %v1627
  %v1642 = vadd.f32 %v1586, %v1627
  %v1643 = vadd.f32 %v1587, %v1627
  %v1644 = vadd.f32 %v1588, %v1627
  %v1645 = vadd.f32 %v1589, %v1627
  %v1646 = vadd.f32 %v1590, %v1627
  %v1647 = vadd.f32 %v1591, %v1627
  %v1648 = vadd.f32 %v1592, %v1627
  %v1649 = vadd.f32 %v1593, %v1627
  %v1650 = vadd.f32 %v1594, %v1627
  %v1651 = vadd.f32 %v1595, %v1627
  %v1652 = vadd.f32 %v1596, %v1627
  %v1653 = vadd.f32 %v1597, %v1627
  %v1654 = vadd.f32 %v1598, %v1627
  %v1655 = vadd.f32 %v1599, %v1627
  %v1656 = vadd.f32 %v1600, %v1627
  %v1657 = vadd.f32 %v1601, %v1627
  %v1658 = vadd.f32 %v1602, %v1627
  %v1659 = vadd.f32 %v1603, %v1627
  %v1660 = vadd.f32 %v1604, %v1627
  %v1661 = vadd.f32 %v1605, %v1627
  %v1662 = vadd.f32 %v1606, %v1627
  %v1663 = vadd.f32 %v1607, %v1627
  %v1664 = vadd.f32 %v1608, %v1627
  %v1665 = vadd.f32 %v1609, %v1627
  %v1666 = vadd.f32 %v1610, %v1627
  %v1667 = vadd.f32 %v1611, %v1627
  %v1668 = vadd.f32 %v1612, %v1627
  %v1669 = vadd.f32 %v1613, %v1627
  %v1670 = vadd.f32 %v1614, %v1627
  %v1671 = vadd.f32 %v1615, %v1627
  %v1672 = vadd.f32 %v1616, %v1627
  %v1673 = vadd.f32 %v1617, %v1627
  %v1674 = vadd.f32 %v1618, %v1627
  %v1675 = vadd.f32 %v1619, %v1627
  %v1676 = vadd.f32 %v1620, %v1627
  %v1677 = vadd.f32 %v1621, %v1627
  %v1678 = vmax.f32 %v1629, 0.0
  %v1679 = vmax.f32 %v1630, 0.0
  %v1680 = vmax.f32 %v1631, 0.0
  %v1681 = vmax.f32 %v1632, 0.0
  %v1682 = vmax.f32 %v1633, 0.0
  %v1683 = vmax.f32 %v1634, 0.0
  %v1684 = vmax.f32 %v1635, 0.0
  %v1685 = vmax.f32 %v1636, 0.0
  %v1686 = vmax.f32 %v1637, 0.0
  %v1687 = vmax.f32 %v1638, 0.0
  %v1688 = vmax.f32 %v1639, 0.0
  %v1689 = vmax.f32 %v1640, 0.0
  %v1690 = vmax.f32 %v1641, 0.0
  %v1691 = vmax.f32 %v1642, 0.0
  %v1692 = vmax.f32 %v1643, 0.0
  %v1693 = vmax.f32 %v1644, 0.0
  %v1694 = vmax.f32 %v1645, 0.0
  %v1695 = vmax.f32 %v1646, 0.0
  %v1696 = vmax.f32 %v1647, 0.0
  %v1697 = vmax.f32 %v1648, 0.0
  %v1698 = vmax.f32 %v1649, 0.0
  %v1699 = vmax.f32 %v1650, 0.0
  %v1700 = vmax.f32 %v1651, 0.0
  %v1701 = vmax.f32 %v1652, 0.0
  %v1702 = vmax.f32 %v1653, 0.0
  %v1703 = vmax.f32 %v1654, 0.0
  %v1704 = vmax.f32 %v1655, 0.0
  %v1705 = vmax.f32 %v1656, 0.0
  %v1706 = vmax.f32 %v1657, 0.0
  %v1707 = vmax.f32 %v1658, 0.0
  %v1708 = vmax.f32 %v1659, 0.0
  %v1709 = vmax.f32 %v1660, 0.0
  %v1710 = vmax.f32 %v1661, 0.0
  %v1711 = vmax.f32 %v1662, 0.0
  %v1712 = vmax.f32 %v1663, 0.0
  %v1713 = vmax.f32 %v1664, 0.0
  %v1714 = vmax.f32 %v1665, 0.0
  %v1715 = vmax.f32 %v1666, 0.0
  %v1716 = vmax.f32 %v1667, 0.0
  %v1717 = vmax.f32 %v1668, 0.0
  %v1718 = vmax.f32 %v1669, 0.0
  %v1719 = vmax.f32 %v1670, 0.0
  %v1720 = vmax.f32 %v1671, 0.0
  %v1721 = vmax.f32 %v1672, 0.0
  %v1722 = vmax.f32 %v1673, 0.0
  %v1723 = vmax.f32 %v1674, 0.0
  %v1724 = vmax.f32 %v1675, 0.0
  %v1725 = vmax.f32 %v1676, 0.0
  %v1726 = vmax.f32 %v1677, 0.0
  %v1727 = vadd.f32 %v1678, %v1679
  %v1728 = vadd.f32 %v1727, %v1680
  %v1729 = vadd.f32 %v1728, %v1681
  %v1730 = vadd.f32 %v1729, %v1682
  %v1731 = vadd.f32 %v1730, %v1683
  %v1732 = vadd.f32 %v1731, %v1684
  %v1733 = vadd.f32 %v1732, %v1685
  %v1734 = vadd.f32 %v1733, %v1686
  %v1735 = vadd.f32 %v1734, %v1687
  %v1736 = vadd.f32 %v1735, %v1688
  %v1737 = vadd.f32 %v1736, %v1689
  %v1738 = vadd.f32 %v1737, %v1690
  %v1739 = vadd.f32 %v1738, %v1691
  %v1740 = vadd.f32 %v1739, %v1692
  %v1741 = vadd.f32 %v1740, %v1693
  %v1742 = vadd.f32 %v1741, %v1694
  %v1743 = vadd.f32 %v1742, %v1695
  %v1744 = vadd.f32 %v1743, %v1696
  %v1745 = vadd.f32 %v1744, %v1697
  %v1746 = vadd.f32 %v1745, %v1698
  %v1747 = vadd.f32 %v1746, %v1699
  %v1748 = vadd.f32 %v1747, %v1700
  %v1749 = vadd.f32 %v1748, %v1701
  %v1750 = vadd.f32 %v1749, %v1702
  %v1751 = vadd.f32 %v1750, %v1703
  %v1752 = vadd.f32 %v1751, %v1704
  %v1753 = vadd.f32 %v1752, %v1705
  %v1754 = vadd.f32 %v1753, %v1706
  %v1755 = vadd.f32 %v1754, %v1707
  %v1756 = vadd.f32 %v1755, %v1708
  %v1757 = vadd.f32 %v1756, %v1709
  %v1758 = vadd.f32 %v1757, %v1710
  %v1759 = vadd.f32 %v1758, %v1711
  %v1760 = vadd.f32 %v1759, %v1712
  %v1761 = vadd.f32 %v1760, %v1713
  %v1762 = vadd.f32 %v1761, %v1714
  %v1763 = vadd.f32 %v1762, %v1715
  %v1764 = vadd.f32 %v1763, %v1716
  %v1765 = vadd.f32 %v1764, %v1717
  %v1766 = vadd.f32 %v1765, %v1718
  %v1767 = vadd.f32 %v1766, %v1719
  %v1768 = vadd.f32 %v1767, %v1720
  %v1769 = vadd.f32 %v1768, %v1721
  %v1770 = vadd.f32 %v1769, %v1722
  %v1771 = vadd.f32 %v1770, %v1723
  %v1772 = vadd.f32 %v1771, %v1724
  %v1773 = vadd.f32 %v1772, %v1725
  %v1774 = vadd.f32 %v1773, %v1726
  %v1775 = vrot.slane %v1774, 4
  %v1776 = vadd.f32 %v1774, %v1775
  %v1777 = vrot.slane %v1776, 2
  %v1778 = vadd.f32 %v1776, %v1777
  %v1779 = vrot.slane %v1778, 1
  %v1780 = vadd.f32 %v1778, %v1779
  %v1781 = vrcp.pop 392.0
  %v1782 = vmul.f32 %v1780, %v1781
  %v1783 = vsub.f32 %v1678, %v1782
  %v1784 = vsub.f32 %v1679, %v1782
  %v1785 = vsub.f32 %v1680, %v1782
  %v1786 = vsub.f32 %v1681, %v1782
  %v1787 = vsub.f32 %v1682, %v1782
  %v1788 = vsub.f32 %v1683, %v1782
  %v1789 = vsub.f32 %v1684, %v1782
  %v1790 = vsub.f32 %v1685, %v1782
  %v1791 = vsub.f32 %v1686, %v1782
  %v1792 = vsub.f32 %v1687, %v1782
  %v1793 = vsub.f32 %v1688, %v1782
  %v1794 = vsub.f32 %v1689, %v1782
  %v1795 = vsub.f32 %v1690, %v1782
  %v1796 = vsub.f32 %v1691, %v1782
  %v1797 = vsub.f32 %v1692, %v1782
  %v1798 = vsub.f32 %v1693, %v1782
  %v1799 = vsub.f32 %v1694, %v1782
  %v1800 = vsub.f32 %v1695, %v1782
  %v1801 = vsub.f32 %v1696, %v1782
  %v1802 = vsub.f32 %v1697, %v1782
  %v1803 = vsub.f32 %v1698, %v1782
  %v1804 = vsub.f32 %v1699, %v1782
  %v1805 = vsub.f32 %v1700, %v1782
  %v1806 = vsub.f32 %v1701, %v1782
  %v1807 = vsub.f32 %v1702, %v1782
  %v1808 = vsub.f32 %v1703, %v1782
  %v1809 = vsub.f32 %v1704, %v1782
  %v1810 = vsub.f32 %v1705, %v1782
  %v1811 = vsub.f32 %v1706, %v1782
  %v1812 = vsub.f32 %v1707, %v1782
  %v1813 = vsub.f32 %v1708, %v1782
  %v1814 = vsub.f32 %v1709, %v1782
  %v1815 = vsub.f32 %v1710, %v1782
  %v1816 = vsub.f32 %v1711, %v1782
  %v1817 = vsub.f32 %v1712, %v1782
  %v1818 = vsub.f32 %v1713, %v1782
  %v1819 = vsub.f32 %v1714, %v1782
  %v1820 = vsub.f32 %v1715, %v1782
  %v1821 = vsub.f32 %v1716, %v1782
  %v1822 = vsub.f32 %v1717, %v1782
  %v1823 = vsub.f32 %v1718, %v1782
  %v1824 = vsub.f32 %v1719, %v1782
  %v1825 = vsub.f32 %v1720, %v1782
  %v1826 = vsub.f32 %v1721, %v1782
  %v1827 = vsub.f32 %v1722, %v1782
  %v1828 = vsub.f32 %v1723, %v1782
  %v1829 = vsub.f32 %v1724, %v1782
  %v1830 = vsub.f32 %v1725, %v1782
  %v1831 = vsub.f32 %v1726, %v1782
  %v1832 = vmul.f32 %v1783, %v1783
  %v1833 = vmul.f32 %v1784, %v1784
  %v1834 = vmul.f32 %v1785, %v1785
  %v1835 = vmul.f32 %v1786, %v1786
  %v1836 = vmul.f32 %v1787, %v1787
  %v1837 = vmul.f32 %v1788, %v1788
  %v1838 = vmul.f32 %v1789, %v1789
  %v1839 = vmul.f32 %v1790, %v1790
  %v1840 = vmul.f32 %v1791, %v1791
  %v1841 = vmul.f32 %v1792, %v1792
  %v1842 = vmul.f32 %v1793, %v1793
  %v1843 = vmul.f32 %v1794, %v1794
  %v1844 = vmul.f32 %v1795, %v1795
  %v1845 = vmul.f32 %v1796, %v1796
  %v1846 = vmul.f32 %v1797, %v1797
  %v1847 = vmul.f32 %v1798, %v1798
  %v1848 = vmul.f32 %v1799, %v1799
  %v1849 = vmul.f32 %v1800, %v1800
  %v1850 = vmul.f32 %v1801, %v1801
  %v1851 = vmul.f32 %v1802, %v1802
  %v1852 = vmul.f32 %v1803, %v1803
  %v1853 = vmul.f32 %v1804, %v1804
  %v1854 = vmul.f32 %v1805, %v1805
  %v1855 = vmul.f32 %v1806, %v1806
  %v1856 = vmul.f32 %v1807, %v1807
  %v1857 = vmul.f32 %v1808, %v1808
  %v1858 = vmul.f32 %v1809, %v1809
  %v1859 = vmul.f32 %v1810, %v1810
  %v1860 = vmul.f32 %v1811, %v1811
  %v1861 = vmul.f32 %v1812, %v1812
  %v1862 = vmul.f32 %v1813, %v1813
  %v1863 = vmul.f32 %v1814, %v1814
  %v1864 = vmul.f32 %v1815, %v1815
  %v1865 = vmul.f32 %v1816, %v1816
  %v1866 = vmul.f32 %v1817, %v1817
  %v1867 = vmul.f32 %v1818, %v1818
  %v1868 = vmul.f32 %v1819, %v1819
  %v1869 = vmul.f32 %v1820, %v1820
  %v1870 = vmul.f32 %v1821, %v1821
  %v1871 = vmul.f32 %v1822, %v1822
  %v1872 = vmul.f32 %v1823, %v1823
  %v1873 = vmul.f32 %v1824, %v1824
  %v1874 = vmul.f32 %v1825, %v1825
  %v1875 = vmul.f32 %v1826, %v1826
  %v1876 = vmul.f32 %v1827, %v1827
  %v1877 = vmul.f32 %v1828, %v1828
  %v1878 = vmul.f32 %v1829, %v1829
  %v1879 = vmul.f32 %v1830, %v1830
  %v1880 = vmul.f32 %v1831, %v1831
  %v1881 = vadd.f32 %v1832, %v1833
  %v1882 = vadd.f32 %v1881, %v1834
  %v1883 = vadd.f32 %v1882, %v1835
  %v1884 = vadd.f32 %v1883, %v1836
  %v1885 = vadd.f32 %v1884, %v1837
  %v1886 = vadd.f32 %v1885, %v1838
  %v1887 = vadd.f32 %v1886, %v1839
  %v1888 = vadd.f32 %v1887, %v1840
  %v1889 = vadd.f32 %v1888, %v1841
  %v1890 = vadd.f32 %v1889, %v1842
  %v1891 = vadd.f32 %v1890, %v1843
  %v1892 = vadd.f32 %v1891, %v1844
  %v1893 = vadd.f32 %v1892, %v1845
  %v1894 = vadd.f32 %v1893, %v1846
  %v1895 = vadd.f32 %v1894, %v1847
  %v1896 = vadd.f32 %v1895, %v1848
  %v1897 = vadd.f32 %v1896, %v1849
  %v1898 = vadd.f32 %v1897, %v1850
  %v1899 = vadd.f32 %v1898, %v1851
  %v1900 = vadd.f32 %v1899, %v1852
  %v1901 = vadd.f32 %v1900, %v1853
  %v1902 = vadd.f32 %v1901, %v1854
  %v1903 = vadd.f32 %v1902, %v1855
  %v1904 = vadd.f32 %v1903, %v1856
  %v1905 = vadd.f32 %v1904, %v1857
  %v1906 = vadd.f32 %v1905, %v1858
  %v1907 = vadd.f32 %v1906, %v1859
  %v1908 = vadd.f32 %v1907, %v1860
  %v1909 = vadd.f32 %v1908, %v1861
  %v1910 = vadd.f32 %v1909, %v1862
  %v1911 = vadd.f32 %v1910, %v1863
  %v1912 = vadd.f32 %v1911, %v1864
  %v1913 = vadd.f32 %v1912, %v1865
  %v1914 = vadd.f32 %v1913, %v1866
  %v1915 = vadd.f32 %v1914, %v1867
  %v1916 = vadd.f32 %v1915, %v1868
  %v1917 = vadd.f32 %v1916, %v1869
  %v1918 = vadd.f32 %v1917, %v1870
  %v1919 = vadd.f32 %v1918, %v1871
  %v1920 = vadd.f32 %v1919, %v1872
  %v1921 = vadd.f32 %v1920, %v1873
  %v1922 = vadd.f32 %v1921, %v1874
  %v1923 = vadd.f32 %v1922, %v1875
  %v1924 = vadd.f32 %v1923, %v1876
  %v1925 = vadd.f32 %v1924, %v1877
  %v1926 = vadd.f32 %v1925, %v1878
  %v1927 = vadd.f32 %v1926, %v1879
  %v1928 = vadd.f32 %v1927, %v1880
  %v1929 = vrot.slane %v1928, 4
  %v1930 = vadd.f32 %v1928, %v1929
  %v1931 = vrot.slane %v1930, 2
  %v1932 = vadd.f32 %v1930, %v1931
  %v1933 = vrot.slane %v1932, 1
  %v1934 = vadd.f32 %v1932, %v1933
  %v1935 = vmul.f32 %v1934, %v1781
  %v1936 = vadd.f32 %v1935, 1e-05
  %v1937 = vrsqrt.pop %v1936
  %v1938 = vld [vmem:[%s3] sm:$0x1]
  %v1939 = vmul.f32 %v1937, %v1938
  %v1940 = vlaneseq
  %v1941 = vshrl.u32 %v1940, 7
  %v1942 = vsub.s32 0, %v1941
  %v1943 = vrot.slane %v1939, %v1942
  %v1944 = vmul.f32 %v1783, %v1943
  %v1945 = vmul.f32 %v1784, %v1943
  %v1946 = vmul.f32 %v1785, %v1943
  %v1947 = vmul.f32 %v1786, %v1943
  %v1948 = vmul.f32 %v1787, %v1943
  %v1949 = vmul.f32 %v1788, %v1943
  %v1950 = vmul.f32 %v1789, %v1943
  %v1951 = vmul.f32 %v1790, %v1943
  %v1952 = vmul.f32 %v1791, %v1943
  %v1953 = vmul.f32 %v1792, %v1943
  %v1954 = vmul.f32 %v1793, %v1943
  %v1955 = vmul.f32 %v1794, %v1943
  %v1956 = vmul.f32 %v1795, %v1943
  %v1957 = vmul.f32 %v1796, %v1943
  %v1958 = vmul.f32 %v1797, %v1943
  %v1959 = vmul.f32 %v1798, %v1943
  %v1960 = vmul.f32 %v1799, %v1943
  %v1961 = vmul.f32 %v1800, %v1943
  %v1962 = vmul.f32 %v1801, %v1943
  %v1963 = vmul.f32 %v1802, %v1943
  %v1964 = vmul.f32 %v1803, %v1943
  %v1965 = vmul.f32 %v1804, %v1943
  %v1966 = vmul.f32 %v1805, %v1943
  %v1967 = vmul.f32 %v1806, %v1943
  %v1968 = vmul.f32 %v1807, %v1943
  %v1969 = vmul.f32 %v1808, %v1943
  %v1970 = vmul.f32 %v1809, %v1943
  %v1971 = vmul.f32 %v1810, %v1943
  %v1972 = vmul.f32 %v1811, %v1943
  %v1973 = vmul.f32 %v1812, %v1943
  %v1974 = vmul.f32 %v1813, %v1943
  %v1975 = vmul.f32 %v1814, %v1943
  %v1976 = vmul.f32 %v1815, %v1943
  %v1977 = vmul.f32 %v1816, %v1943
  %v1978 = vmul.f32 %v1817, %v1943
  %v1979 = vmul.f32 %v1818, %v1943
  %v1980 = vmul.f32 %v1819, %v1943
  %v1981 = vmul.f32 %v1820, %v1943
  %v1982 = vmul.f32 %v1821, %v1943
  %v1983 = vmul.f32 %v1822, %v1943
  %v1984 = vmul.f32 %v1823, %v1943
  %v1985 = vmul.f32 %v1824, %v1943
  %v1986 = vmul.f32 %v1825, %v1943
  %v1987 = vmul.f32 %v1826, %v1943
  %v1988 = vmul.f32 %v1827, %v1943
  %v1989 = vmul.f32 %v1828, %v1943
  %v1990 = vmul.f32 %v1829, %v1943
  %v1991 = vmul.f32 %v1830, %v1943
  %v1992 = vmul.f32 %v1831, %v1943
  %v1993 = vld [vmem:[%s4] sm:$0x1]
  %v1995 = vlaneseq
  %v1996 = vshrl.u32 %v1995, 7
  %v1997 = vsub.s32 0, %v1996
  %v1998 = vrot.slane %v1993, %v1997
  %v2000 = vadd.f32 %v1944, %v1998
  %v2001 = vadd.f32 %v1945, %v1998
  %v2002 = vadd.f32 %v1946, %v1998
  %v2003 = vadd.f32 %v1947, %v1998
  %v2004 = vadd.f32 %v1948, %v1998
  %v2005 = vadd.f32 %v1949, %v1998
  %v2006 = vadd.f32 %v1950, %v1998
  %v2007 = vadd.f32 %v1951, %v1998
  %v2008 = vadd.f32 %v1952, %v1998
  %v2009 = vadd.f32 %v1953, %v1998
  %v2010 = vadd.f32 %v1954, %v1998
  %v2011 = vadd.f32 %v1955, %v1998
  %v2012 = vadd.f32 %v1956, %v1998
  %v2013 = vadd.f32 %v1957, %v1998
  %v2014 = vadd.f32 %v1958, %v1998
  %v2015 = vadd.f32 %v1959, %v1998
  %v2016 = vadd.f32 %v1960, %v1998
  %v2017 = vadd.f32 %v1961, %v1998
  %v2018 = vadd.f32 %v1962, %v1998
  %v2019 = vadd.f32 %v1963, %v1998
  %v2020 = vadd.f32 %v1964, %v1998
  %v2021 = vadd.f32 %v1965, %v1998
  %v2022 = vadd.f32 %v1966, %v1998
  %v2023 = vadd.f32 %v1967, %v1998
  %v2024 = vadd.f32 %v1968, %v1998
  %v2025 = vadd.f32 %v1969, %v1998
  %v2026 = vadd.f32 %v1970, %v1998
  %v2027 = vadd.f32 %v1971, %v1998
  %v2028 = vadd.f32 %v1972, %v1998
  %v2029 = vadd.f32 %v1973, %v1998
  %v2030 = vadd.f32 %v1974, %v1998
  %v2031 = vadd.f32 %v1975, %v1998
  %v2032 = vadd.f32 %v1976, %v1998
  %v2033 = vadd.f32 %v1977, %v1998
  %v2034 = vadd.f32 %v1978, %v1998
  %v2035 = vadd.f32 %v1979, %v1998
  %v2036 = vadd.f32 %v1980, %v1998
  %v2037 = vadd.f32 %v1981, %v1998
  %v2038 = vadd.f32 %v1982, %v1998
  %v2039 = vadd.f32 %v1983, %v1998
  %v2040 = vadd.f32 %v1984, %v1998
  %v2041 = vadd.f32 %v1985, %v1998
  %v2042 = vadd.f32 %v1986, %v1998
  %v2043 = vadd.f32 %v1987, %v1998
  %v2044 = vadd.f32 %v1988, %v1998
  %v2045 = vadd.f32 %v1989, %v1998
  %v2046 = vadd.f32 %v1990, %v1998
  %v2047 = vadd.f32 %v1991, %v1998
  %v2048 = vadd.f32 %v1992, %v1998
  %2049 = vst [vmem:[%s5] sm:$0xff] %v2000
  %2050 = vst [vmem:[%s5 + $0x8] sm:$0xff] %v2001
  %2051 = vst [vmem:[%s5 + $0x10] sm:$0xff] %v2002
  %2052 = vst [vmem:[%s5 + $0x18] sm:$0xff] %v2003
  %2053 = vst [vmem:[%s5 + $0x20] sm:$0xff] %v2004
  %2054 = vst [vmem:[%s5 + $0x28] sm:$0xff] %v2005
  %2055 = vst [vmem:[%s5 + $0x30] sm:$0xff] %v2006
  %2056 = vst [vmem:[%s5 + $0x38] sm:$0xff] %v2007
  %2057 = vst [vmem:[%s5 + $0x40] sm:$0xff] %v2008
  %2058 = vst [vmem:[%s5 + $0x48] sm:$0xff] %v2009
  %2059 = vst [vmem:[%s5 + $0x50] sm:$0xff] %v2010
  %2060 = vst [vmem:[%s5 + $0x58] sm:$0xff] %v2011
  %2061 = vst [vmem:[%s5 + $0x60] sm:$0xff] %v2012
  %2062 = vst [vmem:[%s5 + $0x68] sm:$0xff] %v2013
  %2063 = vst [vmem:[%s5 + $0x70] sm:$0xff] %v2014
  %2064 = vst [vmem:[%s5 + $0x78] sm:$0xff] %v2015
  %2065 = vst [vmem:[%s5 + $0x80] sm:$0xff] %v2016
  %2066 = vst [vmem:[%s5 + $0x88] sm:$0xff] %v2017
  %2067 = vst [vmem:[%s5 + $0x90] sm:$0xff] %v2018
  %2068 = vst [vmem:[%s5 + $0x98] sm:$0xff] %v2019
  %2069 = vst [vmem:[%s5 + $0xa0] sm:$0xff] %v2020
  %2070 = vst [vmem:[%s5 + $0xa8] sm:$0xff] %v2021
  %2071 = vst [vmem:[%s5 + $0xb0] sm:$0xff] %v2022
  %2072 = vst [vmem:[%s5 + $0xb8] sm:$0xff] %v2023
  %2073 = vst [vmem:[%s5 + $0xc0] sm:$0xff] %v2024
  %2074 = vst [vmem:[%s5 + $0xc8] sm:$0xff] %v2025
  %2075 = vst [vmem:[%s5 + $0xd0] sm:$0xff] %v2026
  %2076 = vst [vmem:[%s5 + $0xd8] sm:$0xff] %v2027
  %2077 = vst [vmem:[%s5 + $0xe0] sm:$0xff] %v2028
  %2078 = vst [vmem:[%s5 + $0xe8] sm:$0xff] %v2029
  %2079 = vst [vmem:[%s5 + $0xf0] sm:$0xff] %v2030
  %2080 = vst [vmem:[%s5 + $0xf8] sm:$0xff] %v2031
  %2081 = vst [vmem:[%s5 + $0x100] sm:$0xff] %v2032
  %2082 = vst [vmem:[%s5 + $0x108] sm:$0xff] %v2033
  %2083 = vst [vmem:[%s5 + $0x110] sm:$0xff] %v2034
  %2084 = vst [vmem:[%s5 + $0x118] sm:$0xff] %v2035
  %2085 = vst [vmem:[%s5 + $0x120] sm:$0xff] %v2036
  %2086 = vst [vmem:[%s5 + $0x128] sm:$0xff] %v2037
  %2087 = vst [vmem:[%s5 + $0x130] sm:$0xff] %v2038
  %2088 = vst [vmem:[%s5 + $0x138] sm:$0xff] %v2039
  %2089 = vst [vmem:[%s5 + $0x140] sm:$0xff] %v2040
  %2090 = vst [vmem:[%s5 + $0x148] sm:$0xff] %v2041
  %2091 = vst [vmem:[%s5 + $0x150] sm:$0xff] %v2042
  %2092 = vst [vmem:[%s5 + $0x158] sm:$0xff] %v2043
  %2093 = vst [vmem:[%s5 + $0x160] sm:$0xff] %v2044
  %2094 = vst [vmem:[%s5 + $0x168] sm:$0xff] %v2045
  %2095 = vst [vmem:[%s5 + $0x170] sm:$0xff] %v2046
  %2096 = vst [vmem:[%s5 + $0x178] sm:$0xff] %v2047
  %2097 = vst [vmem:[%s5 + $0x180] sm:$0xff] %v2048
  // Predicated region
  $region22: #{forward.3} parent=0 // pred_check
    _
  $region23: #{forward.3} parent=0 // pred_check_branch
    %2099 = sbr.rel (0) target = $region25
  $region24: #{forward.3} parent=0 // pred_region
    _
  $region25: #{forward.3} parent=0 // pred_fallthru
    _
  // Predicated region
  $region26: #{forward.3} parent=0 // pred_check
    _
  $region27: #{forward.3} parent=0 // pred_check_branch
    %2101 = sbr.rel (0) target = $region29
  $region28: #{forward.3} parent=0 // pred_region
    _
  $region29: #{forward.3} parent=0 // pred_fallthru
    _

// kernel: forward.5
$region0: #{forward.5}
  #allocation0 [shape = 'u32[]', space=smem, size = 0x4, offset = 0x4, fixed_abs, tag = 'smem constant byte address 0x4 - core index']
  #allocation1 [shape = 'u32[144,128]{1,0:T(1,128)}', space=vmem, size = 0x12000, scoped, tag = 'internal scratch']
  %s0 = inlined_call_operand.vmem [shape: f32[2,3200], index: 0, kind: input, shape index: {}]
  %s1 = inlined_call_operand.vmem [shape: f32[3200,128], index: 1, kind: input, shape index: {}]
  %s2 = inlined_call_operand.vmem [shape: f32[1,128], index: 2, kind: input, shape index: {}]
  %s3 = inlined_call_operand.vmem [shape: f32[128,128], index: 3, kind: input, shape index: {}]
  %s4 = inlined_call_operand.vmem [shape: f32[1,128], index: 4, kind: input, shape index: {}]
  %s5 = inlined_call_operand.vmem [shape: f32[128,128], index: 5, kind: input, shape index: {}]
  %s6 = inlined_call_operand.vmem [shape: f32[1,128], index: 6, kind: input, shape index: {}]
  %s7 = inlined_call_operand.hbm [shape: f32[2,128], index: 7, kind: output, shape index: {}]
  %s8 = sld [smem:[#allocation0]]
  $region38: #{forward.5} parent=0
    _
  %s10 = ssub.s32 1, %s8
  %s11 = scalar_select 0, %s10, %s8
  $region1: #{forward.5} parent=0
    #allocation2 [shape = 'u8[1024]{0}', space=vmem, size = 0x400, scoped, tag = 'output window, operand 0, single buffered']
    #allocation3 [shape = 's32[1]{0}', space=sflag, size = 0x4, scoped, tag = 'scoped memory for forward.5']
    %12 = vsyncpa [#allocation3], 0
    // Predicated region
    $region2: #{forward.5} parent=1 // pred_check
      _
    $region3: #{forward.5} parent=1 // pred_check_branch
      %14 = sbr.rel (0) target = $region5
    $region4: #{forward.5} parent=1 // pred_region
      _
    $region5: #{forward.5} parent=1 // pred_fallthru
      _
    // Predicated region
    $region6: #{forward.5} parent=1 // pred_check
      _
    $region7: #{forward.5} parent=1 // pred_check_branch
      %16 = sbr.rel (0) target = $region9
    $region8: #{forward.5} parent=1 // pred_region
      _
    $region9: #{forward.5} parent=1 // pred_fallthru
      _
    // Predicated region
    $region10: #{forward.5} parent=1 // pred_check
      _
    $region11: #{forward.5} parent=1 // pred_check_branch
      %18 = sbr.rel (0) target = $region13
    $region12: #{forward.5} parent=1 // pred_region
      _
    $region13: #{forward.5} parent=1 // pred_fallthru
      _
    // Predicated region
    $region14: #{forward.5} parent=1 // pred_check
      _
    $region15: #{forward.5} parent=1 // pred_check_branch
      %20 = sbr.rel (0) target = $region17
    $region16: #{forward.5} parent=1 // pred_region
      _
    $region17: #{forward.5} parent=1 // pred_fallthru
      _
    // Predicated region
    $region18: #{forward.5} parent=1 // pred_check
      _
    $region19: #{forward.5} parent=1 // pred_check_branch
      %22 = sbr.rel (0) target = $region21
    $region20: #{forward.5} parent=1 // pred_region
      _
    $region21: #{forward.5} parent=1 // pred_fallthru
      _
    // Predicated region
    $region22: #{forward.5} parent=1 // pred_check
      _
    $region23: #{forward.5} parent=1 // pred_check_branch
      %24 = sbr.rel (0) target = $region25
    $region24: #{forward.5} parent=1 // pred_region
      _
    $region25: #{forward.5} parent=1 // pred_fallthru
      _
    // Predicated region
    $region26: #{forward.5} parent=1 // pred_check
      _
    $region27: #{forward.5} parent=1 // pred_check_branch
      %26 = sbr.rel (0) target = $region29
    $region28: #{forward.5} parent=1 // pred_region
      _
    $region29: #{forward.5} parent=1 // pred_fallthru
      _
    %v27 = vld [vmem:[%s0] sm:$0xff]
    %v28 = vld [vmem:[%s0 + $0x8] sm:$0xff]
    %v29 = vld [vmem:[%s0 + $0x10] sm:$0xff]
    %v30 = vld [vmem:[%s0 + $0x18] sm:$0xff]
    %v31 = vld [vmem:[%s0 + $0x20] sm:$0xff]
    %v32 = vld [vmem:[%s0 + $0x28] sm:$0xff]
    %v33 = vld [vmem:[%s0 + $0x30] sm:$0x3]
    %v34 = vld [vmem:[%s1] sm:$0xff]
    %v35 = vld [vmem:[%s1 + $0x8] sm:$0xff]
    %v36 = vld [vmem:[%s1 + $0x10] sm:$0xff]
    %v37 = vld [vmem:[%s1 + $0x18] sm:$0xff]
    %v38 = vld [vmem:[%s1 + $0x20] sm:$0xff]
    %v39 = vld [vmem:[%s1 + $0x28] sm:$0xff]
    %v40 = vld [vmem:[%s1 + $0x30] sm:$0xff]
    %v41 = vld [vmem:[%s1 + $0x38] sm:$0xff]
    %v42 = vld [vmem:[%s1 + $0x40] sm:$0xff]
    %v43 = vld [vmem:[%s1 + $0x48] sm:$0xff]
    %v44 = vld [vmem:[%s1 + $0x50] sm:$0xff]
    %v45 = vld [vmem:[%s1 + $0x58] sm:$0xff]
    %v46 = vld [vmem:[%s1 + $0x60] sm:$0xff]
    %v47 = vld [vmem:[%s1 + $0x68] sm:$0xff]
    %v48 = vld [vmem:[%s1 + $0x70] sm:$0xff]
    %v49 = vld [vmem:[%s1 + $0x78] sm:$0xff]
    %v50 = vld [vmem:[%s1 + $0x80] sm:$0xff]
    %v51 = vld [vmem:[%s1 + $0x88] sm:$0xff]
    %v52 = vld [vmem:[%s1 + $0x90] sm:$0xff]
    %v53 = vld [vmem:[%s1 + $0x98] sm:$0xff]
    %v54 = vld [vmem:[%s1 + $0xa0] sm:$0xff]
    %v55 = vld [vmem:[%s1 + $0xa8] sm:$0xff]
    %v56 = vld [vmem:[%s1 + $0xb0] sm:$0xff]
    %v57 = vld [vmem:[%s1 + $0xb8] sm:$0xff]
    %v58 = vld [vmem:[%s1 + $0xc0] sm:$0xff]
    %v59 = vld [vmem:[%s1 + $0xc8] sm:$0xff]
    %v60 = vld [vmem:[%s1 + $0xd0] sm:$0xff]
    %v61 = vld [vmem:[%s1 + $0xd8] sm:$0xff]
    %v62 = vld [vmem:[%s1 + $0xe0] sm:$0xff]
    %v63 = vld [vmem:[%s1 + $0xe8] sm:$0xff]
    %v64 = vld [vmem:[%s1 + $0xf0] sm:$0xff]
    %v65 = vld [vmem:[%s1 + $0xf8] sm:$0xff]
    %v66 = vld [vmem:[%s1 + $0x100] sm:$0xff]
    %v67 = vld [vmem:[%s1 + $0x108] sm:$0xff]
    %v68 = vld [vmem:[%s1 + $0x110] sm:$0xff]
    %v69 = vld [vmem:[%s1 + $0x118] sm:$0xff]
    %v70 = vld [vmem:[%s1 + $0x120] sm:$0xff]
    %v71 = vld [vmem:[%s1 + $0x128] sm:$0xff]
    %v72 = vld [vmem:[%s1 + $0x130] sm:$0xff]
    %v73 = vld [vmem:[%s1 + $0x138] sm:$0xff]
    %v74 = vld [vmem:[%s1 + $0x140] sm:$0xff]
    %v75 = vld [vmem:[%s1 + $0x148] sm:$0xff]
    %v76 = vld [vmem:[%s1 + $0x150] sm:$0xff]
    %v77 = vld [vmem:[%s1 + $0x158] sm:$0xff]
    %v78 = vld [vmem:[%s1 + $0x160] sm:$0xff]
    %v79 = vld [vmem:[%s1 + $0x168] sm:$0xff]
    %v80 = vld [vmem:[%s1 + $0x170] sm:$0xff]
    %v81 = vld [vmem:[%s1 + $0x178] sm:$0xff]
    %v82 = vld [vmem:[%s1 + $0x180] sm:$0xff]
    %v83 = vld [vmem:[%s1 + $0x188] sm:$0xff]
    %v84 = vld [vmem:[%s1 + $0x190] sm:$0xff]
    %v85 = vld [vmem:[%s1 + $0x198] sm:$0xff]
    %v86 = vld [vmem:[%s1 + $0x1a0] sm:$0xff]
    %v87 = vld [vmem:[%s1 + $0x1a8] sm:$0xff]
    %v88 = vld [vmem:[%s1 + $0x1b0] sm:$0xff]
    %v89 = vld [vmem:[%s1 + $0x1b8] sm:$0xff]
    %v90 = vld [vmem:[%s1 + $0x1c0] sm:$0xff]
    %v91 = vld [vmem:[%s1 + $0x1c8] sm:$0xff]
    %v92 = vld [vmem:[%s1 + $0x1d0] sm:$0xff]
    %v93 = vld [vmem:[%s1 + $0x1d8] sm:$0xff]
    %v94 = vld [vmem:[%s1 + $0x1e0] sm:$0xff]
    %v95 = vld [vmem:[%s1 + $0x1e8] sm:$0xff]
    %v96 = vld [vmem:[%s1 + $0x1f0] sm:$0xff]
    %v97 = vld [vmem:[%s1 + $0x1f8] sm:$0xff]
    %v98 = vld [vmem:[%s1 + $0x200] sm:$0xff]
    %v99 = vld [vmem:[%s1 + $0x208] sm:$0xff]
    %v100 = vld [vmem:[%s1 + $0x210] sm:$0xff]
    %v101 = vld [vmem:[%s1 + $0x218] sm:$0xff]
    %v102 = vld [vmem:[%s1 + $0x220] sm:$0xff]
    %v103 = vld [vmem:[%s1 + $0x228] sm:$0xff]
    %v104 = vld [vmem:[%s1 + $0x230] sm:$0xff]
    %v105 = vld [vmem:[%s1 + $0x238] sm:$0xff]
    %v106 = vld [vmem:[%s1 + $0x240] sm:$0xff]
    %v107 = vld [vmem:[%s1 + $0x248] sm:$0xff]
    %v108 = vld [vmem:[%s1 + $0x250] sm:$0xff]
    %v109 = vld [vmem:[%s1 + $0x258] sm:$0xff]
    %v110 = vld [vmem:[%s1 + $0x260] sm:$0xff]
    %v111 = vld [vmem:[%s1 + $0x268] sm:$0xff]
    %v112 = vld [vmem:[%s1 + $0x270] sm:$0xff]
    %v113 = vld [vmem:[%s1 + $0x278] sm:$0xff]
    %v114 = vld [vmem:[%s1 + $0x280] sm:$0xff]
    %v115 = vld [vmem:[%s1 + $0x288] sm:$0xff]
    %v116 = vld [vmem:[%s1 + $0x290] sm:$0xff]
    %v117 = vld [vmem:[%s1 + $0x298] sm:$0xff]
    %v118 = vld [vmem:[%s1 + $0x2a0] sm:$0xff]
    %v119 = vld [vmem:[%s1 + $0x2a8] sm:$0xff]
    %v120 = vld [vmem:[%s1 + $0x2b0] sm:$0xff]
    %v121 = vld [vmem:[%s1 + $0x2b8] sm:$0xff]
    %v122 = vld [vmem:[%s1 + $0x2c0] sm:$0xff]
    %v123 = vld [vmem:[%s1 + $0x2c8] sm:$0xff]
    %v124 = vld [vmem:[%s1 + $0x2d0] sm:$0xff]
    %v125 = vld [vmem:[%s1 + $0x2d8] sm:$0xff]
    %v126 = vld [vmem:[%s1 + $0x2e0] sm:$0xff]
    %v127 = vld [vmem:[%s1 + $0x2e8] sm:$0xff]
    %v128 = vld [vmem:[%s1 + $0x2f0] sm:$0xff]
    %v129 = vld [vmem:[%s1 + $0x2f8] sm:$0xff]
    %v130 = vld [vmem:[%s1 + $0x300] sm:$0xff]
    %v131 = vld [vmem:[%s1 + $0x308] sm:$0xff]
    %v132 = vld [vmem:[%s1 + $0x310] sm:$0xff]
    %v133 = vld [vmem:[%s1 + $0x318] sm:$0xff]
    %v134 = vld [vmem:[%s1 + $0x320] sm:$0xff]
    %v135 = vld [vmem:[%s1 + $0x328] sm:$0xff]
    %v136 = vld [vmem:[%s1 + $0x330] sm:$0xff]
    %v137 = vld [vmem:[%s1 + $0x338] sm:$0xff]
    %v138 = vld [vmem:[%s1 + $0x340] sm:$0xff]
    %v139 = vld [vmem:[%s1 + $0x348] sm:$0xff]
    %v140 = vld [vmem:[%s1 + $0x350] sm:$0xff]
    %v141 = vld [vmem:[%s1 + $0x358] sm:$0xff]
    %v142 = vld [vmem:[%s1 + $0x360] sm:$0xff]
    %v143 = vld [vmem:[%s1 + $0x368] sm:$0xff]
    %v144 = vld [vmem:[%s1 + $0x370] sm:$0xff]
    %v145 = vld [vmem:[%s1 + $0x378] sm:$0xff]
    %v146 = vld [vmem:[%s1 + $0x380] sm:$0xff]
    %v147 = vld [vmem:[%s1 + $0x388] sm:$0xff]
    %v148 = vld [vmem:[%s1 + $0x390] sm:$0xff]
    %v149 = vld [vmem:[%s1 + $0x398] sm:$0xff]
    %v150 = vld [vmem:[%s1 + $0x3a0] sm:$0xff]
    %v151 = vld [vmem:[%s1 + $0x3a8] sm:$0xff]
    %v152 = vld [vmem:[%s1 + $0x3b0] sm:$0xff]
    %v153 = vld [vmem:[%s1 + $0x3b8] sm:$0xff]
    %v154 = vld [vmem:[%s1 + $0x3c0] sm:$0xff]
    %v155 = vld [vmem:[%s1 + $0x3c8] sm:$0xff]
    %v156 = vld [vmem:[%s1 + $0x3d0] sm:$0xff]
    %v157 = vld [vmem:[%s1 + $0x3d8] sm:$0xff]
    %v158 = vld [vmem:[%s1 + $0x3e0] sm:$0xff]
    %v159 = vld [vmem:[%s1 + $0x3e8] sm:$0xff]
    %v160 = vld [vmem:[%s1 + $0x3f0] sm:$0xff]
    %v161 = vld [vmem:[%s1 + $0x3f8] sm:$0xff]
    %v162 = vld [vmem:[%s1 + $0x400] sm:$0xff]
    %v163 = vld [vmem:[%s1 + $0x408] sm:$0xff]
    %v164 = vld [vmem:[%s1 + $0x410] sm:$0xff]
    %v165 = vld [vmem:[%s1 + $0x418] sm:$0xff]
    %v166 = vld [vmem:[%s1 + $0x420] sm:$0xff]
    %v167 = vld [vmem:[%s1 + $0x428] sm:$0xff]
    %v168 = vld [vmem:[%s1 + $0x430] sm:$0xff]
    %v169 = vld [vmem:[%s1 + $0x438] sm:$0xff]
    %v170 = vld [vmem:[%s1 + $0x440] sm:$0xff]
    %v171 = vld [vmem:[%s1 + $0x448] sm:$0xff]
    %v172 = vld [vmem:[%s1 + $0x450] sm:$0xff]
    %v173 = vld [vmem:[%s1 + $0x458] sm:$0xff]
    %v174 = vld [vmem:[%s1 + $0x460] sm:$0xff]
    %v175 = vld [vmem:[%s1 + $0x468] sm:$0xff]
    %v176 = vld [vmem:[%s1 + $0x470] sm:$0xff]
    %v177 = vld [vmem:[%s1 + $0x478] sm:$0xff]
    %v178 = vld [vmem:[%s1 + $0x480] sm:$0xff]
    %v179 = vld [vmem:[%s1 + $0x488] sm:$0xff]
    %v180 = vld [vmem:[%s1 + $0x490] sm:$0xff]
    %v181 = vld [vmem:[%s1 + $0x498] sm:$0xff]
    %v182 = vld [vmem:[%s1 + $0x4a0] sm:$0xff]
    %v183 = vld [vmem:[%s1 + $0x4a8] sm:$0xff]
    %v184 = vld [vmem:[%s1 + $0x4b0] sm:$0xff]
    %v185 = vld [vmem:[%s1 + $0x4b8] sm:$0xff]
    %v186 = vld [vmem:[%s1 + $0x4c0] sm:$0xff]
    %v187 = vld [vmem:[%s1 + $0x4c8] sm:$0xff]
    %v188 = vld [vmem:[%s1 + $0x4d0] sm:$0xff]
    %v189 = vld [vmem:[%s1 + $0x4d8] sm:$0xff]
    %v190 = vld [vmem:[%s1 + $0x4e0] sm:$0xff]
    %v191 = vld [vmem:[%s1 + $0x4e8] sm:$0xff]
    %v192 = vld [vmem:[%s1 + $0x4f0] sm:$0xff]
    %v193 = vld [vmem:[%s1 + $0x4f8] sm:$0xff]
    %v194 = vld [vmem:[%s1 + $0x500] sm:$0xff]
    %v195 = vld [vmem:[%s1 + $0x508] sm:$0xff]
    %v196 = vld [vmem:[%s1 + $0x510] sm:$0xff]
    %v197 = vld [vmem:[%s1 + $0x518] sm:$0xff]
    %v198 = vld [vmem:[%s1 + $0x520] sm:$0xff]
    %v199 = vld [vmem:[%s1 + $0x528] sm:$0xff]
    %v200 = vld [vmem:[%s1 + $0x530] sm:$0xff]
    %v201 = vld [vmem:[%s1 + $0x538] sm:$0xff]
    %v202 = vld [vmem:[%s1 + $0x540] sm:$0xff]
    %v203 = vld [vmem:[%s1 + $0x548] sm:$0xff]
    %v204 = vld [vmem:[%s1 + $0x550] sm:$0xff]
    %v205 = vld [vmem:[%s1 + $0x558] sm:$0xff]
    %v206 = vld [vmem:[%s1 + $0x560] sm:$0xff]
    %v207 = vld [vmem:[%s1 + $0x568] sm:$0xff]
    %v208 = vld [vmem:[%s1 + $0x570] sm:$0xff]
    %v209 = vld [vmem:[%s1 + $0x578] sm:$0xff]
    %v210 = vld [vmem:[%s1 + $0x580] sm:$0xff]
    %v211 = vld [vmem:[%s1 + $0x588] sm:$0xff]
    %v212 = vld [vmem:[%s1 + $0x590] sm:$0xff]
    %v213 = vld [vmem:[%s1 + $0x598] sm:$0xff]
    %v214 = vld [vmem:[%s1 + $0x5a0] sm:$0xff]
    %v215 = vld [vmem:[%s1 + $0x5a8] sm:$0xff]
    %v216 = vld [vmem:[%s1 + $0x5b0] sm:$0xff]
    %v217 = vld [vmem:[%s1 + $0x5b8] sm:$0xff]
    %v218 = vld [vmem:[%s1 + $0x5c0] sm:$0xff]
    %v219 = vld [vmem:[%s1 + $0x5c8] sm:$0xff]
    %v220 = vld [vmem:[%s1 + $0x5d0] sm:$0xff]
    %v221 = vld [vmem:[%s1 + $0x5d8] sm:$0xff]
    %v222 = vld [vmem:[%s1 + $0x5e0] sm:$0xff]
    %v223 = vld [vmem:[%s1 + $0x5e8] sm:$0xff]
    %v224 = vld [vmem:[%s1 + $0x5f0] sm:$0xff]
    %v225 = vld [vmem:[%s1 + $0x5f8] sm:$0xff]
    %v226 = vld [vmem:[%s1 + $0x600] sm:$0xff]
    %v227 = vld [vmem:[%s1 + $0x608] sm:$0xff]
    %v228 = vld [vmem:[%s1 + $0x610] sm:$0xff]
    %v229 = vld [vmem:[%s1 + $0x618] sm:$0xff]
    %v230 = vld [vmem:[%s1 + $0x620] sm:$0xff]
    %v231 = vld [vmem:[%s1 + $0x628] sm:$0xff]
    %v232 = vld [vmem:[%s1 + $0x630] sm:$0xff]
    %v233 = vld [vmem:[%s1 + $0x638] sm:$0xff]
    %v234 = vld [vmem:[%s1 + $0x640] sm:$0xff]
    %v235 = vld [vmem:[%s1 + $0x648] sm:$0xff]
    %v236 = vld [vmem:[%s1 + $0x650] sm:$0xff]
    %v237 = vld [vmem:[%s1 + $0x658] sm:$0xff]
    %v238 = vld [vmem:[%s1 + $0x660] sm:$0xff]
    %v239 = vld [vmem:[%s1 + $0x668] sm:$0xff]
    %v240 = vld [vmem:[%s1 + $0x670] sm:$0xff]
    %v241 = vld [vmem:[%s1 + $0x678] sm:$0xff]
    %v242 = vld [vmem:[%s1 + $0x680] sm:$0xff]
    %v243 = vld [vmem:[%s1 + $0x688] sm:$0xff]
    %v244 = vld [vmem:[%s1 + $0x690] sm:$0xff]
    %v245 = vld [vmem:[%s1 + $0x698] sm:$0xff]
    %v246 = vld [vmem:[%s1 + $0x6a0] sm:$0xff]
    %v247 = vld [vmem:[%s1 + $0x6a8] sm:$0xff]
    %v248 = vld [vmem:[%s1 + $0x6b0] sm:$0xff]
    %v249 = vld [vmem:[%s1 + $0x6b8] sm:$0xff]
    %v250 = vld [vmem:[%s1 + $0x6c0] sm:$0xff]
    %v251 = vld [vmem:[%s1 + $0x6c8] sm:$0xff]
    %v252 = vld [vmem:[%s1 + $0x6d0] sm:$0xff]
    %v253 = vld [vmem:[%s1 + $0x6d8] sm:$0xff]
    %v254 = vld [vmem:[%s1 + $0x6e0] sm:$0xff]
    %v255 = vld [vmem:[%s1 + $0x6e8] sm:$0xff]
    %v256 = vld [vmem:[%s1 + $0x6f0] sm:$0xff]
    %v257 = vld [vmem:[%s1 + $0x6f8] sm:$0xff]
    %v258 = vld [vmem:[%s1 + $0x700] sm:$0xff]
    %v259 = vld [vmem:[%s1 + $0x708] sm:$0xff]
    %v260 = vld [vmem:[%s1 + $0x710] sm:$0xff]
    %v261 = vld [vmem:[%s1 + $0x718] sm:$0xff]
    %v262 = vld [vmem:[%s1 + $0x720] sm:$0xff]
    %v263 = vld [vmem:[%s1 + $0x728] sm:$0xff]
    %v264 = vld [vmem:[%s1 + $0x730] sm:$0xff]
    %v265 = vld [vmem:[%s1 + $0x738] sm:$0xff]
    %v266 = vld [vmem:[%s1 + $0x740] sm:$0xff]
    %v267 = vld [vmem:[%s1 + $0x748] sm:$0xff]
    %v268 = vld [vmem:[%s1 + $0x750] sm:$0xff]
    %v269 = vld [vmem:[%s1 + $0x758] sm:$0xff]
    %v270 = vld [vmem:[%s1 + $0x760] sm:$0xff]
    %v271 = vld [vmem:[%s1 + $0x768] sm:$0xff]
    %v272 = vld [vmem:[%s1 + $0x770] sm:$0xff]
    %v273 = vld [vmem:[%s1 + $0x778] sm:$0xff]
    %v274 = vld [vmem:[%s1 + $0x780] sm:$0xff]
    %v275 = vld [vmem:[%s1 + $0x788] sm:$0xff]
    %v276 = vld [vmem:[%s1 + $0x790] sm:$0xff]
    %v277 = vld [vmem:[%s1 + $0x798] sm:$0xff]
    %v278 = vld [vmem:[%s1 + $0x7a0] sm:$0xff]
    %v279 = vld [vmem:[%s1 + $0x7a8] sm:$0xff]
    %v280 = vld [vmem:[%s1 + $0x7b0] sm:$0xff]
    %v281 = vld [vmem:[%s1 + $0x7b8] sm:$0xff]
    %v282 = vld [vmem:[%s1 + $0x7c0] sm:$0xff]
    %v283 = vld [vmem:[%s1 + $0x7c8] sm:$0xff]
    %v284 = vld [vmem:[%s1 + $0x7d0] sm:$0xff]
    %v285 = vld [vmem:[%s1 + $0x7d8] sm:$0xff]
    %v286 = vld [vmem:[%s1 + $0x7e0] sm:$0xff]
    %v287 = vld [vmem:[%s1 + $0x7e8] sm:$0xff]
    %v288 = vld [vmem:[%s1 + $0x7f0] sm:$0xff]
    %v289 = vld [vmem:[%s1 + $0x7f8] sm:$0xff]
    %v290 = vld [vmem:[%s1 + $0x800] sm:$0xff]
    %v291 = vld [vmem:[%s1 + $0x808] sm:$0xff]
    %v292 = vld [vmem:[%s1 + $0x810] sm:$0xff]
    %v293 = vld [vmem:[%s1 + $0x818] sm:$0xff]
    %v294 = vld [vmem:[%s1 + $0x820] sm:$0xff]
    %v295 = vld [vmem:[%s1 + $0x828] sm:$0xff]
    %v296 = vld [vmem:[%s1 + $0x830] sm:$0xff]
    %v297 = vld [vmem:[%s1 + $0x838] sm:$0xff]
    %v298 = vld [vmem:[%s1 + $0x840] sm:$0xff]
    %v299 = vld [vmem:[%s1 + $0x848] sm:$0xff]
    %v300 = vld [vmem:[%s1 + $0x850] sm:$0xff]
    %v301 = vld [vmem:[%s1 + $0x858] sm:$0xff]
    %v302 = vld [vmem:[%s1 + $0x860] sm:$0xff]
    %v303 = vld [vmem:[%s1 + $0x868] sm:$0xff]
    %v304 = vld [vmem:[%s1 + $0x870] sm:$0xff]
    %v305 = vld [vmem:[%s1 + $0x878] sm:$0xff]
    %v306 = vld [vmem:[%s1 + $0x880] sm:$0xff]
    %v307 = vld [vmem:[%s1 + $0x888] sm:$0xff]
    %v308 = vld [vmem:[%s1 + $0x890] sm:$0xff]
    %v309 = vld [vmem:[%s1 + $0x898] sm:$0xff]
    %v310 = vld [vmem:[%s1 + $0x8a0] sm:$0xff]
    %v311 = vld [vmem:[%s1 + $0x8a8] sm:$0xff]
    %v312 = vld [vmem:[%s1 + $0x8b0] sm:$0xff]
    %v313 = vld [vmem:[%s1 + $0x8b8] sm:$0xff]
    %v314 = vld [vmem:[%s1 + $0x8c0] sm:$0xff]
    %v315 = vld [vmem:[%s1 + $0x8c8] sm:$0xff]
    %v316 = vld [vmem:[%s1 + $0x8d0] sm:$0xff]
    %v317 = vld [vmem:[%s1 + $0x8d8] sm:$0xff]
    %v318 = vld [vmem:[%s1 + $0x8e0] sm:$0xff]
    %v319 = vld [vmem:[%s1 + $0x8e8] sm:$0xff]
    %v320 = vld [vmem:[%s1 + $0x8f0] sm:$0xff]
    %v321 = vld [vmem:[%s1 + $0x8f8] sm:$0xff]
    %v322 = vld [vmem:[%s1 + $0x900] sm:$0xff]
    %v323 = vld [vmem:[%s1 + $0x908] sm:$0xff]
    %v324 = vld [vmem:[%s1 + $0x910] sm:$0xff]
    %v325 = vld [vmem:[%s1 + $0x918] sm:$0xff]
    %v326 = vld [vmem:[%s1 + $0x920] sm:$0xff]
    %v327 = vld [vmem:[%s1 + $0x928] sm:$0xff]
    %v328 = vld [vmem:[%s1 + $0x930] sm:$0xff]
    %v329 = vld [vmem:[%s1 + $0x938] sm:$0xff]
    %v330 = vld [vmem:[%s1 + $0x940] sm:$0xff]
    %v331 = vld [vmem:[%s1 + $0x948] sm:$0xff]
    %v332 = vld [vmem:[%s1 + $0x950] sm:$0xff]
    %v333 = vld [vmem:[%s1 + $0x958] sm:$0xff]
    %v334 = vld [vmem:[%s1 + $0x960] sm:$0xff]
    %v335 = vld [vmem:[%s1 + $0x968] sm:$0xff]
    %v336 = vld [vmem:[%s1 + $0x970] sm:$0xff]
    %v337 = vld [vmem:[%s1 + $0x978] sm:$0xff]
    %v338 = vld [vmem:[%s1 + $0x980] sm:$0xff]
    %v339 = vld [vmem:[%s1 + $0x988] sm:$0xff]
    %v340 = vld [vmem:[%s1 + $0x990] sm:$0xff]
    %v341 = vld [vmem:[%s1 + $0x998] sm:$0xff]
    %v342 = vld [vmem:[%s1 + $0x9a0] sm:$0xff]
    %v343 = vld [vmem:[%s1 + $0x9a8] sm:$0xff]
    %v344 = vld [vmem:[%s1 + $0x9b0] sm:$0xff]
    %v345 = vld [vmem:[%s1 + $0x9b8] sm:$0xff]
    %v346 = vld [vmem:[%s1 + $0x9c0] sm:$0xff]
    %v347 = vld [vmem:[%s1 + $0x9c8] sm:$0xff]
    %v348 = vld [vmem:[%s1 + $0x9d0] sm:$0xff]
    %v349 = vld [vmem:[%s1 + $0x9d8] sm:$0xff]
    %v350 = vld [vmem:[%s1 + $0x9e0] sm:$0xff]
    %v351 = vld [vmem:[%s1 + $0x9e8] sm:$0xff]
    %v352 = vld [vmem:[%s1 + $0x9f0] sm:$0xff]
    %v353 = vld [vmem:[%s1 + $0x9f8] sm:$0xff]
    %v354 = vld [vmem:[%s1 + $0xa00] sm:$0xff]
    %v355 = vld [vmem:[%s1 + $0xa08] sm:$0xff]
    %v356 = vld [vmem:[%s1 + $0xa10] sm:$0xff]
    %v357 = vld [vmem:[%s1 + $0xa18] sm:$0xff]
    %v358 = vld [vmem:[%s1 + $0xa20] sm:$0xff]
    %v359 = vld [vmem:[%s1 + $0xa28] sm:$0xff]
    %v360 = vld [vmem:[%s1 + $0xa30] sm:$0xff]
    %v361 = vld [vmem:[%s1 + $0xa38] sm:$0xff]
    %v362 = vld [vmem:[%s1 + $0xa40] sm:$0xff]
    %v363 = vld [vmem:[%s1 + $0xa48] sm:$0xff]
    %v364 = vld [vmem:[%s1 + $0xa50] sm:$0xff]
    %v365 = vld [vmem:[%s1 + $0xa58] sm:$0xff]
    %v366 = vld [vmem:[%s1 + $0xa60] sm:$0xff]
    %v367 = vld [vmem:[%s1 + $0xa68] sm:$0xff]
    %v368 = vld [vmem:[%s1 + $0xa70] sm:$0xff]
    %v369 = vld [vmem:[%s1 + $0xa78] sm:$0xff]
    %v370 = vld [vmem:[%s1 + $0xa80] sm:$0xff]
    %v371 = vld [vmem:[%s1 + $0xa88] sm:$0xff]
    %v372 = vld [vmem:[%s1 + $0xa90] sm:$0xff]
    %v373 = vld [vmem:[%s1 + $0xa98] sm:$0xff]
    %v374 = vld [vmem:[%s1 + $0xaa0] sm:$0xff]
    %v375 = vld [vmem:[%s1 + $0xaa8] sm:$0xff]
    %v376 = vld [vmem:[%s1 + $0xab0] sm:$0xff]
    %v377 = vld [vmem:[%s1 + $0xab8] sm:$0xff]
    %v378 = vld [vmem:[%s1 + $0xac0] sm:$0xff]
    %v379 = vld [vmem:[%s1 + $0xac8] sm:$0xff]
    %v380 = vld [vmem:[%s1 + $0xad0] sm:$0xff]
    %v381 = vld [vmem:[%s1 + $0xad8] sm:$0xff]
    %v382 = vld [vmem:[%s1 + $0xae0] sm:$0xff]
    %v383 = vld [vmem:[%s1 + $0xae8] sm:$0xff]
    %v384 = vld [vmem:[%s1 + $0xaf0] sm:$0xff]
    %v385 = vld [vmem:[%s1 + $0xaf8] sm:$0xff]
    %v386 = vld [vmem:[%s1 + $0xb00] sm:$0xff]
    %v387 = vld [vmem:[%s1 + $0xb08] sm:$0xff]
    %v388 = vld [vmem:[%s1 + $0xb10] sm:$0xff]
    %v389 = vld [vmem:[%s1 + $0xb18] sm:$0xff]
    %v390 = vld [vmem:[%s1 + $0xb20] sm:$0xff]
    %v391 = vld [vmem:[%s1 + $0xb28] sm:$0xff]
    %v392 = vld [vmem:[%s1 + $0xb30] sm:$0xff]
    %v393 = vld [vmem:[%s1 + $0xb38] sm:$0xff]
    %v394 = vld [vmem:[%s1 + $0xb40] sm:$0xff]
    %v395 = vld [vmem:[%s1 + $0xb48] sm:$0xff]
    %v396 = vld [vmem:[%s1 + $0xb50] sm:$0xff]
    %v397 = vld [vmem:[%s1 + $0xb58] sm:$0xff]
    %v398 = vld [vmem:[%s1 + $0xb60] sm:$0xff]
    %v399 = vld [vmem:[%s1 + $0xb68] sm:$0xff]
    %v400 = vld [vmem:[%s1 + $0xb70] sm:$0xff]
    %v401 = vld [vmem:[%s1 + $0xb78] sm:$0xff]
    %v402 = vld [vmem:[%s1 + $0xb80] sm:$0xff]
    %v403 = vld [vmem:[%s1 + $0xb88] sm:$0xff]
    %v404 = vld [vmem:[%s1 + $0xb90] sm:$0xff]
    %v405 = vld [vmem:[%s1 + $0xb98] sm:$0xff]
    %v406 = vld [vmem:[%s1 + $0xba0] sm:$0xff]
    %v407 = vld [vmem:[%s1 + $0xba8] sm:$0xff]
    %v408 = vld [vmem:[%s1 + $0xbb0] sm:$0xff]
    %v409 = vld [vmem:[%s1 + $0xbb8] sm:$0xff]
    %v410 = vld [vmem:[%s1 + $0xbc0] sm:$0xff]
    %v411 = vld [vmem:[%s1 + $0xbc8] sm:$0xff]
    %v412 = vld [vmem:[%s1 + $0xbd0] sm:$0xff]
    %v413 = vld [vmem:[%s1 + $0xbd8] sm:$0xff]
    %v414 = vld [vmem:[%s1 + $0xbe0] sm:$0xff]
    %v415 = vld [vmem:[%s1 + $0xbe8] sm:$0xff]
    %v416 = vld [vmem:[%s1 + $0xbf0] sm:$0xff]
    %v417 = vld [vmem:[%s1 + $0xbf8] sm:$0xff]
    %v418 = vld [vmem:[%s1 + $0xc00] sm:$0xff]
    %v419 = vld [vmem:[%s1 + $0xc08] sm:$0xff]
    %v420 = vld [vmem:[%s1 + $0xc10] sm:$0xff]
    %v421 = vld [vmem:[%s1 + $0xc18] sm:$0xff]
    %v422 = vld [vmem:[%s1 + $0xc20] sm:$0xff]
    %v423 = vld [vmem:[%s1 + $0xc28] sm:$0xff]
    %v424 = vld [vmem:[%s1 + $0xc30] sm:$0xff]
    %v425 = vld [vmem:[%s1 + $0xc38] sm:$0xff]
    %v426 = vld [vmem:[%s1 + $0xc40] sm:$0xff]
    %v427 = vld [vmem:[%s1 + $0xc48] sm:$0xff]
    %v428 = vld [vmem:[%s1 + $0xc50] sm:$0xff]
    %v429 = vld [vmem:[%s1 + $0xc58] sm:$0xff]
    %v430 = vld [vmem:[%s1 + $0xc60] sm:$0xff]
    %v431 = vld [vmem:[%s1 + $0xc68] sm:$0xff]
    %v432 = vld [vmem:[%s1 + $0xc70] sm:$0xff]
    %v433 = vld [vmem:[%s1 + $0xc78] sm:$0xff]
    %v434 = vld [vmem:[%s2] sm:$0x1]
    %v436 = vlaneseq
    %v437 = vshrl.u32 %v436, 7
    %v438 = vsub.s32 0, %v437
    %v439 = vrot.slane %v434, %v438
    %v448 = vcombine.high %v27, %v27
    %v450 = vunpack.c.l.s4 1983009808
    %v451 = vunpack.c.0.s8 %v450
    %v452 = vlaneseq
    %v453 = vshrl.u32 %v452, 7
    %v454 = vsub.s32 %v451, %v453
    %v455 = vrot.slane %v27, %v454
    %v457 = vunpack.c.l.s4 1983009808
    %v458 = vunpack.c.0.s8 %v457
    %v459 = vlaneseq
    %v460 = vshrl.u32 %v459, 7
    %v461 = vsub.s32 %v458, %v460
    %v462 = vrot.slane %v448, %v461
    %v463 = vcombine.high %v455, %v455
    %v464 = vcombine.high %v462, %v462
    %v465 = vcombine.high %v28, %v28
    %v467 = vunpack.c.l.s4 1983009808
    %v468 = vunpack.c.0.s8 %v467
    %v469 = vlaneseq
    %v470 = vshrl.u32 %v469, 7
    %v471 = vsub.s32 %v468, %v470
    %v472 = vrot.slane %v28, %v471
    %v474 = vunpack.c.l.s4 1983009808
    %v475 = vunpack.c.0.s8 %v474
    %v476 = vlaneseq
    %v477 = vshrl.u32 %v476, 7
    %v478 = vsub.s32 %v475, %v477
    %v479 = vrot.slane %v465, %v478
    %v480 = vcombine.high %v472, %v472
    %v481 = vcombine.high %v479, %v479
    %v482 = vcombine.high %v29, %v29
    %v484 = vunpack.c.l.s4 1983009808
    %v485 = vunpack.c.0.s8 %v484
    %v486 = vlaneseq
    %v487 = vshrl.u32 %v486, 7
    %v488 = vsub.s32 %v485, %v487
    %v489 = vrot.slane %v29, %v488
    %v491 = vunpack.c.l.s4 1983009808
    %v492 = vunpack.c.0.s8 %v491
    %v493 = vlaneseq
    %v494 = vshrl.u32 %v493, 7
    %v495 = vsub.s32 %v492, %v494
    %v496 = vrot.slane %v482, %v495
    %v497 = vcombine.high %v489, %v489
    %v498 = vcombine.high %v496, %v496
    %v499 = vcombine.high %v30, %v30
    %v501 = vunpack.c.l.s4 1983009808
    %v502 = vunpack.c.0.s8 %v501
    %v503 = vlaneseq
    %v504 = vshrl.u32 %v503, 7
    %v505 = vsub.s32 %v502, %v504
    %v506 = vrot.slane %v30, %v505
    %v508 = vunpack.c.l.s4 1983009808
    %v509 = vunpack.c.0.s8 %v508
    %v510 = vlaneseq
    %v511 = vshrl.u32 %v510, 7
    %v512 = vsub.s32 %v509, %v511
    %v513 = vrot.slane %v499, %v512
    %v514 = vcombine.high %v506, %v506
    %v515 = vcombine.high %v513, %v513
    %v516 = vcombine.high %v31, %v31
    %v518 = vunpack.c.l.s4 1983009808
    %v519 = vunpack.c.0.s8 %v518
    %v520 = vlaneseq
    %v521 = vshrl.u32 %v520, 7
    %v522 = vsub.s32 %v519, %v521
    %v523 = vrot.slane %v31, %v522
    %v525 = vunpack.c.l.s4 1983009808
    %v526 = vunpack.c.0.s8 %v525
    %v527 = vlaneseq
    %v528 = vshrl.u32 %v527, 7
    %v529 = vsub.s32 %v526, %v528
    %v530 = vrot.slane %v516, %v529
    %v531 = vcombine.high %v523, %v523
    %v532 = vcombine.high %v530, %v530
    %v533 = vcombine.high %v32, %v32
    %v535 = vunpack.c.l.s4 1983009808
    %v536 = vunpack.c.0.s8 %v535
    %v537 = vlaneseq
    %v538 = vshrl.u32 %v537, 7
    %v539 = vsub.s32 %v536, %v538
    %v540 = vrot.slane %v32, %v539
    %v542 = vunpack.c.l.s4 1983009808
    %v543 = vunpack.c.0.s8 %v542
    %v544 = vlaneseq
    %v545 = vshrl.u32 %v544, 7
    %v546 = vsub.s32 %v543, %v545
    %v547 = vrot.slane %v533, %v546
    %v548 = vcombine.high %v540, %v540
    %v549 = vcombine.high %v547, %v547
    %v551 = vunpack.c.l.s4 1983009808
    %v552 = vunpack.c.0.s8 %v551
    %v553 = vlaneseq
    %v554 = vshrl.u32 %v553, 7
    %v555 = vsub.s32 %v552, %v554
    %v556 = vrot.slane %v33, %v555
    %582 = vmatprep.subr.mxu0 0.0
    %583 = vmatpush1.msra.mxu0 %v49
    %584 = vmatprep.subr.mxu0 0.0
    %585 = vmatpush1.msra.mxu0 %v48
    %586 = vmatprep.subr.mxu0 0.0
    %587 = vmatpush1.msra.mxu0 %v47
    %588 = vmatprep.subr.mxu0 0.0
    %589 = vmatpush1.msra.mxu0 %v46
    %590 = vmatprep.subr.mxu0 0.0
    %591 = vmatpush1.msra.mxu0 %v45
    %592 = vmatprep.subr.mxu0 0.0
    %593 = vmatpush1.msra.mxu0 %v44
    %594 = vmatprep.subr.mxu0 0.0
    %595 = vmatpush1.msra.mxu0 %v43
    %596 = vmatprep.subr.mxu0 0.0
    %597 = vmatpush1.msra.mxu0 %v42
    %598 = vmatprep.subr.mxu0 0.0
    %599 = vmatpush1.msra.mxu0 %v41
    %600 = vmatprep.subr.mxu0 0.0
    %601 = vmatpush1.msra.mxu0 %v40
    %602 = vmatprep.subr.mxu0 0.0
    %603 = vmatpush1.msra.mxu0 %v39
    %604 = vmatprep.subr.mxu0 0.0
    %605 = vmatpush1.msra.mxu0 %v38
    %606 = vmatprep.subr.mxu0 0.0
    %607 = vmatpush1.msra.mxu0 %v37
    %608 = vmatprep.subr.mxu0 0.0
    %609 = vmatpush1.msra.mxu0 %v36
    %610 = vmatprep.subr.mxu0 0.0
    %611 = vmatpush1.msra.mxu0 %v35
    %612 = vmatprep.subr.mxu0 0.0
    %613 = vmatpush1.msra.mxu0 %v34
    %614 = vmatprep.subr.mxu0 0.0
    %615 = vmatpush2.msra.mxu0 %v65
    %616 = vmatprep.subr.mxu0 0.0
    %617 = vmatpush2.msra.mxu0 %v64
    %618 = vmatprep.subr.mxu0 0.0
    %619 = vmatpush2.msra.mxu0 %v63
    %620 = vmatprep.subr.mxu0 0.0
    %621 = vmatpush2.msra.mxu0 %v62
    %622 = vmatprep.subr.mxu0 0.0
    %623 = vmatpush2.msra.mxu0 %v61
    %624 = vmatprep.subr.mxu0 0.0
    %625 = vmatpush2.msra.mxu0 %v60
    %626 = vmatprep.subr.mxu0 0.0
    %627 = vmatpush2.msra.mxu0 %v59
    %628 = vmatprep.subr.mxu0 0.0
    %629 = vmatpush2.msra.mxu0 %v58
    %630 = vmatprep.subr.mxu0 0.0
    %631 = vmatpush2.msra.mxu0 %v57
    %632 = vmatprep.subr.mxu0 0.0
    %633 = vmatpush2.msra.mxu0 %v56
    %634 = vmatprep.subr.mxu0 0.0
    %635 = vmatpush2.msra.mxu0 %v55
    %636 = vmatprep.subr.mxu0 0.0
    %637 = vmatpush2.msra.mxu0 %v54
    %638 = vmatprep.subr.mxu0 0.0
    %639 = vmatpush2.msra.mxu0 %v53
    %640 = vmatprep.subr.mxu0 0.0
    %641 = vmatpush2.msra.mxu0 %v52
    %642 = vmatprep.subr.mxu0 0.0
    %643 = vmatpush2.msra.mxu0 %v51
    %644 = vmatprep.subr.mxu0 0.0
    %645 = vmatpush2.msra.mxu0 %v50
    %646 = vmatprep.mubr.f32.mxu0 %v463
    %647 = vmatmul.mubr.f32.gmra.mxu0 %v455
    %v648 = vpop.f32.mrf.mxu0
    %v649 = vadd.f32 %v439, %v648
    %v650 = vpop.f32.mrf.mxu0
    %651 = vdwg.mxu0
    %652 = vmatprep.subr.mxu0 0.0
    %653 = vmatpush1.msra.mxu0 %v81
    %654 = vmatprep.subr.mxu0 0.0
    %655 = vmatpush1.msra.mxu0 %v80
    %656 = vmatprep.subr.mxu0 0.0
    %657 = vmatpush1.msra.mxu0 %v79
    %658 = vmatprep.subr.mxu0 0.0
    %659 = vmatpush1.msra.mxu0 %v78
    %660 = vmatprep.subr.mxu0 0.0
    %661 = vmatpush1.msra.mxu0 %v77
    %662 = vmatprep.subr.mxu0 0.0
    %663 = vmatpush1.msra.mxu0 %v76
    %664 = vmatprep.subr.mxu0 0.0
    %665 = vmatpush1.msra.mxu0 %v75
    %666 = vmatprep.subr.mxu0 0.0
    %667 = vmatpush1.msra.mxu0 %v74
    %668 = vmatprep.subr.mxu0 0.0
    %669 = vmatpush1.msra.mxu0 %v73
    %670 = vmatprep.subr.mxu0 0.0
    %671 = vmatpush1.msra.mxu0 %v72
    %672 = vmatprep.subr.mxu0 0.0
    %673 = vmatpush1.msra.mxu0 %v71
    %674 = vmatprep.subr.mxu0 0.0
    %675 = vmatpush1.msra.mxu0 %v70
    %676 = vmatprep.subr.mxu0 0.0
    %677 = vmatpush1.msra.mxu0 %v69
    %678 = vmatprep.subr.mxu0 0.0
    %679 = vmatpush1.msra.mxu0 %v68
    %680 = vmatprep.subr.mxu0 0.0
    %681 = vmatpush1.msra.mxu0 %v67
    %682 = vmatprep.subr.mxu0 0.0
    %683 = vmatpush1.msra.mxu0 %v66
    %684 = vmatprep.subr.mxu0 0.0
    %685 = vmatpush2.msra.mxu0 %v97
    %686 = vmatprep.subr.mxu0 0.0
    %687 = vmatpush2.msra.mxu0 %v96
    %688 = vmatprep.subr.mxu0 0.0
    %689 = vmatpush2.msra.mxu0 %v95
    %690 = vmatprep.subr.mxu0 0.0
    %691 = vmatpush2.msra.mxu0 %v94
    %692 = vmatprep.subr.mxu0 0.0
    %693 = vmatpush2.msra.mxu0 %v93
    %694 = vmatprep.subr.mxu0 0.0
    %695 = vmatpush2.msra.mxu0 %v92
    %696 = vmatprep.subr.mxu0 0.0
    %697 = vmatpush2.msra.mxu0 %v91
    %698 = vmatprep.subr.mxu0 0.0
    %699 = vmatpush2.msra.mxu0 %v90
    %700 = vmatprep.subr.mxu0 0.0
    %701 = vmatpush2.msra.mxu0 %v89
    %702 = vmatprep.subr.mxu0 0.0
    %703 = vmatpush2.msra.mxu0 %v88
    %704 = vmatprep.subr.mxu0 0.0
    %705 = vmatpush2.msra.mxu0 %v87
    %706 = vmatprep.subr.mxu0 0.0
    %707 = vmatpush2.msra.mxu0 %v86
    %708 = vmatprep.subr.mxu0 0.0
    %709 = vmatpush2.msra.mxu0 %v85
    %710 = vmatprep.subr.mxu0 0.0
    %711 = vmatpush2.msra.mxu0 %v84
    %712 = vmatprep.subr.mxu0 0.0
    %713 = vmatpush2.msra.mxu0 %v83
    %714 = vmatprep.subr.mxu0 0.0
    %715 = vmatpush2.msra.mxu0 %v82
    %716 = vmatprep.mubr.f32.mxu0 %v464
    %717 = vmatmul.mubr.f32.gmra.mxu0 %v462
    %v718 = vpop.f32.mrf.mxu0
    %v719 = vadd.f32 %v649, %v718
    %v720 = vpop.f32.mrf.mxu0
    %721 = vdwg.mxu0
    %722 = vmatprep.subr.mxu0 0.0
    %723 = vmatpush1.msra.mxu0 %v113
    %724 = vmatprep.subr.mxu0 0.0
    %725 = vmatpush1.msra.mxu0 %v112
    %726 = vmatprep.subr.mxu0 0.0
    %727 = vmatpush1.msra.mxu0 %v111
    %728 = vmatprep.subr.mxu0 0.0
    %729 = vmatpush1.msra.mxu0 %v110
    %730 = vmatprep.subr.mxu0 0.0
    %731 = vmatpush1.msra.mxu0 %v109
    %732 = vmatprep.subr.mxu0 0.0
    %733 = vmatpush1.msra.mxu0 %v108
    %734 = vmatprep.subr.mxu0 0.0
    %735 = vmatpush1.msra.mxu0 %v107
    %736 = vmatprep.subr.mxu0 0.0
    %737 = vmatpush1.msra.mxu0 %v106
    %738 = vmatprep.subr.mxu0 0.0
    %739 = vmatpush1.msra.mxu0 %v105
    %740 = vmatprep.subr.mxu0 0.0
    %741 = vmatpush1.msra.mxu0 %v104
    %742 = vmatprep.subr.mxu0 0.0
    %743 = vmatpush1.msra.mxu0 %v103
    %744 = vmatprep.subr.mxu0 0.0
    %745 = vmatpush1.msra.mxu0 %v102
    %746 = vmatprep.subr.mxu0 0.0
    %747 = vmatpush1.msra.mxu0 %v101
    %748 = vmatprep.subr.mxu0 0.0
    %749 = vmatpush1.msra.mxu0 %v100
    %750 = vmatprep.subr.mxu0 0.0
    %751 = vmatpush1.msra.mxu0 %v99
    %752 = vmatprep.subr.mxu0 0.0
    %753 = vmatpush1.msra.mxu0 %v98
    %754 = vmatprep.subr.mxu0 0.0
    %755 = vmatpush2.msra.mxu0 %v129
    %756 = vmatprep.subr.mxu0 0.0
    %757 = vmatpush2.msra.mxu0 %v128
    %758 = vmatprep.subr.mxu0 0.0
    %759 = vmatpush2.msra.mxu0 %v127
    %760 = vmatprep.subr.mxu0 0.0
    %761 = vmatpush2.msra.mxu0 %v126
    %762 = vmatprep.subr.mxu0 0.0
    %763 = vmatpush2.msra.mxu0 %v125
    %764 = vmatprep.subr.mxu0 0.0
    %765 = vmatpush2.msra.mxu0 %v124
    %766 = vmatprep.subr.mxu0 0.0
    %767 = vmatpush2.msra.mxu0 %v123
    %768 = vmatprep.subr.mxu0 0.0
    %769 = vmatpush2.msra.mxu0 %v122
    %770 = vmatprep.subr.mxu0 0.0
    %771 = vmatpush2.msra.mxu0 %v121
    %772 = vmatprep.subr.mxu0 0.0
    %773 = vmatpush2.msra.mxu0 %v120
    %774 = vmatprep.subr.mxu0 0.0
    %775 = vmatpush2.msra.mxu0 %v119
    %776 = vmatprep.subr.mxu0 0.0
    %777 = vmatpush2.msra.mxu0 %v118
    %778 = vmatprep.subr.mxu0 0.0
    %779 = vmatpush2.msra.mxu0 %v117
    %780 = vmatprep.subr.mxu0 0.0
    %781 = vmatpush2.msra.mxu0 %v116
    %782 = vmatprep.subr.mxu0 0.0
    %783 = vmatpush2.msra.mxu0 %v115
    %784 = vmatprep.subr.mxu0 0.0
    %785 = vmatpush2.msra.mxu0 %v114
    %786 = vmatprep.mubr.f32.mxu0 %v480
    %787 = vmatmul.mubr.f32.gmra.mxu0 %v472
    %v788 = vpop.f32.mrf.mxu0
    %v789 = vadd.f32 %v719, %v788
    %v790 = vpop.f32.mrf.mxu0
    %791 = vdwg.mxu0
    %792 = vmatprep.subr.mxu0 0.0
    %793 = vmatpush1.msra.mxu0 %v145
    %794 = vmatprep.subr.mxu0 0.0
    %795 = vmatpush1.msra.mxu0 %v144
    %796 = vmatprep.subr.mxu0 0.0
    %797 = vmatpush1.msra.mxu0 %v143
    %798 = vmatprep.subr.mxu0 0.0
    %799 = vmatpush1.msra.mxu0 %v142
    %800 = vmatprep.subr.mxu0 0.0
    %801 = vmatpush1.msra.mxu0 %v141
    %802 = vmatprep.subr.mxu0 0.0
    %803 = vmatpush1.msra.mxu0 %v140
    %804 = vmatprep.subr.mxu0 0.0
    %805 = vmatpush1.msra.mxu0 %v139
    %806 = vmatprep.subr.mxu0 0.0
    %807 = vmatpush1.msra.mxu0 %v138
    %808 = vmatprep.subr.mxu0 0.0
    %809 = vmatpush1.msra.mxu0 %v137
    %810 = vmatprep.subr.mxu0 0.0
    %811 = vmatpush1.msra.mxu0 %v136
    %812 = vmatprep.subr.mxu0 0.0
    %813 = vmatpush1.msra.mxu0 %v135
    %814 = vmatprep.subr.mxu0 0.0
    %815 = vmatpush1.msra.mxu0 %v134
    %816 = vmatprep.subr.mxu0 0.0
    %817 = vmatpush1.msra.mxu0 %v133
    %818 = vmatprep.subr.mxu0 0.0
    %819 = vmatpush1.msra.mxu0 %v132
    %820 = vmatprep.subr.mxu0 0.0
    %821 = vmatpush1.msra.mxu0 %v131
    %822 = vmatprep.subr.mxu0 0.0
    %823 = vmatpush1.msra.mxu0 %v130
    %824 = vmatprep.subr.mxu0 0.0
    %825 = vmatpush2.msra.mxu0 %v161
    %826 = vmatprep.subr.mxu0 0.0
    %827 = vmatpush2.msra.mxu0 %v160
    %828 = vmatprep.subr.mxu0 0.0
    %829 = vmatpush2.msra.mxu0 %v159
    %830 = vmatprep.subr.mxu0 0.0
    %831 = vmatpush2.msra.mxu0 %v158
    %832 = vmatprep.subr.mxu0 0.0
    %833 = vmatpush2.msra.mxu0 %v157
    %834 = vmatprep.subr.mxu0 0.0
    %835 = vmatpush2.msra.mxu0 %v156
    %836 = vmatprep.subr.mxu0 0.0
    %837 = vmatpush2.msra.mxu0 %v155
    %838 = vmatprep.subr.mxu0 0.0
    %839 = vmatpush2.msra.mxu0 %v154
    %840 = vmatprep.subr.mxu0 0.0
    %841 = vmatpush2.msra.mxu0 %v153
    %842 = vmatprep.subr.mxu0 0.0
    %843 = vmatpush2.msra.mxu0 %v152
    %844 = vmatprep.subr.mxu0 0.0
    %845 = vmatpush2.msra.mxu0 %v151
    %846 = vmatprep.subr.mxu0 0.0
    %847 = vmatpush2.msra.mxu0 %v150
    %848 = vmatprep.subr.mxu0 0.0
    %849 = vmatpush2.msra.mxu0 %v149
    %850 = vmatprep.subr.mxu0 0.0
    %851 = vmatpush2.msra.mxu0 %v148
    %852 = vmatprep.subr.mxu0 0.0
    %853 = vmatpush2.msra.mxu0 %v147
    %854 = vmatprep.subr.mxu0 0.0
    %855 = vmatpush2.msra.mxu0 %v146
    %856 = vmatprep.mubr.f32.mxu0 %v481
    %857 = vmatmul.mubr.f32.gmra.mxu0 %v479
    %v858 = vpop.f32.mrf.mxu0
    %v859 = vadd.f32 %v789, %v858
    %v860 = vpop.f32.mrf.mxu0
    %861 = vdwg.mxu0
    %862 = vmatprep.subr.mxu0 0.0
    %863 = vmatpush1.msra.mxu0 %v177
    %864 = vmatprep.subr.mxu0 0.0
    %865 = vmatpush1.msra.mxu0 %v176
    %866 = vmatprep.subr.mxu0 0.0
    %867 = vmatpush1.msra.mxu0 %v175
    %868 = vmatprep.subr.mxu0 0.0
    %869 = vmatpush1.msra.mxu0 %v174
    %870 = vmatprep.subr.mxu0 0.0
    %871 = vmatpush1.msra.mxu0 %v173
    %872 = vmatprep.subr.mxu0 0.0
    %873 = vmatpush1.msra.mxu0 %v172
    %874 = vmatprep.subr.mxu0 0.0
    %875 = vmatpush1.msra.mxu0 %v171
    %876 = vmatprep.subr.mxu0 0.0
    %877 = vmatpush1.msra.mxu0 %v170
    %878 = vmatprep.subr.mxu0 0.0
    %879 = vmatpush1.msra.mxu0 %v169
    %880 = vmatprep.subr.mxu0 0.0
    %881 = vmatpush1.msra.mxu0 %v168
    %882 = vmatprep.subr.mxu0 0.0
    %883 = vmatpush1.msra.mxu0 %v167
    %884 = vmatprep.subr.mxu0 0.0
    %885 = vmatpush1.msra.mxu0 %v166
    %886 = vmatprep.subr.mxu0 0.0
    %887 = vmatpush1.msra.mxu0 %v165
    %888 = vmatprep.subr.mxu0 0.0
    %889 = vmatpush1.msra.mxu0 %v164
    %890 = vmatprep.subr.mxu0 0.0
    %891 = vmatpush1.msra.mxu0 %v163
    %892 = vmatprep.subr.mxu0 0.0
    %893 = vmatpush1.msra.mxu0 %v162
    %894 = vmatprep.subr.mxu0 0.0
    %895 = vmatpush2.msra.mxu0 %v193
    %896 = vmatprep.subr.mxu0 0.0
    %897 = vmatpush2.msra.mxu0 %v192
    %898 = vmatprep.subr.mxu0 0.0
    %899 = vmatpush2.msra.mxu0 %v191
    %900 = vmatprep.subr.mxu0 0.0
    %901 = vmatpush2.msra.mxu0 %v190
    %902 = vmatprep.subr.mxu0 0.0
    %903 = vmatpush2.msra.mxu0 %v189
    %904 = vmatprep.subr.mxu0 0.0
    %905 = vmatpush2.msra.mxu0 %v188
    %906 = vmatprep.subr.mxu0 0.0
    %907 = vmatpush2.msra.mxu0 %v187
    %908 = vmatprep.subr.mxu0 0.0
    %909 = vmatpush2.msra.mxu0 %v186
    %910 = vmatprep.subr.mxu0 0.0
    %911 = vmatpush2.msra.mxu0 %v185
    %912 = vmatprep.subr.mxu0 0.0
    %913 = vmatpush2.msra.mxu0 %v184
    %914 = vmatprep.subr.mxu0 0.0
    %915 = vmatpush2.msra.mxu0 %v183
    %916 = vmatprep.subr.mxu0 0.0
    %917 = vmatpush2.msra.mxu0 %v182
    %918 = vmatprep.subr.mxu0 0.0
    %919 = vmatpush2.msra.mxu0 %v181
    %920 = vmatprep.subr.mxu0 0.0
    %921 = vmatpush2.msra.mxu0 %v180
    %922 = vmatprep.subr.mxu0 0.0
    %923 = vmatpush2.msra.mxu0 %v179
    %924 = vmatprep.subr.mxu0 0.0
    %925 = vmatpush2.msra.mxu0 %v178
    %926 = vmatprep.mubr.f32.mxu0 %v497
    %927 = vmatmul.mubr.f32.gmra.mxu0 %v489
    %v928 = vpop.f32.mrf.mxu0
    %v929 = vadd.f32 %v859, %v928
    %v930 = vpop.f32.mrf.mxu0
    %931 = vdwg.mxu0
    %932 = vmatprep.subr.mxu0 0.0
    %933 = vmatpush1.msra.mxu0 %v209
    %934 = vmatprep.subr.mxu0 0.0
    %935 = vmatpush1.msra.mxu0 %v208
    %936 = vmatprep.subr.mxu0 0.0
    %937 = vmatpush1.msra.mxu0 %v207
    %938 = vmatprep.subr.mxu0 0.0
    %939 = vmatpush1.msra.mxu0 %v206
    %940 = vmatprep.subr.mxu0 0.0
    %941 = vmatpush1.msra.mxu0 %v205
    %942 = vmatprep.subr.mxu0 0.0
    %943 = vmatpush1.msra.mxu0 %v204
    %944 = vmatprep.subr.mxu0 0.0
    %945 = vmatpush1.msra.mxu0 %v203
    %946 = vmatprep.subr.mxu0 0.0
    %947 = vmatpush1.msra.mxu0 %v202
    %948 = vmatprep.subr.mxu0 0.0
    %949 = vmatpush1.msra.mxu0 %v201
    %950 = vmatprep.subr.mxu0 0.0
    %951 = vmatpush1.msra.mxu0 %v200
    %952 = vmatprep.subr.mxu0 0.0
    %953 = vmatpush1.msra.mxu0 %v199
    %954 = vmatprep.subr.mxu0 0.0
    %955 = vmatpush1.msra.mxu0 %v198
    %956 = vmatprep.subr.mxu0 0.0
    %957 = vmatpush1.msra.mxu0 %v197
    %958 = vmatprep.subr.mxu0 0.0
    %959 = vmatpush1.msra.mxu0 %v196
    %960 = vmatprep.subr.mxu0 0.0
    %961 = vmatpush1.msra.mxu0 %v195
    %962 = vmatprep.subr.mxu0 0.0
    %963 = vmatpush1.msra.mxu0 %v194
    %964 = vmatprep.subr.mxu0 0.0
    %965 = vmatpush2.msra.mxu0 %v225
    %966 = vmatprep.subr.mxu0 0.0
    %967 = vmatpush2.msra.mxu0 %v224
    %968 = vmatprep.subr.mxu0 0.0
    %969 = vmatpush2.msra.mxu0 %v223
    %970 = vmatprep.subr.mxu0 0.0
    %971 = vmatpush2.msra.mxu0 %v222
    %972 = vmatprep.subr.mxu0 0.0
    %973 = vmatpush2.msra.mxu0 %v221
    %974 = vmatprep.subr.mxu0 0.0
    %975 = vmatpush2.msra.mxu0 %v220
    %976 = vmatprep.subr.mxu0 0.0
    %977 = vmatpush2.msra.mxu0 %v219
    %978 = vmatprep.subr.mxu0 0.0
    %979 = vmatpush2.msra.mxu0 %v218
    %980 = vmatprep.subr.mxu0 0.0
    %981 = vmatpush2.msra.mxu0 %v217
    %982 = vmatprep.subr.mxu0 0.0
    %983 = vmatpush2.msra.mxu0 %v216
    %984 = vmatprep.subr.mxu0 0.0
    %985 = vmatpush2.msra.mxu0 %v215
    %986 = vmatprep.subr.mxu0 0.0
    %987 = vmatpush2.msra.mxu0 %v214
    %988 = vmatprep.subr.mxu0 0.0
    %989 = vmatpush2.msra.mxu0 %v213
    %990 = vmatprep.subr.mxu0 0.0
    %991 = vmatpush2.msra.mxu0 %v212
    %992 = vmatprep.subr.mxu0 0.0
    %993 = vmatpush2.msra.mxu0 %v211
    %994 = vmatprep.subr.mxu0 0.0
    %995 = vmatpush2.msra.mxu0 %v210
    %996 = vmatprep.mubr.f32.mxu0 %v498
    %997 = vmatmul.mubr.f32.gmra.mxu0 %v496
    %v998 = vpop.f32.mrf.mxu0
    %v999 = vadd.f32 %v929, %v998
    %v1000 = vpop.f32.mrf.mxu0
    %1001 = vdwg.mxu0
    %1002 = vmatprep.subr.mxu0 0.0
    %1003 = vmatpush1.msra.mxu0 %v241
    %1004 = vmatprep.subr.mxu0 0.0
    %1005 = vmatpush1.msra.mxu0 %v240
    %1006 = vmatprep.subr.mxu0 0.0
    %1007 = vmatpush1.msra.mxu0 %v239
    %1008 = vmatprep.subr.mxu0 0.0
    %1009 = vmatpush1.msra.mxu0 %v238
    %1010 = vmatprep.subr.mxu0 0.0
    %1011 = vmatpush1.msra.mxu0 %v237
    %1012 = vmatprep.subr.mxu0 0.0
    %1013 = vmatpush1.msra.mxu0 %v236
    %1014 = vmatprep.subr.mxu0 0.0
    %1015 = vmatpush1.msra.mxu0 %v235
    %1016 = vmatprep.subr.mxu0 0.0
    %1017 = vmatpush1.msra.mxu0 %v234
    %1018 = vmatprep.subr.mxu0 0.0
    %1019 = vmatpush1.msra.mxu0 %v233
    %1020 = vmatprep.subr.mxu0 0.0
    %1021 = vmatpush1.msra.mxu0 %v232
    %1022 = vmatprep.subr.mxu0 0.0
    %1023 = vmatpush1.msra.mxu0 %v231
    %1024 = vmatprep.subr.mxu0 0.0
    %1025 = vmatpush1.msra.mxu0 %v230
    %1026 = vmatprep.subr.mxu0 0.0
    %1027 = vmatpush1.msra.mxu0 %v229
    %1028 = vmatprep.subr.mxu0 0.0
    %1029 = vmatpush1.msra.mxu0 %v228
    %1030 = vmatprep.subr.mxu0 0.0
    %1031 = vmatpush1.msra.mxu0 %v227
    %1032 = vmatprep.subr.mxu0 0.0
    %1033 = vmatpush1.msra.mxu0 %v226
    %1034 = vmatprep.subr.mxu0 0.0
    %1035 = vmatpush2.msra.mxu0 %v257
    %1036 = vmatprep.subr.mxu0 0.0
    %1037 = vmatpush2.msra.mxu0 %v256
    %1038 = vmatprep.subr.mxu0 0.0
    %1039 = vmatpush2.msra.mxu0 %v255
    %1040 = vmatprep.subr.mxu0 0.0
    %1041 = vmatpush2.msra.mxu0 %v254
    %1042 = vmatprep.subr.mxu0 0.0
    %1043 = vmatpush2.msra.mxu0 %v253
    %1044 = vmatprep.subr.mxu0 0.0
    %1045 = vmatpush2.msra.mxu0 %v252
    %1046 = vmatprep.subr.mxu0 0.0
    %1047 = vmatpush2.msra.mxu0 %v251
    %1048 = vmatprep.subr.mxu0 0.0
    %1049 = vmatpush2.msra.mxu0 %v250
    %1050 = vmatprep.subr.mxu0 0.0
    %1051 = vmatpush2.msra.mxu0 %v249
    %1052 = vmatprep.subr.mxu0 0.0
    %1053 = vmatpush2.msra.mxu0 %v248
    %1054 = vmatprep.subr.mxu0 0.0
    %1055 = vmatpush2.msra.mxu0 %v247
    %1056 = vmatprep.subr.mxu0 0.0
    %1057 = vmatpush2.msra.mxu0 %v246
    %1058 = vmatprep.subr.mxu0 0.0
    %1059 = vmatpush2.msra.mxu0 %v245
    %1060 = vmatprep.subr.mxu0 0.0
    %1061 = vmatpush2.msra.mxu0 %v244
    %1062 = vmatprep.subr.mxu0 0.0
    %1063 = vmatpush2.msra.mxu0 %v243
    %1064 = vmatprep.subr.mxu0 0.0
    %1065 = vmatpush2.msra.mxu0 %v242
    %1066 = vmatprep.mubr.f32.mxu0 %v514
    %1067 = vmatmul.mubr.f32.gmra.mxu0 %v506
    %v1068 = vpop.f32.mrf.mxu0
    %v1069 = vadd.f32 %v999, %v1068
    %v1070 = vpop.f32.mrf.mxu0
    %1071 = vdwg.mxu0
    %1072 = vmatprep.subr.mxu0 0.0
    %1073 = vmatpush1.msra.mxu0 %v273
    %1074 = vmatprep.subr.mxu0 0.0
    %1075 = vmatpush1.msra.mxu0 %v272
    %1076 = vmatprep.subr.mxu0 0.0
    %1077 = vmatpush1.msra.mxu0 %v271
    %1078 = vmatprep.subr.mxu0 0.0
    %1079 = vmatpush1.msra.mxu0 %v270
    %1080 = vmatprep.subr.mxu0 0.0
    %1081 = vmatpush1.msra.mxu0 %v269
    %1082 = vmatprep.subr.mxu0 0.0
    %1083 = vmatpush1.msra.mxu0 %v268
    %1084 = vmatprep.subr.mxu0 0.0
    %1085 = vmatpush1.msra.mxu0 %v267
    %1086 = vmatprep.subr.mxu0 0.0
    %1087 = vmatpush1.msra.mxu0 %v266
    %1088 = vmatprep.subr.mxu0 0.0
    %1089 = vmatpush1.msra.mxu0 %v265
    %1090 = vmatprep.subr.mxu0 0.0
    %1091 = vmatpush1.msra.mxu0 %v264
    %1092 = vmatprep.subr.mxu0 0.0
    %1093 = vmatpush1.msra.mxu0 %v263
    %1094 = vmatprep.subr.mxu0 0.0
    %1095 = vmatpush1.msra.mxu0 %v262
    %1096 = vmatprep.subr.mxu0 0.0
    %1097 = vmatpush1.msra.mxu0 %v261
    %1098 = vmatprep.subr.mxu0 0.0
    %1099 = vmatpush1.msra.mxu0 %v260
    %1100 = vmatprep.subr.mxu0 0.0
    %1101 = vmatpush1.msra.mxu0 %v259
    %1102 = vmatprep.subr.mxu0 0.0
    %1103 = vmatpush1.msra.mxu0 %v258
    %1104 = vmatprep.subr.mxu0 0.0
    %1105 = vmatpush2.msra.mxu0 %v289
    %1106 = vmatprep.subr.mxu0 0.0
    %1107 = vmatpush2.msra.mxu0 %v288
    %1108 = vmatprep.subr.mxu0 0.0
    %1109 = vmatpush2.msra.mxu0 %v287
    %1110 = vmatprep.subr.mxu0 0.0
    %1111 = vmatpush2.msra.mxu0 %v286
    %1112 = vmatprep.subr.mxu0 0.0
    %1113 = vmatpush2.msra.mxu0 %v285
    %1114 = vmatprep.subr.mxu0 0.0
    %1115 = vmatpush2.msra.mxu0 %v284
    %1116 = vmatprep.subr.mxu0 0.0
    %1117 = vmatpush2.msra.mxu0 %v283
    %1118 = vmatprep.subr.mxu0 0.0
    %1119 = vmatpush2.msra.mxu0 %v282
    %1120 = vmatprep.subr.mxu0 0.0
    %1121 = vmatpush2.msra.mxu0 %v281
    %1122 = vmatprep.subr.mxu0 0.0
    %1123 = vmatpush2.msra.mxu0 %v280
    %1124 = vmatprep.subr.mxu0 0.0
    %1125 = vmatpush2.msra.mxu0 %v279
    %1126 = vmatprep.subr.mxu0 0.0
    %1127 = vmatpush2.msra.mxu0 %v278
    %1128 = vmatprep.subr.mxu0 0.0
    %1129 = vmatpush2.msra.mxu0 %v277
    %1130 = vmatprep.subr.mxu0 0.0
    %1131 = vmatpush2.msra.mxu0 %v276
    %1132 = vmatprep.subr.mxu0 0.0
    %1133 = vmatpush2.msra.mxu0 %v275
    %1134 = vmatprep.subr.mxu0 0.0
    %1135 = vmatpush2.msra.mxu0 %v274
    %1136 = vmatprep.mubr.f32.mxu0 %v515
    %1137 = vmatmul.mubr.f32.gmra.mxu0 %v513
    %v1138 = vpop.f32.mrf.mxu0
    %v1139 = vadd.f32 %v1069, %v1138
    %v1140 = vpop.f32.mrf.mxu0
    %1141 = vdwg.mxu0
    %1142 = vmatprep.subr.mxu0 0.0
    %1143 = vmatpush1.msra.mxu0 %v305
    %1144 = vmatprep.subr.mxu0 0.0
    %1145 = vmatpush1.msra.mxu0 %v304
    %1146 = vmatprep.subr.mxu0 0.0
    %1147 = vmatpush1.msra.mxu0 %v303
    %1148 = vmatprep.subr.mxu0 0.0
    %1149 = vmatpush1.msra.mxu0 %v302
    %1150 = vmatprep.subr.mxu0 0.0
    %1151 = vmatpush1.msra.mxu0 %v301
    %1152 = vmatprep.subr.mxu0 0.0
    %1153 = vmatpush1.msra.mxu0 %v300
    %1154 = vmatprep.subr.mxu0 0.0
    %1155 = vmatpush1.msra.mxu0 %v299
    %1156 = vmatprep.subr.mxu0 0.0
    %1157 = vmatpush1.msra.mxu0 %v298
    %1158 = vmatprep.subr.mxu0 0.0
    %1159 = vmatpush1.msra.mxu0 %v297
    %1160 = vmatprep.subr.mxu0 0.0
    %1161 = vmatpush1.msra.mxu0 %v296
    %1162 = vmatprep.subr.mxu0 0.0
    %1163 = vmatpush1.msra.mxu0 %v295
    %1164 = vmatprep.subr.mxu0 0.0
    %1165 = vmatpush1.msra.mxu0 %v294
    %1166 = vmatprep.subr.mxu0 0.0
    %1167 = vmatpush1.msra.mxu0 %v293
    %1168 = vmatprep.subr.mxu0 0.0
    %1169 = vmatpush1.msra.mxu0 %v292
    %1170 = vmatprep.subr.mxu0 0.0
    %1171 = vmatpush1.msra.mxu0 %v291
    %1172 = vmatprep.subr.mxu0 0.0
    %1173 = vmatpush1.msra.mxu0 %v290
    %1174 = vmatprep.subr.mxu0 0.0
    %1175 = vmatpush2.msra.mxu0 %v321
    %1176 = vmatprep.subr.mxu0 0.0
    %1177 = vmatpush2.msra.mxu0 %v320
    %1178 = vmatprep.subr.mxu0 0.0
    %1179 = vmatpush2.msra.mxu0 %v319
    %1180 = vmatprep.subr.mxu0 0.0
    %1181 = vmatpush2.msra.mxu0 %v318
    %1182 = vmatprep.subr.mxu0 0.0
    %1183 = vmatpush2.msra.mxu0 %v317
    %1184 = vmatprep.subr.mxu0 0.0
    %1185 = vmatpush2.msra.mxu0 %v316
    %1186 = vmatprep.subr.mxu0 0.0
    %1187 = vmatpush2.msra.mxu0 %v315
    %1188 = vmatprep.subr.mxu0 0.0
    %1189 = vmatpush2.msra.mxu0 %v314
    %1190 = vmatprep.subr.mxu0 0.0
    %1191 = vmatpush2.msra.mxu0 %v313
    %1192 = vmatprep.subr.mxu0 0.0
    %1193 = vmatpush2.msra.mxu0 %v312
    %1194 = vmatprep.subr.mxu0 0.0
    %1195 = vmatpush2.msra.mxu0 %v311
    %1196 = vmatprep.subr.mxu0 0.0
    %1197 = vmatpush2.msra.mxu0 %v310
    %1198 = vmatprep.subr.mxu0 0.0
    %1199 = vmatpush2.msra.mxu0 %v309
    %1200 = vmatprep.subr.mxu0 0.0
    %1201 = vmatpush2.msra.mxu0 %v308
    %1202 = vmatprep.subr.mxu0 0.0
    %1203 = vmatpush2.msra.mxu0 %v307
    %1204 = vmatprep.subr.mxu0 0.0
    %1205 = vmatpush2.msra.mxu0 %v306
    %1206 = vmatprep.mubr.f32.mxu0 %v531
    %1207 = vmatmul.mubr.f32.gmra.mxu0 %v523
    %v1208 = vpop.f32.mrf.mxu0
    %v1209 = vadd.f32 %v1139, %v1208
    %v1210 = vpop.f32.mrf.mxu0
    %1211 = vdwg.mxu0
    %1212 = vmatprep.subr.mxu0 0.0
    %1213 = vmatpush1.msra.mxu0 %v337
    %1214 = vmatprep.subr.mxu0 0.0
    %1215 = vmatpush1.msra.mxu0 %v336
    %1216 = vmatprep.subr.mxu0 0.0
    %1217 = vmatpush1.msra.mxu0 %v335
    %1218 = vmatprep.subr.mxu0 0.0
    %1219 = vmatpush1.msra.mxu0 %v334
    %1220 = vmatprep.subr.mxu0 0.0
    %1221 = vmatpush1.msra.mxu0 %v333
    %1222 = vmatprep.subr.mxu0 0.0
    %1223 = vmatpush1.msra.mxu0 %v332
    %1224 = vmatprep.subr.mxu0 0.0
    %1225 = vmatpush1.msra.mxu0 %v331
    %1226 = vmatprep.subr.mxu0 0.0
    %1227 = vmatpush1.msra.mxu0 %v330
    %1228 = vmatprep.subr.mxu0 0.0
    %1229 = vmatpush1.msra.mxu0 %v329
    %1230 = vmatprep.subr.mxu0 0.0
    %1231 = vmatpush1.msra.mxu0 %v328
    %1232 = vmatprep.subr.mxu0 0.0
    %1233 = vmatpush1.msra.mxu0 %v327
    %1234 = vmatprep.subr.mxu0 0.0
    %1235 = vmatpush1.msra.mxu0 %v326
    %1236 = vmatprep.subr.mxu0 0.0
    %1237 = vmatpush1.msra.mxu0 %v325
    %1238 = vmatprep.subr.mxu0 0.0
    %1239 = vmatpush1.msra.mxu0 %v324
    %1240 = vmatprep.subr.mxu0 0.0
    %1241 = vmatpush1.msra.mxu0 %v323
    %1242 = vmatprep.subr.mxu0 0.0
    %1243 = vmatpush1.msra.mxu0 %v322
    %1244 = vmatprep.subr.mxu0 0.0
    %1245 = vmatpush2.msra.mxu0 %v353
    %1246 = vmatprep.subr.mxu0 0.0
    %1247 = vmatpush2.msra.mxu0 %v352
    %1248 = vmatprep.subr.mxu0 0.0
    %1249 = vmatpush2.msra.mxu0 %v351
    %1250 = vmatprep.subr.mxu0 0.0
    %1251 = vmatpush2.msra.mxu0 %v350
    %1252 = vmatprep.subr.mxu0 0.0
    %1253 = vmatpush2.msra.mxu0 %v349
    %1254 = vmatprep.subr.mxu0 0.0
    %1255 = vmatpush2.msra.mxu0 %v348
    %1256 = vmatprep.subr.mxu0 0.0
    %1257 = vmatpush2.msra.mxu0 %v347
    %1258 = vmatprep.subr.mxu0 0.0
    %1259 = vmatpush2.msra.mxu0 %v346
    %1260 = vmatprep.subr.mxu0 0.0
    %1261 = vmatpush2.msra.mxu0 %v345
    %1262 = vmatprep.subr.mxu0 0.0
    %1263 = vmatpush2.msra.mxu0 %v344
    %1264 = vmatprep.subr.mxu0 0.0
    %1265 = vmatpush2.msra.mxu0 %v343
    %1266 = vmatprep.subr.mxu0 0.0
    %1267 = vmatpush2.msra.mxu0 %v342
    %1268 = vmatprep.subr.mxu0 0.0
    %1269 = vmatpush2.msra.mxu0 %v341
    %1270 = vmatprep.subr.mxu0 0.0
    %1271 = vmatpush2.msra.mxu0 %v340
    %1272 = vmatprep.subr.mxu0 0.0
    %1273 = vmatpush2.msra.mxu0 %v339
    %1274 = vmatprep.subr.mxu0 0.0
    %1275 = vmatpush2.msra.mxu0 %v338
    %1276 = vmatprep.mubr.f32.mxu0 %v532
    %1277 = vmatmul.mubr.f32.gmra.mxu0 %v530
    %v1278 = vpop.f32.mrf.mxu0
    %v1279 = vadd.f32 %v1209, %v1278
    %v1280 = vpop.f32.mrf.mxu0
    %1281 = vdwg.mxu0
    %1282 = vmatprep.subr.mxu0 0.0
    %1283 = vmatpush1.msra.mxu0 %v369
    %1284 = vmatprep.subr.mxu0 0.0
    %1285 = vmatpush1.msra.mxu0 %v368
    %1286 = vmatprep.subr.mxu0 0.0
    %1287 = vmatpush1.msra.mxu0 %v367
    %1288 = vmatprep.subr.mxu0 0.0
    %1289 = vmatpush1.msra.mxu0 %v366
    %1290 = vmatprep.subr.mxu0 0.0
    %1291 = vmatpush1.msra.mxu0 %v365
    %1292 = vmatprep.subr.mxu0 0.0
    %1293 = vmatpush1.msra.mxu0 %v364
    %1294 = vmatprep.subr.mxu0 0.0
    %1295 = vmatpush1.msra.mxu0 %v363
    %1296 = vmatprep.subr.mxu0 0.0
    %1297 = vmatpush1.msra.mxu0 %v362
    %1298 = vmatprep.subr.mxu0 0.0
    %1299 = vmatpush1.msra.mxu0 %v361
    %1300 = vmatprep.subr.mxu0 0.0
    %1301 = vmatpush1.msra.mxu0 %v360
    %1302 = vmatprep.subr.mxu0 0.0
    %1303 = vmatpush1.msra.mxu0 %v359
    %1304 = vmatprep.subr.mxu0 0.0
    %1305 = vmatpush1.msra.mxu0 %v358
    %1306 = vmatprep.subr.mxu0 0.0
    %1307 = vmatpush1.msra.mxu0 %v357
    %1308 = vmatprep.subr.mxu0 0.0
    %1309 = vmatpush1.msra.mxu0 %v356
    %1310 = vmatprep.subr.mxu0 0.0
    %1311 = vmatpush1.msra.mxu0 %v355
    %1312 = vmatprep.subr.mxu0 0.0
    %1313 = vmatpush1.msra.mxu0 %v354
    %1314 = vmatprep.subr.mxu0 0.0
    %1315 = vmatpush2.msra.mxu0 %v385
    %1316 = vmatprep.subr.mxu0 0.0
    %1317 = vmatpush2.msra.mxu0 %v384
    %1318 = vmatprep.subr.mxu0 0.0
    %1319 = vmatpush2.msra.mxu0 %v383
    %1320 = vmatprep.subr.mxu0 0.0
    %1321 = vmatpush2.msra.mxu0 %v382
    %1322 = vmatprep.subr.mxu0 0.0
    %1323 = vmatpush2.msra.mxu0 %v381
    %1324 = vmatprep.subr.mxu0 0.0
    %1325 = vmatpush2.msra.mxu0 %v380
    %1326 = vmatprep.subr.mxu0 0.0
    %1327 = vmatpush2.msra.mxu0 %v379
    %1328 = vmatprep.subr.mxu0 0.0
    %1329 = vmatpush2.msra.mxu0 %v378
    %1330 = vmatprep.subr.mxu0 0.0
    %1331 = vmatpush2.msra.mxu0 %v377
    %1332 = vmatprep.subr.mxu0 0.0
    %1333 = vmatpush2.msra.mxu0 %v376
    %1334 = vmatprep.subr.mxu0 0.0
    %1335 = vmatpush2.msra.mxu0 %v375
    %1336 = vmatprep.subr.mxu0 0.0
    %1337 = vmatpush2.msra.mxu0 %v374
    %1338 = vmatprep.subr.mxu0 0.0
    %1339 = vmatpush2.msra.mxu0 %v373
    %1340 = vmatprep.subr.mxu0 0.0
    %1341 = vmatpush2.msra.mxu0 %v372
    %1342 = vmatprep.subr.mxu0 0.0
    %1343 = vmatpush2.msra.mxu0 %v371
    %1344 = vmatprep.subr.mxu0 0.0
    %1345 = vmatpush2.msra.mxu0 %v370
    %1346 = vmatprep.mubr.f32.mxu0 %v548
    %1347 = vmatmul.mubr.f32.gmra.mxu0 %v540
    %v1348 = vpop.f32.mrf.mxu0
    %v1349 = vadd.f32 %v1279, %v1348
    %v1350 = vpop.f32.mrf.mxu0
    %1351 = vdwg.mxu0
    %1352 = vmatprep.subr.mxu0 0.0
    %1353 = vmatpush1.msra.mxu0 %v401
    %1354 = vmatprep.subr.mxu0 0.0
    %1355 = vmatpush1.msra.mxu0 %v400
    %1356 = vmatprep.subr.mxu0 0.0
    %1357 = vmatpush1.msra.mxu0 %v399
    %1358 = vmatprep.subr.mxu0 0.0
    %1359 = vmatpush1.msra.mxu0 %v398
    %1360 = vmatprep.subr.mxu0 0.0
    %1361 = vmatpush1.msra.mxu0 %v397
    %1362 = vmatprep.subr.mxu0 0.0
    %1363 = vmatpush1.msra.mxu0 %v396
    %1364 = vmatprep.subr.mxu0 0.0
    %1365 = vmatpush1.msra.mxu0 %v395
    %1366 = vmatprep.subr.mxu0 0.0
    %1367 = vmatpush1.msra.mxu0 %v394
    %1368 = vmatprep.subr.mxu0 0.0
    %1369 = vmatpush1.msra.mxu0 %v393
    %1370 = vmatprep.subr.mxu0 0.0
    %1371 = vmatpush1.msra.mxu0 %v392
    %1372 = vmatprep.subr.mxu0 0.0
    %1373 = vmatpush1.msra.mxu0 %v391
    %1374 = vmatprep.subr.mxu0 0.0
    %1375 = vmatpush1.msra.mxu0 %v390
    %1376 = vmatprep.subr.mxu0 0.0
    %1377 = vmatpush1.msra.mxu0 %v389
    %1378 = vmatprep.subr.mxu0 0.0
    %1379 = vmatpush1.msra.mxu0 %v388
    %1380 = vmatprep.subr.mxu0 0.0
    %1381 = vmatpush1.msra.mxu0 %v387
    %1382 = vmatprep.subr.mxu0 0.0
    %1383 = vmatpush1.msra.mxu0 %v386
    %1384 = vmatprep.subr.mxu0 0.0
    %1385 = vmatpush2.msra.mxu0 %v417
    %1386 = vmatprep.subr.mxu0 0.0
    %1387 = vmatpush2.msra.mxu0 %v416
    %1388 = vmatprep.subr.mxu0 0.0
    %1389 = vmatpush2.msra.mxu0 %v415
    %1390 = vmatprep.subr.mxu0 0.0
    %1391 = vmatpush2.msra.mxu0 %v414
    %1392 = vmatprep.subr.mxu0 0.0
    %1393 = vmatpush2.msra.mxu0 %v413
    %1394 = vmatprep.subr.mxu0 0.0
    %1395 = vmatpush2.msra.mxu0 %v412
    %1396 = vmatprep.subr.mxu0 0.0
    %1397 = vmatpush2.msra.mxu0 %v411
    %1398 = vmatprep.subr.mxu0 0.0
    %1399 = vmatpush2.msra.mxu0 %v410
    %1400 = vmatprep.subr.mxu0 0.0
    %1401 = vmatpush2.msra.mxu0 %v409
    %1402 = vmatprep.subr.mxu0 0.0
    %1403 = vmatpush2.msra.mxu0 %v408
    %1404 = vmatprep.subr.mxu0 0.0
    %1405 = vmatpush2.msra.mxu0 %v407
    %1406 = vmatprep.subr.mxu0 0.0
    %1407 = vmatpush2.msra.mxu0 %v406
    %1408 = vmatprep.subr.mxu0 0.0
    %1409 = vmatpush2.msra.mxu0 %v405
    %1410 = vmatprep.subr.mxu0 0.0
    %1411 = vmatpush2.msra.mxu0 %v404
    %1412 = vmatprep.subr.mxu0 0.0
    %1413 = vmatpush2.msra.mxu0 %v403
    %1414 = vmatprep.subr.mxu0 0.0
    %1415 = vmatpush2.msra.mxu0 %v402
    %1416 = vmatprep.mubr.f32.mxu0 %v549
    %1417 = vmatmul.mubr.f32.gmra.mxu0 %v547
    %v1418 = vpop.f32.mrf.mxu0
    %v1419 = vadd.f32 %v1349, %v1418
    %v1420 = vpop.f32.mrf.mxu0
    %1421 = vdwg.mxu0
    %1422 = vmatprep.subr.mxu0 0.0
    %1423 = vmatpush1.msra.mxu0 %v433
    %1424 = vmatprep.subr.mxu0 0.0
    %1425 = vmatpush1.msra.mxu0 %v432
    %1426 = vmatprep.subr.mxu0 0.0
    %1427 = vmatpush1.msra.mxu0 %v431
    %1428 = vmatprep.subr.mxu0 0.0
    %1429 = vmatpush1.msra.mxu0 %v430
    %1430 = vmatprep.subr.mxu0 0.0
    %1431 = vmatpush1.msra.mxu0 %v429
    %1432 = vmatprep.subr.mxu0 0.0
    %1433 = vmatpush1.msra.mxu0 %v428
    %1434 = vmatprep.subr.mxu0 0.0
    %1435 = vmatpush1.msra.mxu0 %v427
    %1436 = vmatprep.subr.mxu0 0.0
    %1437 = vmatpush1.msra.mxu0 %v426
    %1438 = vmatprep.subr.mxu0 0.0
    %1439 = vmatpush1.msra.mxu0 %v425
    %1440 = vmatprep.subr.mxu0 0.0
    %1441 = vmatpush1.msra.mxu0 %v424
    %1442 = vmatprep.subr.mxu0 0.0
    %1443 = vmatpush1.msra.mxu0 %v423
    %1444 = vmatprep.subr.mxu0 0.0
    %1445 = vmatpush1.msra.mxu0 %v422
    %1446 = vmatprep.subr.mxu0 0.0
    %1447 = vmatpush1.msra.mxu0 %v421
    %1448 = vmatprep.subr.mxu0 0.0
    %1449 = vmatpush1.msra.mxu0 %v420
    %1450 = vmatprep.subr.mxu0 0.0
    %1451 = vmatpush1.msra.mxu0 %v419
    %1452 = vmatprep.subr.mxu0 0.0
    %1453 = vmatpush1.msra.mxu0 %v418
    %1454 = vmatprep.subr.mxu0 0.0
    %1455 = vmatpush2.msra.mxu0 0.0
    %1456 = vmatprep.subr.mxu0 0.0
    %1457 = vmatpush2.msra.mxu0 0.0
    %1458 = vmatprep.subr.mxu0 0.0
    %1459 = vmatpush2.msra.mxu0 0.0
    %1460 = vmatprep.subr.mxu0 0.0
    %1461 = vmatpush2.msra.mxu0 0.0
    %1462 = vmatprep.subr.mxu0 0.0
    %1463 = vmatpush2.msra.mxu0 0.0
    %1464 = vmatprep.subr.mxu0 0.0
    %1465 = vmatpush2.msra.mxu0 0.0
    %1466 = vmatprep.subr.mxu0 0.0
    %1467 = vmatpush2.msra.mxu0 0.0
    %1468 = vmatprep.subr.mxu0 0.0
    %1469 = vmatpush2.msra.mxu0 0.0
    %1470 = vmatprep.subr.mxu0 0.0
    %1471 = vmatpush2.msra.mxu0 0.0
    %1472 = vmatprep.subr.mxu0 0.0
    %1473 = vmatpush2.msra.mxu0 0.0
    %1474 = vmatprep.subr.mxu0 0.0
    %1475 = vmatpush2.msra.mxu0 0.0
    %1476 = vmatprep.subr.mxu0 0.0
    %1477 = vmatpush2.msra.mxu0 0.0
    %1478 = vmatprep.subr.mxu0 0.0
    %1479 = vmatpush2.msra.mxu0 0.0
    %1480 = vmatprep.subr.mxu0 0.0
    %1481 = vmatpush2.msra.mxu0 0.0
    %1482 = vmatprep.subr.mxu0 0.0
    %1483 = vmatpush2.msra.mxu0 0.0
    %1484 = vmatprep.subr.mxu0 0.0
    %1485 = vmatpush2.msra.mxu0 0.0
    %1486 = vmatprep.mubr.f32.mxu0 0.0
    %1487 = vmatmul.mubr.f32.gmra.mxu0 %v556
    %v1488 = vpop.f32.mrf.mxu0
    %v1489 = vadd.f32 %v1419, %v1488
    %v1490 = vpop.f32.mrf.mxu0
    %1491 = vdwg.mxu0
    %v1492 = vmax.f32 %v1489, 0.0
    %v1493 = vld [vmem:[%s3] sm:$0xff]
    %v1494 = vld [vmem:[%s3 + $0x8] sm:$0xff]
    %v1495 = vld [vmem:[%s3 + $0x10] sm:$0xff]
    %v1496 = vld [vmem:[%s3 + $0x18] sm:$0xff]
    %v1497 = vld [vmem:[%s3 + $0x20] sm:$0xff]
    %v1498 = vld [vmem:[%s3 + $0x28] sm:$0xff]
    %v1499 = vld [vmem:[%s3 + $0x30] sm:$0xff]
    %v1500 = vld [vmem:[%s3 + $0x38] sm:$0xff]
    %v1501 = vld [vmem:[%s3 + $0x40] sm:$0xff]
    %v1502 = vld [vmem:[%s3 + $0x48] sm:$0xff]
    %v1503 = vld [vmem:[%s3 + $0x50] sm:$0xff]
    %v1504 = vld [vmem:[%s3 + $0x58] sm:$0xff]
    %v1505 = vld [vmem:[%s3 + $0x60] sm:$0xff]
    %v1506 = vld [vmem:[%s3 + $0x68] sm:$0xff]
    %v1507 = vld [vmem:[%s3 + $0x70] sm:$0xff]
    %v1508 = vld [vmem:[%s3 + $0x78] sm:$0xff]
    %v1509 = vld [vmem:[%s4] sm:$0x1]
    %v1511 = vlaneseq
    %v1512 = vshrl.u32 %v1511, 7
    %v1513 = vsub.s32 0, %v1512
    %v1514 = vrot.slane %v1509, %v1513
    %1516 = vmatprep.subr.mxu0 0.0
    %1517 = vmatpush1.msra.mxu0 %v1508
    %1518 = vmatprep.subr.mxu0 0.0
    %1519 = vmatpush1.msra.mxu0 %v1507
    %1520 = vmatprep.subr.mxu0 0.0
    %1521 = vmatpush1.msra.mxu0 %v1506
    %1522 = vmatprep.subr.mxu0 0.0
    %1523 = vmatpush1.msra.mxu0 %v1505
    %1524 = vmatprep.subr.mxu0 0.0
    %1525 = vmatpush1.msra.mxu0 %v1504
    %1526 = vmatprep.subr.mxu0 0.0
    %1527 = vmatpush1.msra.mxu0 %v1503
    %1528 = vmatprep.subr.mxu0 0.0
    %1529 = vmatpush1.msra.mxu0 %v1502
    %1530 = vmatprep.subr.mxu0 0.0
    %1531 = vmatpush1.msra.mxu0 %v1501
    %1532 = vmatprep.subr.mxu0 0.0
    %1533 = vmatpush1.msra.mxu0 %v1500
    %1534 = vmatprep.subr.mxu0 0.0
    %1535 = vmatpush1.msra.mxu0 %v1499
    %1536 = vmatprep.subr.mxu0 0.0
    %1537 = vmatpush1.msra.mxu0 %v1498
    %1538 = vmatprep.subr.mxu0 0.0
    %1539 = vmatpush1.msra.mxu0 %v1497
    %1540 = vmatprep.subr.mxu0 0.0
    %1541 = vmatpush1.msra.mxu0 %v1496
    %1542 = vmatprep.subr.mxu0 0.0
    %1543 = vmatpush1.msra.mxu0 %v1495
    %1544 = vmatprep.subr.mxu0 0.0
    %1545 = vmatpush1.msra.mxu0 %v1494
    %1546 = vmatprep.subr.mxu0 0.0
    %1547 = vmatpush1.msra.mxu0 %v1493
    %1548 = vmatprep.subr.mxu0 0.0
    %1549 = vmatpush2.msra.mxu0 0.0
    %1550 = vmatprep.subr.mxu0 0.0
    %1551 = vmatpush2.msra.mxu0 0.0
    %1552 = vmatprep.subr.mxu0 0.0
    %1553 = vmatpush2.msra.mxu0 0.0
    %1554 = vmatprep.subr.mxu0 0.0
    %1555 = vmatpush2.msra.mxu0 0.0
    %1556 = vmatprep.subr.mxu0 0.0
    %1557 = vmatpush2.msra.mxu0 0.0
    %1558 = vmatprep.subr.mxu0 0.0
    %1559 = vmatpush2.msra.mxu0 0.0
    %1560 = vmatprep.subr.mxu0 0.0
    %1561 = vmatpush2.msra.mxu0 0.0
    %1562 = vmatprep.subr.mxu0 0.0
    %1563 = vmatpush2.msra.mxu0 0.0
    %1564 = vmatprep.subr.mxu0 0.0
    %1565 = vmatpush2.msra.mxu0 0.0
    %1566 = vmatprep.subr.mxu0 0.0
    %1567 = vmatpush2.msra.mxu0 0.0
    %1568 = vmatprep.subr.mxu0 0.0
    %1569 = vmatpush2.msra.mxu0 0.0
    %1570 = vmatprep.subr.mxu0 0.0
    %1571 = vmatpush2.msra.mxu0 0.0
    %1572 = vmatprep.subr.mxu0 0.0
    %1573 = vmatpush2.msra.mxu0 0.0
    %1574 = vmatprep.subr.mxu0 0.0
    %1575 = vmatpush2.msra.mxu0 0.0
    %1576 = vmatprep.subr.mxu0 0.0
    %1577 = vmatpush2.msra.mxu0 0.0
    %1578 = vmatprep.subr.mxu0 0.0
    %1579 = vmatpush2.msra.mxu0 0.0
    %1580 = vmatprep.mubr.f32.mxu0 0.0
    %1581 = vmatmul.mubr.f32.gmra.mxu0 %v1492
    %v1582 = vpop.f32.mrf.mxu0
    %v1583 = vadd.f32 %v1514, %v1582
    %v1584 = vpop.f32.mrf.mxu0
    %1585 = vdwg.mxu0
    %v1586 = vmax.f32 %v1583, 0.0
    %v1587 = vld [vmem:[%s5] sm:$0xff]
    %v1588 = vld [vmem:[%s5 + $0x8] sm:$0xff]
    %v1589 = vld [vmem:[%s5 + $0x10] sm:$0xff]
    %v1590 = vld [vmem:[%s5 + $0x18] sm:$0xff]
    %v1591 = vld [vmem:[%s5 + $0x20] sm:$0xff]
    %v1592 = vld [vmem:[%s5 + $0x28] sm:$0xff]
    %v1593 = vld [vmem:[%s5 + $0x30] sm:$0xff]
    %v1594 = vld [vmem:[%s5 + $0x38] sm:$0xff]
    %v1595 = vld [vmem:[%s5 + $0x40] sm:$0xff]
    %v1596 = vld [vmem:[%s5 + $0x48] sm:$0xff]
    %v1597 = vld [vmem:[%s5 + $0x50] sm:$0xff]
    %v1598 = vld [vmem:[%s5 + $0x58] sm:$0xff]
    %v1599 = vld [vmem:[%s5 + $0x60] sm:$0xff]
    %v1600 = vld [vmem:[%s5 + $0x68] sm:$0xff]
    %v1601 = vld [vmem:[%s5 + $0x70] sm:$0xff]
    %v1602 = vld [vmem:[%s5 + $0x78] sm:$0xff]
    %v1603 = vld [vmem:[%s6] sm:$0x1]
    %v1605 = vlaneseq
    %v1606 = vshrl.u32 %v1605, 7
    %v1607 = vsub.s32 0, %v1606
    %v1608 = vrot.slane %v1603, %v1607
    %1610 = vmatprep.subr.mxu0 0.0
    %1611 = vmatpush1.msra.mxu0 %v1602
    %1612 = vmatprep.subr.mxu0 0.0
    %1613 = vmatpush1.msra.mxu0 %v1601
    %1614 = vmatprep.subr.mxu0 0.0
    %1615 = vmatpush1.msra.mxu0 %v1600
    %1616 = vmatprep.subr.mxu0 0.0
    %1617 = vmatpush1.msra.mxu0 %v1599
    %1618 = vmatprep.subr.mxu0 0.0
    %1619 = vmatpush1.msra.mxu0 %v1598
    %1620 = vmatprep.subr.mxu0 0.0
    %1621 = vmatpush1.msra.mxu0 %v1597
    %1622 = vmatprep.subr.mxu0 0.0
    %1623 = vmatpush1.msra.mxu0 %v1596
    %1624 = vmatprep.subr.mxu0 0.0
    %1625 = vmatpush1.msra.mxu0 %v1595
    %1626 = vmatprep.subr.mxu0 0.0
    %1627 = vmatpush1.msra.mxu0 %v1594
    %1628 = vmatprep.subr.mxu0 0.0
    %1629 = vmatpush1.msra.mxu0 %v1593
    %1630 = vmatprep.subr.mxu0 0.0
    %1631 = vmatpush1.msra.mxu0 %v1592
    %1632 = vmatprep.subr.mxu0 0.0
    %1633 = vmatpush1.msra.mxu0 %v1591
    %1634 = vmatprep.subr.mxu0 0.0
    %1635 = vmatpush1.msra.mxu0 %v1590
    %1636 = vmatprep.subr.mxu0 0.0
    %1637 = vmatpush1.msra.mxu0 %v1589
    %1638 = vmatprep.subr.mxu0 0.0
    %1639 = vmatpush1.msra.mxu0 %v1588
    %1640 = vmatprep.subr.mxu0 0.0
    %1641 = vmatpush1.msra.mxu0 %v1587
    %1642 = vmatprep.subr.mxu0 0.0
    %1643 = vmatpush2.msra.mxu0 0.0
    %1644 = vmatprep.subr.mxu0 0.0
    %1645 = vmatpush2.msra.mxu0 0.0
    %1646 = vmatprep.subr.mxu0 0.0
    %1647 = vmatpush2.msra.mxu0 0.0
    %1648 = vmatprep.subr.mxu0 0.0
    %1649 = vmatpush2.msra.mxu0 0.0
    %1650 = vmatprep.subr.mxu0 0.0
    %1651 = vmatpush2.msra.mxu0 0.0
    %1652 = vmatprep.subr.mxu0 0.0
    %1653 = vmatpush2.msra.mxu0 0.0
    %1654 = vmatprep.subr.mxu0 0.0
    %1655 = vmatpush2.msra.mxu0 0.0
    %1656 = vmatprep.subr.mxu0 0.0
    %1657 = vmatpush2.msra.mxu0 0.0
    %1658 = vmatprep.subr.mxu0 0.0
    %1659 = vmatpush2.msra.mxu0 0.0
    %1660 = vmatprep.subr.mxu0 0.0
    %1661 = vmatpush2.msra.mxu0 0.0
    %1662 = vmatprep.subr.mxu0 0.0
    %1663 = vmatpush2.msra.mxu0 0.0
    %1664 = vmatprep.subr.mxu0 0.0
    %1665 = vmatpush2.msra.mxu0 0.0
    %1666 = vmatprep.subr.mxu0 0.0
    %1667 = vmatpush2.msra.mxu0 0.0
    %1668 = vmatprep.subr.mxu0 0.0
    %1669 = vmatpush2.msra.mxu0 0.0
    %1670 = vmatprep.subr.mxu0 0.0
    %1671 = vmatpush2.msra.mxu0 0.0
    %1672 = vmatprep.subr.mxu0 0.0
    %1673 = vmatpush2.msra.mxu0 0.0
    %1674 = vmatprep.mubr.f32.mxu0 0.0
    %1675 = vmatmul.mubr.f32.gmra.mxu0 %v1586
    %v1676 = vpop.f32.mrf.mxu0
    %v1677 = vadd.f32 %v1608, %v1676
    %v1678 = vpop.f32.mrf.mxu0
    %1679 = vdwg.mxu0
    %1680 = vst [vmem:[#allocation2] sm:$0x3] %v1677
    // Predicated region
    $region30: #{forward.5} parent=1 // pred_check
      _
    $region31: #{forward.5} parent=1 // pred_check_branch
      %1682 = sbr.rel (0) target = $region33
    $region32: #{forward.5} parent=1 // pred_region
      %s1684 = ssub.s32 32, 32
      %1685 = vsyncadd [#allocation3], %s1684
      %s1687 = sshll.u32 [#allocation2], 4
      %s1688 = int_to_ptr.vmem [resolvable:$true] %s1687
      %1690 = dma.vmem_to_hbm [thread:$0]  %s1688, 32, %s7, [#allocation3]
    $region33: #{forward.5} parent=1 // pred_fallthru
      _
    // Predicated region
    $region34: #{forward.5} parent=1 // pred_check
      _
    $region35: #{forward.5} parent=1 // pred_check_branch
      %1692 = sbr.rel (0) target = $region37
    $region36: #{forward.5} parent=1 // pred_region
      %1693 = dma.done [#allocation3], 32
    $region37: #{forward.5} parent=1 // pred_fallthru
      _
    %1694 = vsyncpa [#allocation3], 1

// kernel: forward.4
$region0: #{forward.4}
  #allocation0 [shape = 'u32[]', space=smem, size = 0x4, offset = 0x4, fixed_abs, tag = 'smem constant byte address 0x4 - core index']
  #allocation1 [shape = 'u32[144,128]{1,0:T(1,128)}', space=vmem, size = 0x12000, scoped, tag = 'internal scratch']
  %s0 = inlined_call_operand.vmem [shape: f32[4,50,3200], index: 0, kind: input, shape index: {}]
  %s1 = inlined_call_operand.vmem [shape: f32[3200,128], index: 1, kind: input, shape index: {}]
  %s2 = inlined_call_operand.vmem [shape: f32[1,128], index: 2, kind: input, shape index: {}]
  %s3 = inlined_call_operand.vmem [shape: f32[1,128], index: 3, kind: input, shape index: {}]
  %s4 = inlined_call_operand.vmem [shape: f32[1,128], index: 4, kind: input, shape index: {}]
  %s5 = inlined_call_operand.vmem [shape: f32[50,128], index: 5, kind: output, shape index: {}]
  %s6 = sld [smem:[#allocation0]]
  $region30: #{forward.4} parent=0
    _
  %s8 = ssub.s32 1, %s6
  %s9 = scalar_select 0, %s8, %s6
  // Predicated region
  $region2: #{forward.4} parent=0 // pred_check
    _
  $region3: #{forward.4} parent=0 // pred_check_branch
    %11 = sbr.rel (0) target = $region5
  $region4: #{forward.4} parent=0 // pred_region
    _
  $region5: #{forward.4} parent=0 // pred_fallthru
    _
  // Predicated region
  $region6: #{forward.4} parent=0 // pred_check
    _
  $region7: #{forward.4} parent=0 // pred_check_branch
    %13 = sbr.rel (0) target = $region9
  $region8: #{forward.4} parent=0 // pred_region
    _
  $region9: #{forward.4} parent=0 // pred_fallthru
    _
  // Predicated region
  $region10: #{forward.4} parent=0 // pred_check
    _
  $region11: #{forward.4} parent=0 // pred_check_branch
    %15 = sbr.rel (0) target = $region13
  $region12: #{forward.4} parent=0 // pred_region
    _
  $region13: #{forward.4} parent=0 // pred_fallthru
    _
  // Predicated region
  $region14: #{forward.4} parent=0 // pred_check
    _
  $region15: #{forward.4} parent=0 // pred_check_branch
    %17 = sbr.rel (0) target = $region17
  $region16: #{forward.4} parent=0 // pred_region
    _
  $region17: #{forward.4} parent=0 // pred_fallthru
    _
  // Predicated region
  $region18: #{forward.4} parent=0 // pred_check
    _
  $region19: #{forward.4} parent=0 // pred_check_branch
    %19 = sbr.rel (0) target = $region21
  $region20: #{forward.4} parent=0 // pred_region
    _
  $region21: #{forward.4} parent=0 // pred_fallthru
    _
  %v20 = vld [vmem:[%s0] sm:$0xff]
  %v21 = vld [vmem:[%s0 + $0x8] sm:$0xff]
  %v22 = vld [vmem:[%s0 + $0x10] sm:$0xff]
  %v23 = vld [vmem:[%s0 + $0x18] sm:$0xff]
  %v24 = vld [vmem:[%s0 + $0x20] sm:$0xff]
  %v25 = vld [vmem:[%s0 + $0x28] sm:$0xff]
  %v26 = vld [vmem:[%s0 + $0x30] sm:$0xff]
  %v27 = vld [vmem:[%s0 + $0x38] sm:$0xff]
  %v28 = vld [vmem:[%s0 + $0x40] sm:$0xff]
  %v29 = vld [vmem:[%s0 + $0x48] sm:$0xff]
  %v30 = vld [vmem:[%s0 + $0x50] sm:$0xff]
  %v31 = vld [vmem:[%s0 + $0x58] sm:$0xff]
  %v32 = vld [vmem:[%s0 + $0x60] sm:$0xff]
  %v33 = vld [vmem:[%s0 + $0x68] sm:$0xff]
  %v34 = vld [vmem:[%s0 + $0x70] sm:$0xff]
  %v35 = vld [vmem:[%s0 + $0x78] sm:$0xff]
  %v36 = vld [vmem:[%s0 + $0x80] sm:$0xff]
  %v37 = vld [vmem:[%s0 + $0x88] sm:$0xff]
  %v38 = vld [vmem:[%s0 + $0x90] sm:$0xff]
  %v39 = vld [vmem:[%s0 + $0x98] sm:$0xff]
  %v40 = vld [vmem:[%s0 + $0xa0] sm:$0xff]
  %v41 = vld [vmem:[%s0 + $0xa8] sm:$0xff]
  %v42 = vld [vmem:[%s0 + $0xb0] sm:$0xff]
  %v43 = vld [vmem:[%s0 + $0xb8] sm:$0xff]
  %v44 = vld [vmem:[%s0 + $0xc0] sm:$0xff]
  %v45 = vld [vmem:[%s0 + $0xc8] sm:$0xff]
  %v46 = vld [vmem:[%s0 + $0xd0] sm:$0xff]
  %v47 = vld [vmem:[%s0 + $0xd8] sm:$0xff]
  %v48 = vld [vmem:[%s0 + $0xe0] sm:$0xff]
  %v49 = vld [vmem:[%s0 + $0xe8] sm:$0xff]
  %v50 = vld [vmem:[%s0 + $0xf0] sm:$0xff]
  %v51 = vld [vmem:[%s0 + $0xf8] sm:$0xff]
  %v52 = vld [vmem:[%s0 + $0x100] sm:$0xff]
  %v53 = vld [vmem:[%s0 + $0x108] sm:$0xff]
  %v54 = vld [vmem:[%s0 + $0x110] sm:$0xff]
  %v55 = vld [vmem:[%s0 + $0x118] sm:$0xff]
  %v56 = vld [vmem:[%s0 + $0x120] sm:$0xff]
  %v57 = vld [vmem:[%s0 + $0x128] sm:$0xff]
  %v58 = vld [vmem:[%s0 + $0x130] sm:$0xff]
  %v59 = vld [vmem:[%s0 + $0x138] sm:$0xff]
  %v60 = vld [vmem:[%s0 + $0x140] sm:$0xff]
  %v61 = vld [vmem:[%s0 + $0x148] sm:$0xff]
  %v62 = vld [vmem:[%s0 + $0x150] sm:$0xff]
  %v63 = vld [vmem:[%s0 + $0x158] sm:$0xff]
  %v64 = vld [vmem:[%s0 + $0x160] sm:$0xff]
  %v65 = vld [vmem:[%s0 + $0x168] sm:$0xff]
  %v66 = vld [vmem:[%s0 + $0x170] sm:$0xff]
  %v67 = vld [vmem:[%s0 + $0x178] sm:$0xff]
  %v68 = vld [vmem:[%s0 + $0x180] sm:$0xff]
  %v69 = vld [vmem:[%s0 + $0x188] sm:$0xff]
  %v70 = vld [vmem:[%s0 + $0x190] sm:$0xff]
  %v71 = vld [vmem:[%s0 + $0x198] sm:$0xff]
  %v72 = vld [vmem:[%s0 + $0x1a0] sm:$0xff]
  %v73 = vld [vmem:[%s0 + $0x1a8] sm:$0xff]
  %v74 = vld [vmem:[%s0 + $0x1b0] sm:$0xff]
  %v75 = vld [vmem:[%s0 + $0x1b8] sm:$0xff]
  %v76 = vld [vmem:[%s0 + $0x1c0] sm:$0xff]
  %v77 = vld [vmem:[%s0 + $0x1c8] sm:$0xff]
  %v78 = vld [vmem:[%s0 + $0x1d0] sm:$0xff]
  %v79 = vld [vmem:[%s0 + $0x1d8] sm:$0xff]
  %v80 = vld [vmem:[%s0 + $0x1e0] sm:$0xff]
  %v81 = vld [vmem:[%s0 + $0x1e8] sm:$0xff]
  %v82 = vld [vmem:[%s0 + $0x1f0] sm:$0xff]
  %v83 = vld [vmem:[%s0 + $0x1f8] sm:$0xff]
  %v84 = vld [vmem:[%s0 + $0x200] sm:$0xff]
  %v85 = vld [vmem:[%s0 + $0x208] sm:$0xff]
  %v86 = vld [vmem:[%s0 + $0x210] sm:$0xff]
  %v87 = vld [vmem:[%s0 + $0x218] sm:$0xff]
  %v88 = vld [vmem:[%s0 + $0x220] sm:$0xff]
  %v89 = vld [vmem:[%s0 + $0x228] sm:$0xff]
  %v90 = vld [vmem:[%s0 + $0x230] sm:$0xff]
  %v91 = vld [vmem:[%s0 + $0x238] sm:$0xff]
  %v92 = vld [vmem:[%s0 + $0x240] sm:$0xff]
  %v93 = vld [vmem:[%s0 + $0x248] sm:$0xff]
  %v94 = vld [vmem:[%s0 + $0x250] sm:$0xff]
  %v95 = vld [vmem:[%s0 + $0x258] sm:$0xff]
  %v96 = vld [vmem:[%s0 + $0x260] sm:$0xff]
  %v97 = vld [vmem:[%s0 + $0x268] sm:$0xff]
  %v98 = vld [vmem:[%s0 + $0x270] sm:$0xff]
  %v99 = vld [vmem:[%s0 + $0x278] sm:$0xff]
  %v100 = vld [vmem:[%s0 + $0x280] sm:$0xff]
  %v101 = vld [vmem:[%s0 + $0x288] sm:$0xff]
  %v102 = vld [vmem:[%s0 + $0x290] sm:$0xff]
  %v103 = vld [vmem:[%s0 + $0x298] sm:$0xff]
  %v104 = vld [vmem:[%s0 + $0x2a0] sm:$0xff]
  %v105 = vld [vmem:[%s0 + $0x2a8] sm:$0xff]
  %v106 = vld [vmem:[%s0 + $0x2b0] sm:$0xff]
  %v107 = vld [vmem:[%s0 + $0x2b8] sm:$0xff]
  %v108 = vld [vmem:[%s0 + $0x2c0] sm:$0xff]
  %v109 = vld [vmem:[%s0 + $0x2c8] sm:$0xff]
  %v110 = vld [vmem:[%s0 + $0x2d0] sm:$0xff]
  %v111 = vld [vmem:[%s0 + $0x2d8] sm:$0xff]
  %v112 = vld [vmem:[%s0 + $0x2e0] sm:$0xff]
  %v113 = vld [vmem:[%s0 + $0x2e8] sm:$0xff]
  %v114 = vld [vmem:[%s0 + $0x2f0] sm:$0xff]
  %v115 = vld [vmem:[%s0 + $0x2f8] sm:$0xff]
  %v116 = vld [vmem:[%s0 + $0x300] sm:$0xff]
  %v117 = vld [vmem:[%s0 + $0x308] sm:$0xff]
  %v118 = vld [vmem:[%s0 + $0x310] sm:$0xff]
  %v119 = vld [vmem:[%s0 + $0x318] sm:$0xff]
  %v120 = vld [vmem:[%s0 + $0x320] sm:$0xff]
  %v121 = vld [vmem:[%s0 + $0x328] sm:$0xff]
  %v122 = vld [vmem:[%s0 + $0x330] sm:$0xff]
  %v123 = vld [vmem:[%s0 + $0x338] sm:$0xff]
  %v124 = vld [vmem:[%s0 + $0x340] sm:$0xff]
  %v125 = vld [vmem:[%s0 + $0x348] sm:$0xff]
  %v126 = vld [vmem:[%s0 + $0x350] sm:$0xff]
  %v127 = vld [vmem:[%s0 + $0x358] sm:$0xff]
  %v128 = vld [vmem:[%s0 + $0x360] sm:$0xff]
  %v129 = vld [vmem:[%s0 + $0x368] sm:$0xff]
  %v130 = vld [vmem:[%s0 + $0x370] sm:$0xff]
  %v131 = vld [vmem:[%s0 + $0x378] sm:$0xff]
  %v132 = vld [vmem:[%s0 + $0x380] sm:$0xff]
  %v133 = vld [vmem:[%s0 + $0x388] sm:$0xff]
  %v134 = vld [vmem:[%s0 + $0x390] sm:$0xff]
  %v135 = vld [vmem:[%s0 + $0x398] sm:$0xff]
  %v136 = vld [vmem:[%s0 + $0x3a0] sm:$0xff]
  %v137 = vld [vmem:[%s0 + $0x3a8] sm:$0xff]
  %v138 = vld [vmem:[%s0 + $0x3b0] sm:$0xff]
  %v139 = vld [vmem:[%s0 + $0x3b8] sm:$0xff]
  %v140 = vld [vmem:[%s0 + $0x3c0] sm:$0xff]
  %v141 = vld [vmem:[%s0 + $0x3c8] sm:$0xff]
  %v142 = vld [vmem:[%s0 + $0x3d0] sm:$0xff]
  %v143 = vld [vmem:[%s0 + $0x3d8] sm:$0xff]
  %v144 = vld [vmem:[%s0 + $0x3e0] sm:$0xff]
  %v145 = vld [vmem:[%s0 + $0x3e8] sm:$0xff]
  %v146 = vld [vmem:[%s0 + $0x3f0] sm:$0xff]
  %v147 = vld [vmem:[%s0 + $0x3f8] sm:$0xff]
  %v148 = vld [vmem:[%s0 + $0x400] sm:$0xff]
  %v149 = vld [vmem:[%s0 + $0x408] sm:$0xff]
  %v150 = vld [vmem:[%s0 + $0x410] sm:$0xff]
  %v151 = vld [vmem:[%s0 + $0x418] sm:$0xff]
  %v152 = vld [vmem:[%s0 + $0x420] sm:$0xff]
  %v153 = vld [vmem:[%s0 + $0x428] sm:$0xff]
  %v154 = vld [vmem:[%s0 + $0x430] sm:$0xff]
  %v155 = vld [vmem:[%s0 + $0x438] sm:$0xff]
  %v156 = vld [vmem:[%s0 + $0x440] sm:$0xff]
  %v157 = vld [vmem:[%s0 + $0x448] sm:$0xff]
  %v158 = vld [vmem:[%s0 + $0x450] sm:$0xff]
  %v159 = vld [vmem:[%s0 + $0x458] sm:$0xff]
  %v160 = vld [vmem:[%s0 + $0x460] sm:$0xff]
  %v161 = vld [vmem:[%s0 + $0x468] sm:$0xff]
  %v162 = vld [vmem:[%s0 + $0x470] sm:$0xff]
  %v163 = vld [vmem:[%s0 + $0x478] sm:$0xff]
  %v164 = vld [vmem:[%s0 + $0x480] sm:$0xff]
  %v165 = vld [vmem:[%s0 + $0x488] sm:$0xff]
  %v166 = vld [vmem:[%s0 + $0x490] sm:$0xff]
  %v167 = vld [vmem:[%s0 + $0x498] sm:$0xff]
  %v168 = vld [vmem:[%s0 + $0x4a0] sm:$0xff]
  %v169 = vld [vmem:[%s0 + $0x4a8] sm:$0xff]
  %v170 = vld [vmem:[%s0 + $0x4b0] sm:$0x3]
  %v171 = vld [vmem:[%s0 + $0x4b8] sm:$0x3]
  %v172 = vld [vmem:[%s0 + $0x4c0] sm:$0x3]
  %v173 = vld [vmem:[%s0 + $0x4c8] sm:$0x3]
  %v174 = vld [vmem:[%s0 + $0x4d0] sm:$0x3]
  %v175 = vld [vmem:[%s0 + $0x4d8] sm:$0x3]
  %v176 = vld [vmem:[%s0 + $0x4e0] sm:$0x3]
  %v177 = vld [vmem:[%s0 + $0x4e8] sm:$0x3]
  %v178 = vld [vmem:[%s0 + $0x4f0] sm:$0x3]
  %v179 = vld [vmem:[%s0 + $0x4f8] sm:$0x3]
  %v180 = vld [vmem:[%s0 + $0x500] sm:$0x3]
  %v181 = vld [vmem:[%s0 + $0x508] sm:$0x3]
  %v182 = vld [vmem:[%s0 + $0x510] sm:$0x3]
  %v183 = vld [vmem:[%s0 + $0x518] sm:$0x3]
  %v184 = vld [vmem:[%s0 + $0x520] sm:$0x3]
  %v185 = vld [vmem:[%s0 + $0x528] sm:$0x3]
  %v186 = vld [vmem:[%s0 + $0x530] sm:$0x3]
  %v187 = vld [vmem:[%s0 + $0x538] sm:$0x3]
  %v188 = vld [vmem:[%s0 + $0x540] sm:$0x3]
  %v189 = vld [vmem:[%s0 + $0x548] sm:$0x3]
  %v190 = vld [vmem:[%s0 + $0x550] sm:$0x3]
  %v191 = vld [vmem:[%s0 + $0x558] sm:$0x3]
  %v192 = vld [vmem:[%s0 + $0x560] sm:$0x3]
  %v193 = vld [vmem:[%s0 + $0x568] sm:$0x3]
  %v194 = vld [vmem:[%s0 + $0x570] sm:$0x3]
  %v195 = vld [vmem:[%s1] sm:$0xff]
  %v196 = vld [vmem:[%s1 + $0x8] sm:$0xff]
  %v197 = vld [vmem:[%s1 + $0x10] sm:$0xff]
  %v198 = vld [vmem:[%s1 + $0x18] sm:$0xff]
  %v199 = vld [vmem:[%s1 + $0x20] sm:$0xff]
  %v200 = vld [vmem:[%s1 + $0x28] sm:$0xff]
  %v201 = vld [vmem:[%s1 + $0x30] sm:$0xff]
  %v202 = vld [vmem:[%s1 + $0x38] sm:$0xff]
  %v203 = vld [vmem:[%s1 + $0x40] sm:$0xff]
  %v204 = vld [vmem:[%s1 + $0x48] sm:$0xff]
  %v205 = vld [vmem:[%s1 + $0x50] sm:$0xff]
  %v206 = vld [vmem:[%s1 + $0x58] sm:$0xff]
  %v207 = vld [vmem:[%s1 + $0x60] sm:$0xff]
  %v208 = vld [vmem:[%s1 + $0x68] sm:$0xff]
  %v209 = vld [vmem:[%s1 + $0x70] sm:$0xff]
  %v210 = vld [vmem:[%s1 + $0x78] sm:$0xff]
  %v211 = vld [vmem:[%s1 + $0x80] sm:$0xff]
  %v212 = vld [vmem:[%s1 + $0x88] sm:$0xff]
  %v213 = vld [vmem:[%s1 + $0x90] sm:$0xff]
  %v214 = vld [vmem:[%s1 + $0x98] sm:$0xff]
  %v215 = vld [vmem:[%s1 + $0xa0] sm:$0xff]
  %v216 = vld [vmem:[%s1 + $0xa8] sm:$0xff]
  %v217 = vld [vmem:[%s1 + $0xb0] sm:$0xff]
  %v218 = vld [vmem:[%s1 + $0xb8] sm:$0xff]
  %v219 = vld [vmem:[%s1 + $0xc0] sm:$0xff]
  %v220 = vld [vmem:[%s1 + $0xc8] sm:$0xff]
  %v221 = vld [vmem:[%s1 + $0xd0] sm:$0xff]
  %v222 = vld [vmem:[%s1 + $0xd8] sm:$0xff]
  %v223 = vld [vmem:[%s1 + $0xe0] sm:$0xff]
  %v224 = vld [vmem:[%s1 + $0xe8] sm:$0xff]
  %v225 = vld [vmem:[%s1 + $0xf0] sm:$0xff]
  %v226 = vld [vmem:[%s1 + $0xf8] sm:$0xff]
  %v227 = vld [vmem:[%s1 + $0x100] sm:$0xff]
  %v228 = vld [vmem:[%s1 + $0x108] sm:$0xff]
  %v229 = vld [vmem:[%s1 + $0x110] sm:$0xff]
  %v230 = vld [vmem:[%s1 + $0x118] sm:$0xff]
  %v231 = vld [vmem:[%s1 + $0x120] sm:$0xff]
  %v232 = vld [vmem:[%s1 + $0x128] sm:$0xff]
  %v233 = vld [vmem:[%s1 + $0x130] sm:$0xff]
  %v234 = vld [vmem:[%s1 + $0x138] sm:$0xff]
  %v235 = vld [vmem:[%s1 + $0x140] sm:$0xff]
  %v236 = vld [vmem:[%s1 + $0x148] sm:$0xff]
  %v237 = vld [vmem:[%s1 + $0x150] sm:$0xff]
  %v238 = vld [vmem:[%s1 + $0x158] sm:$0xff]
  %v239 = vld [vmem:[%s1 + $0x160] sm:$0xff]
  %v240 = vld [vmem:[%s1 + $0x168] sm:$0xff]
  %v241 = vld [vmem:[%s1 + $0x170] sm:$0xff]
  %v242 = vld [vmem:[%s1 + $0x178] sm:$0xff]
  %v243 = vld [vmem:[%s1 + $0x180] sm:$0xff]
  %v244 = vld [vmem:[%s1 + $0x188] sm:$0xff]
  %v245 = vld [vmem:[%s1 + $0x190] sm:$0xff]
  %v246 = vld [vmem:[%s1 + $0x198] sm:$0xff]
  %v247 = vld [vmem:[%s1 + $0x1a0] sm:$0xff]
  %v248 = vld [vmem:[%s1 + $0x1a8] sm:$0xff]
  %v249 = vld [vmem:[%s1 + $0x1b0] sm:$0xff]
  %v250 = vld [vmem:[%s1 + $0x1b8] sm:$0xff]
  %v251 = vld [vmem:[%s1 + $0x1c0] sm:$0xff]
  %v252 = vld [vmem:[%s1 + $0x1c8] sm:$0xff]
  %v253 = vld [vmem:[%s1 + $0x1d0] sm:$0xff]
  %v254 = vld [vmem:[%s1 + $0x1d8] sm:$0xff]
  %v255 = vld [vmem:[%s1 + $0x1e0] sm:$0xff]
  %v256 = vld [vmem:[%s1 + $0x1e8] sm:$0xff]
  %v257 = vld [vmem:[%s1 + $0x1f0] sm:$0xff]
  %v258 = vld [vmem:[%s1 + $0x1f8] sm:$0xff]
  %v259 = vld [vmem:[%s1 + $0x200] sm:$0xff]
  %v260 = vld [vmem:[%s1 + $0x208] sm:$0xff]
  %v261 = vld [vmem:[%s1 + $0x210] sm:$0xff]
  %v262 = vld [vmem:[%s1 + $0x218] sm:$0xff]
  %v263 = vld [vmem:[%s1 + $0x220] sm:$0xff]
  %v264 = vld [vmem:[%s1 + $0x228] sm:$0xff]
  %v265 = vld [vmem:[%s1 + $0x230] sm:$0xff]
  %v266 = vld [vmem:[%s1 + $0x238] sm:$0xff]
  %v267 = vld [vmem:[%s1 + $0x240] sm:$0xff]
  %v268 = vld [vmem:[%s1 + $0x248] sm:$0xff]
  %v269 = vld [vmem:[%s1 + $0x250] sm:$0xff]
  %v270 = vld [vmem:[%s1 + $0x258] sm:$0xff]
  %v271 = vld [vmem:[%s1 + $0x260] sm:$0xff]
  %v272 = vld [vmem:[%s1 + $0x268] sm:$0xff]
  %v273 = vld [vmem:[%s1 + $0x270] sm:$0xff]
  %v274 = vld [vmem:[%s1 + $0x278] sm:$0xff]
  %v275 = vld [vmem:[%s1 + $0x280] sm:$0xff]
  %v276 = vld [vmem:[%s1 + $0x288] sm:$0xff]
  %v277 = vld [vmem:[%s1 + $0x290] sm:$0xff]
  %v278 = vld [vmem:[%s1 + $0x298] sm:$0xff]
  %v279 = vld [vmem:[%s1 + $0x2a0] sm:$0xff]
  %v280 = vld [vmem:[%s1 + $0x2a8] sm:$0xff]
  %v281 = vld [vmem:[%s1 + $0x2b0] sm:$0xff]
  %v282 = vld [vmem:[%s1 + $0x2b8] sm:$0xff]
  %v283 = vld [vmem:[%s1 + $0x2c0] sm:$0xff]
  %v284 = vld [vmem:[%s1 + $0x2c8] sm:$0xff]
  %v285 = vld [vmem:[%s1 + $0x2d0] sm:$0xff]
  %v286 = vld [vmem:[%s1 + $0x2d8] sm:$0xff]
  %v287 = vld [vmem:[%s1 + $0x2e0] sm:$0xff]
  %v288 = vld [vmem:[%s1 + $0x2e8] sm:$0xff]
  %v289 = vld [vmem:[%s1 + $0x2f0] sm:$0xff]
  %v290 = vld [vmem:[%s1 + $0x2f8] sm:$0xff]
  %v291 = vld [vmem:[%s1 + $0x300] sm:$0xff]
  %v292 = vld [vmem:[%s1 + $0x308] sm:$0xff]
  %v293 = vld [vmem:[%s1 + $0x310] sm:$0xff]
  %v294 = vld [vmem:[%s1 + $0x318] sm:$0xff]
  %v295 = vld [vmem:[%s1 + $0x320] sm:$0xff]
  %v296 = vld [vmem:[%s1 + $0x328] sm:$0xff]
  %v297 = vld [vmem:[%s1 + $0x330] sm:$0xff]
  %v298 = vld [vmem:[%s1 + $0x338] sm:$0xff]
  %v299 = vld [vmem:[%s1 + $0x340] sm:$0xff]
  %v300 = vld [vmem:[%s1 + $0x348] sm:$0xff]
  %v301 = vld [vmem:[%s1 + $0x350] sm:$0xff]
  %v302 = vld [vmem:[%s1 + $0x358] sm:$0xff]
  %v303 = vld [vmem:[%s1 + $0x360] sm:$0xff]
  %v304 = vld [vmem:[%s1 + $0x368] sm:$0xff]
  %v305 = vld [vmem:[%s1 + $0x370] sm:$0xff]
  %v306 = vld [vmem:[%s1 + $0x378] sm:$0xff]
  %v307 = vld [vmem:[%s1 + $0x380] sm:$0xff]
  %v308 = vld [vmem:[%s1 + $0x388] sm:$0xff]
  %v309 = vld [vmem:[%s1 + $0x390] sm:$0xff]
  %v310 = vld [vmem:[%s1 + $0x398] sm:$0xff]
  %v311 = vld [vmem:[%s1 + $0x3a0] sm:$0xff]
  %v312 = vld [vmem:[%s1 + $0x3a8] sm:$0xff]
  %v313 = vld [vmem:[%s1 + $0x3b0] sm:$0xff]
  %v314 = vld [vmem:[%s1 + $0x3b8] sm:$0xff]
  %v315 = vld [vmem:[%s1 + $0x3c0] sm:$0xff]
  %v316 = vld [vmem:[%s1 + $0x3c8] sm:$0xff]
  %v317 = vld [vmem:[%s1 + $0x3d0] sm:$0xff]
  %v318 = vld [vmem:[%s1 + $0x3d8] sm:$0xff]
  %v319 = vld [vmem:[%s1 + $0x3e0] sm:$0xff]
  %v320 = vld [vmem:[%s1 + $0x3e8] sm:$0xff]
  %v321 = vld [vmem:[%s1 + $0x3f0] sm:$0xff]
  %v322 = vld [vmem:[%s1 + $0x3f8] sm:$0xff]
  %v323 = vld [vmem:[%s1 + $0x400] sm:$0xff]
  %v324 = vld [vmem:[%s1 + $0x408] sm:$0xff]
  %v325 = vld [vmem:[%s1 + $0x410] sm:$0xff]
  %v326 = vld [vmem:[%s1 + $0x418] sm:$0xff]
  %v327 = vld [vmem:[%s1 + $0x420] sm:$0xff]
  %v328 = vld [vmem:[%s1 + $0x428] sm:$0xff]
  %v329 = vld [vmem:[%s1 + $0x430] sm:$0xff]
  %v330 = vld [vmem:[%s1 + $0x438] sm:$0xff]
  %v331 = vld [vmem:[%s1 + $0x440] sm:$0xff]
  %v332 = vld [vmem:[%s1 + $0x448] sm:$0xff]
  %v333 = vld [vmem:[%s1 + $0x450] sm:$0xff]
  %v334 = vld [vmem:[%s1 + $0x458] sm:$0xff]
  %v335 = vld [vmem:[%s1 + $0x460] sm:$0xff]
  %v336 = vld [vmem:[%s1 + $0x468] sm:$0xff]
  %v337 = vld [vmem:[%s1 + $0x470] sm:$0xff]
  %v338 = vld [vmem:[%s1 + $0x478] sm:$0xff]
  %v339 = vld [vmem:[%s1 + $0x480] sm:$0xff]
  %v340 = vld [vmem:[%s1 + $0x488] sm:$0xff]
  %v341 = vld [vmem:[%s1 + $0x490] sm:$0xff]
  %v342 = vld [vmem:[%s1 + $0x498] sm:$0xff]
  %v343 = vld [vmem:[%s1 + $0x4a0] sm:$0xff]
  %v344 = vld [vmem:[%s1 + $0x4a8] sm:$0xff]
  %v345 = vld [vmem:[%s1 + $0x4b0] sm:$0xff]
  %v346 = vld [vmem:[%s1 + $0x4b8] sm:$0xff]
  %v347 = vld [vmem:[%s1 + $0x4c0] sm:$0xff]
  %v348 = vld [vmem:[%s1 + $0x4c8] sm:$0xff]
  %v349 = vld [vmem:[%s1 + $0x4d0] sm:$0xff]
  %v350 = vld [vmem:[%s1 + $0x4d8] sm:$0xff]
  %v351 = vld [vmem:[%s1 + $0x4e0] sm:$0xff]
  %v352 = vld [vmem:[%s1 + $0x4e8] sm:$0xff]
  %v353 = vld [vmem:[%s1 + $0x4f0] sm:$0xff]
  %v354 = vld [vmem:[%s1 + $0x4f8] sm:$0xff]
  %v355 = vld [vmem:[%s1 + $0x500] sm:$0xff]
  %v356 = vld [vmem:[%s1 + $0x508] sm:$0xff]
  %v357 = vld [vmem:[%s1 + $0x510] sm:$0xff]
  %v358 = vld [vmem:[%s1 + $0x518] sm:$0xff]
  %v359 = vld [vmem:[%s1 + $0x520] sm:$0xff]
  %v360 = vld [vmem:[%s1 + $0x528] sm:$0xff]
  %v361 = vld [vmem:[%s1 + $0x530] sm:$0xff]
  %v362 = vld [vmem:[%s1 + $0x538] sm:$0xff]
  %v363 = vld [vmem:[%s1 + $0x540] sm:$0xff]
  %v364 = vld [vmem:[%s1 + $0x548] sm:$0xff]
  %v365 = vld [vmem:[%s1 + $0x550] sm:$0xff]
  %v366 = vld [vmem:[%s1 + $0x558] sm:$0xff]
  %v367 = vld [vmem:[%s1 + $0x560] sm:$0xff]
  %v368 = vld [vmem:[%s1 + $0x568] sm:$0xff]
  %v369 = vld [vmem:[%s1 + $0x570] sm:$0xff]
  %v370 = vld [vmem:[%s1 + $0x578] sm:$0xff]
  %v371 = vld [vmem:[%s1 + $0x580] sm:$0xff]
  %v372 = vld [vmem:[%s1 + $0x588] sm:$0xff]
  %v373 = vld [vmem:[%s1 + $0x590] sm:$0xff]
  %v374 = vld [vmem:[%s1 + $0x598] sm:$0xff]
  %v375 = vld [vmem:[%s1 + $0x5a0] sm:$0xff]
  %v376 = vld [vmem:[%s1 + $0x5a8] sm:$0xff]
  %v377 = vld [vmem:[%s1 + $0x5b0] sm:$0xff]
  %v378 = vld [vmem:[%s1 + $0x5b8] sm:$0xff]
  %v379 = vld [vmem:[%s1 + $0x5c0] sm:$0xff]
  %v380 = vld [vmem:[%s1 + $0x5c8] sm:$0xff]
  %v381 = vld [vmem:[%s1 + $0x5d0] sm:$0xff]
  %v382 = vld [vmem:[%s1 + $0x5d8] sm:$0xff]
  %v383 = vld [vmem:[%s1 + $0x5e0] sm:$0xff]
  %v384 = vld [vmem:[%s1 + $0x5e8] sm:$0xff]
  %v385 = vld [vmem:[%s1 + $0x5f0] sm:$0xff]
  %v386 = vld [vmem:[%s1 + $0x5f8] sm:$0xff]
  %v387 = vld [vmem:[%s1 + $0x600] sm:$0xff]
  %v388 = vld [vmem:[%s1 + $0x608] sm:$0xff]
  %v389 = vld [vmem:[%s1 + $0x610] sm:$0xff]
  %v390 = vld [vmem:[%s1 + $0x618] sm:$0xff]
  %v391 = vld [vmem:[%s1 + $0x620] sm:$0xff]
  %v392 = vld [vmem:[%s1 + $0x628] sm:$0xff]
  %v393 = vld [vmem:[%s1 + $0x630] sm:$0xff]
  %v394 = vld [vmem:[%s1 + $0x638] sm:$0xff]
  %v395 = vld [vmem:[%s1 + $0x640] sm:$0xff]
  %v396 = vld [vmem:[%s1 + $0x648] sm:$0xff]
  %v397 = vld [vmem:[%s1 + $0x650] sm:$0xff]
  %v398 = vld [vmem:[%s1 + $0x658] sm:$0xff]
  %v399 = vld [vmem:[%s1 + $0x660] sm:$0xff]
  %v400 = vld [vmem:[%s1 + $0x668] sm:$0xff]
  %v401 = vld [vmem:[%s1 + $0x670] sm:$0xff]
  %v402 = vld [vmem:[%s1 + $0x678] sm:$0xff]
  %v403 = vld [vmem:[%s1 + $0x680] sm:$0xff]
  %v404 = vld [vmem:[%s1 + $0x688] sm:$0xff]
  %v405 = vld [vmem:[%s1 + $0x690] sm:$0xff]
  %v406 = vld [vmem:[%s1 + $0x698] sm:$0xff]
  %v407 = vld [vmem:[%s1 + $0x6a0] sm:$0xff]
  %v408 = vld [vmem:[%s1 + $0x6a8] sm:$0xff]
  %v409 = vld [vmem:[%s1 + $0x6b0] sm:$0xff]
  %v410 = vld [vmem:[%s1 + $0x6b8] sm:$0xff]
  %v411 = vld [vmem:[%s1 + $0x6c0] sm:$0xff]
  %v412 = vld [vmem:[%s1 + $0x6c8] sm:$0xff]
  %v413 = vld [vmem:[%s1 + $0x6d0] sm:$0xff]
  %v414 = vld [vmem:[%s1 + $0x6d8] sm:$0xff]
  %v415 = vld [vmem:[%s1 + $0x6e0] sm:$0xff]
  %v416 = vld [vmem:[%s1 + $0x6e8] sm:$0xff]
  %v417 = vld [vmem:[%s1 + $0x6f0] sm:$0xff]
  %v418 = vld [vmem:[%s1 + $0x6f8] sm:$0xff]
  %v419 = vld [vmem:[%s1 + $0x700] sm:$0xff]
  %v420 = vld [vmem:[%s1 + $0x708] sm:$0xff]
  %v421 = vld [vmem:[%s1 + $0x710] sm:$0xff]
  %v422 = vld [vmem:[%s1 + $0x718] sm:$0xff]
  %v423 = vld [vmem:[%s1 + $0x720] sm:$0xff]
  %v424 = vld [vmem:[%s1 + $0x728] sm:$0xff]
  %v425 = vld [vmem:[%s1 + $0x730] sm:$0xff]
  %v426 = vld [vmem:[%s1 + $0x738] sm:$0xff]
  %v427 = vld [vmem:[%s1 + $0x740] sm:$0xff]
  %v428 = vld [vmem:[%s1 + $0x748] sm:$0xff]
  %v429 = vld [vmem:[%s1 + $0x750] sm:$0xff]
  %v430 = vld [vmem:[%s1 + $0x758] sm:$0xff]
  %v431 = vld [vmem:[%s1 + $0x760] sm:$0xff]
  %v432 = vld [vmem:[%s1 + $0x768] sm:$0xff]
  %v433 = vld [vmem:[%s1 + $0x770] sm:$0xff]
  %v434 = vld [vmem:[%s1 + $0x778] sm:$0xff]
  %v435 = vld [vmem:[%s1 + $0x780] sm:$0xff]
  %v436 = vld [vmem:[%s1 + $0x788] sm:$0xff]
  %v437 = vld [vmem:[%s1 + $0x790] sm:$0xff]
  %v438 = vld [vmem:[%s1 + $0x798] sm:$0xff]
  %v439 = vld [vmem:[%s1 + $0x7a0] sm:$0xff]
  %v440 = vld [vmem:[%s1 + $0x7a8] sm:$0xff]
  %v441 = vld [vmem:[%s1 + $0x7b0] sm:$0xff]
  %v442 = vld [vmem:[%s1 + $0x7b8] sm:$0xff]
  %v443 = vld [vmem:[%s1 + $0x7c0] sm:$0xff]
  %v444 = vld [vmem:[%s1 + $0x7c8] sm:$0xff]
  %v445 = vld [vmem:[%s1 + $0x7d0] sm:$0xff]
  %v446 = vld [vmem:[%s1 + $0x7d8] sm:$0xff]
  %v447 = vld [vmem:[%s1 + $0x7e0] sm:$0xff]
  %v448 = vld [vmem:[%s1 + $0x7e8] sm:$0xff]
  %v449 = vld [vmem:[%s1 + $0x7f0] sm:$0xff]
  %v450 = vld [vmem:[%s1 + $0x7f8] sm:$0xff]
  %v451 = vld [vmem:[%s1 + $0x800] sm:$0xff]
  %v452 = vld [vmem:[%s1 + $0x808] sm:$0xff]
  %v453 = vld [vmem:[%s1 + $0x810] sm:$0xff]
  %v454 = vld [vmem:[%s1 + $0x818] sm:$0xff]
  %v455 = vld [vmem:[%s1 + $0x820] sm:$0xff]
  %v456 = vld [vmem:[%s1 + $0x828] sm:$0xff]
  %v457 = vld [vmem:[%s1 + $0x830] sm:$0xff]
  %v458 = vld [vmem:[%s1 + $0x838] sm:$0xff]
  %v459 = vld [vmem:[%s1 + $0x840] sm:$0xff]
  %v460 = vld [vmem:[%s1 + $0x848] sm:$0xff]
  %v461 = vld [vmem:[%s1 + $0x850] sm:$0xff]
  %v462 = vld [vmem:[%s1 + $0x858] sm:$0xff]
  %v463 = vld [vmem:[%s1 + $0x860] sm:$0xff]
  %v464 = vld [vmem:[%s1 + $0x868] sm:$0xff]
  %v465 = vld [vmem:[%s1 + $0x870] sm:$0xff]
  %v466 = vld [vmem:[%s1 + $0x878] sm:$0xff]
  %v467 = vld [vmem:[%s1 + $0x880] sm:$0xff]
  %v468 = vld [vmem:[%s1 + $0x888] sm:$0xff]
  %v469 = vld [vmem:[%s1 + $0x890] sm:$0xff]
  %v470 = vld [vmem:[%s1 + $0x898] sm:$0xff]
  %v471 = vld [vmem:[%s1 + $0x8a0] sm:$0xff]
  %v472 = vld [vmem:[%s1 + $0x8a8] sm:$0xff]
  %v473 = vld [vmem:[%s1 + $0x8b0] sm:$0xff]
  %v474 = vld [vmem:[%s1 + $0x8b8] sm:$0xff]
  %v475 = vld [vmem:[%s1 + $0x8c0] sm:$0xff]
  %v476 = vld [vmem:[%s1 + $0x8c8] sm:$0xff]
  %v477 = vld [vmem:[%s1 + $0x8d0] sm:$0xff]
  %v478 = vld [vmem:[%s1 + $0x8d8] sm:$0xff]
  %v479 = vld [vmem:[%s1 + $0x8e0] sm:$0xff]
  %v480 = vld [vmem:[%s1 + $0x8e8] sm:$0xff]
  %v481 = vld [vmem:[%s1 + $0x8f0] sm:$0xff]
  %v482 = vld [vmem:[%s1 + $0x8f8] sm:$0xff]
  %v483 = vld [vmem:[%s1 + $0x900] sm:$0xff]
  %v484 = vld [vmem:[%s1 + $0x908] sm:$0xff]
  %v485 = vld [vmem:[%s1 + $0x910] sm:$0xff]
  %v486 = vld [vmem:[%s1 + $0x918] sm:$0xff]
  %v487 = vld [vmem:[%s1 + $0x920] sm:$0xff]
  %v488 = vld [vmem:[%s1 + $0x928] sm:$0xff]
  %v489 = vld [vmem:[%s1 + $0x930] sm:$0xff]
  %v490 = vld [vmem:[%s1 + $0x938] sm:$0xff]
  %v491 = vld [vmem:[%s1 + $0x940] sm:$0xff]
  %v492 = vld [vmem:[%s1 + $0x948] sm:$0xff]
  %v493 = vld [vmem:[%s1 + $0x950] sm:$0xff]
  %v494 = vld [vmem:[%s1 + $0x958] sm:$0xff]
  %v495 = vld [vmem:[%s1 + $0x960] sm:$0xff]
  %v496 = vld [vmem:[%s1 + $0x968] sm:$0xff]
  %v497 = vld [vmem:[%s1 + $0x970] sm:$0xff]
  %v498 = vld [vmem:[%s1 + $0x978] sm:$0xff]
  %v499 = vld [vmem:[%s1 + $0x980] sm:$0xff]
  %v500 = vld [vmem:[%s1 + $0x988] sm:$0xff]
  %v501 = vld [vmem:[%s1 + $0x990] sm:$0xff]
  %v502 = vld [vmem:[%s1 + $0x998] sm:$0xff]
  %v503 = vld [vmem:[%s1 + $0x9a0] sm:$0xff]
  %v504 = vld [vmem:[%s1 + $0x9a8] sm:$0xff]
  %v505 = vld [vmem:[%s1 + $0x9b0] sm:$0xff]
  %v506 = vld [vmem:[%s1 + $0x9b8] sm:$0xff]
  %v507 = vld [vmem:[%s1 + $0x9c0] sm:$0xff]
  %v508 = vld [vmem:[%s1 + $0x9c8] sm:$0xff]
  %v509 = vld [vmem:[%s1 + $0x9d0] sm:$0xff]
  %v510 = vld [vmem:[%s1 + $0x9d8] sm:$0xff]
  %v511 = vld [vmem:[%s1 + $0x9e0] sm:$0xff]
  %v512 = vld [vmem:[%s1 + $0x9e8] sm:$0xff]
  %v513 = vld [vmem:[%s1 + $0x9f0] sm:$0xff]
  %v514 = vld [vmem:[%s1 + $0x9f8] sm:$0xff]
  %v515 = vld [vmem:[%s1 + $0xa00] sm:$0xff]
  %v516 = vld [vmem:[%s1 + $0xa08] sm:$0xff]
  %v517 = vld [vmem:[%s1 + $0xa10] sm:$0xff]
  %v518 = vld [vmem:[%s1 + $0xa18] sm:$0xff]
  %v519 = vld [vmem:[%s1 + $0xa20] sm:$0xff]
  %v520 = vld [vmem:[%s1 + $0xa28] sm:$0xff]
  %v521 = vld [vmem:[%s1 + $0xa30] sm:$0xff]
  %v522 = vld [vmem:[%s1 + $0xa38] sm:$0xff]
  %v523 = vld [vmem:[%s1 + $0xa40] sm:$0xff]
  %v524 = vld [vmem:[%s1 + $0xa48] sm:$0xff]
  %v525 = vld [vmem:[%s1 + $0xa50] sm:$0xff]
  %v526 = vld [vmem:[%s1 + $0xa58] sm:$0xff]
  %v527 = vld [vmem:[%s1 + $0xa60] sm:$0xff]
  %v528 = vld [vmem:[%s1 + $0xa68] sm:$0xff]
  %v529 = vld [vmem:[%s1 + $0xa70] sm:$0xff]
  %v530 = vld [vmem:[%s1 + $0xa78] sm:$0xff]
  %v531 = vld [vmem:[%s1 + $0xa80] sm:$0xff]
  %v532 = vld [vmem:[%s1 + $0xa88] sm:$0xff]
  %v533 = vld [vmem:[%s1 + $0xa90] sm:$0xff]
  %v534 = vld [vmem:[%s1 + $0xa98] sm:$0xff]
  %v535 = vld [vmem:[%s1 + $0xaa0] sm:$0xff]
  %v536 = vld [vmem:[%s1 + $0xaa8] sm:$0xff]
  %v537 = vld [vmem:[%s1 + $0xab0] sm:$0xff]
  %v538 = vld [vmem:[%s1 + $0xab8] sm:$0xff]
  %v539 = vld [vmem:[%s1 + $0xac0] sm:$0xff]
  %v540 = vld [vmem:[%s1 + $0xac8] sm:$0xff]
  %v541 = vld [vmem:[%s1 + $0xad0] sm:$0xff]
  %v542 = vld [vmem:[%s1 + $0xad8] sm:$0xff]
  %v543 = vld [vmem:[%s1 + $0xae0] sm:$0xff]
  %v544 = vld [vmem:[%s1 + $0xae8] sm:$0xff]
  %v545 = vld [vmem:[%s1 + $0xaf0] sm:$0xff]
  %v546 = vld [vmem:[%s1 + $0xaf8] sm:$0xff]
  %v547 = vld [vmem:[%s1 + $0xb00] sm:$0xff]
  %v548 = vld [vmem:[%s1 + $0xb08] sm:$0xff]
  %v549 = vld [vmem:[%s1 + $0xb10] sm:$0xff]
  %v550 = vld [vmem:[%s1 + $0xb18] sm:$0xff]
  %v551 = vld [vmem:[%s1 + $0xb20] sm:$0xff]
  %v552 = vld [vmem:[%s1 + $0xb28] sm:$0xff]
  %v553 = vld [vmem:[%s1 + $0xb30] sm:$0xff]
  %v554 = vld [vmem:[%s1 + $0xb38] sm:$0xff]
  %v555 = vld [vmem:[%s1 + $0xb40] sm:$0xff]
  %v556 = vld [vmem:[%s1 + $0xb48] sm:$0xff]
  %v557 = vld [vmem:[%s1 + $0xb50] sm:$0xff]
  %v558 = vld [vmem:[%s1 + $0xb58] sm:$0xff]
  %v559 = vld [vmem:[%s1 + $0xb60] sm:$0xff]
  %v560 = vld [vmem:[%s1 + $0xb68] sm:$0xff]
  %v561 = vld [vmem:[%s1 + $0xb70] sm:$0xff]
  %v562 = vld [vmem:[%s1 + $0xb78] sm:$0xff]
  %v563 = vld [vmem:[%s1 + $0xb80] sm:$0xff]
  %v564 = vld [vmem:[%s1 + $0xb88] sm:$0xff]
  %v565 = vld [vmem:[%s1 + $0xb90] sm:$0xff]
  %v566 = vld [vmem:[%s1 + $0xb98] sm:$0xff]
  %v567 = vld [vmem:[%s1 + $0xba0] sm:$0xff]
  %v568 = vld [vmem:[%s1 + $0xba8] sm:$0xff]
  %v569 = vld [vmem:[%s1 + $0xbb0] sm:$0xff]
  %v570 = vld [vmem:[%s1 + $0xbb8] sm:$0xff]
  %v571 = vld [vmem:[%s1 + $0xbc0] sm:$0xff]
  %v572 = vld [vmem:[%s1 + $0xbc8] sm:$0xff]
  %v573 = vld [vmem:[%s1 + $0xbd0] sm:$0xff]
  %v574 = vld [vmem:[%s1 + $0xbd8] sm:$0xff]
  %v575 = vld [vmem:[%s1 + $0xbe0] sm:$0xff]
  %v576 = vld [vmem:[%s1 + $0xbe8] sm:$0xff]
  %v577 = vld [vmem:[%s1 + $0xbf0] sm:$0xff]
  %v578 = vld [vmem:[%s1 + $0xbf8] sm:$0xff]
  %v579 = vld [vmem:[%s1 + $0xc00] sm:$0xff]
  %v580 = vld [vmem:[%s1 + $0xc08] sm:$0xff]
  %v581 = vld [vmem:[%s1 + $0xc10] sm:$0xff]
  %v582 = vld [vmem:[%s1 + $0xc18] sm:$0xff]
  %v583 = vld [vmem:[%s1 + $0xc20] sm:$0xff]
  %v584 = vld [vmem:[%s1 + $0xc28] sm:$0xff]
  %v585 = vld [vmem:[%s1 + $0xc30] sm:$0xff]
  %v586 = vld [vmem:[%s1 + $0xc38] sm:$0xff]
  %v587 = vld [vmem:[%s1 + $0xc40] sm:$0xff]
  %v588 = vld [vmem:[%s1 + $0xc48] sm:$0xff]
  %v589 = vld [vmem:[%s1 + $0xc50] sm:$0xff]
  %v590 = vld [vmem:[%s1 + $0xc58] sm:$0xff]
  %v591 = vld [vmem:[%s1 + $0xc60] sm:$0xff]
  %v592 = vld [vmem:[%s1 + $0xc68] sm:$0xff]
  %v593 = vld [vmem:[%s1 + $0xc70] sm:$0xff]
  %v594 = vld [vmem:[%s1 + $0xc78] sm:$0xff]
  %595 = vmatprep.subr.mxu0 0.0
  %596 = vmatpush1.msra.mxu0 %v210
  %597 = vmatprep.subr.mxu0 0.0
  %598 = vmatpush1.msra.mxu0 %v209
  %599 = vmatprep.subr.mxu0 0.0
  %600 = vmatpush1.msra.mxu0 %v208
  %601 = vmatprep.subr.mxu0 0.0
  %602 = vmatpush1.msra.mxu0 %v207
  %603 = vmatprep.subr.mxu0 0.0
  %604 = vmatpush1.msra.mxu0 %v206
  %605 = vmatprep.subr.mxu0 0.0
  %606 = vmatpush1.msra.mxu0 %v205
  %607 = vmatprep.subr.mxu0 0.0
  %608 = vmatpush1.msra.mxu0 %v204
  %609 = vmatprep.subr.mxu0 0.0
  %610 = vmatpush1.msra.mxu0 %v203
  %611 = vmatprep.subr.mxu0 0.0
  %612 = vmatpush1.msra.mxu0 %v202
  %613 = vmatprep.subr.mxu0 0.0
  %614 = vmatpush1.msra.mxu0 %v201
  %615 = vmatprep.subr.mxu0 0.0
  %616 = vmatpush1.msra.mxu0 %v200
  %617 = vmatprep.subr.mxu0 0.0
  %618 = vmatpush1.msra.mxu0 %v199
  %619 = vmatprep.subr.mxu0 0.0
  %620 = vmatpush1.msra.mxu0 %v198
  %621 = vmatprep.subr.mxu0 0.0
  %622 = vmatpush1.msra.mxu0 %v197
  %623 = vmatprep.subr.mxu0 0.0
  %624 = vmatpush1.msra.mxu0 %v196
  %625 = vmatprep.subr.mxu0 0.0
  %626 = vmatpush1.msra.mxu0 %v195
  %627 = vmatprep.subr.mxu0 0.0
  %628 = vmatpush2.msra.mxu0 %v226
  %629 = vmatprep.subr.mxu0 0.0
  %630 = vmatpush2.msra.mxu0 %v225
  %631 = vmatprep.subr.mxu0 0.0
  %632 = vmatpush2.msra.mxu0 %v224
  %633 = vmatprep.subr.mxu0 0.0
  %634 = vmatpush2.msra.mxu0 %v223
  %635 = vmatprep.subr.mxu0 0.0
  %636 = vmatpush2.msra.mxu0 %v222
  %637 = vmatprep.subr.mxu0 0.0
  %638 = vmatpush2.msra.mxu0 %v221
  %639 = vmatprep.subr.mxu0 0.0
  %640 = vmatpush2.msra.mxu0 %v220
  %641 = vmatprep.subr.mxu0 0.0
  %642 = vmatpush2.msra.mxu0 %v219
  %643 = vmatprep.subr.mxu0 0.0
  %644 = vmatpush2.msra.mxu0 %v218
  %645 = vmatprep.subr.mxu0 0.0
  %646 = vmatpush2.msra.mxu0 %v217
  %647 = vmatprep.subr.mxu0 0.0
  %648 = vmatpush2.msra.mxu0 %v216
  %649 = vmatprep.subr.mxu0 0.0
  %650 = vmatpush2.msra.mxu0 %v215
  %651 = vmatprep.subr.mxu0 0.0
  %652 = vmatpush2.msra.mxu0 %v214
  %653 = vmatprep.subr.mxu0 0.0
  %654 = vmatpush2.msra.mxu0 %v213
  %655 = vmatprep.subr.mxu0 0.0
  %656 = vmatpush2.msra.mxu0 %v212
  %657 = vmatprep.subr.mxu0 0.0
  %658 = vmatpush2.msra.mxu0 %v211
  %659 = vmatprep.mubr.f32.mxu0 %v21
  %660 = vmatmul.mubr.f32.gmra.mxu0 %v20
  %v661 = vpop.f32.mrf.mxu0
  %v662 = vadd.f32 0.0, %v661
  %v663 = vpop.f32.mrf.mxu0
  %664 = vmatprep.mubr.f32.mxu0 %v46
  %665 = vmatmul.mubr.f32.gmra.mxu0 %v45
  %v666 = vpop.f32.mrf.mxu0
  %v667 = vadd.f32 0.0, %v666
  %v668 = vpop.f32.mrf.mxu0
  %669 = vmatprep.mubr.f32.mxu0 %v71
  %670 = vmatmul.mubr.f32.gmra.mxu0 %v70
  %v671 = vpop.f32.mrf.mxu0
  %v672 = vadd.f32 0.0, %v671
  %v673 = vpop.f32.mrf.mxu0
  %674 = vmatprep.mubr.f32.mxu0 %v96
  %675 = vmatmul.mubr.f32.gmra.mxu0 %v95
  %v676 = vpop.f32.mrf.mxu0
  %v677 = vadd.f32 0.0, %v676
  %v678 = vpop.f32.mrf.mxu0
  %679 = vmatprep.mubr.f32.mxu0 %v121
  %680 = vmatmul.mubr.f32.gmra.mxu0 %v120
  %v681 = vpop.f32.mrf.mxu0
  %v682 = vadd.f32 0.0, %v681
  %v683 = vpop.f32.mrf.mxu0
  %684 = vmatprep.mubr.f32.mxu0 %v146
  %685 = vmatmul.mubr.f32.gmra.mxu0 %v145
  %v686 = vpop.f32.mrf.mxu0
  %v687 = vadd.f32 0.0, %v686
  %v688 = vpop.f32.mrf.mxu0
  %689 = vmatprep.mubr.f32.mxu0 %v171
  %690 = vmatmul.mubr.f32.gmra.mxu0 %v170
  %v691 = vpop.f32.mrf.mxu0
  %v692 = vadd.f32 0.0, %v691
  %v693 = vpop.f32.mrf.mxu0
  %694 = vdwg.mxu0
  %695 = vmatprep.subr.mxu0 0.0
  %696 = vmatpush1.msra.mxu0 %v242
  %697 = vmatprep.subr.mxu0 0.0
  %698 = vmatpush1.msra.mxu0 %v241
  %699 = vmatprep.subr.mxu0 0.0
  %700 = vmatpush1.msra.mxu0 %v240
  %701 = vmatprep.subr.mxu0 0.0
  %702 = vmatpush1.msra.mxu0 %v239
  %703 = vmatprep.subr.mxu0 0.0
  %704 = vmatpush1.msra.mxu0 %v238
  %705 = vmatprep.subr.mxu0 0.0
  %706 = vmatpush1.msra.mxu0 %v237
  %707 = vmatprep.subr.mxu0 0.0
  %708 = vmatpush1.msra.mxu0 %v236
  %709 = vmatprep.subr.mxu0 0.0
  %710 = vmatpush1.msra.mxu0 %v235
  %711 = vmatprep.subr.mxu0 0.0
  %712 = vmatpush1.msra.mxu0 %v234
  %713 = vmatprep.subr.mxu0 0.0
  %714 = vmatpush1.msra.mxu0 %v233
  %715 = vmatprep.subr.mxu0 0.0
  %716 = vmatpush1.msra.mxu0 %v232
  %717 = vmatprep.subr.mxu0 0.0
  %718 = vmatpush1.msra.mxu0 %v231
  %719 = vmatprep.subr.mxu0 0.0
  %720 = vmatpush1.msra.mxu0 %v230
  %721 = vmatprep.subr.mxu0 0.0
  %722 = vmatpush1.msra.mxu0 %v229
  %723 = vmatprep.subr.mxu0 0.0
  %724 = vmatpush1.msra.mxu0 %v228
  %725 = vmatprep.subr.mxu0 0.0
  %726 = vmatpush1.msra.mxu0 %v227
  %727 = vmatprep.subr.mxu0 0.0
  %728 = vmatpush2.msra.mxu0 %v258
  %729 = vmatprep.subr.mxu0 0.0
  %730 = vmatpush2.msra.mxu0 %v257
  %731 = vmatprep.subr.mxu0 0.0
  %732 = vmatpush2.msra.mxu0 %v256
  %733 = vmatprep.subr.mxu0 0.0
  %734 = vmatpush2.msra.mxu0 %v255
  %735 = vmatprep.subr.mxu0 0.0
  %736 = vmatpush2.msra.mxu0 %v254
  %737 = vmatprep.subr.mxu0 0.0
  %738 = vmatpush2.msra.mxu0 %v253
  %739 = vmatprep.subr.mxu0 0.0
  %740 = vmatpush2.msra.mxu0 %v252
  %741 = vmatprep.subr.mxu0 0.0
  %742 = vmatpush2.msra.mxu0 %v251
  %743 = vmatprep.subr.mxu0 0.0
  %744 = vmatpush2.msra.mxu0 %v250
  %745 = vmatprep.subr.mxu0 0.0
  %746 = vmatpush2.msra.mxu0 %v249
  %747 = vmatprep.subr.mxu0 0.0
  %748 = vmatpush2.msra.mxu0 %v248
  %749 = vmatprep.subr.mxu0 0.0
  %750 = vmatpush2.msra.mxu0 %v247
  %751 = vmatprep.subr.mxu0 0.0
  %752 = vmatpush2.msra.mxu0 %v246
  %753 = vmatprep.subr.mxu0 0.0
  %754 = vmatpush2.msra.mxu0 %v245
  %755 = vmatprep.subr.mxu0 0.0
  %756 = vmatpush2.msra.mxu0 %v244
  %757 = vmatprep.subr.mxu0 0.0
  %758 = vmatpush2.msra.mxu0 %v243
  %759 = vmatprep.mubr.f32.mxu0 %v23
  %760 = vmatmul.mubr.f32.gmra.mxu0 %v22
  %v761 = vpop.f32.mrf.mxu0
  %v762 = vadd.f32 %v662, %v761
  %v763 = vpop.f32.mrf.mxu0
  %764 = vmatprep.mubr.f32.mxu0 %v48
  %765 = vmatmul.mubr.f32.gmra.mxu0 %v47
  %v766 = vpop.f32.mrf.mxu0
  %v767 = vadd.f32 %v667, %v766
  %v768 = vpop.f32.mrf.mxu0
  %769 = vmatprep.mubr.f32.mxu0 %v73
  %770 = vmatmul.mubr.f32.gmra.mxu0 %v72
  %v771 = vpop.f32.mrf.mxu0
  %v772 = vadd.f32 %v672, %v771
  %v773 = vpop.f32.mrf.mxu0
  %774 = vmatprep.mubr.f32.mxu0 %v98
  %775 = vmatmul.mubr.f32.gmra.mxu0 %v97
  %v776 = vpop.f32.mrf.mxu0
  %v777 = vadd.f32 %v677, %v776
  %v778 = vpop.f32.mrf.mxu0
  %779 = vmatprep.mubr.f32.mxu0 %v123
  %780 = vmatmul.mubr.f32.gmra.mxu0 %v122
  %v781 = vpop.f32.mrf.mxu0
  %v782 = vadd.f32 %v682, %v781
  %v783 = vpop.f32.mrf.mxu0
  %784 = vmatprep.mubr.f32.mxu0 %v148
  %785 = vmatmul.mubr.f32.gmra.mxu0 %v147
  %v786 = vpop.f32.mrf.mxu0
  %v787 = vadd.f32 %v687, %v786
  %v788 = vpop.f32.mrf.mxu0
  %789 = vmatprep.mubr.f32.mxu0 %v173
  %790 = vmatmul.mubr.f32.gmra.mxu0 %v172
  %v791 = vpop.f32.mrf.mxu0
  %v792 = vadd.f32 %v692, %v791
  %v793 = vpop.f32.mrf.mxu0
  %794 = vdwg.mxu0
  %795 = vmatprep.subr.mxu0 0.0
  %796 = vmatpush1.msra.mxu0 %v274
  %797 = vmatprep.subr.mxu0 0.0
  %798 = vmatpush1.msra.mxu0 %v273
  %799 = vmatprep.subr.mxu0 0.0
  %800 = vmatpush1.msra.mxu0 %v272
  %801 = vmatprep.subr.mxu0 0.0
  %802 = vmatpush1.msra.mxu0 %v271
  %803 = vmatprep.subr.mxu0 0.0
  %804 = vmatpush1.msra.mxu0 %v270
  %805 = vmatprep.subr.mxu0 0.0
  %806 = vmatpush1.msra.mxu0 %v269
  %807 = vmatprep.subr.mxu0 0.0
  %808 = vmatpush1.msra.mxu0 %v268
  %809 = vmatprep.subr.mxu0 0.0
  %810 = vmatpush1.msra.mxu0 %v267
  %811 = vmatprep.subr.mxu0 0.0
  %812 = vmatpush1.msra.mxu0 %v266
  %813 = vmatprep.subr.mxu0 0.0
  %814 = vmatpush1.msra.mxu0 %v265
  %815 = vmatprep.subr.mxu0 0.0
  %816 = vmatpush1.msra.mxu0 %v264
  %817 = vmatprep.subr.mxu0 0.0
  %818 = vmatpush1.msra.mxu0 %v263
  %819 = vmatprep.subr.mxu0 0.0
  %820 = vmatpush1.msra.mxu0 %v262
  %821 = vmatprep.subr.mxu0 0.0
  %822 = vmatpush1.msra.mxu0 %v261
  %823 = vmatprep.subr.mxu0 0.0
  %824 = vmatpush1.msra.mxu0 %v260
  %825 = vmatprep.subr.mxu0 0.0
  %826 = vmatpush1.msra.mxu0 %v259
  %827 = vmatprep.subr.mxu0 0.0
  %828 = vmatpush2.msra.mxu0 %v290
  %829 = vmatprep.subr.mxu0 0.0
  %830 = vmatpush2.msra.mxu0 %v289
  %831 = vmatprep.subr.mxu0 0.0
  %832 = vmatpush2.msra.mxu0 %v288
  %833 = vmatprep.subr.mxu0 0.0
  %834 = vmatpush2.msra.mxu0 %v287
  %835 = vmatprep.subr.mxu0 0.0
  %836 = vmatpush2.msra.mxu0 %v286
  %837 = vmatprep.subr.mxu0 0.0
  %838 = vmatpush2.msra.mxu0 %v285
  %839 = vmatprep.subr.mxu0 0.0
  %840 = vmatpush2.msra.mxu0 %v284
  %841 = vmatprep.subr.mxu0 0.0
  %842 = vmatpush2.msra.mxu0 %v283
  %843 = vmatprep.subr.mxu0 0.0
  %844 = vmatpush2.msra.mxu0 %v282
  %845 = vmatprep.subr.mxu0 0.0
  %846 = vmatpush2.msra.mxu0 %v281
  %847 = vmatprep.subr.mxu0 0.0
  %848 = vmatpush2.msra.mxu0 %v280
  %849 = vmatprep.subr.mxu0 0.0
  %850 = vmatpush2.msra.mxu0 %v279
  %851 = vmatprep.subr.mxu0 0.0
  %852 = vmatpush2.msra.mxu0 %v278
  %853 = vmatprep.subr.mxu0 0.0
  %854 = vmatpush2.msra.mxu0 %v277
  %855 = vmatprep.subr.mxu0 0.0
  %856 = vmatpush2.msra.mxu0 %v276
  %857 = vmatprep.subr.mxu0 0.0
  %858 = vmatpush2.msra.mxu0 %v275
  %859 = vmatprep.mubr.f32.mxu0 %v25
  %860 = vmatmul.mubr.f32.gmra.mxu0 %v24
  %v861 = vpop.f32.mrf.mxu0
  %v862 = vadd.f32 %v762, %v861
  %v863 = vpop.f32.mrf.mxu0
  %864 = vmatprep.mubr.f32.mxu0 %v50
  %865 = vmatmul.mubr.f32.gmra.mxu0 %v49
  %v866 = vpop.f32.mrf.mxu0
  %v867 = vadd.f32 %v767, %v866
  %v868 = vpop.f32.mrf.mxu0
  %869 = vmatprep.mubr.f32.mxu0 %v75
  %870 = vmatmul.mubr.f32.gmra.mxu0 %v74
  %v871 = vpop.f32.mrf.mxu0
  %v872 = vadd.f32 %v772, %v871
  %v873 = vpop.f32.mrf.mxu0
  %874 = vmatprep.mubr.f32.mxu0 %v100
  %875 = vmatmul.mubr.f32.gmra.mxu0 %v99
  %v876 = vpop.f32.mrf.mxu0
  %v877 = vadd.f32 %v777, %v876
  %v878 = vpop.f32.mrf.mxu0
  %879 = vmatprep.mubr.f32.mxu0 %v125
  %880 = vmatmul.mubr.f32.gmra.mxu0 %v124
  %v881 = vpop.f32.mrf.mxu0
  %v882 = vadd.f32 %v782, %v881
  %v883 = vpop.f32.mrf.mxu0
  %884 = vmatprep.mubr.f32.mxu0 %v150
  %885 = vmatmul.mubr.f32.gmra.mxu0 %v149
  %v886 = vpop.f32.mrf.mxu0
  %v887 = vadd.f32 %v787, %v886
  %v888 = vpop.f32.mrf.mxu0
  %889 = vmatprep.mubr.f32.mxu0 %v175
  %890 = vmatmul.mubr.f32.gmra.mxu0 %v174
  %v891 = vpop.f32.mrf.mxu0
  %v892 = vadd.f32 %v792, %v891
  %v893 = vpop.f32.mrf.mxu0
  %894 = vdwg.mxu0
  %895 = vmatprep.subr.mxu0 0.0
  %896 = vmatpush1.msra.mxu0 %v306
  %897 = vmatprep.subr.mxu0 0.0
  %898 = vmatpush1.msra.mxu0 %v305
  %899 = vmatprep.subr.mxu0 0.0
  %900 = vmatpush1.msra.mxu0 %v304
  %901 = vmatprep.subr.mxu0 0.0
  %902 = vmatpush1.msra.mxu0 %v303
  %903 = vmatprep.subr.mxu0 0.0
  %904 = vmatpush1.msra.mxu0 %v302
  %905 = vmatprep.subr.mxu0 0.0
  %906 = vmatpush1.msra.mxu0 %v301
  %907 = vmatprep.subr.mxu0 0.0
  %908 = vmatpush1.msra.mxu0 %v300
  %909 = vmatprep.subr.mxu0 0.0
  %910 = vmatpush1.msra.mxu0 %v299
  %911 = vmatprep.subr.mxu0 0.0
  %912 = vmatpush1.msra.mxu0 %v298
  %913 = vmatprep.subr.mxu0 0.0
  %914 = vmatpush1.msra.mxu0 %v297
  %915 = vmatprep.subr.mxu0 0.0
  %916 = vmatpush1.msra.mxu0 %v296
  %917 = vmatprep.subr.mxu0 0.0
  %918 = vmatpush1.msra.mxu0 %v295
  %919 = vmatprep.subr.mxu0 0.0
  %920 = vmatpush1.msra.mxu0 %v294
  %921 = vmatprep.subr.mxu0 0.0
  %922 = vmatpush1.msra.mxu0 %v293
  %923 = vmatprep.subr.mxu0 0.0
  %924 = vmatpush1.msra.mxu0 %v292
  %925 = vmatprep.subr.mxu0 0.0
  %926 = vmatpush1.msra.mxu0 %v291
  %927 = vmatprep.subr.mxu0 0.0
  %928 = vmatpush2.msra.mxu0 %v322
  %929 = vmatprep.subr.mxu0 0.0
  %930 = vmatpush2.msra.mxu0 %v321
  %931 = vmatprep.subr.mxu0 0.0
  %932 = vmatpush2.msra.mxu0 %v320
  %933 = vmatprep.subr.mxu0 0.0
  %934 = vmatpush2.msra.mxu0 %v319
  %935 = vmatprep.subr.mxu0 0.0
  %936 = vmatpush2.msra.mxu0 %v318
  %937 = vmatprep.subr.mxu0 0.0
  %938 = vmatpush2.msra.mxu0 %v317
  %939 = vmatprep.subr.mxu0 0.0
  %940 = vmatpush2.msra.mxu0 %v316
  %941 = vmatprep.subr.mxu0 0.0
  %942 = vmatpush2.msra.mxu0 %v315
  %943 = vmatprep.subr.mxu0 0.0
  %944 = vmatpush2.msra.mxu0 %v314
  %945 = vmatprep.subr.mxu0 0.0
  %946 = vmatpush2.msra.mxu0 %v313
  %947 = vmatprep.subr.mxu0 0.0
  %948 = vmatpush2.msra.mxu0 %v312
  %949 = vmatprep.subr.mxu0 0.0
  %950 = vmatpush2.msra.mxu0 %v311
  %951 = vmatprep.subr.mxu0 0.0
  %952 = vmatpush2.msra.mxu0 %v310
  %953 = vmatprep.subr.mxu0 0.0
  %954 = vmatpush2.msra.mxu0 %v309
  %955 = vmatprep.subr.mxu0 0.0
  %956 = vmatpush2.msra.mxu0 %v308
  %957 = vmatprep.subr.mxu0 0.0
  %958 = vmatpush2.msra.mxu0 %v307
  %959 = vmatprep.mubr.f32.mxu0 %v27
  %960 = vmatmul.mubr.f32.gmra.mxu0 %v26
  %v961 = vpop.f32.mrf.mxu0
  %v962 = vadd.f32 %v862, %v961
  %v963 = vpop.f32.mrf.mxu0
  %964 = vmatprep.mubr.f32.mxu0 %v52
  %965 = vmatmul.mubr.f32.gmra.mxu0 %v51
  %v966 = vpop.f32.mrf.mxu0
  %v967 = vadd.f32 %v867, %v966
  %v968 = vpop.f32.mrf.mxu0
  %969 = vmatprep.mubr.f32.mxu0 %v77
  %970 = vmatmul.mubr.f32.gmra.mxu0 %v76
  %v971 = vpop.f32.mrf.mxu0
  %v972 = vadd.f32 %v872, %v971
  %v973 = vpop.f32.mrf.mxu0
  %974 = vmatprep.mubr.f32.mxu0 %v102
  %975 = vmatmul.mubr.f32.gmra.mxu0 %v101
  %v976 = vpop.f32.mrf.mxu0
  %v977 = vadd.f32 %v877, %v976
  %v978 = vpop.f32.mrf.mxu0
  %979 = vmatprep.mubr.f32.mxu0 %v127
  %980 = vmatmul.mubr.f32.gmra.mxu0 %v126
  %v981 = vpop.f32.mrf.mxu0
  %v982 = vadd.f32 %v882, %v981
  %v983 = vpop.f32.mrf.mxu0
  %984 = vmatprep.mubr.f32.mxu0 %v152
  %985 = vmatmul.mubr.f32.gmra.mxu0 %v151
  %v986 = vpop.f32.mrf.mxu0
  %v987 = vadd.f32 %v887, %v986
  %v988 = vpop.f32.mrf.mxu0
  %989 = vmatprep.mubr.f32.mxu0 %v177
  %990 = vmatmul.mubr.f32.gmra.mxu0 %v176
  %v991 = vpop.f32.mrf.mxu0
  %v992 = vadd.f32 %v892, %v991
  %v993 = vpop.f32.mrf.mxu0
  %994 = vdwg.mxu0
  %995 = vmatprep.subr.mxu0 0.0
  %996 = vmatpush1.msra.mxu0 %v338
  %997 = vmatprep.subr.mxu0 0.0
  %998 = vmatpush1.msra.mxu0 %v337
  %999 = vmatprep.subr.mxu0 0.0
  %1000 = vmatpush1.msra.mxu0 %v336
  %1001 = vmatprep.subr.mxu0 0.0
  %1002 = vmatpush1.msra.mxu0 %v335
  %1003 = vmatprep.subr.mxu0 0.0
  %1004 = vmatpush1.msra.mxu0 %v334
  %1005 = vmatprep.subr.mxu0 0.0
  %1006 = vmatpush1.msra.mxu0 %v333
  %1007 = vmatprep.subr.mxu0 0.0
  %1008 = vmatpush1.msra.mxu0 %v332
  %1009 = vmatprep.subr.mxu0 0.0
  %1010 = vmatpush1.msra.mxu0 %v331
  %1011 = vmatprep.subr.mxu0 0.0
  %1012 = vmatpush1.msra.mxu0 %v330
  %1013 = vmatprep.subr.mxu0 0.0
  %1014 = vmatpush1.msra.mxu0 %v329
  %1015 = vmatprep.subr.mxu0 0.0
  %1016 = vmatpush1.msra.mxu0 %v328
  %1017 = vmatprep.subr.mxu0 0.0
  %1018 = vmatpush1.msra.mxu0 %v327
  %1019 = vmatprep.subr.mxu0 0.0
  %1020 = vmatpush1.msra.mxu0 %v326
  %1021 = vmatprep.subr.mxu0 0.0
  %1022 = vmatpush1.msra.mxu0 %v325
  %1023 = vmatprep.subr.mxu0 0.0
  %1024 = vmatpush1.msra.mxu0 %v324
  %1025 = vmatprep.subr.mxu0 0.0
  %1026 = vmatpush1.msra.mxu0 %v323
  %1027 = vmatprep.subr.mxu0 0.0
  %1028 = vmatpush2.msra.mxu0 %v354
  %1029 = vmatprep.subr.mxu0 0.0
  %1030 = vmatpush2.msra.mxu0 %v353
  %1031 = vmatprep.subr.mxu0 0.0
  %1032 = vmatpush2.msra.mxu0 %v352
  %1033 = vmatprep.subr.mxu0 0.0
  %1034 = vmatpush2.msra.mxu0 %v351
  %1035 = vmatprep.subr.mxu0 0.0
  %1036 = vmatpush2.msra.mxu0 %v350
  %1037 = vmatprep.subr.mxu0 0.0
  %1038 = vmatpush2.msra.mxu0 %v349
  %1039 = vmatprep.subr.mxu0 0.0
  %1040 = vmatpush2.msra.mxu0 %v348
  %1041 = vmatprep.subr.mxu0 0.0
  %1042 = vmatpush2.msra.mxu0 %v347
  %1043 = vmatprep.subr.mxu0 0.0
  %1044 = vmatpush2.msra.mxu0 %v346
  %1045 = vmatprep.subr.mxu0 0.0
  %1046 = vmatpush2.msra.mxu0 %v345
  %1047 = vmatprep.subr.mxu0 0.0
  %1048 = vmatpush2.msra.mxu0 %v344
  %1049 = vmatprep.subr.mxu0 0.0
  %1050 = vmatpush2.msra.mxu0 %v343
  %1051 = vmatprep.subr.mxu0 0.0
  %1052 = vmatpush2.msra.mxu0 %v342
  %1053 = vmatprep.subr.mxu0 0.0
  %1054 = vmatpush2.msra.mxu0 %v341
  %1055 = vmatprep.subr.mxu0 0.0
  %1056 = vmatpush2.msra.mxu0 %v340
  %1057 = vmatprep.subr.mxu0 0.0
  %1058 = vmatpush2.msra.mxu0 %v339
  %1059 = vmatprep.mubr.f32.mxu0 %v29
  %1060 = vmatmul.mubr.f32.gmra.mxu0 %v28
  %v1061 = vpop.f32.mrf.mxu0
  %v1062 = vadd.f32 %v962, %v1061
  %v1063 = vpop.f32.mrf.mxu0
  %1064 = vmatprep.mubr.f32.mxu0 %v54
  %1065 = vmatmul.mubr.f32.gmra.mxu0 %v53
  %v1066 = vpop.f32.mrf.mxu0
  %v1067 = vadd.f32 %v967, %v1066
  %v1068 = vpop.f32.mrf.mxu0
  %1069 = vmatprep.mubr.f32.mxu0 %v79
  %1070 = vmatmul.mubr.f32.gmra.mxu0 %v78
  %v1071 = vpop.f32.mrf.mxu0
  %v1072 = vadd.f32 %v972, %v1071
  %v1073 = vpop.f32.mrf.mxu0
  %1074 = vmatprep.mubr.f32.mxu0 %v104
  %1075 = vmatmul.mubr.f32.gmra.mxu0 %v103
  %v1076 = vpop.f32.mrf.mxu0
  %v1077 = vadd.f32 %v977, %v1076
  %v1078 = vpop.f32.mrf.mxu0
  %1079 = vmatprep.mubr.f32.mxu0 %v129
  %1080 = vmatmul.mubr.f32.gmra.mxu0 %v128
  %v1081 = vpop.f32.mrf.mxu0
  %v1082 = vadd.f32 %v982, %v1081
  %v1083 = vpop.f32.mrf.mxu0
  %1084 = vmatprep.mubr.f32.mxu0 %v154
  %1085 = vmatmul.mubr.f32.gmra.mxu0 %v153
  %v1086 = vpop.f32.mrf.mxu0
  %v1087 = vadd.f32 %v987, %v1086
  %v1088 = vpop.f32.mrf.mxu0
  %1089 = vmatprep.mubr.f32.mxu0 %v179
  %1090 = vmatmul.mubr.f32.gmra.mxu0 %v178
  %v1091 = vpop.f32.mrf.mxu0
  %v1092 = vadd.f32 %v992, %v1091
  %v1093 = vpop.f32.mrf.mxu0
  %1094 = vdwg.mxu0
  %1095 = vmatprep.subr.mxu0 0.0
  %1096 = vmatpush1.msra.mxu0 %v370
  %1097 = vmatprep.subr.mxu0 0.0
  %1098 = vmatpush1.msra.mxu0 %v369
  %1099 = vmatprep.subr.mxu0 0.0
  %1100 = vmatpush1.msra.mxu0 %v368
  %1101 = vmatprep.subr.mxu0 0.0
  %1102 = vmatpush1.msra.mxu0 %v367
  %1103 = vmatprep.subr.mxu0 0.0
  %1104 = vmatpush1.msra.mxu0 %v366
  %1105 = vmatprep.subr.mxu0 0.0
  %1106 = vmatpush1.msra.mxu0 %v365
  %1107 = vmatprep.subr.mxu0 0.0
  %1108 = vmatpush1.msra.mxu0 %v364
  %1109 = vmatprep.subr.mxu0 0.0
  %1110 = vmatpush1.msra.mxu0 %v363
  %1111 = vmatprep.subr.mxu0 0.0
  %1112 = vmatpush1.msra.mxu0 %v362
  %1113 = vmatprep.subr.mxu0 0.0
  %1114 = vmatpush1.msra.mxu0 %v361
  %1115 = vmatprep.subr.mxu0 0.0
  %1116 = vmatpush1.msra.mxu0 %v360
  %1117 = vmatprep.subr.mxu0 0.0
  %1118 = vmatpush1.msra.mxu0 %v359
  %1119 = vmatprep.subr.mxu0 0.0
  %1120 = vmatpush1.msra.mxu0 %v358
  %1121 = vmatprep.subr.mxu0 0.0
  %1122 = vmatpush1.msra.mxu0 %v357
  %1123 = vmatprep.subr.mxu0 0.0
  %1124 = vmatpush1.msra.mxu0 %v356
  %1125 = vmatprep.subr.mxu0 0.0
  %1126 = vmatpush1.msra.mxu0 %v355
  %1127 = vmatprep.subr.mxu0 0.0
  %1128 = vmatpush2.msra.mxu0 %v386
  %1129 = vmatprep.subr.mxu0 0.0
  %1130 = vmatpush2.msra.mxu0 %v385
  %1131 = vmatprep.subr.mxu0 0.0
  %1132 = vmatpush2.msra.mxu0 %v384
  %1133 = vmatprep.subr.mxu0 0.0
  %1134 = vmatpush2.msra.mxu0 %v383
  %1135 = vmatprep.subr.mxu0 0.0
  %1136 = vmatpush2.msra.mxu0 %v382
  %1137 = vmatprep.subr.mxu0 0.0
  %1138 = vmatpush2.msra.mxu0 %v381
  %1139 = vmatprep.subr.mxu0 0.0
  %1140 = vmatpush2.msra.mxu0 %v380
  %1141 = vmatprep.subr.mxu0 0.0
  %1142 = vmatpush2.msra.mxu0 %v379
  %1143 = vmatprep.subr.mxu0 0.0
  %1144 = vmatpush2.msra.mxu0 %v378
  %1145 = vmatprep.subr.mxu0 0.0
  %1146 = vmatpush2.msra.mxu0 %v377
  %1147 = vmatprep.subr.mxu0 0.0
  %1148 = vmatpush2.msra.mxu0 %v376
  %1149 = vmatprep.subr.mxu0 0.0
  %1150 = vmatpush2.msra.mxu0 %v375
  %1151 = vmatprep.subr.mxu0 0.0
  %1152 = vmatpush2.msra.mxu0 %v374
  %1153 = vmatprep.subr.mxu0 0.0
  %1154 = vmatpush2.msra.mxu0 %v373
  %1155 = vmatprep.subr.mxu0 0.0
  %1156 = vmatpush2.msra.mxu0 %v372
  %1157 = vmatprep.subr.mxu0 0.0
  %1158 = vmatpush2.msra.mxu0 %v371
  %1159 = vmatprep.mubr.f32.mxu0 %v31
  %1160 = vmatmul.mubr.f32.gmra.mxu0 %v30
  %v1161 = vpop.f32.mrf.mxu0
  %v1162 = vadd.f32 %v1062, %v1161
  %v1163 = vpop.f32.mrf.mxu0
  %1164 = vmatprep.mubr.f32.mxu0 %v56
  %1165 = vmatmul.mubr.f32.gmra.mxu0 %v55
  %v1166 = vpop.f32.mrf.mxu0
  %v1167 = vadd.f32 %v1067, %v1166
  %v1168 = vpop.f32.mrf.mxu0
  %1169 = vmatprep.mubr.f32.mxu0 %v81
  %1170 = vmatmul.mubr.f32.gmra.mxu0 %v80
  %v1171 = vpop.f32.mrf.mxu0
  %v1172 = vadd.f32 %v1072, %v1171
  %v1173 = vpop.f32.mrf.mxu0
  %1174 = vmatprep.mubr.f32.mxu0 %v106
  %1175 = vmatmul.mubr.f32.gmra.mxu0 %v105
  %v1176 = vpop.f32.mrf.mxu0
  %v1177 = vadd.f32 %v1077, %v1176
  %v1178 = vpop.f32.mrf.mxu0
  %1179 = vmatprep.mubr.f32.mxu0 %v131
  %1180 = vmatmul.mubr.f32.gmra.mxu0 %v130
  %v1181 = vpop.f32.mrf.mxu0
  %v1182 = vadd.f32 %v1082, %v1181
  %v1183 = vpop.f32.mrf.mxu0
  %1184 = vmatprep.mubr.f32.mxu0 %v156
  %1185 = vmatmul.mubr.f32.gmra.mxu0 %v155
  %v1186 = vpop.f32.mrf.mxu0
  %v1187 = vadd.f32 %v1087, %v1186
  %v1188 = vpop.f32.mrf.mxu0
  %1189 = vmatprep.mubr.f32.mxu0 %v181
  %1190 = vmatmul.mubr.f32.gmra.mxu0 %v180
  %v1191 = vpop.f32.mrf.mxu0
  %v1192 = vadd.f32 %v1092, %v1191
  %v1193 = vpop.f32.mrf.mxu0
  %1194 = vdwg.mxu0
  %1195 = vmatprep.subr.mxu0 0.0
  %1196 = vmatpush1.msra.mxu0 %v402
  %1197 = vmatprep.subr.mxu0 0.0
  %1198 = vmatpush1.msra.mxu0 %v401
  %1199 = vmatprep.subr.mxu0 0.0
  %1200 = vmatpush1.msra.mxu0 %v400
  %1201 = vmatprep.subr.mxu0 0.0
  %1202 = vmatpush1.msra.mxu0 %v399
  %1203 = vmatprep.subr.mxu0 0.0
  %1204 = vmatpush1.msra.mxu0 %v398
  %1205 = vmatprep.subr.mxu0 0.0
  %1206 = vmatpush1.msra.mxu0 %v397
  %1207 = vmatprep.subr.mxu0 0.0
  %1208 = vmatpush1.msra.mxu0 %v396
  %1209 = vmatprep.subr.mxu0 0.0
  %1210 = vmatpush1.msra.mxu0 %v395
  %1211 = vmatprep.subr.mxu0 0.0
  %1212 = vmatpush1.msra.mxu0 %v394
  %1213 = vmatprep.subr.mxu0 0.0
  %1214 = vmatpush1.msra.mxu0 %v393
  %1215 = vmatprep.subr.mxu0 0.0
  %1216 = vmatpush1.msra.mxu0 %v392
  %1217 = vmatprep.subr.mxu0 0.0
  %1218 = vmatpush1.msra.mxu0 %v391
  %1219 = vmatprep.subr.mxu0 0.0
  %1220 = vmatpush1.msra.mxu0 %v390
  %1221 = vmatprep.subr.mxu0 0.0
  %1222 = vmatpush1.msra.mxu0 %v389
  %1223 = vmatprep.subr.mxu0 0.0
  %1224 = vmatpush1.msra.mxu0 %v388
  %1225 = vmatprep.subr.mxu0 0.0
  %1226 = vmatpush1.msra.mxu0 %v387
  %1227 = vmatprep.subr.mxu0 0.0
  %1228 = vmatpush2.msra.mxu0 %v418
  %1229 = vmatprep.subr.mxu0 0.0
  %1230 = vmatpush2.msra.mxu0 %v417
  %1231 = vmatprep.subr.mxu0 0.0
  %1232 = vmatpush2.msra.mxu0 %v416
  %1233 = vmatprep.subr.mxu0 0.0
  %1234 = vmatpush2.msra.mxu0 %v415
  %1235 = vmatprep.subr.mxu0 0.0
  %1236 = vmatpush2.msra.mxu0 %v414
  %1237 = vmatprep.subr.mxu0 0.0
  %1238 = vmatpush2.msra.mxu0 %v413
  %1239 = vmatprep.subr.mxu0 0.0
  %1240 = vmatpush2.msra.mxu0 %v412
  %1241 = vmatprep.subr.mxu0 0.0
  %1242 = vmatpush2.msra.mxu0 %v411
  %1243 = vmatprep.subr.mxu0 0.0
  %1244 = vmatpush2.msra.mxu0 %v410
  %1245 = vmatprep.subr.mxu0 0.0
  %1246 = vmatpush2.msra.mxu0 %v409
  %1247 = vmatprep.subr.mxu0 0.0
  %1248 = vmatpush2.msra.mxu0 %v408
  %1249 = vmatprep.subr.mxu0 0.0
  %1250 = vmatpush2.msra.mxu0 %v407
  %1251 = vmatprep.subr.mxu0 0.0
  %1252 = vmatpush2.msra.mxu0 %v406
  %1253 = vmatprep.subr.mxu0 0.0
  %1254 = vmatpush2.msra.mxu0 %v405
  %1255 = vmatprep.subr.mxu0 0.0
  %1256 = vmatpush2.msra.mxu0 %v404
  %1257 = vmatprep.subr.mxu0 0.0
  %1258 = vmatpush2.msra.mxu0 %v403
  %1259 = vmatprep.mubr.f32.mxu0 %v33
  %1260 = vmatmul.mubr.f32.gmra.mxu0 %v32
  %v1261 = vpop.f32.mrf.mxu0
  %v1262 = vadd.f32 %v1162, %v1261
  %v1263 = vpop.f32.mrf.mxu0
  %1264 = vmatprep.mubr.f32.mxu0 %v58
  %1265 = vmatmul.mubr.f32.gmra.mxu0 %v57
  %v1266 = vpop.f32.mrf.mxu0
  %v1267 = vadd.f32 %v1167, %v1266
  %v1268 = vpop.f32.mrf.mxu0
  %1269 = vmatprep.mubr.f32.mxu0 %v83
  %1270 = vmatmul.mubr.f32.gmra.mxu0 %v82
  %v1271 = vpop.f32.mrf.mxu0
  %v1272 = vadd.f32 %v1172, %v1271
  %v1273 = vpop.f32.mrf.mxu0
  %1274 = vmatprep.mubr.f32.mxu0 %v108
  %1275 = vmatmul.mubr.f32.gmra.mxu0 %v107
  %v1276 = vpop.f32.mrf.mxu0
  %v1277 = vadd.f32 %v1177, %v1276
  %v1278 = vpop.f32.mrf.mxu0
  %1279 = vmatprep.mubr.f32.mxu0 %v133
  %1280 = vmatmul.mubr.f32.gmra.mxu0 %v132
  %v1281 = vpop.f32.mrf.mxu0
  %v1282 = vadd.f32 %v1182, %v1281
  %v1283 = vpop.f32.mrf.mxu0
  %1284 = vmatprep.mubr.f32.mxu0 %v158
  %1285 = vmatmul.mubr.f32.gmra.mxu0 %v157
  %v1286 = vpop.f32.mrf.mxu0
  %v1287 = vadd.f32 %v1187, %v1286
  %v1288 = vpop.f32.mrf.mxu0
  %1289 = vmatprep.mubr.f32.mxu0 %v183
  %1290 = vmatmul.mubr.f32.gmra.mxu0 %v182
  %v1291 = vpop.f32.mrf.mxu0
  %v1292 = vadd.f32 %v1192, %v1291
  %v1293 = vpop.f32.mrf.mxu0
  %1294 = vdwg.mxu0
  %1295 = vmatprep.subr.mxu0 0.0
  %1296 = vmatpush1.msra.mxu0 %v434
  %1297 = vmatprep.subr.mxu0 0.0
  %1298 = vmatpush1.msra.mxu0 %v433
  %1299 = vmatprep.subr.mxu0 0.0
  %1300 = vmatpush1.msra.mxu0 %v432
  %1301 = vmatprep.subr.mxu0 0.0
  %1302 = vmatpush1.msra.mxu0 %v431
  %1303 = vmatprep.subr.mxu0 0.0
  %1304 = vmatpush1.msra.mxu0 %v430
  %1305 = vmatprep.subr.mxu0 0.0
  %1306 = vmatpush1.msra.mxu0 %v429
  %1307 = vmatprep.subr.mxu0 0.0
  %1308 = vmatpush1.msra.mxu0 %v428
  %1309 = vmatprep.subr.mxu0 0.0
  %1310 = vmatpush1.msra.mxu0 %v427
  %1311 = vmatprep.subr.mxu0 0.0
  %1312 = vmatpush1.msra.mxu0 %v426
  %1313 = vmatprep.subr.mxu0 0.0
  %1314 = vmatpush1.msra.mxu0 %v425
  %1315 = vmatprep.subr.mxu0 0.0
  %1316 = vmatpush1.msra.mxu0 %v424
  %1317 = vmatprep.subr.mxu0 0.0
  %1318 = vmatpush1.msra.mxu0 %v423
  %1319 = vmatprep.subr.mxu0 0.0
  %1320 = vmatpush1.msra.mxu0 %v422
  %1321 = vmatprep.subr.mxu0 0.0
  %1322 = vmatpush1.msra.mxu0 %v421
  %1323 = vmatprep.subr.mxu0 0.0
  %1324 = vmatpush1.msra.mxu0 %v420
  %1325 = vmatprep.subr.mxu0 0.0
  %1326 = vmatpush1.msra.mxu0 %v419
  %1327 = vmatprep.subr.mxu0 0.0
  %1328 = vmatpush2.msra.mxu0 %v450
  %1329 = vmatprep.subr.mxu0 0.0
  %1330 = vmatpush2.msra.mxu0 %v449
  %1331 = vmatprep.subr.mxu0 0.0
  %1332 = vmatpush2.msra.mxu0 %v448
  %1333 = vmatprep.subr.mxu0 0.0
  %1334 = vmatpush2.msra.mxu0 %v447
  %1335 = vmatprep.subr.mxu0 0.0
  %1336 = vmatpush2.msra.mxu0 %v446
  %1337 = vmatprep.subr.mxu0 0.0
  %1338 = vmatpush2.msra.mxu0 %v445
  %1339 = vmatprep.subr.mxu0 0.0
  %1340 = vmatpush2.msra.mxu0 %v444
  %1341 = vmatprep.subr.mxu0 0.0
  %1342 = vmatpush2.msra.mxu0 %v443
  %1343 = vmatprep.subr.mxu0 0.0
  %1344 = vmatpush2.msra.mxu0 %v442
  %1345 = vmatprep.subr.mxu0 0.0
  %1346 = vmatpush2.msra.mxu0 %v441
  %1347 = vmatprep.subr.mxu0 0.0
  %1348 = vmatpush2.msra.mxu0 %v440
  %1349 = vmatprep.subr.mxu0 0.0
  %1350 = vmatpush2.msra.mxu0 %v439
  %1351 = vmatprep.subr.mxu0 0.0
  %1352 = vmatpush2.msra.mxu0 %v438
  %1353 = vmatprep.subr.mxu0 0.0
  %1354 = vmatpush2.msra.mxu0 %v437
  %1355 = vmatprep.subr.mxu0 0.0
  %1356 = vmatpush2.msra.mxu0 %v436
  %1357 = vmatprep.subr.mxu0 0.0
  %1358 = vmatpush2.msra.mxu0 %v435
  %1359 = vmatprep.mubr.f32.mxu0 %v35
  %1360 = vmatmul.mubr.f32.gmra.mxu0 %v34
  %v1361 = vpop.f32.mrf.mxu0
  %v1362 = vadd.f32 %v1262, %v1361
  %v1363 = vpop.f32.mrf.mxu0
  %1364 = vmatprep.mubr.f32.mxu0 %v60
  %1365 = vmatmul.mubr.f32.gmra.mxu0 %v59
  %v1366 = vpop.f32.mrf.mxu0
  %v1367 = vadd.f32 %v1267, %v1366
  %v1368 = vpop.f32.mrf.mxu0
  %1369 = vmatprep.mubr.f32.mxu0 %v85
  %1370 = vmatmul.mubr.f32.gmra.mxu0 %v84
  %v1371 = vpop.f32.mrf.mxu0
  %v1372 = vadd.f32 %v1272, %v1371
  %v1373 = vpop.f32.mrf.mxu0
  %1374 = vmatprep.mubr.f32.mxu0 %v110
  %1375 = vmatmul.mubr.f32.gmra.mxu0 %v109
  %v1376 = vpop.f32.mrf.mxu0
  %v1377 = vadd.f32 %v1277, %v1376
  %v1378 = vpop.f32.mrf.mxu0
  %1379 = vmatprep.mubr.f32.mxu0 %v135
  %1380 = vmatmul.mubr.f32.gmra.mxu0 %v134
  %v1381 = vpop.f32.mrf.mxu0
  %v1382 = vadd.f32 %v1282, %v1381
  %v1383 = vpop.f32.mrf.mxu0
  %1384 = vmatprep.mubr.f32.mxu0 %v160
  %1385 = vmatmul.mubr.f32.gmra.mxu0 %v159
  %v1386 = vpop.f32.mrf.mxu0
  %v1387 = vadd.f32 %v1287, %v1386
  %v1388 = vpop.f32.mrf.mxu0
  %1389 = vmatprep.mubr.f32.mxu0 %v185
  %1390 = vmatmul.mubr.f32.gmra.mxu0 %v184
  %v1391 = vpop.f32.mrf.mxu0
  %v1392 = vadd.f32 %v1292, %v1391
  %v1393 = vpop.f32.mrf.mxu0
  %1394 = vdwg.mxu0
  %1395 = vmatprep.subr.mxu0 0.0
  %1396 = vmatpush1.msra.mxu0 %v466
  %1397 = vmatprep.subr.mxu0 0.0
  %1398 = vmatpush1.msra.mxu0 %v465
  %1399 = vmatprep.subr.mxu0 0.0
  %1400 = vmatpush1.msra.mxu0 %v464
  %1401 = vmatprep.subr.mxu0 0.0
  %1402 = vmatpush1.msra.mxu0 %v463
  %1403 = vmatprep.subr.mxu0 0.0
  %1404 = vmatpush1.msra.mxu0 %v462
  %1405 = vmatprep.subr.mxu0 0.0
  %1406 = vmatpush1.msra.mxu0 %v461
  %1407 = vmatprep.subr.mxu0 0.0
  %1408 = vmatpush1.msra.mxu0 %v460
  %1409 = vmatprep.subr.mxu0 0.0
  %1410 = vmatpush1.msra.mxu0 %v459
  %1411 = vmatprep.subr.mxu0 0.0
  %1412 = vmatpush1.msra.mxu0 %v458
  %1413 = vmatprep.subr.mxu0 0.0
  %1414 = vmatpush1.msra.mxu0 %v457
  %1415 = vmatprep.subr.mxu0 0.0
  %1416 = vmatpush1.msra.mxu0 %v456
  %1417 = vmatprep.subr.mxu0 0.0
  %1418 = vmatpush1.msra.mxu0 %v455
  %1419 = vmatprep.subr.mxu0 0.0
  %1420 = vmatpush1.msra.mxu0 %v454
  %1421 = vmatprep.subr.mxu0 0.0
  %1422 = vmatpush1.msra.mxu0 %v453
  %1423 = vmatprep.subr.mxu0 0.0
  %1424 = vmatpush1.msra.mxu0 %v452
  %1425 = vmatprep.subr.mxu0 0.0
  %1426 = vmatpush1.msra.mxu0 %v451
  %1427 = vmatprep.subr.mxu0 0.0
  %1428 = vmatpush2.msra.mxu0 %v482
  %1429 = vmatprep.subr.mxu0 0.0
  %1430 = vmatpush2.msra.mxu0 %v481
  %1431 = vmatprep.subr.mxu0 0.0
  %1432 = vmatpush2.msra.mxu0 %v480
  %1433 = vmatprep.subr.mxu0 0.0
  %1434 = vmatpush2.msra.mxu0 %v479
  %1435 = vmatprep.subr.mxu0 0.0
  %1436 = vmatpush2.msra.mxu0 %v478
  %1437 = vmatprep.subr.mxu0 0.0
  %1438 = vmatpush2.msra.mxu0 %v477
  %1439 = vmatprep.subr.mxu0 0.0
  %1440 = vmatpush2.msra.mxu0 %v476
  %1441 = vmatprep.subr.mxu0 0.0
  %1442 = vmatpush2.msra.mxu0 %v475
  %1443 = vmatprep.subr.mxu0 0.0
  %1444 = vmatpush2.msra.mxu0 %v474
  %1445 = vmatprep.subr.mxu0 0.0
  %1446 = vmatpush2.msra.mxu0 %v473
  %1447 = vmatprep.subr.mxu0 0.0
  %1448 = vmatpush2.msra.mxu0 %v472
  %1449 = vmatprep.subr.mxu0 0.0
  %1450 = vmatpush2.msra.mxu0 %v471
  %1451 = vmatprep.subr.mxu0 0.0
  %1452 = vmatpush2.msra.mxu0 %v470
  %1453 = vmatprep.subr.mxu0 0.0
  %1454 = vmatpush2.msra.mxu0 %v469
  %1455 = vmatprep.subr.mxu0 0.0
  %1456 = vmatpush2.msra.mxu0 %v468
  %1457 = vmatprep.subr.mxu0 0.0
  %1458 = vmatpush2.msra.mxu0 %v467
  %1459 = vmatprep.mubr.f32.mxu0 %v37
  %1460 = vmatmul.mubr.f32.gmra.mxu0 %v36
  %v1461 = vpop.f32.mrf.mxu0
  %v1462 = vadd.f32 %v1362, %v1461
  %v1463 = vpop.f32.mrf.mxu0
  %1464 = vmatprep.mubr.f32.mxu0 %v62
  %1465 = vmatmul.mubr.f32.gmra.mxu0 %v61
  %v1466 = vpop.f32.mrf.mxu0
  %v1467 = vadd.f32 %v1367, %v1466
  %v1468 = vpop.f32.mrf.mxu0
  %1469 = vmatprep.mubr.f32.mxu0 %v87
  %1470 = vmatmul.mubr.f32.gmra.mxu0 %v86
  %v1471 = vpop.f32.mrf.mxu0
  %v1472 = vadd.f32 %v1372, %v1471
  %v1473 = vpop.f32.mrf.mxu0
  %1474 = vmatprep.mubr.f32.mxu0 %v112
  %1475 = vmatmul.mubr.f32.gmra.mxu0 %v111
  %v1476 = vpop.f32.mrf.mxu0
  %v1477 = vadd.f32 %v1377, %v1476
  %v1478 = vpop.f32.mrf.mxu0
  %1479 = vmatprep.mubr.f32.mxu0 %v137
  %1480 = vmatmul.mubr.f32.gmra.mxu0 %v136
  %v1481 = vpop.f32.mrf.mxu0
  %v1482 = vadd.f32 %v1382, %v1481
  %v1483 = vpop.f32.mrf.mxu0
  %1484 = vmatprep.mubr.f32.mxu0 %v162
  %1485 = vmatmul.mubr.f32.gmra.mxu0 %v161
  %v1486 = vpop.f32.mrf.mxu0
  %v1487 = vadd.f32 %v1387, %v1486
  %v1488 = vpop.f32.mrf.mxu0
  %1489 = vmatprep.mubr.f32.mxu0 %v187
  %1490 = vmatmul.mubr.f32.gmra.mxu0 %v186
  %v1491 = vpop.f32.mrf.mxu0
  %v1492 = vadd.f32 %v1392, %v1491
  %v1493 = vpop.f32.mrf.mxu0
  %1494 = vdwg.mxu0
  %1495 = vmatprep.subr.mxu0 0.0
  %1496 = vmatpush1.msra.mxu0 %v498
  %1497 = vmatprep.subr.mxu0 0.0
  %1498 = vmatpush1.msra.mxu0 %v497
  %1499 = vmatprep.subr.mxu0 0.0
  %1500 = vmatpush1.msra.mxu0 %v496
  %1501 = vmatprep.subr.mxu0 0.0
  %1502 = vmatpush1.msra.mxu0 %v495
  %1503 = vmatprep.subr.mxu0 0.0
  %1504 = vmatpush1.msra.mxu0 %v494
  %1505 = vmatprep.subr.mxu0 0.0
  %1506 = vmatpush1.msra.mxu0 %v493
  %1507 = vmatprep.subr.mxu0 0.0
  %1508 = vmatpush1.msra.mxu0 %v492
  %1509 = vmatprep.subr.mxu0 0.0
  %1510 = vmatpush1.msra.mxu0 %v491
  %1511 = vmatprep.subr.mxu0 0.0
  %1512 = vmatpush1.msra.mxu0 %v490
  %1513 = vmatprep.subr.mxu0 0.0
  %1514 = vmatpush1.msra.mxu0 %v489
  %1515 = vmatprep.subr.mxu0 0.0
  %1516 = vmatpush1.msra.mxu0 %v488
  %1517 = vmatprep.subr.mxu0 0.0
  %1518 = vmatpush1.msra.mxu0 %v487
  %1519 = vmatprep.subr.mxu0 0.0
  %1520 = vmatpush1.msra.mxu0 %v486
  %1521 = vmatprep.subr.mxu0 0.0
  %1522 = vmatpush1.msra.mxu0 %v485
  %1523 = vmatprep.subr.mxu0 0.0
  %1524 = vmatpush1.msra.mxu0 %v484
  %1525 = vmatprep.subr.mxu0 0.0
  %1526 = vmatpush1.msra.mxu0 %v483
  %1527 = vmatprep.subr.mxu0 0.0
  %1528 = vmatpush2.msra.mxu0 %v514
  %1529 = vmatprep.subr.mxu0 0.0
  %1530 = vmatpush2.msra.mxu0 %v513
  %1531 = vmatprep.subr.mxu0 0.0
  %1532 = vmatpush2.msra.mxu0 %v512
  %1533 = vmatprep.subr.mxu0 0.0
  %1534 = vmatpush2.msra.mxu0 %v511
  %1535 = vmatprep.subr.mxu0 0.0
  %1536 = vmatpush2.msra.mxu0 %v510
  %1537 = vmatprep.subr.mxu0 0.0
  %1538 = vmatpush2.msra.mxu0 %v509
  %1539 = vmatprep.subr.mxu0 0.0
  %1540 = vmatpush2.msra.mxu0 %v508
  %1541 = vmatprep.subr.mxu0 0.0
  %1542 = vmatpush2.msra.mxu0 %v507
  %1543 = vmatprep.subr.mxu0 0.0
  %1544 = vmatpush2.msra.mxu0 %v506
  %1545 = vmatprep.subr.mxu0 0.0
  %1546 = vmatpush2.msra.mxu0 %v505
  %1547 = vmatprep.subr.mxu0 0.0
  %1548 = vmatpush2.msra.mxu0 %v504
  %1549 = vmatprep.subr.mxu0 0.0
  %1550 = vmatpush2.msra.mxu0 %v503
  %1551 = vmatprep.subr.mxu0 0.0
  %1552 = vmatpush2.msra.mxu0 %v502
  %1553 = vmatprep.subr.mxu0 0.0
  %1554 = vmatpush2.msra.mxu0 %v501
  %1555 = vmatprep.subr.mxu0 0.0
  %1556 = vmatpush2.msra.mxu0 %v500
  %1557 = vmatprep.subr.mxu0 0.0
  %1558 = vmatpush2.msra.mxu0 %v499
  %1559 = vmatprep.mubr.f32.mxu0 %v39
  %1560 = vmatmul.mubr.f32.gmra.mxu0 %v38
  %v1561 = vpop.f32.mrf.mxu0
  %v1562 = vadd.f32 %v1462, %v1561
  %v1563 = vpop.f32.mrf.mxu0
  %1564 = vmatprep.mubr.f32.mxu0 %v64
  %1565 = vmatmul.mubr.f32.gmra.mxu0 %v63
  %v1566 = vpop.f32.mrf.mxu0
  %v1567 = vadd.f32 %v1467, %v1566
  %v1568 = vpop.f32.mrf.mxu0
  %1569 = vmatprep.mubr.f32.mxu0 %v89
  %1570 = vmatmul.mubr.f32.gmra.mxu0 %v88
  %v1571 = vpop.f32.mrf.mxu0
  %v1572 = vadd.f32 %v1472, %v1571
  %v1573 = vpop.f32.mrf.mxu0
  %1574 = vmatprep.mubr.f32.mxu0 %v114
  %1575 = vmatmul.mubr.f32.gmra.mxu0 %v113
  %v1576 = vpop.f32.mrf.mxu0
  %v1577 = vadd.f32 %v1477, %v1576
  %v1578 = vpop.f32.mrf.mxu0
  %1579 = vmatprep.mubr.f32.mxu0 %v139
  %1580 = vmatmul.mubr.f32.gmra.mxu0 %v138
  %v1581 = vpop.f32.mrf.mxu0
  %v1582 = vadd.f32 %v1482, %v1581
  %v1583 = vpop.f32.mrf.mxu0
  %1584 = vmatprep.mubr.f32.mxu0 %v164
  %1585 = vmatmul.mubr.f32.gmra.mxu0 %v163
  %v1586 = vpop.f32.mrf.mxu0
  %v1587 = vadd.f32 %v1487, %v1586
  %v1588 = vpop.f32.mrf.mxu0
  %1589 = vmatprep.mubr.f32.mxu0 %v189
  %1590 = vmatmul.mubr.f32.gmra.mxu0 %v188
  %v1591 = vpop.f32.mrf.mxu0
  %v1592 = vadd.f32 %v1492, %v1591
  %v1593 = vpop.f32.mrf.mxu0
  %1594 = vdwg.mxu0
  %1595 = vmatprep.subr.mxu0 0.0
  %1596 = vmatpush1.msra.mxu0 %v530
  %1597 = vmatprep.subr.mxu0 0.0
  %1598 = vmatpush1.msra.mxu0 %v529
  %1599 = vmatprep.subr.mxu0 0.0
  %1600 = vmatpush1.msra.mxu0 %v528
  %1601 = vmatprep.subr.mxu0 0.0
  %1602 = vmatpush1.msra.mxu0 %v527
  %1603 = vmatprep.subr.mxu0 0.0
  %1604 = vmatpush1.msra.mxu0 %v526
  %1605 = vmatprep.subr.mxu0 0.0
  %1606 = vmatpush1.msra.mxu0 %v525
  %1607 = vmatprep.subr.mxu0 0.0
  %1608 = vmatpush1.msra.mxu0 %v524
  %1609 = vmatprep.subr.mxu0 0.0
  %1610 = vmatpush1.msra.mxu0 %v523
  %1611 = vmatprep.subr.mxu0 0.0
  %1612 = vmatpush1.msra.mxu0 %v522
  %1613 = vmatprep.subr.mxu0 0.0
  %1614 = vmatpush1.msra.mxu0 %v521
  %1615 = vmatprep.subr.mxu0 0.0
  %1616 = vmatpush1.msra.mxu0 %v520
  %1617 = vmatprep.subr.mxu0 0.0
  %1618 = vmatpush1.msra.mxu0 %v519
  %1619 = vmatprep.subr.mxu0 0.0
  %1620 = vmatpush1.msra.mxu0 %v518
  %1621 = vmatprep.subr.mxu0 0.0
  %1622 = vmatpush1.msra.mxu0 %v517
  %1623 = vmatprep.subr.mxu0 0.0
  %1624 = vmatpush1.msra.mxu0 %v516
  %1625 = vmatprep.subr.mxu0 0.0
  %1626 = vmatpush1.msra.mxu0 %v515
  %1627 = vmatprep.subr.mxu0 0.0
  %1628 = vmatpush2.msra.mxu0 %v546
  %1629 = vmatprep.subr.mxu0 0.0
  %1630 = vmatpush2.msra.mxu0 %v545
  %1631 = vmatprep.subr.mxu0 0.0
  %1632 = vmatpush2.msra.mxu0 %v544
  %1633 = vmatprep.subr.mxu0 0.0
  %1634 = vmatpush2.msra.mxu0 %v543
  %1635 = vmatprep.subr.mxu0 0.0
  %1636 = vmatpush2.msra.mxu0 %v542
  %1637 = vmatprep.subr.mxu0 0.0
  %1638 = vmatpush2.msra.mxu0 %v541
  %1639 = vmatprep.subr.mxu0 0.0
  %1640 = vmatpush2.msra.mxu0 %v540
  %1641 = vmatprep.subr.mxu0 0.0
  %1642 = vmatpush2.msra.mxu0 %v539
  %1643 = vmatprep.subr.mxu0 0.0
  %1644 = vmatpush2.msra.mxu0 %v538
  %1645 = vmatprep.subr.mxu0 0.0
  %1646 = vmatpush2.msra.mxu0 %v537
  %1647 = vmatprep.subr.mxu0 0.0
  %1648 = vmatpush2.msra.mxu0 %v536
  %1649 = vmatprep.subr.mxu0 0.0
  %1650 = vmatpush2.msra.mxu0 %v535
  %1651 = vmatprep.subr.mxu0 0.0
  %1652 = vmatpush2.msra.mxu0 %v534
  %1653 = vmatprep.subr.mxu0 0.0
  %1654 = vmatpush2.msra.mxu0 %v533
  %1655 = vmatprep.subr.mxu0 0.0
  %1656 = vmatpush2.msra.mxu0 %v532
  %1657 = vmatprep.subr.mxu0 0.0
  %1658 = vmatpush2.msra.mxu0 %v531
  %1659 = vmatprep.mubr.f32.mxu0 %v41
  %1660 = vmatmul.mubr.f32.gmra.mxu0 %v40
  %v1661 = vpop.f32.mrf.mxu0
  %v1662 = vadd.f32 %v1562, %v1661
  %v1663 = vpop.f32.mrf.mxu0
  %1664 = vmatprep.mubr.f32.mxu0 %v66
  %1665 = vmatmul.mubr.f32.gmra.mxu0 %v65
  %v1666 = vpop.f32.mrf.mxu0
  %v1667 = vadd.f32 %v1567, %v1666
  %v1668 = vpop.f32.mrf.mxu0
  %1669 = vmatprep.mubr.f32.mxu0 %v91
  %1670 = vmatmul.mubr.f32.gmra.mxu0 %v90
  %v1671 = vpop.f32.mrf.mxu0
  %v1672 = vadd.f32 %v1572, %v1671
  %v1673 = vpop.f32.mrf.mxu0
  %1674 = vmatprep.mubr.f32.mxu0 %v116
  %1675 = vmatmul.mubr.f32.gmra.mxu0 %v115
  %v1676 = vpop.f32.mrf.mxu0
  %v1677 = vadd.f32 %v1577, %v1676
  %v1678 = vpop.f32.mrf.mxu0
  %1679 = vmatprep.mubr.f32.mxu0 %v141
  %1680 = vmatmul.mubr.f32.gmra.mxu0 %v140
  %v1681 = vpop.f32.mrf.mxu0
  %v1682 = vadd.f32 %v1582, %v1681
  %v1683 = vpop.f32.mrf.mxu0
  %1684 = vmatprep.mubr.f32.mxu0 %v166
  %1685 = vmatmul.mubr.f32.gmra.mxu0 %v165
  %v1686 = vpop.f32.mrf.mxu0
  %v1687 = vadd.f32 %v1587, %v1686
  %v1688 = vpop.f32.mrf.mxu0
  %1689 = vmatprep.mubr.f32.mxu0 %v191
  %1690 = vmatmul.mubr.f32.gmra.mxu0 %v190
  %v1691 = vpop.f32.mrf.mxu0
  %v1692 = vadd.f32 %v1592, %v1691
  %v1693 = vpop.f32.mrf.mxu0
  %1694 = vdwg.mxu0
  %1695 = vmatprep.subr.mxu0 0.0
  %1696 = vmatpush1.msra.mxu0 %v562
  %1697 = vmatprep.subr.mxu0 0.0
  %1698 = vmatpush1.msra.mxu0 %v561
  %1699 = vmatprep.subr.mxu0 0.0
  %1700 = vmatpush1.msra.mxu0 %v560
  %1701 = vmatprep.subr.mxu0 0.0
  %1702 = vmatpush1.msra.mxu0 %v559
  %1703 = vmatprep.subr.mxu0 0.0
  %1704 = vmatpush1.msra.mxu0 %v558
  %1705 = vmatprep.subr.mxu0 0.0
  %1706 = vmatpush1.msra.mxu0 %v557
  %1707 = vmatprep.subr.mxu0 0.0
  %1708 = vmatpush1.msra.mxu0 %v556
  %1709 = vmatprep.subr.mxu0 0.0
  %1710 = vmatpush1.msra.mxu0 %v555
  %1711 = vmatprep.subr.mxu0 0.0
  %1712 = vmatpush1.msra.mxu0 %v554
  %1713 = vmatprep.subr.mxu0 0.0
  %1714 = vmatpush1.msra.mxu0 %v553
  %1715 = vmatprep.subr.mxu0 0.0
  %1716 = vmatpush1.msra.mxu0 %v552
  %1717 = vmatprep.subr.mxu0 0.0
  %1718 = vmatpush1.msra.mxu0 %v551
  %1719 = vmatprep.subr.mxu0 0.0
  %1720 = vmatpush1.msra.mxu0 %v550
  %1721 = vmatprep.subr.mxu0 0.0
  %1722 = vmatpush1.msra.mxu0 %v549
  %1723 = vmatprep.subr.mxu0 0.0
  %1724 = vmatpush1.msra.mxu0 %v548
  %1725 = vmatprep.subr.mxu0 0.0
  %1726 = vmatpush1.msra.mxu0 %v547
  %1727 = vmatprep.subr.mxu0 0.0
  %1728 = vmatpush2.msra.mxu0 %v578
  %1729 = vmatprep.subr.mxu0 0.0
  %1730 = vmatpush2.msra.mxu0 %v577
  %1731 = vmatprep.subr.mxu0 0.0
  %1732 = vmatpush2.msra.mxu0 %v576
  %1733 = vmatprep.subr.mxu0 0.0
  %1734 = vmatpush2.msra.mxu0 %v575
  %1735 = vmatprep.subr.mxu0 0.0
  %1736 = vmatpush2.msra.mxu0 %v574
  %1737 = vmatprep.subr.mxu0 0.0
  %1738 = vmatpush2.msra.mxu0 %v573
  %1739 = vmatprep.subr.mxu0 0.0
  %1740 = vmatpush2.msra.mxu0 %v572
  %1741 = vmatprep.subr.mxu0 0.0
  %1742 = vmatpush2.msra.mxu0 %v571
  %1743 = vmatprep.subr.mxu0 0.0
  %1744 = vmatpush2.msra.mxu0 %v570
  %1745 = vmatprep.subr.mxu0 0.0
  %1746 = vmatpush2.msra.mxu0 %v569
  %1747 = vmatprep.subr.mxu0 0.0
  %1748 = vmatpush2.msra.mxu0 %v568
  %1749 = vmatprep.subr.mxu0 0.0
  %1750 = vmatpush2.msra.mxu0 %v567
  %1751 = vmatprep.subr.mxu0 0.0
  %1752 = vmatpush2.msra.mxu0 %v566
  %1753 = vmatprep.subr.mxu0 0.0
  %1754 = vmatpush2.msra.mxu0 %v565
  %1755 = vmatprep.subr.mxu0 0.0
  %1756 = vmatpush2.msra.mxu0 %v564
  %1757 = vmatprep.subr.mxu0 0.0
  %1758 = vmatpush2.msra.mxu0 %v563
  %1759 = vmatprep.mubr.f32.mxu0 %v43
  %1760 = vmatmul.mubr.f32.gmra.mxu0 %v42
  %v1761 = vpop.f32.mrf.mxu0
  %v1762 = vadd.f32 %v1662, %v1761
  %v1763 = vpop.f32.mrf.mxu0
  %1764 = vmatprep.mubr.f32.mxu0 %v68
  %1765 = vmatmul.mubr.f32.gmra.mxu0 %v67
  %v1766 = vpop.f32.mrf.mxu0
  %v1767 = vadd.f32 %v1667, %v1766
  %v1768 = vpop.f32.mrf.mxu0
  %1769 = vmatprep.mubr.f32.mxu0 %v93
  %1770 = vmatmul.mubr.f32.gmra.mxu0 %v92
  %v1771 = vpop.f32.mrf.mxu0
  %v1772 = vadd.f32 %v1672, %v1771
  %v1773 = vpop.f32.mrf.mxu0
  %1774 = vmatprep.mubr.f32.mxu0 %v118
  %1775 = vmatmul.mubr.f32.gmra.mxu0 %v117
  %v1776 = vpop.f32.mrf.mxu0
  %v1777 = vadd.f32 %v1677, %v1776
  %v1778 = vpop.f32.mrf.mxu0
  %1779 = vmatprep.mubr.f32.mxu0 %v143
  %1780 = vmatmul.mubr.f32.gmra.mxu0 %v142
  %v1781 = vpop.f32.mrf.mxu0
  %v1782 = vadd.f32 %v1682, %v1781
  %v1783 = vpop.f32.mrf.mxu0
  %1784 = vmatprep.mubr.f32.mxu0 %v168
  %1785 = vmatmul.mubr.f32.gmra.mxu0 %v167
  %v1786 = vpop.f32.mrf.mxu0
  %v1787 = vadd.f32 %v1687, %v1786
  %v1788 = vpop.f32.mrf.mxu0
  %1789 = vmatprep.mubr.f32.mxu0 %v193
  %1790 = vmatmul.mubr.f32.gmra.mxu0 %v192
  %v1791 = vpop.f32.mrf.mxu0
  %v1792 = vadd.f32 %v1692, %v1791
  %v1793 = vpop.f32.mrf.mxu0
  %1794 = vdwg.mxu0
  %1795 = vmatprep.subr.mxu0 0.0
  %1796 = vmatpush1.msra.mxu0 %v594
  %1797 = vmatprep.subr.mxu0 0.0
  %1798 = vmatpush1.msra.mxu0 %v593
  %1799 = vmatprep.subr.mxu0 0.0
  %1800 = vmatpush1.msra.mxu0 %v592
  %1801 = vmatprep.subr.mxu0 0.0
  %1802 = vmatpush1.msra.mxu0 %v591
  %1803 = vmatprep.subr.mxu0 0.0
  %1804 = vmatpush1.msra.mxu0 %v590
  %1805 = vmatprep.subr.mxu0 0.0
  %1806 = vmatpush1.msra.mxu0 %v589
  %1807 = vmatprep.subr.mxu0 0.0
  %1808 = vmatpush1.msra.mxu0 %v588
  %1809 = vmatprep.subr.mxu0 0.0
  %1810 = vmatpush1.msra.mxu0 %v587
  %1811 = vmatprep.subr.mxu0 0.0
  %1812 = vmatpush1.msra.mxu0 %v586
  %1813 = vmatprep.subr.mxu0 0.0
  %1814 = vmatpush1.msra.mxu0 %v585
  %1815 = vmatprep.subr.mxu0 0.0
  %1816 = vmatpush1.msra.mxu0 %v584
  %1817 = vmatprep.subr.mxu0 0.0
  %1818 = vmatpush1.msra.mxu0 %v583
  %1819 = vmatprep.subr.mxu0 0.0
  %1820 = vmatpush1.msra.mxu0 %v582
  %1821 = vmatprep.subr.mxu0 0.0
  %1822 = vmatpush1.msra.mxu0 %v581
  %1823 = vmatprep.subr.mxu0 0.0
  %1824 = vmatpush1.msra.mxu0 %v580
  %1825 = vmatprep.subr.mxu0 0.0
  %1826 = vmatpush1.msra.mxu0 %v579
  %1827 = vmatprep.subr.mxu0 0.0
  %1828 = vmatpush2.msra.mxu0 0.0
  %1829 = vmatprep.subr.mxu0 0.0
  %1830 = vmatpush2.msra.mxu0 0.0
  %1831 = vmatprep.subr.mxu0 0.0
  %1832 = vmatpush2.msra.mxu0 0.0
  %1833 = vmatprep.subr.mxu0 0.0
  %1834 = vmatpush2.msra.mxu0 0.0
  %1835 = vmatprep.subr.mxu0 0.0
  %1836 = vmatpush2.msra.mxu0 0.0
  %1837 = vmatprep.subr.mxu0 0.0
  %1838 = vmatpush2.msra.mxu0 0.0
  %1839 = vmatprep.subr.mxu0 0.0
  %1840 = vmatpush2.msra.mxu0 0.0
  %1841 = vmatprep.subr.mxu0 0.0
  %1842 = vmatpush2.msra.mxu0 0.0
  %1843 = vmatprep.subr.mxu0 0.0
  %1844 = vmatpush2.msra.mxu0 0.0
  %1845 = vmatprep.subr.mxu0 0.0
  %1846 = vmatpush2.msra.mxu0 0.0
  %1847 = vmatprep.subr.mxu0 0.0
  %1848 = vmatpush2.msra.mxu0 0.0
  %1849 = vmatprep.subr.mxu0 0.0
  %1850 = vmatpush2.msra.mxu0 0.0
  %1851 = vmatprep.subr.mxu0 0.0
  %1852 = vmatpush2.msra.mxu0 0.0
  %1853 = vmatprep.subr.mxu0 0.0
  %1854 = vmatpush2.msra.mxu0 0.0
  %1855 = vmatprep.subr.mxu0 0.0
  %1856 = vmatpush2.msra.mxu0 0.0
  %1857 = vmatprep.subr.mxu0 0.0
  %1858 = vmatpush2.msra.mxu0 0.0
  %1859 = vmatprep.mubr.f32.mxu0 0.0
  %1860 = vmatmul.mubr.f32.gmra.mxu0 %v44
  %v1861 = vpop.f32.mrf.mxu0
  %v1862 = vadd.f32 %v1762, %v1861
  %v1863 = vpop.f32.mrf.mxu0
  %1864 = vmatprep.mubr.f32.mxu0 0.0
  %1865 = vmatmul.mubr.f32.gmra.mxu0 %v69
  %v1866 = vpop.f32.mrf.mxu0
  %v1867 = vadd.f32 %v1767, %v1866
  %v1868 = vpop.f32.mrf.mxu0
  %1869 = vmatprep.mubr.f32.mxu0 0.0
  %1870 = vmatmul.mubr.f32.gmra.mxu0 %v94
  %v1871 = vpop.f32.mrf.mxu0
  %v1872 = vadd.f32 %v1772, %v1871
  %v1873 = vpop.f32.mrf.mxu0
  %1874 = vmatprep.mubr.f32.mxu0 0.0
  %1875 = vmatmul.mubr.f32.gmra.mxu0 %v119
  %v1876 = vpop.f32.mrf.mxu0
  %v1877 = vadd.f32 %v1777, %v1876
  %v1878 = vpop.f32.mrf.mxu0
  %1879 = vmatprep.mubr.f32.mxu0 0.0
  %1880 = vmatmul.mubr.f32.gmra.mxu0 %v144
  %v1881 = vpop.f32.mrf.mxu0
  %v1882 = vadd.f32 %v1782, %v1881
  %v1883 = vpop.f32.mrf.mxu0
  %1884 = vmatprep.mubr.f32.mxu0 0.0
  %1885 = vmatmul.mubr.f32.gmra.mxu0 %v169
  %v1886 = vpop.f32.mrf.mxu0
  %v1887 = vadd.f32 %v1787, %v1886
  %v1888 = vpop.f32.mrf.mxu0
  %1889 = vmatprep.mubr.f32.mxu0 0.0
  %1890 = vmatmul.mubr.f32.gmra.mxu0 %v194
  %v1891 = vpop.f32.mrf.mxu0
  %v1892 = vadd.f32 %v1792, %v1891
  %v1893 = vpop.f32.mrf.mxu0
  %1894 = vdwg.mxu0
  %s1895 = scalar_lea.vmem %s0, 1400
  %v1896 = vld [vmem:[%s1895] sm:$0xff]
  %v1897 = vld [vmem:[%s1895 + $0x8] sm:$0xff]
  %v1898 = vld [vmem:[%s1895 + $0x10] sm:$0xff]
  %v1899 = vld [vmem:[%s1895 + $0x18] sm:$0xff]
  %v1900 = vld [vmem:[%s1895 + $0x20] sm:$0xff]
  %v1901 = vld [vmem:[%s1895 + $0x28] sm:$0xff]
  %v1902 = vld [vmem:[%s1895 + $0x30] sm:$0xff]
  %v1903 = vld [vmem:[%s1895 + $0x38] sm:$0xff]
  %v1904 = vld [vmem:[%s1895 + $0x40] sm:$0xff]
  %v1905 = vld [vmem:[%s1895 + $0x48] sm:$0xff]
  %v1906 = vld [vmem:[%s1895 + $0x50] sm:$0xff]
  %v1907 = vld [vmem:[%s1895 + $0x58] sm:$0xff]
  %v1908 = vld [vmem:[%s1895 + $0x60] sm:$0xff]
  %v1909 = vld [vmem:[%s1895 + $0x68] sm:$0xff]
  %v1910 = vld [vmem:[%s1895 + $0x70] sm:$0xff]
  %v1911 = vld [vmem:[%s1895 + $0x78] sm:$0xff]
  %v1912 = vld [vmem:[%s1895 + $0x80] sm:$0xff]
  %v1913 = vld [vmem:[%s1895 + $0x88] sm:$0xff]
  %v1914 = vld [vmem:[%s1895 + $0x90] sm:$0xff]
  %v1915 = vld [vmem:[%s1895 + $0x98] sm:$0xff]
  %v1916 = vld [vmem:[%s1895 + $0xa0] sm:$0xff]
  %v1917 = vld [vmem:[%s1895 + $0xa8] sm:$0xff]
  %v1918 = vld [vmem:[%s1895 + $0xb0] sm:$0xff]
  %v1919 = vld [vmem:[%s1895 + $0xb8] sm:$0xff]
  %v1920 = vld [vmem:[%s1895 + $0xc0] sm:$0xff]
  %v1921 = vld [vmem:[%s1895 + $0xc8] sm:$0xff]
  %v1922 = vld [vmem:[%s1895 + $0xd0] sm:$0xff]
  %v1923 = vld [vmem:[%s1895 + $0xd8] sm:$0xff]
  %v1924 = vld [vmem:[%s1895 + $0xe0] sm:$0xff]
  %v1925 = vld [vmem:[%s1895 + $0xe8] sm:$0xff]
  %v1926 = vld [vmem:[%s1895 + $0xf0] sm:$0xff]
  %v1927 = vld [vmem:[%s1895 + $0xf8] sm:$0xff]
  %v1928 = vld [vmem:[%s1895 + $0x100] sm:$0xff]
  %v1929 = vld [vmem:[%s1895 + $0x108] sm:$0xff]
  %v1930 = vld [vmem:[%s1895 + $0x110] sm:$0xff]
  %v1931 = vld [vmem:[%s1895 + $0x118] sm:$0xff]
  %v1932 = vld [vmem:[%s1895 + $0x120] sm:$0xff]
  %v1933 = vld [vmem:[%s1895 + $0x128] sm:$0xff]
  %v1934 = vld [vmem:[%s1895 + $0x130] sm:$0xff]
  %v1935 = vld [vmem:[%s1895 + $0x138] sm:$0xff]
  %v1936 = vld [vmem:[%s1895 + $0x140] sm:$0xff]
  %v1937 = vld [vmem:[%s1895 + $0x148] sm:$0xff]
  %v1938 = vld [vmem:[%s1895 + $0x150] sm:$0xff]
  %v1939 = vld [vmem:[%s1895 + $0x158] sm:$0xff]
  %v1940 = vld [vmem:[%s1895 + $0x160] sm:$0xff]
  %v1941 = vld [vmem:[%s1895 + $0x168] sm:$0xff]
  %v1942 = vld [vmem:[%s1895 + $0x170] sm:$0xff]
  %v1943 = vld [vmem:[%s1895 + $0x178] sm:$0xff]
  %v1944 = vld [vmem:[%s1895 + $0x180] sm:$0xff]
  %v1945 = vld [vmem:[%s1895 + $0x188] sm:$0xff]
  %v1946 = vld [vmem:[%s1895 + $0x190] sm:$0xff]
  %v1947 = vld [vmem:[%s1895 + $0x198] sm:$0xff]
  %v1948 = vld [vmem:[%s1895 + $0x1a0] sm:$0xff]
  %v1949 = vld [vmem:[%s1895 + $0x1a8] sm:$0xff]
  %v1950 = vld [vmem:[%s1895 + $0x1b0] sm:$0xff]
  %v1951 = vld [vmem:[%s1895 + $0x1b8] sm:$0xff]
  %v1952 = vld [vmem:[%s1895 + $0x1c0] sm:$0xff]
  %v1953 = vld [vmem:[%s1895 + $0x1c8] sm:$0xff]
  %v1954 = vld [vmem:[%s1895 + $0x1d0] sm:$0xff]
  %v1955 = vld [vmem:[%s1895 + $0x1d8] sm:$0xff]
  %v1956 = vld [vmem:[%s1895 + $0x1e0] sm:$0xff]
  %v1957 = vld [vmem:[%s1895 + $0x1e8] sm:$0xff]
  %v1958 = vld [vmem:[%s1895 + $0x1f0] sm:$0xff]
  %v1959 = vld [vmem:[%s1895 + $0x1f8] sm:$0xff]
  %v1960 = vld [vmem:[%s1895 + $0x200] sm:$0xff]
  %v1961 = vld [vmem:[%s1895 + $0x208] sm:$0xff]
  %v1962 = vld [vmem:[%s1895 + $0x210] sm:$0xff]
  %v1963 = vld [vmem:[%s1895 + $0x218] sm:$0xff]
  %v1964 = vld [vmem:[%s1895 + $0x220] sm:$0xff]
  %v1965 = vld [vmem:[%s1895 + $0x228] sm:$0xff]
  %v1966 = vld [vmem:[%s1895 + $0x230] sm:$0xff]
  %v1967 = vld [vmem:[%s1895 + $0x238] sm:$0xff]
  %v1968 = vld [vmem:[%s1895 + $0x240] sm:$0xff]
  %v1969 = vld [vmem:[%s1895 + $0x248] sm:$0xff]
  %v1970 = vld [vmem:[%s1895 + $0x250] sm:$0xff]
  %v1971 = vld [vmem:[%s1895 + $0x258] sm:$0xff]
  %v1972 = vld [vmem:[%s1895 + $0x260] sm:$0xff]
  %v1973 = vld [vmem:[%s1895 + $0x268] sm:$0xff]
  %v1974 = vld [vmem:[%s1895 + $0x270] sm:$0xff]
  %v1975 = vld [vmem:[%s1895 + $0x278] sm:$0xff]
  %v1976 = vld [vmem:[%s1895 + $0x280] sm:$0xff]
  %v1977 = vld [vmem:[%s1895 + $0x288] sm:$0xff]
  %v1978 = vld [vmem:[%s1895 + $0x290] sm:$0xff]
  %v1979 = vld [vmem:[%s1895 + $0x298] sm:$0xff]
  %v1980 = vld [vmem:[%s1895 + $0x2a0] sm:$0xff]
  %v1981 = vld [vmem:[%s1895 + $0x2a8] sm:$0xff]
  %v1982 = vld [vmem:[%s1895 + $0x2b0] sm:$0xff]
  %v1983 = vld [vmem:[%s1895 + $0x2b8] sm:$0xff]
  %v1984 = vld [vmem:[%s1895 + $0x2c0] sm:$0xff]
  %v1985 = vld [vmem:[%s1895 + $0x2c8] sm:$0xff]
  %v1986 = vld [vmem:[%s1895 + $0x2d0] sm:$0xff]
  %v1987 = vld [vmem:[%s1895 + $0x2d8] sm:$0xff]
  %v1988 = vld [vmem:[%s1895 + $0x2e0] sm:$0xff]
  %v1989 = vld [vmem:[%s1895 + $0x2e8] sm:$0xff]
  %v1990 = vld [vmem:[%s1895 + $0x2f0] sm:$0xff]
  %v1991 = vld [vmem:[%s1895 + $0x2f8] sm:$0xff]
  %v1992 = vld [vmem:[%s1895 + $0x300] sm:$0xff]
  %v1993 = vld [vmem:[%s1895 + $0x308] sm:$0xff]
  %v1994 = vld [vmem:[%s1895 + $0x310] sm:$0xff]
  %v1995 = vld [vmem:[%s1895 + $0x318] sm:$0xff]
  %v1996 = vld [vmem:[%s1895 + $0x320] sm:$0xff]
  %v1997 = vld [vmem:[%s1895 + $0x328] sm:$0xff]
  %v1998 = vld [vmem:[%s1895 + $0x330] sm:$0xff]
  %v1999 = vld [vmem:[%s1895 + $0x338] sm:$0xff]
  %v2000 = vld [vmem:[%s1895 + $0x340] sm:$0xff]
  %v2001 = vld [vmem:[%s1895 + $0x348] sm:$0xff]
  %v2002 = vld [vmem:[%s1895 + $0x350] sm:$0xff]
  %v2003 = vld [vmem:[%s1895 + $0x358] sm:$0xff]
  %v2004 = vld [vmem:[%s1895 + $0x360] sm:$0xff]
  %v2005 = vld [vmem:[%s1895 + $0x368] sm:$0xff]
  %v2006 = vld [vmem:[%s1895 + $0x370] sm:$0xff]
  %v2007 = vld [vmem:[%s1895 + $0x378] sm:$0xff]
  %v2008 = vld [vmem:[%s1895 + $0x380] sm:$0xff]
  %v2009 = vld [vmem:[%s1895 + $0x388] sm:$0xff]
  %v2010 = vld [vmem:[%s1895 + $0x390] sm:$0xff]
  %v2011 = vld [vmem:[%s1895 + $0x398] sm:$0xff]
  %v2012 = vld [vmem:[%s1895 + $0x3a0] sm:$0xff]
  %v2013 = vld [vmem:[%s1895 + $0x3a8] sm:$0xff]
  %v2014 = vld [vmem:[%s1895 + $0x3b0] sm:$0xff]
  %v2015 = vld [vmem:[%s1895 + $0x3b8] sm:$0xff]
  %v2016 = vld [vmem:[%s1895 + $0x3c0] sm:$0xff]
  %v2017 = vld [vmem:[%s1895 + $0x3c8] sm:$0xff]
  %v2018 = vld [vmem:[%s1895 + $0x3d0] sm:$0xff]
  %v2019 = vld [vmem:[%s1895 + $0x3d8] sm:$0xff]
  %v2020 = vld [vmem:[%s1895 + $0x3e0] sm:$0xff]
  %v2021 = vld [vmem:[%s1895 + $0x3e8] sm:$0xff]
  %v2022 = vld [vmem:[%s1895 + $0x3f0] sm:$0xff]
  %v2023 = vld [vmem:[%s1895 + $0x3f8] sm:$0xff]
  %v2024 = vld [vmem:[%s1895 + $0x400] sm:$0xff]
  %v2025 = vld [vmem:[%s1895 + $0x408] sm:$0xff]
  %v2026 = vld [vmem:[%s1895 + $0x410] sm:$0xff]
  %v2027 = vld [vmem:[%s1895 + $0x418] sm:$0xff]
  %v2028 = vld [vmem:[%s1895 + $0x420] sm:$0xff]
  %v2029 = vld [vmem:[%s1895 + $0x428] sm:$0xff]
  %v2030 = vld [vmem:[%s1895 + $0x430] sm:$0xff]
  %v2031 = vld [vmem:[%s1895 + $0x438] sm:$0xff]
  %v2032 = vld [vmem:[%s1895 + $0x440] sm:$0xff]
  %v2033 = vld [vmem:[%s1895 + $0x448] sm:$0xff]
  %v2034 = vld [vmem:[%s1895 + $0x450] sm:$0xff]
  %v2035 = vld [vmem:[%s1895 + $0x458] sm:$0xff]
  %v2036 = vld [vmem:[%s1895 + $0x460] sm:$0xff]
  %v2037 = vld [vmem:[%s1895 + $0x468] sm:$0xff]
  %v2038 = vld [vmem:[%s1895 + $0x470] sm:$0xff]
  %v2039 = vld [vmem:[%s1895 + $0x478] sm:$0xff]
  %v2040 = vld [vmem:[%s1895 + $0x480] sm:$0xff]
  %v2041 = vld [vmem:[%s1895 + $0x488] sm:$0xff]
  %v2042 = vld [vmem:[%s1895 + $0x490] sm:$0xff]
  %v2043 = vld [vmem:[%s1895 + $0x498] sm:$0xff]
  %v2044 = vld [vmem:[%s1895 + $0x4a0] sm:$0xff]
  %v2045 = vld [vmem:[%s1895 + $0x4a8] sm:$0xff]
  %v2046 = vld [vmem:[%s1895 + $0x4b0] sm:$0x3]
  %v2047 = vld [vmem:[%s1895 + $0x4b8] sm:$0x3]
  %v2048 = vld [vmem:[%s1895 + $0x4c0] sm:$0x3]
  %v2049 = vld [vmem:[%s1895 + $0x4c8] sm:$0x3]
  %v2050 = vld [vmem:[%s1895 + $0x4d0] sm:$0x3]
  %v2051 = vld [vmem:[%s1895 + $0x4d8] sm:$0x3]
  %v2052 = vld [vmem:[%s1895 + $0x4e0] sm:$0x3]
  %v2053 = vld [vmem:[%s1895 + $0x4e8] sm:$0x3]
  %v2054 = vld [vmem:[%s1895 + $0x4f0] sm:$0x3]
  %v2055 = vld [vmem:[%s1895 + $0x4f8] sm:$0x3]
  %v2056 = vld [vmem:[%s1895 + $0x500] sm:$0x3]
  %v2057 = vld [vmem:[%s1895 + $0x508] sm:$0x3]
  %v2058 = vld [vmem:[%s1895 + $0x510] sm:$0x3]
  %v2059 = vld [vmem:[%s1895 + $0x518] sm:$0x3]
  %v2060 = vld [vmem:[%s1895 + $0x520] sm:$0x3]
  %v2061 = vld [vmem:[%s1895 + $0x528] sm:$0x3]
  %v2062 = vld [vmem:[%s1895 + $0x530] sm:$0x3]
  %v2063 = vld [vmem:[%s1895 + $0x538] sm:$0x3]
  %v2064 = vld [vmem:[%s1895 + $0x540] sm:$0x3]
  %v2065 = vld [vmem:[%s1895 + $0x548] sm:$0x3]
  %v2066 = vld [vmem:[%s1895 + $0x550] sm:$0x3]
  %v2067 = vld [vmem:[%s1895 + $0x558] sm:$0x3]
  %v2068 = vld [vmem:[%s1895 + $0x560] sm:$0x3]
  %v2069 = vld [vmem:[%s1895 + $0x568] sm:$0x3]
  %v2070 = vld [vmem:[%s1895 + $0x570] sm:$0x3]
  %2071 = vmatprep.subr.mxu0 0.0
  %2072 = vmatpush1.msra.mxu0 %v210
  %2073 = vmatprep.subr.mxu0 0.0
  %2074 = vmatpush1.msra.mxu0 %v209
  %2075 = vmatprep.subr.mxu0 0.0
  %2076 = vmatpush1.msra.mxu0 %v208
  %2077 = vmatprep.subr.mxu0 0.0
  %2078 = vmatpush1.msra.mxu0 %v207
  %2079 = vmatprep.subr.mxu0 0.0
  %2080 = vmatpush1.msra.mxu0 %v206
  %2081 = vmatprep.subr.mxu0 0.0
  %2082 = vmatpush1.msra.mxu0 %v205
  %2083 = vmatprep.subr.mxu0 0.0
  %2084 = vmatpush1.msra.mxu0 %v204
  %2085 = vmatprep.subr.mxu0 0.0
  %2086 = vmatpush1.msra.mxu0 %v203
  %2087 = vmatprep.subr.mxu0 0.0
  %2088 = vmatpush1.msra.mxu0 %v202
  %2089 = vmatprep.subr.mxu0 0.0
  %2090 = vmatpush1.msra.mxu0 %v201
  %2091 = vmatprep.subr.mxu0 0.0
  %2092 = vmatpush1.msra.mxu0 %v200
  %2093 = vmatprep.subr.mxu0 0.0
  %2094 = vmatpush1.msra.mxu0 %v199
  %2095 = vmatprep.subr.mxu0 0.0
  %2096 = vmatpush1.msra.mxu0 %v198
  %2097 = vmatprep.subr.mxu0 0.0
  %2098 = vmatpush1.msra.mxu0 %v197
  %2099 = vmatprep.subr.mxu0 0.0
  %2100 = vmatpush1.msra.mxu0 %v196
  %2101 = vmatprep.subr.mxu0 0.0
  %2102 = vmatpush1.msra.mxu0 %v195
  %2103 = vmatprep.subr.mxu0 0.0
  %2104 = vmatpush2.msra.mxu0 %v226
  %2105 = vmatprep.subr.mxu0 0.0
  %2106 = vmatpush2.msra.mxu0 %v225
  %2107 = vmatprep.subr.mxu0 0.0
  %2108 = vmatpush2.msra.mxu0 %v224
  %2109 = vmatprep.subr.mxu0 0.0
  %2110 = vmatpush2.msra.mxu0 %v223
  %2111 = vmatprep.subr.mxu0 0.0
  %2112 = vmatpush2.msra.mxu0 %v222
  %2113 = vmatprep.subr.mxu0 0.0
  %2114 = vmatpush2.msra.mxu0 %v221
  %2115 = vmatprep.subr.mxu0 0.0
  %2116 = vmatpush2.msra.mxu0 %v220
  %2117 = vmatprep.subr.mxu0 0.0
  %2118 = vmatpush2.msra.mxu0 %v219
  %2119 = vmatprep.subr.mxu0 0.0
  %2120 = vmatpush2.msra.mxu0 %v218
  %2121 = vmatprep.subr.mxu0 0.0
  %2122 = vmatpush2.msra.mxu0 %v217
  %2123 = vmatprep.subr.mxu0 0.0
  %2124 = vmatpush2.msra.mxu0 %v216
  %2125 = vmatprep.subr.mxu0 0.0
  %2126 = vmatpush2.msra.mxu0 %v215
  %2127 = vmatprep.subr.mxu0 0.0
  %2128 = vmatpush2.msra.mxu0 %v214
  %2129 = vmatprep.subr.mxu0 0.0
  %2130 = vmatpush2.msra.mxu0 %v213
  %2131 = vmatprep.subr.mxu0 0.0
  %2132 = vmatpush2.msra.mxu0 %v212
  %2133 = vmatprep.subr.mxu0 0.0
  %2134 = vmatpush2.msra.mxu0 %v211
  %2135 = vmatprep.mubr.f32.mxu0 %v1897
  %2136 = vmatmul.mubr.f32.gmra.mxu0 %v1896
  %v2137 = vpop.f32.mrf.mxu0
  %v2138 = vadd.f32 0.0, %v2137
  %v2139 = vpop.f32.mrf.mxu0
  %2140 = vmatprep.mubr.f32.mxu0 %v1922
  %2141 = vmatmul.mubr.f32.gmra.mxu0 %v1921
  %v2142 = vpop.f32.mrf.mxu0
  %v2143 = vadd.f32 0.0, %v2142
  %v2144 = vpop.f32.mrf.mxu0
  %2145 = vmatprep.mubr.f32.mxu0 %v1947
  %2146 = vmatmul.mubr.f32.gmra.mxu0 %v1946
  %v2147 = vpop.f32.mrf.mxu0
  %v2148 = vadd.f32 0.0, %v2147
  %v2149 = vpop.f32.mrf.mxu0
  %2150 = vmatprep.mubr.f32.mxu0 %v1972
  %2151 = vmatmul.mubr.f32.gmra.mxu0 %v1971
  %v2152 = vpop.f32.mrf.mxu0
  %v2153 = vadd.f32 0.0, %v2152
  %v2154 = vpop.f32.mrf.mxu0
  %2155 = vmatprep.mubr.f32.mxu0 %v1997
  %2156 = vmatmul.mubr.f32.gmra.mxu0 %v1996
  %v2157 = vpop.f32.mrf.mxu0
  %v2158 = vadd.f32 0.0, %v2157
  %v2159 = vpop.f32.mrf.mxu0
  %2160 = vmatprep.mubr.f32.mxu0 %v2022
  %2161 = vmatmul.mubr.f32.gmra.mxu0 %v2021
  %v2162 = vpop.f32.mrf.mxu0
  %v2163 = vadd.f32 0.0, %v2162
  %v2164 = vpop.f32.mrf.mxu0
  %2165 = vmatprep.mubr.f32.mxu0 %v2047
  %2166 = vmatmul.mubr.f32.gmra.mxu0 %v2046
  %v2167 = vpop.f32.mrf.mxu0
  %v2168 = vadd.f32 0.0, %v2167
  %v2169 = vpop.f32.mrf.mxu0
  %2170 = vdwg.mxu0
  %2171 = vmatprep.subr.mxu0 0.0
  %2172 = vmatpush1.msra.mxu0 %v242
  %2173 = vmatprep.subr.mxu0 0.0
  %2174 = vmatpush1.msra.mxu0 %v241
  %2175 = vmatprep.subr.mxu0 0.0
  %2176 = vmatpush1.msra.mxu0 %v240
  %2177 = vmatprep.subr.mxu0 0.0
  %2178 = vmatpush1.msra.mxu0 %v239
  %2179 = vmatprep.subr.mxu0 0.0
  %2180 = vmatpush1.msra.mxu0 %v238
  %2181 = vmatprep.subr.mxu0 0.0
  %2182 = vmatpush1.msra.mxu0 %v237
  %2183 = vmatprep.subr.mxu0 0.0
  %2184 = vmatpush1.msra.mxu0 %v236
  %2185 = vmatprep.subr.mxu0 0.0
  %2186 = vmatpush1.msra.mxu0 %v235
  %2187 = vmatprep.subr.mxu0 0.0
  %2188 = vmatpush1.msra.mxu0 %v234
  %2189 = vmatprep.subr.mxu0 0.0
  %2190 = vmatpush1.msra.mxu0 %v233
  %2191 = vmatprep.subr.mxu0 0.0
  %2192 = vmatpush1.msra.mxu0 %v232
  %2193 = vmatprep.subr.mxu0 0.0
  %2194 = vmatpush1.msra.mxu0 %v231
  %2195 = vmatprep.subr.mxu0 0.0
  %2196 = vmatpush1.msra.mxu0 %v230
  %2197 = vmatprep.subr.mxu0 0.0
  %2198 = vmatpush1.msra.mxu0 %v229
  %2199 = vmatprep.subr.mxu0 0.0
  %2200 = vmatpush1.msra.mxu0 %v228
  %2201 = vmatprep.subr.mxu0 0.0
  %2202 = vmatpush1.msra.mxu0 %v227
  %2203 = vmatprep.subr.mxu0 0.0
  %2204 = vmatpush2.msra.mxu0 %v258
  %2205 = vmatprep.subr.mxu0 0.0
  %2206 = vmatpush2.msra.mxu0 %v257
  %2207 = vmatprep.subr.mxu0 0.0
  %2208 = vmatpush2.msra.mxu0 %v256
  %2209 = vmatprep.subr.mxu0 0.0
  %2210 = vmatpush2.msra.mxu0 %v255
  %2211 = vmatprep.subr.mxu0 0.0
  %2212 = vmatpush2.msra.mxu0 %v254
  %2213 = vmatprep.subr.mxu0 0.0
  %2214 = vmatpush2.msra.mxu0 %v253
  %2215 = vmatprep.subr.mxu0 0.0
  %2216 = vmatpush2.msra.mxu0 %v252
  %2217 = vmatprep.subr.mxu0 0.0
  %2218 = vmatpush2.msra.mxu0 %v251
  %2219 = vmatprep.subr.mxu0 0.0
  %2220 = vmatpush2.msra.mxu0 %v250
  %2221 = vmatprep.subr.mxu0 0.0
  %2222 = vmatpush2.msra.mxu0 %v249
  %2223 = vmatprep.subr.mxu0 0.0
  %2224 = vmatpush2.msra.mxu0 %v248
  %2225 = vmatprep.subr.mxu0 0.0
  %2226 = vmatpush2.msra.mxu0 %v247
  %2227 = vmatprep.subr.mxu0 0.0
  %2228 = vmatpush2.msra.mxu0 %v246
  %2229 = vmatprep.subr.mxu0 0.0
  %2230 = vmatpush2.msra.mxu0 %v245
  %2231 = vmatprep.subr.mxu0 0.0
  %2232 = vmatpush2.msra.mxu0 %v244
  %2233 = vmatprep.subr.mxu0 0.0
  %2234 = vmatpush2.msra.mxu0 %v243
  %2235 = vmatprep.mubr.f32.mxu0 %v1899
  %2236 = vmatmul.mubr.f32.gmra.mxu0 %v1898
  %v2237 = vpop.f32.mrf.mxu0
  %v2238 = vadd.f32 %v2138, %v2237
  %v2239 = vpop.f32.mrf.mxu0
  %2240 = vmatprep.mubr.f32.mxu0 %v1924
  %2241 = vmatmul.mubr.f32.gmra.mxu0 %v1923
  %v2242 = vpop.f32.mrf.mxu0
  %v2243 = vadd.f32 %v2143, %v2242
  %v2244 = vpop.f32.mrf.mxu0
  %2245 = vmatprep.mubr.f32.mxu0 %v1949
  %2246 = vmatmul.mubr.f32.gmra.mxu0 %v1948
  %v2247 = vpop.f32.mrf.mxu0
  %v2248 = vadd.f32 %v2148, %v2247
  %v2249 = vpop.f32.mrf.mxu0
  %2250 = vmatprep.mubr.f32.mxu0 %v1974
  %2251 = vmatmul.mubr.f32.gmra.mxu0 %v1973
  %v2252 = vpop.f32.mrf.mxu0
  %v2253 = vadd.f32 %v2153, %v2252
  %v2254 = vpop.f32.mrf.mxu0
  %2255 = vmatprep.mubr.f32.mxu0 %v1999
  %2256 = vmatmul.mubr.f32.gmra.mxu0 %v1998
  %v2257 = vpop.f32.mrf.mxu0
  %v2258 = vadd.f32 %v2158, %v2257
  %v2259 = vpop.f32.mrf.mxu0
  %2260 = vmatprep.mubr.f32.mxu0 %v2024
  %2261 = vmatmul.mubr.f32.gmra.mxu0 %v2023
  %v2262 = vpop.f32.mrf.mxu0
  %v2263 = vadd.f32 %v2163, %v2262
  %v2264 = vpop.f32.mrf.mxu0
  %2265 = vmatprep.mubr.f32.mxu0 %v2049
  %2266 = vmatmul.mubr.f32.gmra.mxu0 %v2048
  %v2267 = vpop.f32.mrf.mxu0
  %v2268 = vadd.f32 %v2168, %v2267
  %v2269 = vpop.f32.mrf.mxu0
  %2270 = vdwg.mxu0
  %2271 = vmatprep.subr.mxu0 0.0
  %2272 = vmatpush1.msra.mxu0 %v274
  %2273 = vmatprep.subr.mxu0 0.0
  %2274 = vmatpush1.msra.mxu0 %v273
  %2275 = vmatprep.subr.mxu0 0.0
  %2276 = vmatpush1.msra.mxu0 %v272
  %2277 = vmatprep.subr.mxu0 0.0
  %2278 = vmatpush1.msra.mxu0 %v271
  %2279 = vmatprep.subr.mxu0 0.0
  %2280 = vmatpush1.msra.mxu0 %v270
  %2281 = vmatprep.subr.mxu0 0.0
  %2282 = vmatpush1.msra.mxu0 %v269
  %2283 = vmatprep.subr.mxu0 0.0
  %2284 = vmatpush1.msra.mxu0 %v268
  %2285 = vmatprep.subr.mxu0 0.0
  %2286 = vmatpush1.msra.mxu0 %v267
  %2287 = vmatprep.subr.mxu0 0.0
  %2288 = vmatpush1.msra.mxu0 %v266
  %2289 = vmatprep.subr.mxu0 0.0
  %2290 = vmatpush1.msra.mxu0 %v265
  %2291 = vmatprep.subr.mxu0 0.0
  %2292 = vmatpush1.msra.mxu0 %v264
  %2293 = vmatprep.subr.mxu0 0.0
  %2294 = vmatpush1.msra.mxu0 %v263
  %2295 = vmatprep.subr.mxu0 0.0
  %2296 = vmatpush1.msra.mxu0 %v262
  %2297 = vmatprep.subr.mxu0 0.0
  %2298 = vmatpush1.msra.mxu0 %v261
  %2299 = vmatprep.subr.mxu0 0.0
  %2300 = vmatpush1.msra.mxu0 %v260
  %2301 = vmatprep.subr.mxu0 0.0
  %2302 = vmatpush1.msra.mxu0 %v259
  %2303 = vmatprep.subr.mxu0 0.0
  %2304 = vmatpush2.msra.mxu0 %v290
  %2305 = vmatprep.subr.mxu0 0.0
  %2306 = vmatpush2.msra.mxu0 %v289
  %2307 = vmatprep.subr.mxu0 0.0
  %2308 = vmatpush2.msra.mxu0 %v288
  %2309 = vmatprep.subr.mxu0 0.0
  %2310 = vmatpush2.msra.mxu0 %v287
  %2311 = vmatprep.subr.mxu0 0.0
  %2312 = vmatpush2.msra.mxu0 %v286
  %2313 = vmatprep.subr.mxu0 0.0
  %2314 = vmatpush2.msra.mxu0 %v285
  %2315 = vmatprep.subr.mxu0 0.0
  %2316 = vmatpush2.msra.mxu0 %v284
  %2317 = vmatprep.subr.mxu0 0.0
  %2318 = vmatpush2.msra.mxu0 %v283
  %2319 = vmatprep.subr.mxu0 0.0
  %2320 = vmatpush2.msra.mxu0 %v282
  %2321 = vmatprep.subr.mxu0 0.0
  %2322 = vmatpush2.msra.mxu0 %v281
  %2323 = vmatprep.subr.mxu0 0.0
  %2324 = vmatpush2.msra.mxu0 %v280
  %2325 = vmatprep.subr.mxu0 0.0
  %2326 = vmatpush2.msra.mxu0 %v279
  %2327 = vmatprep.subr.mxu0 0.0
  %2328 = vmatpush2.msra.mxu0 %v278
  %2329 = vmatprep.subr.mxu0 0.0
  %2330 = vmatpush2.msra.mxu0 %v277
  %2331 = vmatprep.subr.mxu0 0.0
  %2332 = vmatpush2.msra.mxu0 %v276
  %2333 = vmatprep.subr.mxu0 0.0
  %2334 = vmatpush2.msra.mxu0 %v275
  %2335 = vmatprep.mubr.f32.mxu0 %v1901
  %2336 = vmatmul.mubr.f32.gmra.mxu0 %v1900
  %v2337 = vpop.f32.mrf.mxu0
  %v2338 = vadd.f32 %v2238, %v2337
  %v2339 = vpop.f32.mrf.mxu0
  %2340 = vmatprep.mubr.f32.mxu0 %v1926
  %2341 = vmatmul.mubr.f32.gmra.mxu0 %v1925
  %v2342 = vpop.f32.mrf.mxu0
  %v2343 = vadd.f32 %v2243, %v2342
  %v2344 = vpop.f32.mrf.mxu0
  %2345 = vmatprep.mubr.f32.mxu0 %v1951
  %2346 = vmatmul.mubr.f32.gmra.mxu0 %v1950
  %v2347 = vpop.f32.mrf.mxu0
  %v2348 = vadd.f32 %v2248, %v2347
  %v2349 = vpop.f32.mrf.mxu0
  %2350 = vmatprep.mubr.f32.mxu0 %v1976
  %2351 = vmatmul.mubr.f32.gmra.mxu0 %v1975
  %v2352 = vpop.f32.mrf.mxu0
  %v2353 = vadd.f32 %v2253, %v2352
  %v2354 = vpop.f32.mrf.mxu0
  %2355 = vmatprep.mubr.f32.mxu0 %v2001
  %2356 = vmatmul.mubr.f32.gmra.mxu0 %v2000
  %v2357 = vpop.f32.mrf.mxu0
  %v2358 = vadd.f32 %v2258, %v2357
  %v2359 = vpop.f32.mrf.mxu0
  %2360 = vmatprep.mubr.f32.mxu0 %v2026
  %2361 = vmatmul.mubr.f32.gmra.mxu0 %v2025
  %v2362 = vpop.f32.mrf.mxu0
  %v2363 = vadd.f32 %v2263, %v2362
  %v2364 = vpop.f32.mrf.mxu0
  %2365 = vmatprep.mubr.f32.mxu0 %v2051
  %2366 = vmatmul.mubr.f32.gmra.mxu0 %v2050
  %v2367 = vpop.f32.mrf.mxu0
  %v2368 = vadd.f32 %v2268, %v2367
  %v2369 = vpop.f32.mrf.mxu0
  %2370 = vdwg.mxu0
  %2371 = vmatprep.subr.mxu0 0.0
  %2372 = vmatpush1.msra.mxu0 %v306
  %2373 = vmatprep.subr.mxu0 0.0
  %2374 = vmatpush1.msra.mxu0 %v305
  %2375 = vmatprep.subr.mxu0 0.0
  %2376 = vmatpush1.msra.mxu0 %v304
  %2377 = vmatprep.subr.mxu0 0.0
  %2378 = vmatpush1.msra.mxu0 %v303
  %2379 = vmatprep.subr.mxu0 0.0
  %2380 = vmatpush1.msra.mxu0 %v302
  %2381 = vmatprep.subr.mxu0 0.0
  %2382 = vmatpush1.msra.mxu0 %v301
  %2383 = vmatprep.subr.mxu0 0.0
  %2384 = vmatpush1.msra.mxu0 %v300
  %2385 = vmatprep.subr.mxu0 0.0
  %2386 = vmatpush1.msra.mxu0 %v299
  %2387 = vmatprep.subr.mxu0 0.0
  %2388 = vmatpush1.msra.mxu0 %v298
  %2389 = vmatprep.subr.mxu0 0.0
  %2390 = vmatpush1.msra.mxu0 %v297
  %2391 = vmatprep.subr.mxu0 0.0
  %2392 = vmatpush1.msra.mxu0 %v296
  %2393 = vmatprep.subr.mxu0 0.0
  %2394 = vmatpush1.msra.mxu0 %v295
  %2395 = vmatprep.subr.mxu0 0.0
  %2396 = vmatpush1.msra.mxu0 %v294
  %2397 = vmatprep.subr.mxu0 0.0
  %2398 = vmatpush1.msra.mxu0 %v293
  %2399 = vmatprep.subr.mxu0 0.0
  %2400 = vmatpush1.msra.mxu0 %v292
  %2401 = vmatprep.subr.mxu0 0.0
  %2402 = vmatpush1.msra.mxu0 %v291
  %2403 = vmatprep.subr.mxu0 0.0
  %2404 = vmatpush2.msra.mxu0 %v322
  %2405 = vmatprep.subr.mxu0 0.0
  %2406 = vmatpush2.msra.mxu0 %v321
  %2407 = vmatprep.subr.mxu0 0.0
  %2408 = vmatpush2.msra.mxu0 %v320
  %2409 = vmatprep.subr.mxu0 0.0
  %2410 = vmatpush2.msra.mxu0 %v319
  %2411 = vmatprep.subr.mxu0 0.0
  %2412 = vmatpush2.msra.mxu0 %v318
  %2413 = vmatprep.subr.mxu0 0.0
  %2414 = vmatpush2.msra.mxu0 %v317
  %2415 = vmatprep.subr.mxu0 0.0
  %2416 = vmatpush2.msra.mxu0 %v316
  %2417 = vmatprep.subr.mxu0 0.0
  %2418 = vmatpush2.msra.mxu0 %v315
  %2419 = vmatprep.subr.mxu0 0.0
  %2420 = vmatpush2.msra.mxu0 %v314
  %2421 = vmatprep.subr.mxu0 0.0
  %2422 = vmatpush2.msra.mxu0 %v313
  %2423 = vmatprep.subr.mxu0 0.0
  %2424 = vmatpush2.msra.mxu0 %v312
  %2425 = vmatprep.subr.mxu0 0.0
  %2426 = vmatpush2.msra.mxu0 %v311
  %2427 = vmatprep.subr.mxu0 0.0
  %2428 = vmatpush2.msra.mxu0 %v310
  %2429 = vmatprep.subr.mxu0 0.0
  %2430 = vmatpush2.msra.mxu0 %v309
  %2431 = vmatprep.subr.mxu0 0.0
  %2432 = vmatpush2.msra.mxu0 %v308
  %2433 = vmatprep.subr.mxu0 0.0
  %2434 = vmatpush2.msra.mxu0 %v307
  %2435 = vmatprep.mubr.f32.mxu0 %v1903
  %2436 = vmatmul.mubr.f32.gmra.mxu0 %v1902
  %v2437 = vpop.f32.mrf.mxu0
  %v2438 = vadd.f32 %v2338, %v2437
  %v2439 = vpop.f32.mrf.mxu0
  %2440 = vmatprep.mubr.f32.mxu0 %v1928
  %2441 = vmatmul.mubr.f32.gmra.mxu0 %v1927
  %v2442 = vpop.f32.mrf.mxu0
  %v2443 = vadd.f32 %v2343, %v2442
  %v2444 = vpop.f32.mrf.mxu0
  %2445 = vmatprep.mubr.f32.mxu0 %v1953
  %2446 = vmatmul.mubr.f32.gmra.mxu0 %v1952
  %v2447 = vpop.f32.mrf.mxu0
  %v2448 = vadd.f32 %v2348, %v2447
  %v2449 = vpop.f32.mrf.mxu0
  %2450 = vmatprep.mubr.f32.mxu0 %v1978
  %2451 = vmatmul.mubr.f32.gmra.mxu0 %v1977
  %v2452 = vpop.f32.mrf.mxu0
  %v2453 = vadd.f32 %v2353, %v2452
  %v2454 = vpop.f32.mrf.mxu0
  %2455 = vmatprep.mubr.f32.mxu0 %v2003
  %2456 = vmatmul.mubr.f32.gmra.mxu0 %v2002
  %v2457 = vpop.f32.mrf.mxu0
  %v2458 = vadd.f32 %v2358, %v2457
  %v2459 = vpop.f32.mrf.mxu0
  %2460 = vmatprep.mubr.f32.mxu0 %v2028
  %2461 = vmatmul.mubr.f32.gmra.mxu0 %v2027
  %v2462 = vpop.f32.mrf.mxu0
  %v2463 = vadd.f32 %v2363, %v2462
  %v2464 = vpop.f32.mrf.mxu0
  %2465 = vmatprep.mubr.f32.mxu0 %v2053
  %2466 = vmatmul.mubr.f32.gmra.mxu0 %v2052
  %v2467 = vpop.f32.mrf.mxu0
  %v2468 = vadd.f32 %v2368, %v2467
  %v2469 = vpop.f32.mrf.mxu0
  %2470 = vdwg.mxu0
  %2471 = vmatprep.subr.mxu0 0.0
  %2472 = vmatpush1.msra.mxu0 %v338
  %2473 = vmatprep.subr.mxu0 0.0
  %2474 = vmatpush1.msra.mxu0 %v337
  %2475 = vmatprep.subr.mxu0 0.0
  %2476 = vmatpush1.msra.mxu0 %v336
  %2477 = vmatprep.subr.mxu0 0.0
  %2478 = vmatpush1.msra.mxu0 %v335
  %2479 = vmatprep.subr.mxu0 0.0
  %2480 = vmatpush1.msra.mxu0 %v334
  %2481 = vmatprep.subr.mxu0 0.0
  %2482 = vmatpush1.msra.mxu0 %v333
  %2483 = vmatprep.subr.mxu0 0.0
  %2484 = vmatpush1.msra.mxu0 %v332
  %2485 = vmatprep.subr.mxu0 0.0
  %2486 = vmatpush1.msra.mxu0 %v331
  %2487 = vmatprep.subr.mxu0 0.0
  %2488 = vmatpush1.msra.mxu0 %v330
  %2489 = vmatprep.subr.mxu0 0.0
  %2490 = vmatpush1.msra.mxu0 %v329
  %2491 = vmatprep.subr.mxu0 0.0
  %2492 = vmatpush1.msra.mxu0 %v328
  %2493 = vmatprep.subr.mxu0 0.0
  %2494 = vmatpush1.msra.mxu0 %v327
  %2495 = vmatprep.subr.mxu0 0.0
  %2496 = vmatpush1.msra.mxu0 %v326
  %2497 = vmatprep.subr.mxu0 0.0
  %2498 = vmatpush1.msra.mxu0 %v325
  %2499 = vmatprep.subr.mxu0 0.0
  %2500 = vmatpush1.msra.mxu0 %v324
  %2501 = vmatprep.subr.mxu0 0.0
  %2502 = vmatpush1.msra.mxu0 %v323
  %2503 = vmatprep.subr.mxu0 0.0
  %2504 = vmatpush2.msra.mxu0 %v354
  %2505 = vmatprep.subr.mxu0 0.0
  %2506 = vmatpush2.msra.mxu0 %v353
  %2507 = vmatprep.subr.mxu0 0.0
  %2508 = vmatpush2.msra.mxu0 %v352
  %2509 = vmatprep.subr.mxu0 0.0
  %2510 = vmatpush2.msra.mxu0 %v351
  %2511 = vmatprep.subr.mxu0 0.0
  %2512 = vmatpush2.msra.mxu0 %v350
  %2513 = vmatprep.subr.mxu0 0.0
  %2514 = vmatpush2.msra.mxu0 %v349
  %2515 = vmatprep.subr.mxu0 0.0
  %2516 = vmatpush2.msra.mxu0 %v348
  %2517 = vmatprep.subr.mxu0 0.0
  %2518 = vmatpush2.msra.mxu0 %v347
  %2519 = vmatprep.subr.mxu0 0.0
  %2520 = vmatpush2.msra.mxu0 %v346
  %2521 = vmatprep.subr.mxu0 0.0
  %2522 = vmatpush2.msra.mxu0 %v345
  %2523 = vmatprep.subr.mxu0 0.0
  %2524 = vmatpush2.msra.mxu0 %v344
  %2525 = vmatprep.subr.mxu0 0.0
  %2526 = vmatpush2.msra.mxu0 %v343
  %2527 = vmatprep.subr.mxu0 0.0
  %2528 = vmatpush2.msra.mxu0 %v342
  %2529 = vmatprep.subr.mxu0 0.0
  %2530 = vmatpush2.msra.mxu0 %v341
  %2531 = vmatprep.subr.mxu0 0.0
  %2532 = vmatpush2.msra.mxu0 %v340
  %2533 = vmatprep.subr.mxu0 0.0
  %2534 = vmatpush2.msra.mxu0 %v339
  %2535 = vmatprep.mubr.f32.mxu0 %v1905
  %2536 = vmatmul.mubr.f32.gmra.mxu0 %v1904
  %v2537 = vpop.f32.mrf.mxu0
  %v2538 = vadd.f32 %v2438, %v2537
  %v2539 = vpop.f32.mrf.mxu0
  %2540 = vmatprep.mubr.f32.mxu0 %v1930
  %2541 = vmatmul.mubr.f32.gmra.mxu0 %v1929
  %v2542 = vpop.f32.mrf.mxu0
  %v2543 = vadd.f32 %v2443, %v2542
  %v2544 = vpop.f32.mrf.mxu0
  %2545 = vmatprep.mubr.f32.mxu0 %v1955
  %2546 = vmatmul.mubr.f32.gmra.mxu0 %v1954
  %v2547 = vpop.f32.mrf.mxu0
  %v2548 = vadd.f32 %v2448, %v2547
  %v2549 = vpop.f32.mrf.mxu0
  %2550 = vmatprep.mubr.f32.mxu0 %v1980
  %2551 = vmatmul.mubr.f32.gmra.mxu0 %v1979
  %v2552 = vpop.f32.mrf.mxu0
  %v2553 = vadd.f32 %v2453, %v2552
  %v2554 = vpop.f32.mrf.mxu0
  %2555 = vmatprep.mubr.f32.mxu0 %v2005
  %2556 = vmatmul.mubr.f32.gmra.mxu0 %v2004
  %v2557 = vpop.f32.mrf.mxu0
  %v2558 = vadd.f32 %v2458, %v2557
  %v2559 = vpop.f32.mrf.mxu0
  %2560 = vmatprep.mubr.f32.mxu0 %v2030
  %2561 = vmatmul.mubr.f32.gmra.mxu0 %v2029
  %v2562 = vpop.f32.mrf.mxu0
  %v2563 = vadd.f32 %v2463, %v2562
  %v2564 = vpop.f32.mrf.mxu0
  %2565 = vmatprep.mubr.f32.mxu0 %v2055
  %2566 = vmatmul.mubr.f32.gmra.mxu0 %v2054
  %v2567 = vpop.f32.mrf.mxu0
  %v2568 = vadd.f32 %v2468, %v2567
  %v2569 = vpop.f32.mrf.mxu0
  %2570 = vdwg.mxu0
  %2571 = vmatprep.subr.mxu0 0.0
  %2572 = vmatpush1.msra.mxu0 %v370
  %2573 = vmatprep.subr.mxu0 0.0
  %2574 = vmatpush1.msra.mxu0 %v369
  %2575 = vmatprep.subr.mxu0 0.0
  %2576 = vmatpush1.msra.mxu0 %v368
  %2577 = vmatprep.subr.mxu0 0.0
  %2578 = vmatpush1.msra.mxu0 %v367
  %2579 = vmatprep.subr.mxu0 0.0
  %2580 = vmatpush1.msra.mxu0 %v366
  %2581 = vmatprep.subr.mxu0 0.0
  %2582 = vmatpush1.msra.mxu0 %v365
  %2583 = vmatprep.subr.mxu0 0.0
  %2584 = vmatpush1.msra.mxu0 %v364
  %2585 = vmatprep.subr.mxu0 0.0
  %2586 = vmatpush1.msra.mxu0 %v363
  %2587 = vmatprep.subr.mxu0 0.0
  %2588 = vmatpush1.msra.mxu0 %v362
  %2589 = vmatprep.subr.mxu0 0.0
  %2590 = vmatpush1.msra.mxu0 %v361
  %2591 = vmatprep.subr.mxu0 0.0
  %2592 = vmatpush1.msra.mxu0 %v360
  %2593 = vmatprep.subr.mxu0 0.0
  %2594 = vmatpush1.msra.mxu0 %v359
  %2595 = vmatprep.subr.mxu0 0.0
  %2596 = vmatpush1.msra.mxu0 %v358
  %2597 = vmatprep.subr.mxu0 0.0
  %2598 = vmatpush1.msra.mxu0 %v357
  %2599 = vmatprep.subr.mxu0 0.0
  %2600 = vmatpush1.msra.mxu0 %v356
  %2601 = vmatprep.subr.mxu0 0.0
  %2602 = vmatpush1.msra.mxu0 %v355
  %2603 = vmatprep.subr.mxu0 0.0
  %2604 = vmatpush2.msra.mxu0 %v386
  %2605 = vmatprep.subr.mxu0 0.0
  %2606 = vmatpush2.msra.mxu0 %v385
  %2607 = vmatprep.subr.mxu0 0.0
  %2608 = vmatpush2.msra.mxu0 %v384
  %2609 = vmatprep.subr.mxu0 0.0
  %2610 = vmatpush2.msra.mxu0 %v383
  %2611 = vmatprep.subr.mxu0 0.0
  %2612 = vmatpush2.msra.mxu0 %v382
  %2613 = vmatprep.subr.mxu0 0.0
  %2614 = vmatpush2.msra.mxu0 %v381
  %2615 = vmatprep.subr.mxu0 0.0
  %2616 = vmatpush2.msra.mxu0 %v380
  %2617 = vmatprep.subr.mxu0 0.0
  %2618 = vmatpush2.msra.mxu0 %v379
  %2619 = vmatprep.subr.mxu0 0.0
  %2620 = vmatpush2.msra.mxu0 %v378
  %2621 = vmatprep.subr.mxu0 0.0
  %2622 = vmatpush2.msra.mxu0 %v377
  %2623 = vmatprep.subr.mxu0 0.0
  %2624 = vmatpush2.msra.mxu0 %v376
  %2625 = vmatprep.subr.mxu0 0.0
  %2626 = vmatpush2.msra.mxu0 %v375
  %2627 = vmatprep.subr.mxu0 0.0
  %2628 = vmatpush2.msra.mxu0 %v374
  %2629 = vmatprep.subr.mxu0 0.0
  %2630 = vmatpush2.msra.mxu0 %v373
  %2631 = vmatprep.subr.mxu0 0.0
  %2632 = vmatpush2.msra.mxu0 %v372
  %2633 = vmatprep.subr.mxu0 0.0
  %2634 = vmatpush2.msra.mxu0 %v371
  %2635 = vmatprep.mubr.f32.mxu0 %v1907
  %2636 = vmatmul.mubr.f32.gmra.mxu0 %v1906
  %v2637 = vpop.f32.mrf.mxu0
  %v2638 = vadd.f32 %v2538, %v2637
  %v2639 = vpop.f32.mrf.mxu0
  %2640 = vmatprep.mubr.f32.mxu0 %v1932
  %2641 = vmatmul.mubr.f32.gmra.mxu0 %v1931
  %v2642 = vpop.f32.mrf.mxu0
  %v2643 = vadd.f32 %v2543, %v2642
  %v2644 = vpop.f32.mrf.mxu0
  %2645 = vmatprep.mubr.f32.mxu0 %v1957
  %2646 = vmatmul.mubr.f32.gmra.mxu0 %v1956
  %v2647 = vpop.f32.mrf.mxu0
  %v2648 = vadd.f32 %v2548, %v2647
  %v2649 = vpop.f32.mrf.mxu0
  %2650 = vmatprep.mubr.f32.mxu0 %v1982
  %2651 = vmatmul.mubr.f32.gmra.mxu0 %v1981
  %v2652 = vpop.f32.mrf.mxu0
  %v2653 = vadd.f32 %v2553, %v2652
  %v2654 = vpop.f32.mrf.mxu0
  %2655 = vmatprep.mubr.f32.mxu0 %v2007
  %2656 = vmatmul.mubr.f32.gmra.mxu0 %v2006
  %v2657 = vpop.f32.mrf.mxu0
  %v2658 = vadd.f32 %v2558, %v2657
  %v2659 = vpop.f32.mrf.mxu0
  %2660 = vmatprep.mubr.f32.mxu0 %v2032
  %2661 = vmatmul.mubr.f32.gmra.mxu0 %v2031
  %v2662 = vpop.f32.mrf.mxu0
  %v2663 = vadd.f32 %v2563, %v2662
  %v2664 = vpop.f32.mrf.mxu0
  %2665 = vmatprep.mubr.f32.mxu0 %v2057
  %2666 = vmatmul.mubr.f32.gmra.mxu0 %v2056
  %v2667 = vpop.f32.mrf.mxu0
  %v2668 = vadd.f32 %v2568, %v2667
  %v2669 = vpop.f32.mrf.mxu0
  %2670 = vdwg.mxu0
  %2671 = vmatprep.subr.mxu0 0.0
  %2672 = vmatpush1.msra.mxu0 %v402
  %2673 = vmatprep.subr.mxu0 0.0
  %2674 = vmatpush1.msra.mxu0 %v401
  %2675 = vmatprep.subr.mxu0 0.0
  %2676 = vmatpush1.msra.mxu0 %v400
  %2677 = vmatprep.subr.mxu0 0.0
  %2678 = vmatpush1.msra.mxu0 %v399
  %2679 = vmatprep.subr.mxu0 0.0
  %2680 = vmatpush1.msra.mxu0 %v398
  %2681 = vmatprep.subr.mxu0 0.0
  %2682 = vmatpush1.msra.mxu0 %v397
  %2683 = vmatprep.subr.mxu0 0.0
  %2684 = vmatpush1.msra.mxu0 %v396
  %2685 = vmatprep.subr.mxu0 0.0
  %2686 = vmatpush1.msra.mxu0 %v395
  %2687 = vmatprep.subr.mxu0 0.0
  %2688 = vmatpush1.msra.mxu0 %v394
  %2689 = vmatprep.subr.mxu0 0.0
  %2690 = vmatpush1.msra.mxu0 %v393
  %2691 = vmatprep.subr.mxu0 0.0
  %2692 = vmatpush1.msra.mxu0 %v392
  %2693 = vmatprep.subr.mxu0 0.0
  %2694 = vmatpush1.msra.mxu0 %v391
  %2695 = vmatprep.subr.mxu0 0.0
  %2696 = vmatpush1.msra.mxu0 %v390
  %2697 = vmatprep.subr.mxu0 0.0
  %2698 = vmatpush1.msra.mxu0 %v389
  %2699 = vmatprep.subr.mxu0 0.0
  %2700 = vmatpush1.msra.mxu0 %v388
  %2701 = vmatprep.subr.mxu0 0.0
  %2702 = vmatpush1.msra.mxu0 %v387
  %2703 = vmatprep.subr.mxu0 0.0
  %2704 = vmatpush2.msra.mxu0 %v418
  %2705 = vmatprep.subr.mxu0 0.0
  %2706 = vmatpush2.msra.mxu0 %v417
  %2707 = vmatprep.subr.mxu0 0.0
  %2708 = vmatpush2.msra.mxu0 %v416
  %2709 = vmatprep.subr.mxu0 0.0
  %2710 = vmatpush2.msra.mxu0 %v415
  %2711 = vmatprep.subr.mxu0 0.0
  %2712 = vmatpush2.msra.mxu0 %v414
  %2713 = vmatprep.subr.mxu0 0.0
  %2714 = vmatpush2.msra.mxu0 %v413
  %2715 = vmatprep.subr.mxu0 0.0
  %2716 = vmatpush2.msra.mxu0 %v412
  %2717 = vmatprep.subr.mxu0 0.0
  %2718 = vmatpush2.msra.mxu0 %v411
  %2719 = vmatprep.subr.mxu0 0.0
  %2720 = vmatpush2.msra.mxu0 %v410
  %2721 = vmatprep.subr.mxu0 0.0
  %2722 = vmatpush2.msra.mxu0 %v409
  %2723 = vmatprep.subr.mxu0 0.0
  %2724 = vmatpush2.msra.mxu0 %v408
  %2725 = vmatprep.subr.mxu0 0.0
  %2726 = vmatpush2.msra.mxu0 %v407
  %2727 = vmatprep.subr.mxu0 0.0
  %2728 = vmatpush2.msra.mxu0 %v406
  %2729 = vmatprep.subr.mxu0 0.0
  %2730 = vmatpush2.msra.mxu0 %v405
  %2731 = vmatprep.subr.mxu0 0.0
  %2732 = vmatpush2.msra.mxu0 %v404
  %2733 = vmatprep.subr.mxu0 0.0
  %2734 = vmatpush2.msra.mxu0 %v403
  %2735 = vmatprep.mubr.f32.mxu0 %v1909
  %2736 = vmatmul.mubr.f32.gmra.mxu0 %v1908
  %v2737 = vpop.f32.mrf.mxu0
  %v2738 = vadd.f32 %v2638, %v2737
  %v2739 = vpop.f32.mrf.mxu0
  %2740 = vmatprep.mubr.f32.mxu0 %v1934
  %2741 = vmatmul.mubr.f32.gmra.mxu0 %v1933
  %v2742 = vpop.f32.mrf.mxu0
  %v2743 = vadd.f32 %v2643, %v2742
  %v2744 = vpop.f32.mrf.mxu0
  %2745 = vmatprep.mubr.f32.mxu0 %v1959
  %2746 = vmatmul.mubr.f32.gmra.mxu0 %v1958
  %v2747 = vpop.f32.mrf.mxu0
  %v2748 = vadd.f32 %v2648, %v2747
  %v2749 = vpop.f32.mrf.mxu0
  %2750 = vmatprep.mubr.f32.mxu0 %v1984
  %2751 = vmatmul.mubr.f32.gmra.mxu0 %v1983
  %v2752 = vpop.f32.mrf.mxu0
  %v2753 = vadd.f32 %v2653, %v2752
  %v2754 = vpop.f32.mrf.mxu0
  %2755 = vmatprep.mubr.f32.mxu0 %v2009
  %2756 = vmatmul.mubr.f32.gmra.mxu0 %v2008
  %v2757 = vpop.f32.mrf.mxu0
  %v2758 = vadd.f32 %v2658, %v2757
  %v2759 = vpop.f32.mrf.mxu0
  %2760 = vmatprep.mubr.f32.mxu0 %v2034
  %2761 = vmatmul.mubr.f32.gmra.mxu0 %v2033
  %v2762 = vpop.f32.mrf.mxu0
  %v2763 = vadd.f32 %v2663, %v2762
  %v2764 = vpop.f32.mrf.mxu0
  %2765 = vmatprep.mubr.f32.mxu0 %v2059
  %2766 = vmatmul.mubr.f32.gmra.mxu0 %v2058
  %v2767 = vpop.f32.mrf.mxu0
  %v2768 = vadd.f32 %v2668, %v2767
  %v2769 = vpop.f32.mrf.mxu0
  %2770 = vdwg.mxu0
  %2771 = vmatprep.subr.mxu0 0.0
  %2772 = vmatpush1.msra.mxu0 %v434
  %2773 = vmatprep.subr.mxu0 0.0
  %2774 = vmatpush1.msra.mxu0 %v433
  %2775 = vmatprep.subr.mxu0 0.0
  %2776 = vmatpush1.msra.mxu0 %v432
  %2777 = vmatprep.subr.mxu0 0.0
  %2778 = vmatpush1.msra.mxu0 %v431
  %2779 = vmatprep.subr.mxu0 0.0
  %2780 = vmatpush1.msra.mxu0 %v430
  %2781 = vmatprep.subr.mxu0 0.0
  %2782 = vmatpush1.msra.mxu0 %v429
  %2783 = vmatprep.subr.mxu0 0.0
  %2784 = vmatpush1.msra.mxu0 %v428
  %2785 = vmatprep.subr.mxu0 0.0
  %2786 = vmatpush1.msra.mxu0 %v427
  %2787 = vmatprep.subr.mxu0 0.0
  %2788 = vmatpush1.msra.mxu0 %v426
  %2789 = vmatprep.subr.mxu0 0.0
  %2790 = vmatpush1.msra.mxu0 %v425
  %2791 = vmatprep.subr.mxu0 0.0
  %2792 = vmatpush1.msra.mxu0 %v424
  %2793 = vmatprep.subr.mxu0 0.0
  %2794 = vmatpush1.msra.mxu0 %v423
  %2795 = vmatprep.subr.mxu0 0.0
  %2796 = vmatpush1.msra.mxu0 %v422
  %2797 = vmatprep.subr.mxu0 0.0
  %2798 = vmatpush1.msra.mxu0 %v421
  %2799 = vmatprep.subr.mxu0 0.0
  %2800 = vmatpush1.msra.mxu0 %v420
  %2801 = vmatprep.subr.mxu0 0.0
  %2802 = vmatpush1.msra.mxu0 %v419
  %2803 = vmatprep.subr.mxu0 0.0
  %2804 = vmatpush2.msra.mxu0 %v450
  %2805 = vmatprep.subr.mxu0 0.0
  %2806 = vmatpush2.msra.mxu0 %v449
  %2807 = vmatprep.subr.mxu0 0.0
  %2808 = vmatpush2.msra.mxu0 %v448
  %2809 = vmatprep.subr.mxu0 0.0
  %2810 = vmatpush2.msra.mxu0 %v447
  %2811 = vmatprep.subr.mxu0 0.0
  %2812 = vmatpush2.msra.mxu0 %v446
  %2813 = vmatprep.subr.mxu0 0.0
  %2814 = vmatpush2.msra.mxu0 %v445
  %2815 = vmatprep.subr.mxu0 0.0
  %2816 = vmatpush2.msra.mxu0 %v444
  %2817 = vmatprep.subr.mxu0 0.0
  %2818 = vmatpush2.msra.mxu0 %v443
  %2819 = vmatprep.subr.mxu0 0.0
  %2820 = vmatpush2.msra.mxu0 %v442
  %2821 = vmatprep.subr.mxu0 0.0
  %2822 = vmatpush2.msra.mxu0 %v441
  %2823 = vmatprep.subr.mxu0 0.0
  %2824 = vmatpush2.msra.mxu0 %v440
  %2825 = vmatprep.subr.mxu0 0.0
  %2826 = vmatpush2.msra.mxu0 %v439
  %2827 = vmatprep.subr.mxu0 0.0
  %2828 = vmatpush2.msra.mxu0 %v438
  %2829 = vmatprep.subr.mxu0 0.0
  %2830 = vmatpush2.msra.mxu0 %v437
  %2831 = vmatprep.subr.mxu0 0.0
  %2832 = vmatpush2.msra.mxu0 %v436
  %2833 = vmatprep.subr.mxu0 0.0
  %2834 = vmatpush2.msra.mxu0 %v435
  %2835 = vmatprep.mubr.f32.mxu0 %v1911
  %2836 = vmatmul.mubr.f32.gmra.mxu0 %v1910
  %v2837 = vpop.f32.mrf.mxu0
  %v2838 = vadd.f32 %v2738, %v2837
  %v2839 = vpop.f32.mrf.mxu0
  %2840 = vmatprep.mubr.f32.mxu0 %v1936
  %2841 = vmatmul.mubr.f32.gmra.mxu0 %v1935
  %v2842 = vpop.f32.mrf.mxu0
  %v2843 = vadd.f32 %v2743, %v2842
  %v2844 = vpop.f32.mrf.mxu0
  %2845 = vmatprep.mubr.f32.mxu0 %v1961
  %2846 = vmatmul.mubr.f32.gmra.mxu0 %v1960
  %v2847 = vpop.f32.mrf.mxu0
  %v2848 = vadd.f32 %v2748, %v2847
  %v2849 = vpop.f32.mrf.mxu0
  %2850 = vmatprep.mubr.f32.mxu0 %v1986
  %2851 = vmatmul.mubr.f32.gmra.mxu0 %v1985
  %v2852 = vpop.f32.mrf.mxu0
  %v2853 = vadd.f32 %v2753, %v2852
  %v2854 = vpop.f32.mrf.mxu0
  %2855 = vmatprep.mubr.f32.mxu0 %v2011
  %2856 = vmatmul.mubr.f32.gmra.mxu0 %v2010
  %v2857 = vpop.f32.mrf.mxu0
  %v2858 = vadd.f32 %v2758, %v2857
  %v2859 = vpop.f32.mrf.mxu0
  %2860 = vmatprep.mubr.f32.mxu0 %v2036
  %2861 = vmatmul.mubr.f32.gmra.mxu0 %v2035
  %v2862 = vpop.f32.mrf.mxu0
  %v2863 = vadd.f32 %v2763, %v2862
  %v2864 = vpop.f32.mrf.mxu0
  %2865 = vmatprep.mubr.f32.mxu0 %v2061
  %2866 = vmatmul.mubr.f32.gmra.mxu0 %v2060
  %v2867 = vpop.f32.mrf.mxu0
  %v2868 = vadd.f32 %v2768, %v2867
  %v2869 = vpop.f32.mrf.mxu0
  %2870 = vdwg.mxu0
  %2871 = vmatprep.subr.mxu0 0.0
  %2872 = vmatpush1.msra.mxu0 %v466
  %2873 = vmatprep.subr.mxu0 0.0
  %2874 = vmatpush1.msra.mxu0 %v465
  %2875 = vmatprep.subr.mxu0 0.0
  %2876 = vmatpush1.msra.mxu0 %v464
  %2877 = vmatprep.subr.mxu0 0.0
  %2878 = vmatpush1.msra.mxu0 %v463
  %2879 = vmatprep.subr.mxu0 0.0
  %2880 = vmatpush1.msra.mxu0 %v462
  %2881 = vmatprep.subr.mxu0 0.0
  %2882 = vmatpush1.msra.mxu0 %v461
  %2883 = vmatprep.subr.mxu0 0.0
  %2884 = vmatpush1.msra.mxu0 %v460
  %2885 = vmatprep.subr.mxu0 0.0
  %2886 = vmatpush1.msra.mxu0 %v459
  %2887 = vmatprep.subr.mxu0 0.0
  %2888 = vmatpush1.msra.mxu0 %v458
  %2889 = vmatprep.subr.mxu0 0.0
  %2890 = vmatpush1.msra.mxu0 %v457
  %2891 = vmatprep.subr.mxu0 0.0
  %2892 = vmatpush1.msra.mxu0 %v456
  %2893 = vmatprep.subr.mxu0 0.0
  %2894 = vmatpush1.msra.mxu0 %v455
  %2895 = vmatprep.subr.mxu0 0.0
  %2896 = vmatpush1.msra.mxu0 %v454
  %2897 = vmatprep.subr.mxu0 0.0
  %2898 = vmatpush1.msra.mxu0 %v453
  %2899 = vmatprep.subr.mxu0 0.0
  %2900 = vmatpush1.msra.mxu0 %v452
  %2901 = vmatprep.subr.mxu0 0.0
  %2902 = vmatpush1.msra.mxu0 %v451
  %2903 = vmatprep.subr.mxu0 0.0
  %2904 = vmatpush2.msra.mxu0 %v482
  %2905 = vmatprep.subr.mxu0 0.0
  %2906 = vmatpush2.msra.mxu0 %v481
  %2907 = vmatprep.subr.mxu0 0.0
  %2908 = vmatpush2.msra.mxu0 %v480
  %2909 = vmatprep.subr.mxu0 0.0
  %2910 = vmatpush2.msra.mxu0 %v479
  %2911 = vmatprep.subr.mxu0 0.0
  %2912 = vmatpush2.msra.mxu0 %v478
  %2913 = vmatprep.subr.mxu0 0.0
  %2914 = vmatpush2.msra.mxu0 %v477
  %2915 = vmatprep.subr.mxu0 0.0
  %2916 = vmatpush2.msra.mxu0 %v476
  %2917 = vmatprep.subr.mxu0 0.0
  %2918 = vmatpush2.msra.mxu0 %v475
  %2919 = vmatprep.subr.mxu0 0.0
  %2920 = vmatpush2.msra.mxu0 %v474
  %2921 = vmatprep.subr.mxu0 0.0
  %2922 = vmatpush2.msra.mxu0 %v473
  %2923 = vmatprep.subr.mxu0 0.0
  %2924 = vmatpush2.msra.mxu0 %v472
  %2925 = vmatprep.subr.mxu0 0.0
  %2926 = vmatpush2.msra.mxu0 %v471
  %2927 = vmatprep.subr.mxu0 0.0
  %2928 = vmatpush2.msra.mxu0 %v470
  %2929 = vmatprep.subr.mxu0 0.0
  %2930 = vmatpush2.msra.mxu0 %v469
  %2931 = vmatprep.subr.mxu0 0.0
  %2932 = vmatpush2.msra.mxu0 %v468
  %2933 = vmatprep.subr.mxu0 0.0
  %2934 = vmatpush2.msra.mxu0 %v467
  %2935 = vmatprep.mubr.f32.mxu0 %v1913
  %2936 = vmatmul.mubr.f32.gmra.mxu0 %v1912
  %v2937 = vpop.f32.mrf.mxu0
  %v2938 = vadd.f32 %v2838, %v2937
  %v2939 = vpop.f32.mrf.mxu0
  %2940 = vmatprep.mubr.f32.mxu0 %v1938
  %2941 = vmatmul.mubr.f32.gmra.mxu0 %v1937
  %v2942 = vpop.f32.mrf.mxu0
  %v2943 = vadd.f32 %v2843, %v2942
  %v2944 = vpop.f32.mrf.mxu0
  %2945 = vmatprep.mubr.f32.mxu0 %v1963
  %2946 = vmatmul.mubr.f32.gmra.mxu0 %v1962
  %v2947 = vpop.f32.mrf.mxu0
  %v2948 = vadd.f32 %v2848, %v2947
  %v2949 = vpop.f32.mrf.mxu0
  %2950 = vmatprep.mubr.f32.mxu0 %v1988
  %2951 = vmatmul.mubr.f32.gmra.mxu0 %v1987
  %v2952 = vpop.f32.mrf.mxu0
  %v2953 = vadd.f32 %v2853, %v2952
  %v2954 = vpop.f32.mrf.mxu0
  %2955 = vmatprep.mubr.f32.mxu0 %v2013
  %2956 = vmatmul.mubr.f32.gmra.mxu0 %v2012
  %v2957 = vpop.f32.mrf.mxu0
  %v2958 = vadd.f32 %v2858, %v2957
  %v2959 = vpop.f32.mrf.mxu0
  %2960 = vmatprep.mubr.f32.mxu0 %v2038
  %2961 = vmatmul.mubr.f32.gmra.mxu0 %v2037
  %v2962 = vpop.f32.mrf.mxu0
  %v2963 = vadd.f32 %v2863, %v2962
  %v2964 = vpop.f32.mrf.mxu0
  %2965 = vmatprep.mubr.f32.mxu0 %v2063
  %2966 = vmatmul.mubr.f32.gmra.mxu0 %v2062
  %v2967 = vpop.f32.mrf.mxu0
  %v2968 = vadd.f32 %v2868, %v2967
  %v2969 = vpop.f32.mrf.mxu0
  %2970 = vdwg.mxu0
  %2971 = vmatprep.subr.mxu0 0.0
  %2972 = vmatpush1.msra.mxu0 %v498
  %2973 = vmatprep.subr.mxu0 0.0
  %2974 = vmatpush1.msra.mxu0 %v497
  %2975 = vmatprep.subr.mxu0 0.0
  %2976 = vmatpush1.msra.mxu0 %v496
  %2977 = vmatprep.subr.mxu0 0.0
  %2978 = vmatpush1.msra.mxu0 %v495
  %2979 = vmatprep.subr.mxu0 0.0
  %2980 = vmatpush1.msra.mxu0 %v494
  %2981 = vmatprep.subr.mxu0 0.0
  %2982 = vmatpush1.msra.mxu0 %v493
  %2983 = vmatprep.subr.mxu0 0.0
  %2984 = vmatpush1.msra.mxu0 %v492
  %2985 = vmatprep.subr.mxu0 0.0
  %2986 = vmatpush1.msra.mxu0 %v491
  %2987 = vmatprep.subr.mxu0 0.0
  %2988 = vmatpush1.msra.mxu0 %v490
  %2989 = vmatprep.subr.mxu0 0.0
  %2990 = vmatpush1.msra.mxu0 %v489
  %2991 = vmatprep.subr.mxu0 0.0
  %2992 = vmatpush1.msra.mxu0 %v488
  %2993 = vmatprep.subr.mxu0 0.0
  %2994 = vmatpush1.msra.mxu0 %v487
  %2995 = vmatprep.subr.mxu0 0.0
  %2996 = vmatpush1.msra.mxu0 %v486
  %2997 = vmatprep.subr.mxu0 0.0
  %2998 = vmatpush1.msra.mxu0 %v485
  %2999 = vmatprep.subr.mxu0 0.0
  %3000 = vmatpush1.msra.mxu0 %v484
  %3001 = vmatprep.subr.mxu0 0.0
  %3002 = vmatpush1.msra.mxu0 %v483
  %3003 = vmatprep.subr.mxu0 0.0
  %3004 = vmatpush2.msra.mxu0 %v514
  %3005 = vmatprep.subr.mxu0 0.0
  %3006 = vmatpush2.msra.mxu0 %v513
  %3007 = vmatprep.subr.mxu0 0.0
  %3008 = vmatpush2.msra.mxu0 %v512
  %3009 = vmatprep.subr.mxu0 0.0
  %3010 = vmatpush2.msra.mxu0 %v511
  %3011 = vmatprep.subr.mxu0 0.0
  %3012 = vmatpush2.msra.mxu0 %v510
  %3013 = vmatprep.subr.mxu0 0.0
  %3014 = vmatpush2.msra.mxu0 %v509
  %3015 = vmatprep.subr.mxu0 0.0
  %3016 = vmatpush2.msra.mxu0 %v508
  %3017 = vmatprep.subr.mxu0 0.0
  %3018 = vmatpush2.msra.mxu0 %v507
  %3019 = vmatprep.subr.mxu0 0.0
  %3020 = vmatpush2.msra.mxu0 %v506
  %3021 = vmatprep.subr.mxu0 0.0
  %3022 = vmatpush2.msra.mxu0 %v505
  %3023 = vmatprep.subr.mxu0 0.0
  %3024 = vmatpush2.msra.mxu0 %v504
  %3025 = vmatprep.subr.mxu0 0.0
  %3026 = vmatpush2.msra.mxu0 %v503
  %3027 = vmatprep.subr.mxu0 0.0
  %3028 = vmatpush2.msra.mxu0 %v502
  %3029 = vmatprep.subr.mxu0 0.0
  %3030 = vmatpush2.msra.mxu0 %v501
  %3031 = vmatprep.subr.mxu0 0.0
  %3032 = vmatpush2.msra.mxu0 %v500
  %3033 = vmatprep.subr.mxu0 0.0
  %3034 = vmatpush2.msra.mxu0 %v499
  %3035 = vmatprep.mubr.f32.mxu0 %v1915
  %3036 = vmatmul.mubr.f32.gmra.mxu0 %v1914
  %v3037 = vpop.f32.mrf.mxu0
  %v3038 = vadd.f32 %v2938, %v3037
  %v3039 = vpop.f32.mrf.mxu0
  %3040 = vmatprep.mubr.f32.mxu0 %v1940
  %3041 = vmatmul.mubr.f32.gmra.mxu0 %v1939
  %v3042 = vpop.f32.mrf.mxu0
  %v3043 = vadd.f32 %v2943, %v3042
  %v3044 = vpop.f32.mrf.mxu0
  %3045 = vmatprep.mubr.f32.mxu0 %v1965
  %3046 = vmatmul.mubr.f32.gmra.mxu0 %v1964
  %v3047 = vpop.f32.mrf.mxu0
  %v3048 = vadd.f32 %v2948, %v3047
  %v3049 = vpop.f32.mrf.mxu0
  %3050 = vmatprep.mubr.f32.mxu0 %v1990
  %3051 = vmatmul.mubr.f32.gmra.mxu0 %v1989
  %v3052 = vpop.f32.mrf.mxu0
  %v3053 = vadd.f32 %v2953, %v3052
  %v3054 = vpop.f32.mrf.mxu0
  %3055 = vmatprep.mubr.f32.mxu0 %v2015
  %3056 = vmatmul.mubr.f32.gmra.mxu0 %v2014
  %v3057 = vpop.f32.mrf.mxu0
  %v3058 = vadd.f32 %v2958, %v3057
  %v3059 = vpop.f32.mrf.mxu0
  %3060 = vmatprep.mubr.f32.mxu0 %v2040
  %3061 = vmatmul.mubr.f32.gmra.mxu0 %v2039
  %v3062 = vpop.f32.mrf.mxu0
  %v3063 = vadd.f32 %v2963, %v3062
  %v3064 = vpop.f32.mrf.mxu0
  %3065 = vmatprep.mubr.f32.mxu0 %v2065
  %3066 = vmatmul.mubr.f32.gmra.mxu0 %v2064
  %v3067 = vpop.f32.mrf.mxu0
  %v3068 = vadd.f32 %v2968, %v3067
  %v3069 = vpop.f32.mrf.mxu0
  %3070 = vdwg.mxu0
  %3071 = vmatprep.subr.mxu0 0.0
  %3072 = vmatpush1.msra.mxu0 %v530
  %3073 = vmatprep.subr.mxu0 0.0
  %3074 = vmatpush1.msra.mxu0 %v529
  %3075 = vmatprep.subr.mxu0 0.0
  %3076 = vmatpush1.msra.mxu0 %v528
  %3077 = vmatprep.subr.mxu0 0.0
  %3078 = vmatpush1.msra.mxu0 %v527
  %3079 = vmatprep.subr.mxu0 0.0
  %3080 = vmatpush1.msra.mxu0 %v526
  %3081 = vmatprep.subr.mxu0 0.0
  %3082 = vmatpush1.msra.mxu0 %v525
  %3083 = vmatprep.subr.mxu0 0.0
  %3084 = vmatpush1.msra.mxu0 %v524
  %3085 = vmatprep.subr.mxu0 0.0
  %3086 = vmatpush1.msra.mxu0 %v523
  %3087 = vmatprep.subr.mxu0 0.0
  %3088 = vmatpush1.msra.mxu0 %v522
  %3089 = vmatprep.subr.mxu0 0.0
  %3090 = vmatpush1.msra.mxu0 %v521
  %3091 = vmatprep.subr.mxu0 0.0
  %3092 = vmatpush1.msra.mxu0 %v520
  %3093 = vmatprep.subr.mxu0 0.0
  %3094 = vmatpush1.msra.mxu0 %v519
  %3095 = vmatprep.subr.mxu0 0.0
  %3096 = vmatpush1.msra.mxu0 %v518
  %3097 = vmatprep.subr.mxu0 0.0
  %3098 = vmatpush1.msra.mxu0 %v517
  %3099 = vmatprep.subr.mxu0 0.0
  %3100 = vmatpush1.msra.mxu0 %v516
  %3101 = vmatprep.subr.mxu0 0.0
  %3102 = vmatpush1.msra.mxu0 %v515
  %3103 = vmatprep.subr.mxu0 0.0
  %3104 = vmatpush2.msra.mxu0 %v546
  %3105 = vmatprep.subr.mxu0 0.0
  %3106 = vmatpush2.msra.mxu0 %v545
  %3107 = vmatprep.subr.mxu0 0.0
  %3108 = vmatpush2.msra.mxu0 %v544
  %3109 = vmatprep.subr.mxu0 0.0
  %3110 = vmatpush2.msra.mxu0 %v543
  %3111 = vmatprep.subr.mxu0 0.0
  %3112 = vmatpush2.msra.mxu0 %v542
  %3113 = vmatprep.subr.mxu0 0.0
  %3114 = vmatpush2.msra.mxu0 %v541
  %3115 = vmatprep.subr.mxu0 0.0
  %3116 = vmatpush2.msra.mxu0 %v540
  %3117 = vmatprep.subr.mxu0 0.0
  %3118 = vmatpush2.msra.mxu0 %v539
  %3119 = vmatprep.subr.mxu0 0.0
  %3120 = vmatpush2.msra.mxu0 %v538
  %3121 = vmatprep.subr.mxu0 0.0
  %3122 = vmatpush2.msra.mxu0 %v537
  %3123 = vmatprep.subr.mxu0 0.0
  %3124 = vmatpush2.msra.mxu0 %v536
  %3125 = vmatprep.subr.mxu0 0.0
  %3126 = vmatpush2.msra.mxu0 %v535
  %3127 = vmatprep.subr.mxu0 0.0
  %3128 = vmatpush2.msra.mxu0 %v534
  %3129 = vmatprep.subr.mxu0 0.0
  %3130 = vmatpush2.msra.mxu0 %v533
  %3131 = vmatprep.subr.mxu0 0.0
  %3132 = vmatpush2.msra.mxu0 %v532
  %3133 = vmatprep.subr.mxu0 0.0
  %3134 = vmatpush2.msra.mxu0 %v531
  %3135 = vmatprep.mubr.f32.mxu0 %v1917
  %3136 = vmatmul.mubr.f32.gmra.mxu0 %v1916
  %v3137 = vpop.f32.mrf.mxu0
  %v3138 = vadd.f32 %v3038, %v3137
  %v3139 = vpop.f32.mrf.mxu0
  %3140 = vmatprep.mubr.f32.mxu0 %v1942
  %3141 = vmatmul.mubr.f32.gmra.mxu0 %v1941
  %v3142 = vpop.f32.mrf.mxu0
  %v3143 = vadd.f32 %v3043, %v3142
  %v3144 = vpop.f32.mrf.mxu0
  %3145 = vmatprep.mubr.f32.mxu0 %v1967
  %3146 = vmatmul.mubr.f32.gmra.mxu0 %v1966
  %v3147 = vpop.f32.mrf.mxu0
  %v3148 = vadd.f32 %v3048, %v3147
  %v3149 = vpop.f32.mrf.mxu0
  %3150 = vmatprep.mubr.f32.mxu0 %v1992
  %3151 = vmatmul.mubr.f32.gmra.mxu0 %v1991
  %v3152 = vpop.f32.mrf.mxu0
  %v3153 = vadd.f32 %v3053, %v3152
  %v3154 = vpop.f32.mrf.mxu0
  %3155 = vmatprep.mubr.f32.mxu0 %v2017
  %3156 = vmatmul.mubr.f32.gmra.mxu0 %v2016
  %v3157 = vpop.f32.mrf.mxu0
  %v3158 = vadd.f32 %v3058, %v3157
  %v3159 = vpop.f32.mrf.mxu0
  %3160 = vmatprep.mubr.f32.mxu0 %v2042
  %3161 = vmatmul.mubr.f32.gmra.mxu0 %v2041
  %v3162 = vpop.f32.mrf.mxu0
  %v3163 = vadd.f32 %v3063, %v3162
  %v3164 = vpop.f32.mrf.mxu0
  %3165 = vmatprep.mubr.f32.mxu0 %v2067
  %3166 = vmatmul.mubr.f32.gmra.mxu0 %v2066
  %v3167 = vpop.f32.mrf.mxu0
  %v3168 = vadd.f32 %v3068, %v3167
  %v3169 = vpop.f32.mrf.mxu0
  %3170 = vdwg.mxu0
  %3171 = vmatprep.subr.mxu0 0.0
  %3172 = vmatpush1.msra.mxu0 %v562
  %3173 = vmatprep.subr.mxu0 0.0
  %3174 = vmatpush1.msra.mxu0 %v561
  %3175 = vmatprep.subr.mxu0 0.0
  %3176 = vmatpush1.msra.mxu0 %v560
  %3177 = vmatprep.subr.mxu0 0.0
  %3178 = vmatpush1.msra.mxu0 %v559
  %3179 = vmatprep.subr.mxu0 0.0
  %3180 = vmatpush1.msra.mxu0 %v558
  %3181 = vmatprep.subr.mxu0 0.0
  %3182 = vmatpush1.msra.mxu0 %v557
  %3183 = vmatprep.subr.mxu0 0.0
  %3184 = vmatpush1.msra.mxu0 %v556
  %3185 = vmatprep.subr.mxu0 0.0
  %3186 = vmatpush1.msra.mxu0 %v555
  %3187 = vmatprep.subr.mxu0 0.0
  %3188 = vmatpush1.msra.mxu0 %v554
  %3189 = vmatprep.subr.mxu0 0.0
  %3190 = vmatpush1.msra.mxu0 %v553
  %3191 = vmatprep.subr.mxu0 0.0
  %3192 = vmatpush1.msra.mxu0 %v552
  %3193 = vmatprep.subr.mxu0 0.0
  %3194 = vmatpush1.msra.mxu0 %v551
  %3195 = vmatprep.subr.mxu0 0.0
  %3196 = vmatpush1.msra.mxu0 %v550
  %3197 = vmatprep.subr.mxu0 0.0
  %3198 = vmatpush1.msra.mxu0 %v549
  %3199 = vmatprep.subr.mxu0 0.0
  %3200 = vmatpush1.msra.mxu0 %v548
  %3201 = vmatprep.subr.mxu0 0.0
  %3202 = vmatpush1.msra.mxu0 %v547
  %3203 = vmatprep.subr.mxu0 0.0
  %3204 = vmatpush2.msra.mxu0 %v578
  %3205 = vmatprep.subr.mxu0 0.0
  %3206 = vmatpush2.msra.mxu0 %v577
  %3207 = vmatprep.subr.mxu0 0.0
  %3208 = vmatpush2.msra.mxu0 %v576
  %3209 = vmatprep.subr.mxu0 0.0
  %3210 = vmatpush2.msra.mxu0 %v575
  %3211 = vmatprep.subr.mxu0 0.0
  %3212 = vmatpush2.msra.mxu0 %v574
  %3213 = vmatprep.subr.mxu0 0.0
  %3214 = vmatpush2.msra.mxu0 %v573
  %3215 = vmatprep.subr.mxu0 0.0
  %3216 = vmatpush2.msra.mxu0 %v572
  %3217 = vmatprep.subr.mxu0 0.0
  %3218 = vmatpush2.msra.mxu0 %v571
  %3219 = vmatprep.subr.mxu0 0.0
  %3220 = vmatpush2.msra.mxu0 %v570
  %3221 = vmatprep.subr.mxu0 0.0
  %3222 = vmatpush2.msra.mxu0 %v569
  %3223 = vmatprep.subr.mxu0 0.0
  %3224 = vmatpush2.msra.mxu0 %v568
  %3225 = vmatprep.subr.mxu0 0.0
  %3226 = vmatpush2.msra.mxu0 %v567
  %3227 = vmatprep.subr.mxu0 0.0
  %3228 = vmatpush2.msra.mxu0 %v566
  %3229 = vmatprep.subr.mxu0 0.0
  %3230 = vmatpush2.msra.mxu0 %v565
  %3231 = vmatprep.subr.mxu0 0.0
  %3232 = vmatpush2.msra.mxu0 %v564
  %3233 = vmatprep.subr.mxu0 0.0
  %3234 = vmatpush2.msra.mxu0 %v563
  %3235 = vmatprep.mubr.f32.mxu0 %v1919
  %3236 = vmatmul.mubr.f32.gmra.mxu0 %v1918
  %v3237 = vpop.f32.mrf.mxu0
  %v3238 = vadd.f32 %v3138, %v3237
  %v3239 = vpop.f32.mrf.mxu0
  %3240 = vmatprep.mubr.f32.mxu0 %v1944
  %3241 = vmatmul.mubr.f32.gmra.mxu0 %v1943
  %v3242 = vpop.f32.mrf.mxu0
  %v3243 = vadd.f32 %v3143, %v3242
  %v3244 = vpop.f32.mrf.mxu0
  %3245 = vmatprep.mubr.f32.mxu0 %v1969
  %3246 = vmatmul.mubr.f32.gmra.mxu0 %v1968
  %v3247 = vpop.f32.mrf.mxu0
  %v3248 = vadd.f32 %v3148, %v3247
  %v3249 = vpop.f32.mrf.mxu0
  %3250 = vmatprep.mubr.f32.mxu0 %v1994
  %3251 = vmatmul.mubr.f32.gmra.mxu0 %v1993
  %v3252 = vpop.f32.mrf.mxu0
  %v3253 = vadd.f32 %v3153, %v3252
  %v3254 = vpop.f32.mrf.mxu0
  %3255 = vmatprep.mubr.f32.mxu0 %v2019
  %3256 = vmatmul.mubr.f32.gmra.mxu0 %v2018
  %v3257 = vpop.f32.mrf.mxu0
  %v3258 = vadd.f32 %v3158, %v3257
  %v3259 = vpop.f32.mrf.mxu0
  %3260 = vmatprep.mubr.f32.mxu0 %v2044
  %3261 = vmatmul.mubr.f32.gmra.mxu0 %v2043
  %v3262 = vpop.f32.mrf.mxu0
  %v3263 = vadd.f32 %v3163, %v3262
  %v3264 = vpop.f32.mrf.mxu0
  %3265 = vmatprep.mubr.f32.mxu0 %v2069
  %3266 = vmatmul.mubr.f32.gmra.mxu0 %v2068
  %v3267 = vpop.f32.mrf.mxu0
  %v3268 = vadd.f32 %v3168, %v3267
  %v3269 = vpop.f32.mrf.mxu0
  %3270 = vdwg.mxu0
  %3271 = vmatprep.subr.mxu0 0.0
  %3272 = vmatpush1.msra.mxu0 %v594
  %3273 = vmatprep.subr.mxu0 0.0
  %3274 = vmatpush1.msra.mxu0 %v593
  %3275 = vmatprep.subr.mxu0 0.0
  %3276 = vmatpush1.msra.mxu0 %v592
  %3277 = vmatprep.subr.mxu0 0.0
  %3278 = vmatpush1.msra.mxu0 %v591
  %3279 = vmatprep.subr.mxu0 0.0
  %3280 = vmatpush1.msra.mxu0 %v590
  %3281 = vmatprep.subr.mxu0 0.0
  %3282 = vmatpush1.msra.mxu0 %v589
  %3283 = vmatprep.subr.mxu0 0.0
  %3284 = vmatpush1.msra.mxu0 %v588
  %3285 = vmatprep.subr.mxu0 0.0
  %3286 = vmatpush1.msra.mxu0 %v587
  %3287 = vmatprep.subr.mxu0 0.0
  %3288 = vmatpush1.msra.mxu0 %v586
  %3289 = vmatprep.subr.mxu0 0.0
  %3290 = vmatpush1.msra.mxu0 %v585
  %3291 = vmatprep.subr.mxu0 0.0
  %3292 = vmatpush1.msra.mxu0 %v584
  %3293 = vmatprep.subr.mxu0 0.0
  %3294 = vmatpush1.msra.mxu0 %v583
  %3295 = vmatprep.subr.mxu0 0.0
  %3296 = vmatpush1.msra.mxu0 %v582
  %3297 = vmatprep.subr.mxu0 0.0
  %3298 = vmatpush1.msra.mxu0 %v581
  %3299 = vmatprep.subr.mxu0 0.0
  %3300 = vmatpush1.msra.mxu0 %v580
  %3301 = vmatprep.subr.mxu0 0.0
  %3302 = vmatpush1.msra.mxu0 %v579
  %3303 = vmatprep.subr.mxu0 0.0
  %3304 = vmatpush2.msra.mxu0 0.0
  %3305 = vmatprep.subr.mxu0 0.0
  %3306 = vmatpush2.msra.mxu0 0.0
  %3307 = vmatprep.subr.mxu0 0.0
  %3308 = vmatpush2.msra.mxu0 0.0
  %3309 = vmatprep.subr.mxu0 0.0
  %3310 = vmatpush2.msra.mxu0 0.0
  %3311 = vmatprep.subr.mxu0 0.0
  %3312 = vmatpush2.msra.mxu0 0.0
  %3313 = vmatprep.subr.mxu0 0.0
  %3314 = vmatpush2.msra.mxu0 0.0
  %3315 = vmatprep.subr.mxu0 0.0
  %3316 = vmatpush2.msra.mxu0 0.0
  %3317 = vmatprep.subr.mxu0 0.0
  %3318 = vmatpush2.msra.mxu0 0.0
  %3319 = vmatprep.subr.mxu0 0.0
  %3320 = vmatpush2.msra.mxu0 0.0
  %3321 = vmatprep.subr.mxu0 0.0
  %3322 = vmatpush2.msra.mxu0 0.0
  %3323 = vmatprep.subr.mxu0 0.0
  %3324 = vmatpush2.msra.mxu0 0.0
  %3325 = vmatprep.subr.mxu0 0.0
  %3326 = vmatpush2.msra.mxu0 0.0
  %3327 = vmatprep.subr.mxu0 0.0
  %3328 = vmatpush2.msra.mxu0 0.0
  %3329 = vmatprep.subr.mxu0 0.0
  %3330 = vmatpush2.msra.mxu0 0.0
  %3331 = vmatprep.subr.mxu0 0.0
  %3332 = vmatpush2.msra.mxu0 0.0
  %3333 = vmatprep.subr.mxu0 0.0
  %3334 = vmatpush2.msra.mxu0 0.0
  %3335 = vmatprep.mubr.f32.mxu0 0.0
  %3336 = vmatmul.mubr.f32.gmra.mxu0 %v1920
  %v3337 = vpop.f32.mrf.mxu0
  %v3338 = vadd.f32 %v3238, %v3337
  %v3339 = vpop.f32.mrf.mxu0
  %3340 = vmatprep.mubr.f32.mxu0 0.0
  %3341 = vmatmul.mubr.f32.gmra.mxu0 %v1945
  %v3342 = vpop.f32.mrf.mxu0
  %v3343 = vadd.f32 %v3243, %v3342
  %v3344 = vpop.f32.mrf.mxu0
  %3345 = vmatprep.mubr.f32.mxu0 0.0
  %3346 = vmatmul.mubr.f32.gmra.mxu0 %v1970
  %v3347 = vpop.f32.mrf.mxu0
  %v3348 = vadd.f32 %v3248, %v3347
  %v3349 = vpop.f32.mrf.mxu0
  %3350 = vmatprep.mubr.f32.mxu0 0.0
  %3351 = vmatmul.mubr.f32.gmra.mxu0 %v1995
  %v3352 = vpop.f32.mrf.mxu0
  %v3353 = vadd.f32 %v3253, %v3352
  %v3354 = vpop.f32.mrf.mxu0
  %3355 = vmatprep.mubr.f32.mxu0 0.0
  %3356 = vmatmul.mubr.f32.gmra.mxu0 %v2020
  %v3357 = vpop.f32.mrf.mxu0
  %v3358 = vadd.f32 %v3258, %v3357
  %v3359 = vpop.f32.mrf.mxu0
  %3360 = vmatprep.mubr.f32.mxu0 0.0
  %3361 = vmatmul.mubr.f32.gmra.mxu0 %v2045
  %v3362 = vpop.f32.mrf.mxu0
  %v3363 = vadd.f32 %v3263, %v3362
  %v3364 = vpop.f32.mrf.mxu0
  %3365 = vmatprep.mubr.f32.mxu0 0.0
  %3366 = vmatmul.mubr.f32.gmra.mxu0 %v2070
  %v3367 = vpop.f32.mrf.mxu0
  %v3368 = vadd.f32 %v3268, %v3367
  %v3369 = vpop.f32.mrf.mxu0
  %3370 = vdwg.mxu0
  %v3371 = vmax.f32 %v1862, %v3338
  %v3372 = vmax.f32 %v1867, %v3343
  %v3373 = vmax.f32 %v1872, %v3348
  %v3374 = vmax.f32 %v1877, %v3353
  %v3375 = vmax.f32 %v1882, %v3358
  %v3376 = vmax.f32 %v1887, %v3363
  %v3377 = vmax.f32 %v1892, %v3368
  %s3378 = scalar_lea.vmem %s0, 2800
  %v3379 = vld [vmem:[%s3378] sm:$0xff]
  %v3380 = vld [vmem:[%s3378 + $0x8] sm:$0xff]
  %v3381 = vld [vmem:[%s3378 + $0x10] sm:$0xff]
  %v3382 = vld [vmem:[%s3378 + $0x18] sm:$0xff]
  %v3383 = vld [vmem:[%s3378 + $0x20] sm:$0xff]
  %v3384 = vld [vmem:[%s3378 + $0x28] sm:$0xff]
  %v3385 = vld [vmem:[%s3378 + $0x30] sm:$0xff]
  %v3386 = vld [vmem:[%s3378 + $0x38] sm:$0xff]
  %v3387 = vld [vmem:[%s3378 + $0x40] sm:$0xff]
  %v3388 = vld [vmem:[%s3378 + $0x48] sm:$0xff]
  %v3389 = vld [vmem:[%s3378 + $0x50] sm:$0xff]
  %v3390 = vld [vmem:[%s3378 + $0x58] sm:$0xff]
  %v3391 = vld [vmem:[%s3378 + $0x60] sm:$0xff]
  %v3392 = vld [vmem:[%s3378 + $0x68] sm:$0xff]
  %v3393 = vld [vmem:[%s3378 + $0x70] sm:$0xff]
  %v3394 = vld [vmem:[%s3378 + $0x78] sm:$0xff]
  %v3395 = vld [vmem:[%s3378 + $0x80] sm:$0xff]
  %v3396 = vld [vmem:[%s3378 + $0x88] sm:$0xff]
  %v3397 = vld [vmem:[%s3378 + $0x90] sm:$0xff]
  %v3398 = vld [vmem:[%s3378 + $0x98] sm:$0xff]
  %v3399 = vld [vmem:[%s3378 + $0xa0] sm:$0xff]
  %v3400 = vld [vmem:[%s3378 + $0xa8] sm:$0xff]
  %v3401 = vld [vmem:[%s3378 + $0xb0] sm:$0xff]
  %v3402 = vld [vmem:[%s3378 + $0xb8] sm:$0xff]
  %v3403 = vld [vmem:[%s3378 + $0xc0] sm:$0xff]
  %v3404 = vld [vmem:[%s3378 + $0xc8] sm:$0xff]
  %v3405 = vld [vmem:[%s3378 + $0xd0] sm:$0xff]
  %v3406 = vld [vmem:[%s3378 + $0xd8] sm:$0xff]
  %v3407 = vld [vmem:[%s3378 + $0xe0] sm:$0xff]
  %v3408 = vld [vmem:[%s3378 + $0xe8] sm:$0xff]
  %v3409 = vld [vmem:[%s3378 + $0xf0] sm:$0xff]
  %v3410 = vld [vmem:[%s3378 + $0xf8] sm:$0xff]
  %v3411 = vld [vmem:[%s3378 + $0x100] sm:$0xff]
  %v3412 = vld [vmem:[%s3378 + $0x108] sm:$0xff]
  %v3413 = vld [vmem:[%s3378 + $0x110] sm:$0xff]
  %v3414 = vld [vmem:[%s3378 + $0x118] sm:$0xff]
  %v3415 = vld [vmem:[%s3378 + $0x120] sm:$0xff]
  %v3416 = vld [vmem:[%s3378 + $0x128] sm:$0xff]
  %v3417 = vld [vmem:[%s3378 + $0x130] sm:$0xff]
  %v3418 = vld [vmem:[%s3378 + $0x138] sm:$0xff]
  %v3419 = vld [vmem:[%s3378 + $0x140] sm:$0xff]
  %v3420 = vld [vmem:[%s3378 + $0x148] sm:$0xff]
  %v3421 = vld [vmem:[%s3378 + $0x150] sm:$0xff]
  %v3422 = vld [vmem:[%s3378 + $0x158] sm:$0xff]
  %v3423 = vld [vmem:[%s3378 + $0x160] sm:$0xff]
  %v3424 = vld [vmem:[%s3378 + $0x168] sm:$0xff]
  %v3425 = vld [vmem:[%s3378 + $0x170] sm:$0xff]
  %v3426 = vld [vmem:[%s3378 + $0x178] sm:$0xff]
  %v3427 = vld [vmem:[%s3378 + $0x180] sm:$0xff]
  %v3428 = vld [vmem:[%s3378 + $0x188] sm:$0xff]
  %v3429 = vld [vmem:[%s3378 + $0x190] sm:$0xff]
  %v3430 = vld [vmem:[%s3378 + $0x198] sm:$0xff]
  %v3431 = vld [vmem:[%s3378 + $0x1a0] sm:$0xff]
  %v3432 = vld [vmem:[%s3378 + $0x1a8] sm:$0xff]
  %v3433 = vld [vmem:[%s3378 + $0x1b0] sm:$0xff]
  %v3434 = vld [vmem:[%s3378 + $0x1b8] sm:$0xff]
  %v3435 = vld [vmem:[%s3378 + $0x1c0] sm:$0xff]
  %v3436 = vld [vmem:[%s3378 + $0x1c8] sm:$0xff]
  %v3437 = vld [vmem:[%s3378 + $0x1d0] sm:$0xff]
  %v3438 = vld [vmem:[%s3378 + $0x1d8] sm:$0xff]
  %v3439 = vld [vmem:[%s3378 + $0x1e0] sm:$0xff]
  %v3440 = vld [vmem:[%s3378 + $0x1e8] sm:$0xff]
  %v3441 = vld [vmem:[%s3378 + $0x1f0] sm:$0xff]
  %v3442 = vld [vmem:[%s3378 + $0x1f8] sm:$0xff]
  %v3443 = vld [vmem:[%s3378 + $0x200] sm:$0xff]
  %v3444 = vld [vmem:[%s3378 + $0x208] sm:$0xff]
  %v3445 = vld [vmem:[%s3378 + $0x210] sm:$0xff]
  %v3446 = vld [vmem:[%s3378 + $0x218] sm:$0xff]
  %v3447 = vld [vmem:[%s3378 + $0x220] sm:$0xff]
  %v3448 = vld [vmem:[%s3378 + $0x228] sm:$0xff]
  %v3449 = vld [vmem:[%s3378 + $0x230] sm:$0xff]
  %v3450 = vld [vmem:[%s3378 + $0x238] sm:$0xff]
  %v3451 = vld [vmem:[%s3378 + $0x240] sm:$0xff]
  %v3452 = vld [vmem:[%s3378 + $0x248] sm:$0xff]
  %v3453 = vld [vmem:[%s3378 + $0x250] sm:$0xff]
  %v3454 = vld [vmem:[%s3378 + $0x258] sm:$0xff]
  %v3455 = vld [vmem:[%s3378 + $0x260] sm:$0xff]
  %v3456 = vld [vmem:[%s3378 + $0x268] sm:$0xff]
  %v3457 = vld [vmem:[%s3378 + $0x270] sm:$0xff]
  %v3458 = vld [vmem:[%s3378 + $0x278] sm:$0xff]
  %v3459 = vld [vmem:[%s3378 + $0x280] sm:$0xff]
  %v3460 = vld [vmem:[%s3378 + $0x288] sm:$0xff]
  %v3461 = vld [vmem:[%s3378 + $0x290] sm:$0xff]
  %v3462 = vld [vmem:[%s3378 + $0x298] sm:$0xff]
  %v3463 = vld [vmem:[%s3378 + $0x2a0] sm:$0xff]
  %v3464 = vld [vmem:[%s3378 + $0x2a8] sm:$0xff]
  %v3465 = vld [vmem:[%s3378 + $0x2b0] sm:$0xff]
  %v3466 = vld [vmem:[%s3378 + $0x2b8] sm:$0xff]
  %v3467 = vld [vmem:[%s3378 + $0x2c0] sm:$0xff]
  %v3468 = vld [vmem:[%s3378 + $0x2c8] sm:$0xff]
  %v3469 = vld [vmem:[%s3378 + $0x2d0] sm:$0xff]
  %v3470 = vld [vmem:[%s3378 + $0x2d8] sm:$0xff]
  %v3471 = vld [vmem:[%s3378 + $0x2e0] sm:$0xff]
  %v3472 = vld [vmem:[%s3378 + $0x2e8] sm:$0xff]
  %v3473 = vld [vmem:[%s3378 + $0x2f0] sm:$0xff]
  %v3474 = vld [vmem:[%s3378 + $0x2f8] sm:$0xff]
  %v3475 = vld [vmem:[%s3378 + $0x300] sm:$0xff]
  %v3476 = vld [vmem:[%s3378 + $0x308] sm:$0xff]
  %v3477 = vld [vmem:[%s3378 + $0x310] sm:$0xff]
  %v3478 = vld [vmem:[%s3378 + $0x318] sm:$0xff]
  %v3479 = vld [vmem:[%s3378 + $0x320] sm:$0xff]
  %v3480 = vld [vmem:[%s3378 + $0x328] sm:$0xff]
  %v3481 = vld [vmem:[%s3378 + $0x330] sm:$0xff]
  %v3482 = vld [vmem:[%s3378 + $0x338] sm:$0xff]
  %v3483 = vld [vmem:[%s3378 + $0x340] sm:$0xff]
  %v3484 = vld [vmem:[%s3378 + $0x348] sm:$0xff]
  %v3485 = vld [vmem:[%s3378 + $0x350] sm:$0xff]
  %v3486 = vld [vmem:[%s3378 + $0x358] sm:$0xff]
  %v3487 = vld [vmem:[%s3378 + $0x360] sm:$0xff]
  %v3488 = vld [vmem:[%s3378 + $0x368] sm:$0xff]
  %v3489 = vld [vmem:[%s3378 + $0x370] sm:$0xff]
  %v3490 = vld [vmem:[%s3378 + $0x378] sm:$0xff]
  %v3491 = vld [vmem:[%s3378 + $0x380] sm:$0xff]
  %v3492 = vld [vmem:[%s3378 + $0x388] sm:$0xff]
  %v3493 = vld [vmem:[%s3378 + $0x390] sm:$0xff]
  %v3494 = vld [vmem:[%s3378 + $0x398] sm:$0xff]
  %v3495 = vld [vmem:[%s3378 + $0x3a0] sm:$0xff]
  %v3496 = vld [vmem:[%s3378 + $0x3a8] sm:$0xff]
  %v3497 = vld [vmem:[%s3378 + $0x3b0] sm:$0xff]
  %v3498 = vld [vmem:[%s3378 + $0x3b8] sm:$0xff]
  %v3499 = vld [vmem:[%s3378 + $0x3c0] sm:$0xff]
  %v3500 = vld [vmem:[%s3378 + $0x3c8] sm:$0xff]
  %v3501 = vld [vmem:[%s3378 + $0x3d0] sm:$0xff]
  %v3502 = vld [vmem:[%s3378 + $0x3d8] sm:$0xff]
  %v3503 = vld [vmem:[%s3378 + $0x3e0] sm:$0xff]
  %v3504 = vld [vmem:[%s3378 + $0x3e8] sm:$0xff]
  %v3505 = vld [vmem:[%s3378 + $0x3f0] sm:$0xff]
  %v3506 = vld [vmem:[%s3378 + $0x3f8] sm:$0xff]
  %v3507 = vld [vmem:[%s3378 + $0x400] sm:$0xff]
  %v3508 = vld [vmem:[%s3378 + $0x408] sm:$0xff]
  %v3509 = vld [vmem:[%s3378 + $0x410] sm:$0xff]
  %v3510 = vld [vmem:[%s3378 + $0x418] sm:$0xff]
  %v3511 = vld [vmem:[%s3378 + $0x420] sm:$0xff]
  %v3512 = vld [vmem:[%s3378 + $0x428] sm:$0xff]
  %v3513 = vld [vmem:[%s3378 + $0x430] sm:$0xff]
  %v3514 = vld [vmem:[%s3378 + $0x438] sm:$0xff]
  %v3515 = vld [vmem:[%s3378 + $0x440] sm:$0xff]
  %v3516 = vld [vmem:[%s3378 + $0x448] sm:$0xff]
  %v3517 = vld [vmem:[%s3378 + $0x450] sm:$0xff]
  %v3518 = vld [vmem:[%s3378 + $0x458] sm:$0xff]
  %v3519 = vld [vmem:[%s3378 + $0x460] sm:$0xff]
  %v3520 = vld [vmem:[%s3378 + $0x468] sm:$0xff]
  %v3521 = vld [vmem:[%s3378 + $0x470] sm:$0xff]
  %v3522 = vld [vmem:[%s3378 + $0x478] sm:$0xff]
  %v3523 = vld [vmem:[%s3378 + $0x480] sm:$0xff]
  %v3524 = vld [vmem:[%s3378 + $0x488] sm:$0xff]
  %v3525 = vld [vmem:[%s3378 + $0x490] sm:$0xff]
  %v3526 = vld [vmem:[%s3378 + $0x498] sm:$0xff]
  %v3527 = vld [vmem:[%s3378 + $0x4a0] sm:$0xff]
  %v3528 = vld [vmem:[%s3378 + $0x4a8] sm:$0xff]
  %v3529 = vld [vmem:[%s3378 + $0x4b0] sm:$0x3]
  %v3530 = vld [vmem:[%s3378 + $0x4b8] sm:$0x3]
  %v3531 = vld [vmem:[%s3378 + $0x4c0] sm:$0x3]
  %v3532 = vld [vmem:[%s3378 + $0x4c8] sm:$0x3]
  %v3533 = vld [vmem:[%s3378 + $0x4d0] sm:$0x3]
  %v3534 = vld [vmem:[%s3378 + $0x4d8] sm:$0x3]
  %v3535 = vld [vmem:[%s3378 + $0x4e0] sm:$0x3]
  %v3536 = vld [vmem:[%s3378 + $0x4e8] sm:$0x3]
  %v3537 = vld [vmem:[%s3378 + $0x4f0] sm:$0x3]
  %v3538 = vld [vmem:[%s3378 + $0x4f8] sm:$0x3]
  %v3539 = vld [vmem:[%s3378 + $0x500] sm:$0x3]
  %v3540 = vld [vmem:[%s3378 + $0x508] sm:$0x3]
  %v3541 = vld [vmem:[%s3378 + $0x510] sm:$0x3]
  %v3542 = vld [vmem:[%s3378 + $0x518] sm:$0x3]
  %v3543 = vld [vmem:[%s3378 + $0x520] sm:$0x3]
  %v3544 = vld [vmem:[%s3378 + $0x528] sm:$0x3]
  %v3545 = vld [vmem:[%s3378 + $0x530] sm:$0x3]
  %v3546 = vld [vmem:[%s3378 + $0x538] sm:$0x3]
  %v3547 = vld [vmem:[%s3378 + $0x540] sm:$0x3]
  %v3548 = vld [vmem:[%s3378 + $0x548] sm:$0x3]
  %v3549 = vld [vmem:[%s3378 + $0x550] sm:$0x3]
  %v3550 = vld [vmem:[%s3378 + $0x558] sm:$0x3]
  %v3551 = vld [vmem:[%s3378 + $0x560] sm:$0x3]
  %v3552 = vld [vmem:[%s3378 + $0x568] sm:$0x3]
  %v3553 = vld [vmem:[%s3378 + $0x570] sm:$0x3]
  %3554 = vmatprep.subr.mxu0 0.0
  %3555 = vmatpush1.msra.mxu0 %v210
  %3556 = vmatprep.subr.mxu0 0.0
  %3557 = vmatpush1.msra.mxu0 %v209
  %3558 = vmatprep.subr.mxu0 0.0
  %3559 = vmatpush1.msra.mxu0 %v208
  %3560 = vmatprep.subr.mxu0 0.0
  %3561 = vmatpush1.msra.mxu0 %v207
  %3562 = vmatprep.subr.mxu0 0.0
  %3563 = vmatpush1.msra.mxu0 %v206
  %3564 = vmatprep.subr.mxu0 0.0
  %3565 = vmatpush1.msra.mxu0 %v205
  %3566 = vmatprep.subr.mxu0 0.0
  %3567 = vmatpush1.msra.mxu0 %v204
  %3568 = vmatprep.subr.mxu0 0.0
  %3569 = vmatpush1.msra.mxu0 %v203
  %3570 = vmatprep.subr.mxu0 0.0
  %3571 = vmatpush1.msra.mxu0 %v202
  %3572 = vmatprep.subr.mxu0 0.0
  %3573 = vmatpush1.msra.mxu0 %v201
  %3574 = vmatprep.subr.mxu0 0.0
  %3575 = vmatpush1.msra.mxu0 %v200
  %3576 = vmatprep.subr.mxu0 0.0
  %3577 = vmatpush1.msra.mxu0 %v199
  %3578 = vmatprep.subr.mxu0 0.0
  %3579 = vmatpush1.msra.mxu0 %v198
  %3580 = vmatprep.subr.mxu0 0.0
  %3581 = vmatpush1.msra.mxu0 %v197
  %3582 = vmatprep.subr.mxu0 0.0
  %3583 = vmatpush1.msra.mxu0 %v196
  %3584 = vmatprep.subr.mxu0 0.0
  %3585 = vmatpush1.msra.mxu0 %v195
  %3586 = vmatprep.subr.mxu0 0.0
  %3587 = vmatpush2.msra.mxu0 %v226
  %3588 = vmatprep.subr.mxu0 0.0
  %3589 = vmatpush2.msra.mxu0 %v225
  %3590 = vmatprep.subr.mxu0 0.0
  %3591 = vmatpush2.msra.mxu0 %v224
  %3592 = vmatprep.subr.mxu0 0.0
  %3593 = vmatpush2.msra.mxu0 %v223
  %3594 = vmatprep.subr.mxu0 0.0
  %3595 = vmatpush2.msra.mxu0 %v222
  %3596 = vmatprep.subr.mxu0 0.0
  %3597 = vmatpush2.msra.mxu0 %v221
  %3598 = vmatprep.subr.mxu0 0.0
  %3599 = vmatpush2.msra.mxu0 %v220
  %3600 = vmatprep.subr.mxu0 0.0
  %3601 = vmatpush2.msra.mxu0 %v219
  %3602 = vmatprep.subr.mxu0 0.0
  %3603 = vmatpush2.msra.mxu0 %v218
  %3604 = vmatprep.subr.mxu0 0.0
  %3605 = vmatpush2.msra.mxu0 %v217
  %3606 = vmatprep.subr.mxu0 0.0
  %3607 = vmatpush2.msra.mxu0 %v216
  %3608 = vmatprep.subr.mxu0 0.0
  %3609 = vmatpush2.msra.mxu0 %v215
  %3610 = vmatprep.subr.mxu0 0.0
  %3611 = vmatpush2.msra.mxu0 %v214
  %3612 = vmatprep.subr.mxu0 0.0
  %3613 = vmatpush2.msra.mxu0 %v213
  %3614 = vmatprep.subr.mxu0 0.0
  %3615 = vmatpush2.msra.mxu0 %v212
  %3616 = vmatprep.subr.mxu0 0.0
  %3617 = vmatpush2.msra.mxu0 %v211
  %3618 = vmatprep.mubr.f32.mxu0 %v3380
  %3619 = vmatmul.mubr.f32.gmra.mxu0 %v3379
  %v3620 = vpop.f32.mrf.mxu0
  %v3621 = vadd.f32 0.0, %v3620
  %v3622 = vpop.f32.mrf.mxu0
  %3623 = vmatprep.mubr.f32.mxu0 %v3405
  %3624 = vmatmul.mubr.f32.gmra.mxu0 %v3404
  %v3625 = vpop.f32.mrf.mxu0
  %v3626 = vadd.f32 0.0, %v3625
  %v3627 = vpop.f32.mrf.mxu0
  %3628 = vmatprep.mubr.f32.mxu0 %v3430
  %3629 = vmatmul.mubr.f32.gmra.mxu0 %v3429
  %v3630 = vpop.f32.mrf.mxu0
  %v3631 = vadd.f32 0.0, %v3630
  %v3632 = vpop.f32.mrf.mxu0
  %3633 = vmatprep.mubr.f32.mxu0 %v3455
  %3634 = vmatmul.mubr.f32.gmra.mxu0 %v3454
  %v3635 = vpop.f32.mrf.mxu0
  %v3636 = vadd.f32 0.0, %v3635
  %v3637 = vpop.f32.mrf.mxu0
  %3638 = vmatprep.mubr.f32.mxu0 %v3480
  %3639 = vmatmul.mubr.f32.gmra.mxu0 %v3479
  %v3640 = vpop.f32.mrf.mxu0
  %v3641 = vadd.f32 0.0, %v3640
  %v3642 = vpop.f32.mrf.mxu0
  %3643 = vmatprep.mubr.f32.mxu0 %v3505
  %3644 = vmatmul.mubr.f32.gmra.mxu0 %v3504
  %v3645 = vpop.f32.mrf.mxu0
  %v3646 = vadd.f32 0.0, %v3645
  %v3647 = vpop.f32.mrf.mxu0
  %3648 = vmatprep.mubr.f32.mxu0 %v3530
  %3649 = vmatmul.mubr.f32.gmra.mxu0 %v3529
  %v3650 = vpop.f32.mrf.mxu0
  %v3651 = vadd.f32 0.0, %v3650
  %v3652 = vpop.f32.mrf.mxu0
  %3653 = vdwg.mxu0
  %3654 = vmatprep.subr.mxu0 0.0
  %3655 = vmatpush1.msra.mxu0 %v242
  %3656 = vmatprep.subr.mxu0 0.0
  %3657 = vmatpush1.msra.mxu0 %v241
  %3658 = vmatprep.subr.mxu0 0.0
  %3659 = vmatpush1.msra.mxu0 %v240
  %3660 = vmatprep.subr.mxu0 0.0
  %3661 = vmatpush1.msra.mxu0 %v239
  %3662 = vmatprep.subr.mxu0 0.0
  %3663 = vmatpush1.msra.mxu0 %v238
  %3664 = vmatprep.subr.mxu0 0.0
  %3665 = vmatpush1.msra.mxu0 %v237
  %3666 = vmatprep.subr.mxu0 0.0
  %3667 = vmatpush1.msra.mxu0 %v236
  %3668 = vmatprep.subr.mxu0 0.0
  %3669 = vmatpush1.msra.mxu0 %v235
  %3670 = vmatprep.subr.mxu0 0.0
  %3671 = vmatpush1.msra.mxu0 %v234
  %3672 = vmatprep.subr.mxu0 0.0
  %3673 = vmatpush1.msra.mxu0 %v233
  %3674 = vmatprep.subr.mxu0 0.0
  %3675 = vmatpush1.msra.mxu0 %v232
  %3676 = vmatprep.subr.mxu0 0.0
  %3677 = vmatpush1.msra.mxu0 %v231
  %3678 = vmatprep.subr.mxu0 0.0
  %3679 = vmatpush1.msra.mxu0 %v230
  %3680 = vmatprep.subr.mxu0 0.0
  %3681 = vmatpush1.msra.mxu0 %v229
  %3682 = vmatprep.subr.mxu0 0.0
  %3683 = vmatpush1.msra.mxu0 %v228
  %3684 = vmatprep.subr.mxu0 0.0
  %3685 = vmatpush1.msra.mxu0 %v227
  %3686 = vmatprep.subr.mxu0 0.0
  %3687 = vmatpush2.msra.mxu0 %v258
  %3688 = vmatprep.subr.mxu0 0.0
  %3689 = vmatpush2.msra.mxu0 %v257
  %3690 = vmatprep.subr.mxu0 0.0
  %3691 = vmatpush2.msra.mxu0 %v256
  %3692 = vmatprep.subr.mxu0 0.0
  %3693 = vmatpush2.msra.mxu0 %v255
  %3694 = vmatprep.subr.mxu0 0.0
  %3695 = vmatpush2.msra.mxu0 %v254
  %3696 = vmatprep.subr.mxu0 0.0
  %3697 = vmatpush2.msra.mxu0 %v253
  %3698 = vmatprep.subr.mxu0 0.0
  %3699 = vmatpush2.msra.mxu0 %v252
  %3700 = vmatprep.subr.mxu0 0.0
  %3701 = vmatpush2.msra.mxu0 %v251
  %3702 = vmatprep.subr.mxu0 0.0
  %3703 = vmatpush2.msra.mxu0 %v250
  %3704 = vmatprep.subr.mxu0 0.0
  %3705 = vmatpush2.msra.mxu0 %v249
  %3706 = vmatprep.subr.mxu0 0.0
  %3707 = vmatpush2.msra.mxu0 %v248
  %3708 = vmatprep.subr.mxu0 0.0
  %3709 = vmatpush2.msra.mxu0 %v247
  %3710 = vmatprep.subr.mxu0 0.0
  %3711 = vmatpush2.msra.mxu0 %v246
  %3712 = vmatprep.subr.mxu0 0.0
  %3713 = vmatpush2.msra.mxu0 %v245
  %3714 = vmatprep.subr.mxu0 0.0
  %3715 = vmatpush2.msra.mxu0 %v244
  %3716 = vmatprep.subr.mxu0 0.0
  %3717 = vmatpush2.msra.mxu0 %v243
  %3718 = vmatprep.mubr.f32.mxu0 %v3382
  %3719 = vmatmul.mubr.f32.gmra.mxu0 %v3381
  %v3720 = vpop.f32.mrf.mxu0
  %v3721 = vadd.f32 %v3621, %v3720
  %v3722 = vpop.f32.mrf.mxu0
  %3723 = vmatprep.mubr.f32.mxu0 %v3407
  %3724 = vmatmul.mubr.f32.gmra.mxu0 %v3406
  %v3725 = vpop.f32.mrf.mxu0
  %v3726 = vadd.f32 %v3626, %v3725
  %v3727 = vpop.f32.mrf.mxu0
  %3728 = vmatprep.mubr.f32.mxu0 %v3432
  %3729 = vmatmul.mubr.f32.gmra.mxu0 %v3431
  %v3730 = vpop.f32.mrf.mxu0
  %v3731 = vadd.f32 %v3631, %v3730
  %v3732 = vpop.f32.mrf.mxu0
  %3733 = vmatprep.mubr.f32.mxu0 %v3457
  %3734 = vmatmul.mubr.f32.gmra.mxu0 %v3456
  %v3735 = vpop.f32.mrf.mxu0
  %v3736 = vadd.f32 %v3636, %v3735
  %v3737 = vpop.f32.mrf.mxu0
  %3738 = vmatprep.mubr.f32.mxu0 %v3482
  %3739 = vmatmul.mubr.f32.gmra.mxu0 %v3481
  %v3740 = vpop.f32.mrf.mxu0
  %v3741 = vadd.f32 %v3641, %v3740
  %v3742 = vpop.f32.mrf.mxu0
  %3743 = vmatprep.mubr.f32.mxu0 %v3507
  %3744 = vmatmul.mubr.f32.gmra.mxu0 %v3506
  %v3745 = vpop.f32.mrf.mxu0
  %v3746 = vadd.f32 %v3646, %v3745
  %v3747 = vpop.f32.mrf.mxu0
  %3748 = vmatprep.mubr.f32.mxu0 %v3532
  %3749 = vmatmul.mubr.f32.gmra.mxu0 %v3531
  %v3750 = vpop.f32.mrf.mxu0
  %v3751 = vadd.f32 %v3651, %v3750
  %v3752 = vpop.f32.mrf.mxu0
  %3753 = vdwg.mxu0
  %3754 = vmatprep.subr.mxu0 0.0
  %3755 = vmatpush1.msra.mxu0 %v274
  %3756 = vmatprep.subr.mxu0 0.0
  %3757 = vmatpush1.msra.mxu0 %v273
  %3758 = vmatprep.subr.mxu0 0.0
  %3759 = vmatpush1.msra.mxu0 %v272
  %3760 = vmatprep.subr.mxu0 0.0
  %3761 = vmatpush1.msra.mxu0 %v271
  %3762 = vmatprep.subr.mxu0 0.0
  %3763 = vmatpush1.msra.mxu0 %v270
  %3764 = vmatprep.subr.mxu0 0.0
  %3765 = vmatpush1.msra.mxu0 %v269
  %3766 = vmatprep.subr.mxu0 0.0
  %3767 = vmatpush1.msra.mxu0 %v268
  %3768 = vmatprep.subr.mxu0 0.0
  %3769 = vmatpush1.msra.mxu0 %v267
  %3770 = vmatprep.subr.mxu0 0.0
  %3771 = vmatpush1.msra.mxu0 %v266
  %3772 = vmatprep.subr.mxu0 0.0
  %3773 = vmatpush1.msra.mxu0 %v265
  %3774 = vmatprep.subr.mxu0 0.0
  %3775 = vmatpush1.msra.mxu0 %v264
  %3776 = vmatprep.subr.mxu0 0.0
  %3777 = vmatpush1.msra.mxu0 %v263
  %3778 = vmatprep.subr.mxu0 0.0
  %3779 = vmatpush1.msra.mxu0 %v262
  %3780 = vmatprep.subr.mxu0 0.0
  %3781 = vmatpush1.msra.mxu0 %v261
  %3782 = vmatprep.subr.mxu0 0.0
  %3783 = vmatpush1.msra.mxu0 %v260
  %3784 = vmatprep.subr.mxu0 0.0
  %3785 = vmatpush1.msra.mxu0 %v259
  %3786 = vmatprep.subr.mxu0 0.0
  %3787 = vmatpush2.msra.mxu0 %v290
  %3788 = vmatprep.subr.mxu0 0.0
  %3789 = vmatpush2.msra.mxu0 %v289
  %3790 = vmatprep.subr.mxu0 0.0
  %3791 = vmatpush2.msra.mxu0 %v288
  %3792 = vmatprep.subr.mxu0 0.0
  %3793 = vmatpush2.msra.mxu0 %v287
  %3794 = vmatprep.subr.mxu0 0.0
  %3795 = vmatpush2.msra.mxu0 %v286
  %3796 = vmatprep.subr.mxu0 0.0
  %3797 = vmatpush2.msra.mxu0 %v285
  %3798 = vmatprep.subr.mxu0 0.0
  %3799 = vmatpush2.msra.mxu0 %v284
  %3800 = vmatprep.subr.mxu0 0.0
  %3801 = vmatpush2.msra.mxu0 %v283
  %3802 = vmatprep.subr.mxu0 0.0
  %3803 = vmatpush2.msra.mxu0 %v282
  %3804 = vmatprep.subr.mxu0 0.0
  %3805 = vmatpush2.msra.mxu0 %v281
  %3806 = vmatprep.subr.mxu0 0.0
  %3807 = vmatpush2.msra.mxu0 %v280
  %3808 = vmatprep.subr.mxu0 0.0
  %3809 = vmatpush2.msra.mxu0 %v279
  %3810 = vmatprep.subr.mxu0 0.0
  %3811 = vmatpush2.msra.mxu0 %v278
  %3812 = vmatprep.subr.mxu0 0.0
  %3813 = vmatpush2.msra.mxu0 %v277
  %3814 = vmatprep.subr.mxu0 0.0
  %3815 = vmatpush2.msra.mxu0 %v276
  %3816 = vmatprep.subr.mxu0 0.0
  %3817 = vmatpush2.msra.mxu0 %v275
  %3818 = vmatprep.mubr.f32.mxu0 %v3384
  %3819 = vmatmul.mubr.f32.gmra.mxu0 %v3383
  %v3820 = vpop.f32.mrf.mxu0
  %v3821 = vadd.f32 %v3721, %v3820
  %v3822 = vpop.f32.mrf.mxu0
  %3823 = vmatprep.mubr.f32.mxu0 %v3409
  %3824 = vmatmul.mubr.f32.gmra.mxu0 %v3408
  %v3825 = vpop.f32.mrf.mxu0
  %v3826 = vadd.f32 %v3726, %v3825
  %v3827 = vpop.f32.mrf.mxu0
  %3828 = vmatprep.mubr.f32.mxu0 %v3434
  %3829 = vmatmul.mubr.f32.gmra.mxu0 %v3433
  %v3830 = vpop.f32.mrf.mxu0
  %v3831 = vadd.f32 %v3731, %v3830
  %v3832 = vpop.f32.mrf.mxu0
  %3833 = vmatprep.mubr.f32.mxu0 %v3459
  %3834 = vmatmul.mubr.f32.gmra.mxu0 %v3458
  %v3835 = vpop.f32.mrf.mxu0
  %v3836 = vadd.f32 %v3736, %v3835
  %v3837 = vpop.f32.mrf.mxu0
  %3838 = vmatprep.mubr.f32.mxu0 %v3484
  %3839 = vmatmul.mubr.f32.gmra.mxu0 %v3483
  %v3840 = vpop.f32.mrf.mxu0
  %v3841 = vadd.f32 %v3741, %v3840
  %v3842 = vpop.f32.mrf.mxu0
  %3843 = vmatprep.mubr.f32.mxu0 %v3509
  %3844 = vmatmul.mubr.f32.gmra.mxu0 %v3508
  %v3845 = vpop.f32.mrf.mxu0
  %v3846 = vadd.f32 %v3746, %v3845
  %v3847 = vpop.f32.mrf.mxu0
  %3848 = vmatprep.mubr.f32.mxu0 %v3534
  %3849 = vmatmul.mubr.f32.gmra.mxu0 %v3533
  %v3850 = vpop.f32.mrf.mxu0
  %v3851 = vadd.f32 %v3751, %v3850
  %v3852 = vpop.f32.mrf.mxu0
  %3853 = vdwg.mxu0
  %3854 = vmatprep.subr.mxu0 0.0
  %3855 = vmatpush1.msra.mxu0 %v306
  %3856 = vmatprep.subr.mxu0 0.0
  %3857 = vmatpush1.msra.mxu0 %v305
  %3858 = vmatprep.subr.mxu0 0.0
  %3859 = vmatpush1.msra.mxu0 %v304
  %3860 = vmatprep.subr.mxu0 0.0
  %3861 = vmatpush1.msra.mxu0 %v303
  %3862 = vmatprep.subr.mxu0 0.0
  %3863 = vmatpush1.msra.mxu0 %v302
  %3864 = vmatprep.subr.mxu0 0.0
  %3865 = vmatpush1.msra.mxu0 %v301
  %3866 = vmatprep.subr.mxu0 0.0
  %3867 = vmatpush1.msra.mxu0 %v300
  %3868 = vmatprep.subr.mxu0 0.0
  %3869 = vmatpush1.msra.mxu0 %v299
  %3870 = vmatprep.subr.mxu0 0.0
  %3871 = vmatpush1.msra.mxu0 %v298
  %3872 = vmatprep.subr.mxu0 0.0
  %3873 = vmatpush1.msra.mxu0 %v297
  %3874 = vmatprep.subr.mxu0 0.0
  %3875 = vmatpush1.msra.mxu0 %v296
  %3876 = vmatprep.subr.mxu0 0.0
  %3877 = vmatpush1.msra.mxu0 %v295
  %3878 = vmatprep.subr.mxu0 0.0
  %3879 = vmatpush1.msra.mxu0 %v294
  %3880 = vmatprep.subr.mxu0 0.0
  %3881 = vmatpush1.msra.mxu0 %v293
  %3882 = vmatprep.subr.mxu0 0.0
  %3883 = vmatpush1.msra.mxu0 %v292
  %3884 = vmatprep.subr.mxu0 0.0
  %3885 = vmatpush1.msra.mxu0 %v291
  %3886 = vmatprep.subr.mxu0 0.0
  %3887 = vmatpush2.msra.mxu0 %v322
  %3888 = vmatprep.subr.mxu0 0.0
  %3889 = vmatpush2.msra.mxu0 %v321
  %3890 = vmatprep.subr.mxu0 0.0
  %3891 = vmatpush2.msra.mxu0 %v320
  %3892 = vmatprep.subr.mxu0 0.0
  %3893 = vmatpush2.msra.mxu0 %v319
  %3894 = vmatprep.subr.mxu0 0.0
  %3895 = vmatpush2.msra.mxu0 %v318
  %3896 = vmatprep.subr.mxu0 0.0
  %3897 = vmatpush2.msra.mxu0 %v317
  %3898 = vmatprep.subr.mxu0 0.0
  %3899 = vmatpush2.msra.mxu0 %v316
  %3900 = vmatprep.subr.mxu0 0.0
  %3901 = vmatpush2.msra.mxu0 %v315
  %3902 = vmatprep.subr.mxu0 0.0
  %3903 = vmatpush2.msra.mxu0 %v314
  %3904 = vmatprep.subr.mxu0 0.0
  %3905 = vmatpush2.msra.mxu0 %v313
  %3906 = vmatprep.subr.mxu0 0.0
  %3907 = vmatpush2.msra.mxu0 %v312
  %3908 = vmatprep.subr.mxu0 0.0
  %3909 = vmatpush2.msra.mxu0 %v311
  %3910 = vmatprep.subr.mxu0 0.0
  %3911 = vmatpush2.msra.mxu0 %v310
  %3912 = vmatprep.subr.mxu0 0.0
  %3913 = vmatpush2.msra.mxu0 %v309
  %3914 = vmatprep.subr.mxu0 0.0
  %3915 = vmatpush2.msra.mxu0 %v308
  %3916 = vmatprep.subr.mxu0 0.0
  %3917 = vmatpush2.msra.mxu0 %v307
  %3918 = vmatprep.mubr.f32.mxu0 %v3386
  %3919 = vmatmul.mubr.f32.gmra.mxu0 %v3385
  %v3920 = vpop.f32.mrf.mxu0
  %v3921 = vadd.f32 %v3821, %v3920
  %v3922 = vpop.f32.mrf.mxu0
  %3923 = vmatprep.mubr.f32.mxu0 %v3411
  %3924 = vmatmul.mubr.f32.gmra.mxu0 %v3410
  %v3925 = vpop.f32.mrf.mxu0
  %v3926 = vadd.f32 %v3826, %v3925
  %v3927 = vpop.f32.mrf.mxu0
  %3928 = vmatprep.mubr.f32.mxu0 %v3436
  %3929 = vmatmul.mubr.f32.gmra.mxu0 %v3435
  %v3930 = vpop.f32.mrf.mxu0
  %v3931 = vadd.f32 %v3831, %v3930
  %v3932 = vpop.f32.mrf.mxu0
  %3933 = vmatprep.mubr.f32.mxu0 %v3461
  %3934 = vmatmul.mubr.f32.gmra.mxu0 %v3460
  %v3935 = vpop.f32.mrf.mxu0
  %v3936 = vadd.f32 %v3836, %v3935
  %v3937 = vpop.f32.mrf.mxu0
  %3938 = vmatprep.mubr.f32.mxu0 %v3486
  %3939 = vmatmul.mubr.f32.gmra.mxu0 %v3485
  %v3940 = vpop.f32.mrf.mxu0
  %v3941 = vadd.f32 %v3841, %v3940
  %v3942 = vpop.f32.mrf.mxu0
  %3943 = vmatprep.mubr.f32.mxu0 %v3511
  %3944 = vmatmul.mubr.f32.gmra.mxu0 %v3510
  %v3945 = vpop.f32.mrf.mxu0
  %v3946 = vadd.f32 %v3846, %v3945
  %v3947 = vpop.f32.mrf.mxu0
  %3948 = vmatprep.mubr.f32.mxu0 %v3536
  %3949 = vmatmul.mubr.f32.gmra.mxu0 %v3535
  %v3950 = vpop.f32.mrf.mxu0
  %v3951 = vadd.f32 %v3851, %v3950
  %v3952 = vpop.f32.mrf.mxu0
  %3953 = vdwg.mxu0
  %3954 = vmatprep.subr.mxu0 0.0
  %3955 = vmatpush1.msra.mxu0 %v338
  %3956 = vmatprep.subr.mxu0 0.0
  %3957 = vmatpush1.msra.mxu0 %v337
  %3958 = vmatprep.subr.mxu0 0.0
  %3959 = vmatpush1.msra.mxu0 %v336
  %3960 = vmatprep.subr.mxu0 0.0
  %3961 = vmatpush1.msra.mxu0 %v335
  %3962 = vmatprep.subr.mxu0 0.0
  %3963 = vmatpush1.msra.mxu0 %v334
  %3964 = vmatprep.subr.mxu0 0.0
  %3965 = vmatpush1.msra.mxu0 %v333
  %3966 = vmatprep.subr.mxu0 0.0
  %3967 = vmatpush1.msra.mxu0 %v332
  %3968 = vmatprep.subr.mxu0 0.0
  %3969 = vmatpush1.msra.mxu0 %v331
  %3970 = vmatprep.subr.mxu0 0.0
  %3971 = vmatpush1.msra.mxu0 %v330
  %3972 = vmatprep.subr.mxu0 0.0
  %3973 = vmatpush1.msra.mxu0 %v329
  %3974 = vmatprep.subr.mxu0 0.0
  %3975 = vmatpush1.msra.mxu0 %v328
  %3976 = vmatprep.subr.mxu0 0.0
  %3977 = vmatpush1.msra.mxu0 %v327
  %3978 = vmatprep.subr.mxu0 0.0
  %3979 = vmatpush1.msra.mxu0 %v326
  %3980 = vmatprep.subr.mxu0 0.0
  %3981 = vmatpush1.msra.mxu0 %v325
  %3982 = vmatprep.subr.mxu0 0.0
  %3983 = vmatpush1.msra.mxu0 %v324
  %3984 = vmatprep.subr.mxu0 0.0
  %3985 = vmatpush1.msra.mxu0 %v323
  %3986 = vmatprep.subr.mxu0 0.0
  %3987 = vmatpush2.msra.mxu0 %v354
  %3988 = vmatprep.subr.mxu0 0.0
  %3989 = vmatpush2.msra.mxu0 %v353
  %3990 = vmatprep.subr.mxu0 0.0
  %3991 = vmatpush2.msra.mxu0 %v352
  %3992 = vmatprep.subr.mxu0 0.0
  %3993 = vmatpush2.msra.mxu0 %v351
  %3994 = vmatprep.subr.mxu0 0.0
  %3995 = vmatpush2.msra.mxu0 %v350
  %3996 = vmatprep.subr.mxu0 0.0
  %3997 = vmatpush2.msra.mxu0 %v349
  %3998 = vmatprep.subr.mxu0 0.0
  %3999 = vmatpush2.msra.mxu0 %v348
  %4000 = vmatprep.subr.mxu0 0.0
  %4001 = vmatpush2.msra.mxu0 %v347
  %4002 = vmatprep.subr.mxu0 0.0
  %4003 = vmatpush2.msra.mxu0 %v346
  %4004 = vmatprep.subr.mxu0 0.0
  %4005 = vmatpush2.msra.mxu0 %v345
  %4006 = vmatprep.subr.mxu0 0.0
  %4007 = vmatpush2.msra.mxu0 %v344
  %4008 = vmatprep.subr.mxu0 0.0
  %4009 = vmatpush2.msra.mxu0 %v343
  %4010 = vmatprep.subr.mxu0 0.0
  %4011 = vmatpush2.msra.mxu0 %v342
  %4012 = vmatprep.subr.mxu0 0.0
  %4013 = vmatpush2.msra.mxu0 %v341
  %4014 = vmatprep.subr.mxu0 0.0
  %4015 = vmatpush2.msra.mxu0 %v340
  %4016 = vmatprep.subr.mxu0 0.0
  %4017 = vmatpush2.msra.mxu0 %v339
  %4018 = vmatprep.mubr.f32.mxu0 %v3388
  %4019 = vmatmul.mubr.f32.gmra.mxu0 %v3387
  %v4020 = vpop.f32.mrf.mxu0
  %v4021 = vadd.f32 %v3921, %v4020
  %v4022 = vpop.f32.mrf.mxu0
  %4023 = vmatprep.mubr.f32.mxu0 %v3413
  %4024 = vmatmul.mubr.f32.gmra.mxu0 %v3412
  %v4025 = vpop.f32.mrf.mxu0
  %v4026 = vadd.f32 %v3926, %v4025
  %v4027 = vpop.f32.mrf.mxu0
  %4028 = vmatprep.mubr.f32.mxu0 %v3438
  %4029 = vmatmul.mubr.f32.gmra.mxu0 %v3437
  %v4030 = vpop.f32.mrf.mxu0
  %v4031 = vadd.f32 %v3931, %v4030
  %v4032 = vpop.f32.mrf.mxu0
  %4033 = vmatprep.mubr.f32.mxu0 %v3463
  %4034 = vmatmul.mubr.f32.gmra.mxu0 %v3462
  %v4035 = vpop.f32.mrf.mxu0
  %v4036 = vadd.f32 %v3936, %v4035
  %v4037 = vpop.f32.mrf.mxu0
  %4038 = vmatprep.mubr.f32.mxu0 %v3488
  %4039 = vmatmul.mubr.f32.gmra.mxu0 %v3487
  %v4040 = vpop.f32.mrf.mxu0
  %v4041 = vadd.f32 %v3941, %v4040
  %v4042 = vpop.f32.mrf.mxu0
  %4043 = vmatprep.mubr.f32.mxu0 %v3513
  %4044 = vmatmul.mubr.f32.gmra.mxu0 %v3512
  %v4045 = vpop.f32.mrf.mxu0
  %v4046 = vadd.f32 %v3946, %v4045
  %v4047 = vpop.f32.mrf.mxu0
  %4048 = vmatprep.mubr.f32.mxu0 %v3538
  %4049 = vmatmul.mubr.f32.gmra.mxu0 %v3537
  %v4050 = vpop.f32.mrf.mxu0
  %v4051 = vadd.f32 %v3951, %v4050
  %v4052 = vpop.f32.mrf.mxu0
  %4053 = vdwg.mxu0
  %4054 = vmatprep.subr.mxu0 0.0
  %4055 = vmatpush1.msra.mxu0 %v370
  %4056 = vmatprep.subr.mxu0 0.0
  %4057 = vmatpush1.msra.mxu0 %v369
  %4058 = vmatprep.subr.mxu0 0.0
  %4059 = vmatpush1.msra.mxu0 %v368
  %4060 = vmatprep.subr.mxu0 0.0
  %4061 = vmatpush1.msra.mxu0 %v367
  %4062 = vmatprep.subr.mxu0 0.0
  %4063 = vmatpush1.msra.mxu0 %v366
  %4064 = vmatprep.subr.mxu0 0.0
  %4065 = vmatpush1.msra.mxu0 %v365
  %4066 = vmatprep.subr.mxu0 0.0
  %4067 = vmatpush1.msra.mxu0 %v364
  %4068 = vmatprep.subr.mxu0 0.0
  %4069 = vmatpush1.msra.mxu0 %v363
  %4070 = vmatprep.subr.mxu0 0.0
  %4071 = vmatpush1.msra.mxu0 %v362
  %4072 = vmatprep.subr.mxu0 0.0
  %4073 = vmatpush1.msra.mxu0 %v361
  %4074 = vmatprep.subr.mxu0 0.0
  %4075 = vmatpush1.msra.mxu0 %v360
  %4076 = vmatprep.subr.mxu0 0.0
  %4077 = vmatpush1.msra.mxu0 %v359
  %4078 = vmatprep.subr.mxu0 0.0
  %4079 = vmatpush1.msra.mxu0 %v358
  %4080 = vmatprep.subr.mxu0 0.0
  %4081 = vmatpush1.msra.mxu0 %v357
  %4082 = vmatprep.subr.mxu0 0.0
  %4083 = vmatpush1.msra.mxu0 %v356
  %4084 = vmatprep.subr.mxu0 0.0
  %4085 = vmatpush1.msra.mxu0 %v355
  %4086 = vmatprep.subr.mxu0 0.0
  %4087 = vmatpush2.msra.mxu0 %v386
  %4088 = vmatprep.subr.mxu0 0.0
  %4089 = vmatpush2.msra.mxu0 %v385
  %4090 = vmatprep.subr.mxu0 0.0
  %4091 = vmatpush2.msra.mxu0 %v384
  %4092 = vmatprep.subr.mxu0 0.0
  %4093 = vmatpush2.msra.mxu0 %v383
  %4094 = vmatprep.subr.mxu0 0.0
  %4095 = vmatpush2.msra.mxu0 %v382
  %4096 = vmatprep.subr.mxu0 0.0
  %4097 = vmatpush2.msra.mxu0 %v381
  %4098 = vmatprep.subr.mxu0 0.0
  %4099 = vmatpush2.msra.mxu0 %v380
  %4100 = vmatprep.subr.mxu0 0.0
  %4101 = vmatpush2.msra.mxu0 %v379
  %4102 = vmatprep.subr.mxu0 0.0
  %4103 = vmatpush2.msra.mxu0 %v378
  %4104 = vmatprep.subr.mxu0 0.0
  %4105 = vmatpush2.msra.mxu0 %v377
  %4106 = vmatprep.subr.mxu0 0.0
  %4107 = vmatpush2.msra.mxu0 %v376
  %4108 = vmatprep.subr.mxu0 0.0
  %4109 = vmatpush2.msra.mxu0 %v375
  %4110 = vmatprep.subr.mxu0 0.0
  %4111 = vmatpush2.msra.mxu0 %v374
  %4112 = vmatprep.subr.mxu0 0.0
  %4113 = vmatpush2.msra.mxu0 %v373
  %4114 = vmatprep.subr.mxu0 0.0
  %4115 = vmatpush2.msra.mxu0 %v372
  %4116 = vmatprep.subr.mxu0 0.0
  %4117 = vmatpush2.msra.mxu0 %v371
  %4118 = vmatprep.mubr.f32.mxu0 %v3390
  %4119 = vmatmul.mubr.f32.gmra.mxu0 %v3389
  %v4120 = vpop.f32.mrf.mxu0
  %v4121 = vadd.f32 %v4021, %v4120
  %v4122 = vpop.f32.mrf.mxu0
  %4123 = vmatprep.mubr.f32.mxu0 %v3415
  %4124 = vmatmul.mubr.f32.gmra.mxu0 %v3414
  %v4125 = vpop.f32.mrf.mxu0
  %v4126 = vadd.f32 %v4026, %v4125
  %v4127 = vpop.f32.mrf.mxu0
  %4128 = vmatprep.mubr.f32.mxu0 %v3440
  %4129 = vmatmul.mubr.f32.gmra.mxu0 %v3439
  %v4130 = vpop.f32.mrf.mxu0
  %v4131 = vadd.f32 %v4031, %v4130
  %v4132 = vpop.f32.mrf.mxu0
  %4133 = vmatprep.mubr.f32.mxu0 %v3465
  %4134 = vmatmul.mubr.f32.gmra.mxu0 %v3464
  %v4135 = vpop.f32.mrf.mxu0
  %v4136 = vadd.f32 %v4036, %v4135
  %v4137 = vpop.f32.mrf.mxu0
  %4138 = vmatprep.mubr.f32.mxu0 %v3490
  %4139 = vmatmul.mubr.f32.gmra.mxu0 %v3489
  %v4140 = vpop.f32.mrf.mxu0
  %v4141 = vadd.f32 %v4041, %v4140
  %v4142 = vpop.f32.mrf.mxu0
  %4143 = vmatprep.mubr.f32.mxu0 %v3515
  %4144 = vmatmul.mubr.f32.gmra.mxu0 %v3514
  %v4145 = vpop.f32.mrf.mxu0
  %v4146 = vadd.f32 %v4046, %v4145
  %v4147 = vpop.f32.mrf.mxu0
  %4148 = vmatprep.mubr.f32.mxu0 %v3540
  %4149 = vmatmul.mubr.f32.gmra.mxu0 %v3539
  %v4150 = vpop.f32.mrf.mxu0
  %v4151 = vadd.f32 %v4051, %v4150
  %v4152 = vpop.f32.mrf.mxu0
  %4153 = vdwg.mxu0
  %4154 = vmatprep.subr.mxu0 0.0
  %4155 = vmatpush1.msra.mxu0 %v402
  %4156 = vmatprep.subr.mxu0 0.0
  %4157 = vmatpush1.msra.mxu0 %v401
  %4158 = vmatprep.subr.mxu0 0.0
  %4159 = vmatpush1.msra.mxu0 %v400
  %4160 = vmatprep.subr.mxu0 0.0
  %4161 = vmatpush1.msra.mxu0 %v399
  %4162 = vmatprep.subr.mxu0 0.0
  %4163 = vmatpush1.msra.mxu0 %v398
  %4164 = vmatprep.subr.mxu0 0.0
  %4165 = vmatpush1.msra.mxu0 %v397
  %4166 = vmatprep.subr.mxu0 0.0
  %4167 = vmatpush1.msra.mxu0 %v396
  %4168 = vmatprep.subr.mxu0 0.0
  %4169 = vmatpush1.msra.mxu0 %v395
  %4170 = vmatprep.subr.mxu0 0.0
  %4171 = vmatpush1.msra.mxu0 %v394
  %4172 = vmatprep.subr.mxu0 0.0
  %4173 = vmatpush1.msra.mxu0 %v393
  %4174 = vmatprep.subr.mxu0 0.0
  %4175 = vmatpush1.msra.mxu0 %v392
  %4176 = vmatprep.subr.mxu0 0.0
  %4177 = vmatpush1.msra.mxu0 %v391
  %4178 = vmatprep.subr.mxu0 0.0
  %4179 = vmatpush1.msra.mxu0 %v390
  %4180 = vmatprep.subr.mxu0 0.0
  %4181 = vmatpush1.msra.mxu0 %v389
  %4182 = vmatprep.subr.mxu0 0.0
  %4183 = vmatpush1.msra.mxu0 %v388
  %4184 = vmatprep.subr.mxu0 0.0
  %4185 = vmatpush1.msra.mxu0 %v387
  %4186 = vmatprep.subr.mxu0 0.0
  %4187 = vmatpush2.msra.mxu0 %v418
  %4188 = vmatprep.subr.mxu0 0.0
  %4189 = vmatpush2.msra.mxu0 %v417
  %4190 = vmatprep.subr.mxu0 0.0
  %4191 = vmatpush2.msra.mxu0 %v416
  %4192 = vmatprep.subr.mxu0 0.0
  %4193 = vmatpush2.msra.mxu0 %v415
  %4194 = vmatprep.subr.mxu0 0.0
  %4195 = vmatpush2.msra.mxu0 %v414
  %4196 = vmatprep.subr.mxu0 0.0
  %4197 = vmatpush2.msra.mxu0 %v413
  %4198 = vmatprep.subr.mxu0 0.0
  %4199 = vmatpush2.msra.mxu0 %v412
  %4200 = vmatprep.subr.mxu0 0.0
  %4201 = vmatpush2.msra.mxu0 %v411
  %4202 = vmatprep.subr.mxu0 0.0
  %4203 = vmatpush2.msra.mxu0 %v410
  %4204 = vmatprep.subr.mxu0 0.0
  %4205 = vmatpush2.msra.mxu0 %v409
  %4206 = vmatprep.subr.mxu0 0.0
  %4207 = vmatpush2.msra.mxu0 %v408
  %4208 = vmatprep.subr.mxu0 0.0
  %4209 = vmatpush2.msra.mxu0 %v407
  %4210 = vmatprep.subr.mxu0 0.0
  %4211 = vmatpush2.msra.mxu0 %v406
  %4212 = vmatprep.subr.mxu0 0.0
  %4213 = vmatpush2.msra.mxu0 %v405
  %4214 = vmatprep.subr.mxu0 0.0
  %4215 = vmatpush2.msra.mxu0 %v404
  %4216 = vmatprep.subr.mxu0 0.0
  %4217 = vmatpush2.msra.mxu0 %v403
  %4218 = vmatprep.mubr.f32.mxu0 %v3392
  %4219 = vmatmul.mubr.f32.gmra.mxu0 %v3391
  %v4220 = vpop.f32.mrf.mxu0
  %v4221 = vadd.f32 %v4121, %v4220
  %v4222 = vpop.f32.mrf.mxu0
  %4223 = vmatprep.mubr.f32.mxu0 %v3417
  %4224 = vmatmul.mubr.f32.gmra.mxu0 %v3416
  %v4225 = vpop.f32.mrf.mxu0
  %v4226 = vadd.f32 %v4126, %v4225
  %v4227 = vpop.f32.mrf.mxu0
  %4228 = vmatprep.mubr.f32.mxu0 %v3442
  %4229 = vmatmul.mubr.f32.gmra.mxu0 %v3441
  %v4230 = vpop.f32.mrf.mxu0
  %v4231 = vadd.f32 %v4131, %v4230
  %v4232 = vpop.f32.mrf.mxu0
  %4233 = vmatprep.mubr.f32.mxu0 %v3467
  %4234 = vmatmul.mubr.f32.gmra.mxu0 %v3466
  %v4235 = vpop.f32.mrf.mxu0
  %v4236 = vadd.f32 %v4136, %v4235
  %v4237 = vpop.f32.mrf.mxu0
  %4238 = vmatprep.mubr.f32.mxu0 %v3492
  %4239 = vmatmul.mubr.f32.gmra.mxu0 %v3491
  %v4240 = vpop.f32.mrf.mxu0
  %v4241 = vadd.f32 %v4141, %v4240
  %v4242 = vpop.f32.mrf.mxu0
  %4243 = vmatprep.mubr.f32.mxu0 %v3517
  %4244 = vmatmul.mubr.f32.gmra.mxu0 %v3516
  %v4245 = vpop.f32.mrf.mxu0
  %v4246 = vadd.f32 %v4146, %v4245
  %v4247 = vpop.f32.mrf.mxu0
  %4248 = vmatprep.mubr.f32.mxu0 %v3542
  %4249 = vmatmul.mubr.f32.gmra.mxu0 %v3541
  %v4250 = vpop.f32.mrf.mxu0
  %v4251 = vadd.f32 %v4151, %v4250
  %v4252 = vpop.f32.mrf.mxu0
  %4253 = vdwg.mxu0
  %4254 = vmatprep.subr.mxu0 0.0
  %4255 = vmatpush1.msra.mxu0 %v434
  %4256 = vmatprep.subr.mxu0 0.0
  %4257 = vmatpush1.msra.mxu0 %v433
  %4258 = vmatprep.subr.mxu0 0.0
  %4259 = vmatpush1.msra.mxu0 %v432
  %4260 = vmatprep.subr.mxu0 0.0
  %4261 = vmatpush1.msra.mxu0 %v431
  %4262 = vmatprep.subr.mxu0 0.0
  %4263 = vmatpush1.msra.mxu0 %v430
  %4264 = vmatprep.subr.mxu0 0.0
  %4265 = vmatpush1.msra.mxu0 %v429
  %4266 = vmatprep.subr.mxu0 0.0
  %4267 = vmatpush1.msra.mxu0 %v428
  %4268 = vmatprep.subr.mxu0 0.0
  %4269 = vmatpush1.msra.mxu0 %v427
  %4270 = vmatprep.subr.mxu0 0.0
  %4271 = vmatpush1.msra.mxu0 %v426
  %4272 = vmatprep.subr.mxu0 0.0
  %4273 = vmatpush1.msra.mxu0 %v425
  %4274 = vmatprep.subr.mxu0 0.0
  %4275 = vmatpush1.msra.mxu0 %v424
  %4276 = vmatprep.subr.mxu0 0.0
  %4277 = vmatpush1.msra.mxu0 %v423
  %4278 = vmatprep.subr.mxu0 0.0
  %4279 = vmatpush1.msra.mxu0 %v422
  %4280 = vmatprep.subr.mxu0 0.0
  %4281 = vmatpush1.msra.mxu0 %v421
  %4282 = vmatprep.subr.mxu0 0.0
  %4283 = vmatpush1.msra.mxu0 %v420
  %4284 = vmatprep.subr.mxu0 0.0
  %4285 = vmatpush1.msra.mxu0 %v419
  %4286 = vmatprep.subr.mxu0 0.0
  %4287 = vmatpush2.msra.mxu0 %v450
  %4288 = vmatprep.subr.mxu0 0.0
  %4289 = vmatpush2.msra.mxu0 %v449
  %4290 = vmatprep.subr.mxu0 0.0
  %4291 = vmatpush2.msra.mxu0 %v448
  %4292 = vmatprep.subr.mxu0 0.0
  %4293 = vmatpush2.msra.mxu0 %v447
  %4294 = vmatprep.subr.mxu0 0.0
  %4295 = vmatpush2.msra.mxu0 %v446
  %4296 = vmatprep.subr.mxu0 0.0
  %4297 = vmatpush2.msra.mxu0 %v445
  %4298 = vmatprep.subr.mxu0 0.0
  %4299 = vmatpush2.msra.mxu0 %v444
  %4300 = vmatprep.subr.mxu0 0.0
  %4301 = vmatpush2.msra.mxu0 %v443
  %4302 = vmatprep.subr.mxu0 0.0
  %4303 = vmatpush2.msra.mxu0 %v442
  %4304 = vmatprep.subr.mxu0 0.0
  %4305 = vmatpush2.msra.mxu0 %v441
  %4306 = vmatprep.subr.mxu0 0.0
  %4307 = vmatpush2.msra.mxu0 %v440
  %4308 = vmatprep.subr.mxu0 0.0
  %4309 = vmatpush2.msra.mxu0 %v439
  %4310 = vmatprep.subr.mxu0 0.0
  %4311 = vmatpush2.msra.mxu0 %v438
  %4312 = vmatprep.subr.mxu0 0.0
  %4313 = vmatpush2.msra.mxu0 %v437
  %4314 = vmatprep.subr.mxu0 0.0
  %4315 = vmatpush2.msra.mxu0 %v436
  %4316 = vmatprep.subr.mxu0 0.0
  %4317 = vmatpush2.msra.mxu0 %v435
  %4318 = vmatprep.mubr.f32.mxu0 %v3394
  %4319 = vmatmul.mubr.f32.gmra.mxu0 %v3393
  %v4320 = vpop.f32.mrf.mxu0
  %v4321 = vadd.f32 %v4221, %v4320
  %v4322 = vpop.f32.mrf.mxu0
  %4323 = vmatprep.mubr.f32.mxu0 %v3419
  %4324 = vmatmul.mubr.f32.gmra.mxu0 %v3418
  %v4325 = vpop.f32.mrf.mxu0
  %v4326 = vadd.f32 %v4226, %v4325
  %v4327 = vpop.f32.mrf.mxu0
  %4328 = vmatprep.mubr.f32.mxu0 %v3444
  %4329 = vmatmul.mubr.f32.gmra.mxu0 %v3443
  %v4330 = vpop.f32.mrf.mxu0
  %v4331 = vadd.f32 %v4231, %v4330
  %v4332 = vpop.f32.mrf.mxu0
  %4333 = vmatprep.mubr.f32.mxu0 %v3469
  %4334 = vmatmul.mubr.f32.gmra.mxu0 %v3468
  %v4335 = vpop.f32.mrf.mxu0
  %v4336 = vadd.f32 %v4236, %v4335
  %v4337 = vpop.f32.mrf.mxu0
  %4338 = vmatprep.mubr.f32.mxu0 %v3494
  %4339 = vmatmul.mubr.f32.gmra.mxu0 %v3493
  %v4340 = vpop.f32.mrf.mxu0
  %v4341 = vadd.f32 %v4241, %v4340
  %v4342 = vpop.f32.mrf.mxu0
  %4343 = vmatprep.mubr.f32.mxu0 %v3519
  %4344 = vmatmul.mubr.f32.gmra.mxu0 %v3518
  %v4345 = vpop.f32.mrf.mxu0
  %v4346 = vadd.f32 %v4246, %v4345
  %v4347 = vpop.f32.mrf.mxu0
  %4348 = vmatprep.mubr.f32.mxu0 %v3544
  %4349 = vmatmul.mubr.f32.gmra.mxu0 %v3543
  %v4350 = vpop.f32.mrf.mxu0
  %v4351 = vadd.f32 %v4251, %v4350
  %v4352 = vpop.f32.mrf.mxu0
  %4353 = vdwg.mxu0
  %4354 = vmatprep.subr.mxu0 0.0
  %4355 = vmatpush1.msra.mxu0 %v466
  %4356 = vmatprep.subr.mxu0 0.0
  %4357 = vmatpush1.msra.mxu0 %v465
  %4358 = vmatprep.subr.mxu0 0.0
  %4359 = vmatpush1.msra.mxu0 %v464
  %4360 = vmatprep.subr.mxu0 0.0
  %4361 = vmatpush1.msra.mxu0 %v463
  %4362 = vmatprep.subr.mxu0 0.0
  %4363 = vmatpush1.msra.mxu0 %v462
  %4364 = vmatprep.subr.mxu0 0.0
  %4365 = vmatpush1.msra.mxu0 %v461
  %4366 = vmatprep.subr.mxu0 0.0
  %4367 = vmatpush1.msra.mxu0 %v460
  %4368 = vmatprep.subr.mxu0 0.0
  %4369 = vmatpush1.msra.mxu0 %v459
  %4370 = vmatprep.subr.mxu0 0.0
  %4371 = vmatpush1.msra.mxu0 %v458
  %4372 = vmatprep.subr.mxu0 0.0
  %4373 = vmatpush1.msra.mxu0 %v457
  %4374 = vmatprep.subr.mxu0 0.0
  %4375 = vmatpush1.msra.mxu0 %v456
  %4376 = vmatprep.subr.mxu0 0.0
  %4377 = vmatpush1.msra.mxu0 %v455
  %4378 = vmatprep.subr.mxu0 0.0
  %4379 = vmatpush1.msra.mxu0 %v454
  %4380 = vmatprep.subr.mxu0 0.0
  %4381 = vmatpush1.msra.mxu0 %v453
  %4382 = vmatprep.subr.mxu0 0.0
  %4383 = vmatpush1.msra.mxu0 %v452
  %4384 = vmatprep.subr.mxu0 0.0
  %4385 = vmatpush1.msra.mxu0 %v451
  %4386 = vmatprep.subr.mxu0 0.0
  %4387 = vmatpush2.msra.mxu0 %v482
  %4388 = vmatprep.subr.mxu0 0.0
  %4389 = vmatpush2.msra.mxu0 %v481
  %4390 = vmatprep.subr.mxu0 0.0
  %4391 = vmatpush2.msra.mxu0 %v480
  %4392 = vmatprep.subr.mxu0 0.0
  %4393 = vmatpush2.msra.mxu0 %v479
  %4394 = vmatprep.subr.mxu0 0.0
  %4395 = vmatpush2.msra.mxu0 %v478
  %4396 = vmatprep.subr.mxu0 0.0
  %4397 = vmatpush2.msra.mxu0 %v477
  %4398 = vmatprep.subr.mxu0 0.0
  %4399 = vmatpush2.msra.mxu0 %v476
  %4400 = vmatprep.subr.mxu0 0.0
  %4401 = vmatpush2.msra.mxu0 %v475
  %4402 = vmatprep.subr.mxu0 0.0
  %4403 = vmatpush2.msra.mxu0 %v474
  %4404 = vmatprep.subr.mxu0 0.0
  %4405 = vmatpush2.msra.mxu0 %v473
  %4406 = vmatprep.subr.mxu0 0.0
  %4407 = vmatpush2.msra.mxu0 %v472
  %4408 = vmatprep.subr.mxu0 0.0
  %4409 = vmatpush2.msra.mxu0 %v471
  %4410 = vmatprep.subr.mxu0 0.0
  %4411 = vmatpush2.msra.mxu0 %v470
  %4412 = vmatprep.subr.mxu0 0.0
  %4413 = vmatpush2.msra.mxu0 %v469
  %4414 = vmatprep.subr.mxu0 0.0
  %4415 = vmatpush2.msra.mxu0 %v468
  %4416 = vmatprep.subr.mxu0 0.0
  %4417 = vmatpush2.msra.mxu0 %v467
  %4418 = vmatprep.mubr.f32.mxu0 %v3396
  %4419 = vmatmul.mubr.f32.gmra.mxu0 %v3395
  %v4420 = vpop.f32.mrf.mxu0
  %v4421 = vadd.f32 %v4321, %v4420
  %v4422 = vpop.f32.mrf.mxu0
  %4423 = vmatprep.mubr.f32.mxu0 %v3421
  %4424 = vmatmul.mubr.f32.gmra.mxu0 %v3420
  %v4425 = vpop.f32.mrf.mxu0
  %v4426 = vadd.f32 %v4326, %v4425
  %v4427 = vpop.f32.mrf.mxu0
  %4428 = vmatprep.mubr.f32.mxu0 %v3446
  %4429 = vmatmul.mubr.f32.gmra.mxu0 %v3445
  %v4430 = vpop.f32.mrf.mxu0
  %v4431 = vadd.f32 %v4331, %v4430
  %v4432 = vpop.f32.mrf.mxu0
  %4433 = vmatprep.mubr.f32.mxu0 %v3471
  %4434 = vmatmul.mubr.f32.gmra.mxu0 %v3470
  %v4435 = vpop.f32.mrf.mxu0
  %v4436 = vadd.f32 %v4336, %v4435
  %v4437 = vpop.f32.mrf.mxu0
  %4438 = vmatprep.mubr.f32.mxu0 %v3496
  %4439 = vmatmul.mubr.f32.gmra.mxu0 %v3495
  %v4440 = vpop.f32.mrf.mxu0
  %v4441 = vadd.f32 %v4341, %v4440
  %v4442 = vpop.f32.mrf.mxu0
  %4443 = vmatprep.mubr.f32.mxu0 %v3521
  %4444 = vmatmul.mubr.f32.gmra.mxu0 %v3520
  %v4445 = vpop.f32.mrf.mxu0
  %v4446 = vadd.f32 %v4346, %v4445
  %v4447 = vpop.f32.mrf.mxu0
  %4448 = vmatprep.mubr.f32.mxu0 %v3546
  %4449 = vmatmul.mubr.f32.gmra.mxu0 %v3545
  %v4450 = vpop.f32.mrf.mxu0
  %v4451 = vadd.f32 %v4351, %v4450
  %v4452 = vpop.f32.mrf.mxu0
  %4453 = vdwg.mxu0
  %4454 = vmatprep.subr.mxu0 0.0
  %4455 = vmatpush1.msra.mxu0 %v498
  %4456 = vmatprep.subr.mxu0 0.0
  %4457 = vmatpush1.msra.mxu0 %v497
  %4458 = vmatprep.subr.mxu0 0.0
  %4459 = vmatpush1.msra.mxu0 %v496
  %4460 = vmatprep.subr.mxu0 0.0
  %4461 = vmatpush1.msra.mxu0 %v495
  %4462 = vmatprep.subr.mxu0 0.0
  %4463 = vmatpush1.msra.mxu0 %v494
  %4464 = vmatprep.subr.mxu0 0.0
  %4465 = vmatpush1.msra.mxu0 %v493
  %4466 = vmatprep.subr.mxu0 0.0
  %4467 = vmatpush1.msra.mxu0 %v492
  %4468 = vmatprep.subr.mxu0 0.0
  %4469 = vmatpush1.msra.mxu0 %v491
  %4470 = vmatprep.subr.mxu0 0.0
  %4471 = vmatpush1.msra.mxu0 %v490
  %4472 = vmatprep.subr.mxu0 0.0
  %4473 = vmatpush1.msra.mxu0 %v489
  %4474 = vmatprep.subr.mxu0 0.0
  %4475 = vmatpush1.msra.mxu0 %v488
  %4476 = vmatprep.subr.mxu0 0.0
  %4477 = vmatpush1.msra.mxu0 %v487
  %4478 = vmatprep.subr.mxu0 0.0
  %4479 = vmatpush1.msra.mxu0 %v486
  %4480 = vmatprep.subr.mxu0 0.0
  %4481 = vmatpush1.msra.mxu0 %v485
  %4482 = vmatprep.subr.mxu0 0.0
  %4483 = vmatpush1.msra.mxu0 %v484
  %4484 = vmatprep.subr.mxu0 0.0
  %4485 = vmatpush1.msra.mxu0 %v483
  %4486 = vmatprep.subr.mxu0 0.0
  %4487 = vmatpush2.msra.mxu0 %v514
  %4488 = vmatprep.subr.mxu0 0.0
  %4489 = vmatpush2.msra.mxu0 %v513
  %4490 = vmatprep.subr.mxu0 0.0
  %4491 = vmatpush2.msra.mxu0 %v512
  %4492 = vmatprep.subr.mxu0 0.0
  %4493 = vmatpush2.msra.mxu0 %v511
  %4494 = vmatprep.subr.mxu0 0.0
  %4495 = vmatpush2.msra.mxu0 %v510
  %4496 = vmatprep.subr.mxu0 0.0
  %4497 = vmatpush2.msra.mxu0 %v509
  %4498 = vmatprep.subr.mxu0 0.0
  %4499 = vmatpush2.msra.mxu0 %v508
  %4500 = vmatprep.subr.mxu0 0.0
  %4501 = vmatpush2.msra.mxu0 %v507
  %4502 = vmatprep.subr.mxu0 0.0
  %4503 = vmatpush2.msra.mxu0 %v506
  %4504 = vmatprep.subr.mxu0 0.0
  %4505 = vmatpush2.msra.mxu0 %v505
  %4506 = vmatprep.subr.mxu0 0.0
  %4507 = vmatpush2.msra.mxu0 %v504
  %4508 = vmatprep.subr.mxu0 0.0
  %4509 = vmatpush2.msra.mxu0 %v503
  %4510 = vmatprep.subr.mxu0 0.0
  %4511 = vmatpush2.msra.mxu0 %v502
  %4512 = vmatprep.subr.mxu0 0.0
  %4513 = vmatpush2.msra.mxu0 %v501
  %4514 = vmatprep.subr.mxu0 0.0
  %4515 = vmatpush2.msra.mxu0 %v500
  %4516 = vmatprep.subr.mxu0 0.0
  %4517 = vmatpush2.msra.mxu0 %v499
  %4518 = vmatprep.mubr.f32.mxu0 %v3398
  %4519 = vmatmul.mubr.f32.gmra.mxu0 %v3397
  %v4520 = vpop.f32.mrf.mxu0
  %v4521 = vadd.f32 %v4421, %v4520
  %v4522 = vpop.f32.mrf.mxu0
  %4523 = vmatprep.mubr.f32.mxu0 %v3423
  %4524 = vmatmul.mubr.f32.gmra.mxu0 %v3422
  %v4525 = vpop.f32.mrf.mxu0
  %v4526 = vadd.f32 %v4426, %v4525
  %v4527 = vpop.f32.mrf.mxu0
  %4528 = vmatprep.mubr.f32.mxu0 %v3448
  %4529 = vmatmul.mubr.f32.gmra.mxu0 %v3447
  %v4530 = vpop.f32.mrf.mxu0
  %v4531 = vadd.f32 %v4431, %v4530
  %v4532 = vpop.f32.mrf.mxu0
  %4533 = vmatprep.mubr.f32.mxu0 %v3473
  %4534 = vmatmul.mubr.f32.gmra.mxu0 %v3472
  %v4535 = vpop.f32.mrf.mxu0
  %v4536 = vadd.f32 %v4436, %v4535
  %v4537 = vpop.f32.mrf.mxu0
  %4538 = vmatprep.mubr.f32.mxu0 %v3498
  %4539 = vmatmul.mubr.f32.gmra.mxu0 %v3497
  %v4540 = vpop.f32.mrf.mxu0
  %v4541 = vadd.f32 %v4441, %v4540
  %v4542 = vpop.f32.mrf.mxu0
  %4543 = vmatprep.mubr.f32.mxu0 %v3523
  %4544 = vmatmul.mubr.f32.gmra.mxu0 %v3522
  %v4545 = vpop.f32.mrf.mxu0
  %v4546 = vadd.f32 %v4446, %v4545
  %v4547 = vpop.f32.mrf.mxu0
  %4548 = vmatprep.mubr.f32.mxu0 %v3548
  %4549 = vmatmul.mubr.f32.gmra.mxu0 %v3547
  %v4550 = vpop.f32.mrf.mxu0
  %v4551 = vadd.f32 %v4451, %v4550
  %v4552 = vpop.f32.mrf.mxu0
  %4553 = vdwg.mxu0
  %4554 = vmatprep.subr.mxu0 0.0
  %4555 = vmatpush1.msra.mxu0 %v530
  %4556 = vmatprep.subr.mxu0 0.0
  %4557 = vmatpush1.msra.mxu0 %v529
  %4558 = vmatprep.subr.mxu0 0.0
  %4559 = vmatpush1.msra.mxu0 %v528
  %4560 = vmatprep.subr.mxu0 0.0
  %4561 = vmatpush1.msra.mxu0 %v527
  %4562 = vmatprep.subr.mxu0 0.0
  %4563 = vmatpush1.msra.mxu0 %v526
  %4564 = vmatprep.subr.mxu0 0.0
  %4565 = vmatpush1.msra.mxu0 %v525
  %4566 = vmatprep.subr.mxu0 0.0
  %4567 = vmatpush1.msra.mxu0 %v524
  %4568 = vmatprep.subr.mxu0 0.0
  %4569 = vmatpush1.msra.mxu0 %v523
  %4570 = vmatprep.subr.mxu0 0.0
  %4571 = vmatpush1.msra.mxu0 %v522
  %4572 = vmatprep.subr.mxu0 0.0
  %4573 = vmatpush1.msra.mxu0 %v521
  %4574 = vmatprep.subr.mxu0 0.0
  %4575 = vmatpush1.msra.mxu0 %v520
  %4576 = vmatprep.subr.mxu0 0.0
  %4577 = vmatpush1.msra.mxu0 %v519
  %4578 = vmatprep.subr.mxu0 0.0
  %4579 = vmatpush1.msra.mxu0 %v518
  %4580 = vmatprep.subr.mxu0 0.0
  %4581 = vmatpush1.msra.mxu0 %v517
  %4582 = vmatprep.subr.mxu0 0.0
  %4583 = vmatpush1.msra.mxu0 %v516
  %4584 = vmatprep.subr.mxu0 0.0
  %4585 = vmatpush1.msra.mxu0 %v515
  %4586 = vmatprep.subr.mxu0 0.0
  %4587 = vmatpush2.msra.mxu0 %v546
  %4588 = vmatprep.subr.mxu0 0.0
  %4589 = vmatpush2.msra.mxu0 %v545
  %4590 = vmatprep.subr.mxu0 0.0
  %4591 = vmatpush2.msra.mxu0 %v544
  %4592 = vmatprep.subr.mxu0 0.0
  %4593 = vmatpush2.msra.mxu0 %v543
  %4594 = vmatprep.subr.mxu0 0.0
  %4595 = vmatpush2.msra.mxu0 %v542
  %4596 = vmatprep.subr.mxu0 0.0
  %4597 = vmatpush2.msra.mxu0 %v541
  %4598 = vmatprep.subr.mxu0 0.0
  %4599 = vmatpush2.msra.mxu0 %v540
  %4600 = vmatprep.subr.mxu0 0.0
  %4601 = vmatpush2.msra.mxu0 %v539
  %4602 = vmatprep.subr.mxu0 0.0
  %4603 = vmatpush2.msra.mxu0 %v538
  %4604 = vmatprep.subr.mxu0 0.0
  %4605 = vmatpush2.msra.mxu0 %v537
  %4606 = vmatprep.subr.mxu0 0.0
  %4607 = vmatpush2.msra.mxu0 %v536
  %4608 = vmatprep.subr.mxu0 0.0
  %4609 = vmatpush2.msra.mxu0 %v535
  %4610 = vmatprep.subr.mxu0 0.0
  %4611 = vmatpush2.msra.mxu0 %v534
  %4612 = vmatprep.subr.mxu0 0.0
  %4613 = vmatpush2.msra.mxu0 %v533
  %4614 = vmatprep.subr.mxu0 0.0
  %4615 = vmatpush2.msra.mxu0 %v532
  %4616 = vmatprep.subr.mxu0 0.0
  %4617 = vmatpush2.msra.mxu0 %v531
  %4618 = vmatprep.mubr.f32.mxu0 %v3400
  %4619 = vmatmul.mubr.f32.gmra.mxu0 %v3399
  %v4620 = vpop.f32.mrf.mxu0
  %v4621 = vadd.f32 %v4521, %v4620
  %v4622 = vpop.f32.mrf.mxu0
  %4623 = vmatprep.mubr.f32.mxu0 %v3425
  %4624 = vmatmul.mubr.f32.gmra.mxu0 %v3424
  %v4625 = vpop.f32.mrf.mxu0
  %v4626 = vadd.f32 %v4526, %v4625
  %v4627 = vpop.f32.mrf.mxu0
  %4628 = vmatprep.mubr.f32.mxu0 %v3450
  %4629 = vmatmul.mubr.f32.gmra.mxu0 %v3449
  %v4630 = vpop.f32.mrf.mxu0
  %v4631 = vadd.f32 %v4531, %v4630
  %v4632 = vpop.f32.mrf.mxu0
  %4633 = vmatprep.mubr.f32.mxu0 %v3475
  %4634 = vmatmul.mubr.f32.gmra.mxu0 %v3474
  %v4635 = vpop.f32.mrf.mxu0
  %v4636 = vadd.f32 %v4536, %v4635
  %v4637 = vpop.f32.mrf.mxu0
  %4638 = vmatprep.mubr.f32.mxu0 %v3500
  %4639 = vmatmul.mubr.f32.gmra.mxu0 %v3499
  %v4640 = vpop.f32.mrf.mxu0
  %v4641 = vadd.f32 %v4541, %v4640
  %v4642 = vpop.f32.mrf.mxu0
  %4643 = vmatprep.mubr.f32.mxu0 %v3525
  %4644 = vmatmul.mubr.f32.gmra.mxu0 %v3524
  %v4645 = vpop.f32.mrf.mxu0
  %v4646 = vadd.f32 %v4546, %v4645
  %v4647 = vpop.f32.mrf.mxu0
  %4648 = vmatprep.mubr.f32.mxu0 %v3550
  %4649 = vmatmul.mubr.f32.gmra.mxu0 %v3549
  %v4650 = vpop.f32.mrf.mxu0
  %v4651 = vadd.f32 %v4551, %v4650
  %v4652 = vpop.f32.mrf.mxu0
  %4653 = vdwg.mxu0
  %4654 = vmatprep.subr.mxu0 0.0
  %4655 = vmatpush1.msra.mxu0 %v562
  %4656 = vmatprep.subr.mxu0 0.0
  %4657 = vmatpush1.msra.mxu0 %v561
  %4658 = vmatprep.subr.mxu0 0.0
  %4659 = vmatpush1.msra.mxu0 %v560
  %4660 = vmatprep.subr.mxu0 0.0
  %4661 = vmatpush1.msra.mxu0 %v559
  %4662 = vmatprep.subr.mxu0 0.0
  %4663 = vmatpush1.msra.mxu0 %v558
  %4664 = vmatprep.subr.mxu0 0.0
  %4665 = vmatpush1.msra.mxu0 %v557
  %4666 = vmatprep.subr.mxu0 0.0
  %4667 = vmatpush1.msra.mxu0 %v556
  %4668 = vmatprep.subr.mxu0 0.0
  %4669 = vmatpush1.msra.mxu0 %v555
  %4670 = vmatprep.subr.mxu0 0.0
  %4671 = vmatpush1.msra.mxu0 %v554
  %4672 = vmatprep.subr.mxu0 0.0
  %4673 = vmatpush1.msra.mxu0 %v553
  %4674 = vmatprep.subr.mxu0 0.0
  %4675 = vmatpush1.msra.mxu0 %v552
  %4676 = vmatprep.subr.mxu0 0.0
  %4677 = vmatpush1.msra.mxu0 %v551
  %4678 = vmatprep.subr.mxu0 0.0
  %4679 = vmatpush1.msra.mxu0 %v550
  %4680 = vmatprep.subr.mxu0 0.0
  %4681 = vmatpush1.msra.mxu0 %v549
  %4682 = vmatprep.subr.mxu0 0.0
  %4683 = vmatpush1.msra.mxu0 %v548
  %4684 = vmatprep.subr.mxu0 0.0
  %4685 = vmatpush1.msra.mxu0 %v547
  %4686 = vmatprep.subr.mxu0 0.0
  %4687 = vmatpush2.msra.mxu0 %v578
  %4688 = vmatprep.subr.mxu0 0.0
  %4689 = vmatpush2.msra.mxu0 %v577
  %4690 = vmatprep.subr.mxu0 0.0
  %4691 = vmatpush2.msra.mxu0 %v576
  %4692 = vmatprep.subr.mxu0 0.0
  %4693 = vmatpush2.msra.mxu0 %v575
  %4694 = vmatprep.subr.mxu0 0.0
  %4695 = vmatpush2.msra.mxu0 %v574
  %4696 = vmatprep.subr.mxu0 0.0
  %4697 = vmatpush2.msra.mxu0 %v573
  %4698 = vmatprep.subr.mxu0 0.0
  %4699 = vmatpush2.msra.mxu0 %v572
  %4700 = vmatprep.subr.mxu0 0.0
  %4701 = vmatpush2.msra.mxu0 %v571
  %4702 = vmatprep.subr.mxu0 0.0
  %4703 = vmatpush2.msra.mxu0 %v570
  %4704 = vmatprep.subr.mxu0 0.0
  %4705 = vmatpush2.msra.mxu0 %v569
  %4706 = vmatprep.subr.mxu0 0.0
  %4707 = vmatpush2.msra.mxu0 %v568
  %4708 = vmatprep.subr.mxu0 0.0
  %4709 = vmatpush2.msra.mxu0 %v567
  %4710 = vmatprep.subr.mxu0 0.0
  %4711 = vmatpush2.msra.mxu0 %v566
  %4712 = vmatprep.subr.mxu0 0.0
  %4713 = vmatpush2.msra.mxu0 %v565
  %4714 = vmatprep.subr.mxu0 0.0
  %4715 = vmatpush2.msra.mxu0 %v564
  %4716 = vmatprep.subr.mxu0 0.0
  %4717 = vmatpush2.msra.mxu0 %v563
  %4718 = vmatprep.mubr.f32.mxu0 %v3402
  %4719 = vmatmul.mubr.f32.gmra.mxu0 %v3401
  %v4720 = vpop.f32.mrf.mxu0
  %v4721 = vadd.f32 %v4621, %v4720
  %v4722 = vpop.f32.mrf.mxu0
  %4723 = vmatprep.mubr.f32.mxu0 %v3427
  %4724 = vmatmul.mubr.f32.gmra.mxu0 %v3426
  %v4725 = vpop.f32.mrf.mxu0
  %v4726 = vadd.f32 %v4626, %v4725
  %v4727 = vpop.f32.mrf.mxu0
  %4728 = vmatprep.mubr.f32.mxu0 %v3452
  %4729 = vmatmul.mubr.f32.gmra.mxu0 %v3451
  %v4730 = vpop.f32.mrf.mxu0
  %v4731 = vadd.f32 %v4631, %v4730
  %v4732 = vpop.f32.mrf.mxu0
  %4733 = vmatprep.mubr.f32.mxu0 %v3477
  %4734 = vmatmul.mubr.f32.gmra.mxu0 %v3476
  %v4735 = vpop.f32.mrf.mxu0
  %v4736 = vadd.f32 %v4636, %v4735
  %v4737 = vpop.f32.mrf.mxu0
  %4738 = vmatprep.mubr.f32.mxu0 %v3502
  %4739 = vmatmul.mubr.f32.gmra.mxu0 %v3501
  %v4740 = vpop.f32.mrf.mxu0
  %v4741 = vadd.f32 %v4641, %v4740
  %v4742 = vpop.f32.mrf.mxu0
  %4743 = vmatprep.mubr.f32.mxu0 %v3527
  %4744 = vmatmul.mubr.f32.gmra.mxu0 %v3526
  %v4745 = vpop.f32.mrf.mxu0
  %v4746 = vadd.f32 %v4646, %v4745
  %v4747 = vpop.f32.mrf.mxu0
  %4748 = vmatprep.mubr.f32.mxu0 %v3552
  %4749 = vmatmul.mubr.f32.gmra.mxu0 %v3551
  %v4750 = vpop.f32.mrf.mxu0
  %v4751 = vadd.f32 %v4651, %v4750
  %v4752 = vpop.f32.mrf.mxu0
  %4753 = vdwg.mxu0
  %4754 = vmatprep.subr.mxu0 0.0
  %4755 = vmatpush1.msra.mxu0 %v594
  %4756 = vmatprep.subr.mxu0 0.0
  %4757 = vmatpush1.msra.mxu0 %v593
  %4758 = vmatprep.subr.mxu0 0.0
  %4759 = vmatpush1.msra.mxu0 %v592
  %4760 = vmatprep.subr.mxu0 0.0
  %4761 = vmatpush1.msra.mxu0 %v591
  %4762 = vmatprep.subr.mxu0 0.0
  %4763 = vmatpush1.msra.mxu0 %v590
  %4764 = vmatprep.subr.mxu0 0.0
  %4765 = vmatpush1.msra.mxu0 %v589
  %4766 = vmatprep.subr.mxu0 0.0
  %4767 = vmatpush1.msra.mxu0 %v588
  %4768 = vmatprep.subr.mxu0 0.0
  %4769 = vmatpush1.msra.mxu0 %v587
  %4770 = vmatprep.subr.mxu0 0.0
  %4771 = vmatpush1.msra.mxu0 %v586
  %4772 = vmatprep.subr.mxu0 0.0
  %4773 = vmatpush1.msra.mxu0 %v585
  %4774 = vmatprep.subr.mxu0 0.0
  %4775 = vmatpush1.msra.mxu0 %v584
  %4776 = vmatprep.subr.mxu0 0.0
  %4777 = vmatpush1.msra.mxu0 %v583
  %4778 = vmatprep.subr.mxu0 0.0
  %4779 = vmatpush1.msra.mxu0 %v582
  %4780 = vmatprep.subr.mxu0 0.0
  %4781 = vmatpush1.msra.mxu0 %v581
  %4782 = vmatprep.subr.mxu0 0.0
  %4783 = vmatpush1.msra.mxu0 %v580
  %4784 = vmatprep.subr.mxu0 0.0
  %4785 = vmatpush1.msra.mxu0 %v579
  %4786 = vmatprep.subr.mxu0 0.0
  %4787 = vmatpush2.msra.mxu0 0.0
  %4788 = vmatprep.subr.mxu0 0.0
  %4789 = vmatpush2.msra.mxu0 0.0
  %4790 = vmatprep.subr.mxu0 0.0
  %4791 = vmatpush2.msra.mxu0 0.0
  %4792 = vmatprep.subr.mxu0 0.0
  %4793 = vmatpush2.msra.mxu0 0.0
  %4794 = vmatprep.subr.mxu0 0.0
  %4795 = vmatpush2.msra.mxu0 0.0
  %4796 = vmatprep.subr.mxu0 0.0
  %4797 = vmatpush2.msra.mxu0 0.0
  %4798 = vmatprep.subr.mxu0 0.0
  %4799 = vmatpush2.msra.mxu0 0.0
  %4800 = vmatprep.subr.mxu0 0.0
  %4801 = vmatpush2.msra.mxu0 0.0
  %4802 = vmatprep.subr.mxu0 0.0
  %4803 = vmatpush2.msra.mxu0 0.0
  %4804 = vmatprep.subr.mxu0 0.0
  %4805 = vmatpush2.msra.mxu0 0.0
  %4806 = vmatprep.subr.mxu0 0.0
  %4807 = vmatpush2.msra.mxu0 0.0
  %4808 = vmatprep.subr.mxu0 0.0
  %4809 = vmatpush2.msra.mxu0 0.0
  %4810 = vmatprep.subr.mxu0 0.0
  %4811 = vmatpush2.msra.mxu0 0.0
  %4812 = vmatprep.subr.mxu0 0.0
  %4813 = vmatpush2.msra.mxu0 0.0
  %4814 = vmatprep.subr.mxu0 0.0
  %4815 = vmatpush2.msra.mxu0 0.0
  %4816 = vmatprep.subr.mxu0 0.0
  %4817 = vmatpush2.msra.mxu0 0.0
  %4818 = vmatprep.mubr.f32.mxu0 0.0
  %4819 = vmatmul.mubr.f32.gmra.mxu0 %v3403
  %v4820 = vpop.f32.mrf.mxu0
  %v4821 = vadd.f32 %v4721, %v4820
  %v4822 = vpop.f32.mrf.mxu0
  %4823 = vmatprep.mubr.f32.mxu0 0.0
  %4824 = vmatmul.mubr.f32.gmra.mxu0 %v3428
  %v4825 = vpop.f32.mrf.mxu0
  %v4826 = vadd.f32 %v4726, %v4825
  %v4827 = vpop.f32.mrf.mxu0
  %4828 = vmatprep.mubr.f32.mxu0 0.0
  %4829 = vmatmul.mubr.f32.gmra.mxu0 %v3453
  %v4830 = vpop.f32.mrf.mxu0
  %v4831 = vadd.f32 %v4731, %v4830
  %v4832 = vpop.f32.mrf.mxu0
  %4833 = vmatprep.mubr.f32.mxu0 0.0
  %4834 = vmatmul.mubr.f32.gmra.mxu0 %v3478
  %v4835 = vpop.f32.mrf.mxu0
  %v4836 = vadd.f32 %v4736, %v4835
  %v4837 = vpop.f32.mrf.mxu0
  %4838 = vmatprep.mubr.f32.mxu0 0.0
  %4839 = vmatmul.mubr.f32.gmra.mxu0 %v3503
  %v4840 = vpop.f32.mrf.mxu0
  %v4841 = vadd.f32 %v4741, %v4840
  %v4842 = vpop.f32.mrf.mxu0
  %4843 = vmatprep.mubr.f32.mxu0 0.0
  %4844 = vmatmul.mubr.f32.gmra.mxu0 %v3528
  %v4845 = vpop.f32.mrf.mxu0
  %v4846 = vadd.f32 %v4746, %v4845
  %v4847 = vpop.f32.mrf.mxu0
  %4848 = vmatprep.mubr.f32.mxu0 0.0
  %4849 = vmatmul.mubr.f32.gmra.mxu0 %v3553
  %v4850 = vpop.f32.mrf.mxu0
  %v4851 = vadd.f32 %v4751, %v4850
  %v4852 = vpop.f32.mrf.mxu0
  %4853 = vdwg.mxu0
  %v4854 = vmax.f32 %v3371, %v4821
  %v4855 = vmax.f32 %v3372, %v4826
  %v4856 = vmax.f32 %v3373, %v4831
  %v4857 = vmax.f32 %v3374, %v4836
  %v4858 = vmax.f32 %v3375, %v4841
  %v4859 = vmax.f32 %v3376, %v4846
  %v4860 = vmax.f32 %v3377, %v4851
  %s4861 = scalar_lea.vmem %s0, 4200
  %v4862 = vld [vmem:[%s4861] sm:$0xff]
  %v4863 = vld [vmem:[%s4861 + $0x8] sm:$0xff]
  %v4864 = vld [vmem:[%s4861 + $0x10] sm:$0xff]
  %v4865 = vld [vmem:[%s4861 + $0x18] sm:$0xff]
  %v4866 = vld [vmem:[%s4861 + $0x20] sm:$0xff]
  %v4867 = vld [vmem:[%s4861 + $0x28] sm:$0xff]
  %v4868 = vld [vmem:[%s4861 + $0x30] sm:$0xff]
  %v4869 = vld [vmem:[%s4861 + $0x38] sm:$0xff]
  %v4870 = vld [vmem:[%s4861 + $0x40] sm:$0xff]
  %v4871 = vld [vmem:[%s4861 + $0x48] sm:$0xff]
  %v4872 = vld [vmem:[%s4861 + $0x50] sm:$0xff]
  %v4873 = vld [vmem:[%s4861 + $0x58] sm:$0xff]
  %v4874 = vld [vmem:[%s4861 + $0x60] sm:$0xff]
  %v4875 = vld [vmem:[%s4861 + $0x68] sm:$0xff]
  %v4876 = vld [vmem:[%s4861 + $0x70] sm:$0xff]
  %v4877 = vld [vmem:[%s4861 + $0x78] sm:$0xff]
  %v4878 = vld [vmem:[%s4861 + $0x80] sm:$0xff]
  %v4879 = vld [vmem:[%s4861 + $0x88] sm:$0xff]
  %v4880 = vld [vmem:[%s4861 + $0x90] sm:$0xff]
  %v4881 = vld [vmem:[%s4861 + $0x98] sm:$0xff]
  %v4882 = vld [vmem:[%s4861 + $0xa0] sm:$0xff]
  %v4883 = vld [vmem:[%s4861 + $0xa8] sm:$0xff]
  %v4884 = vld [vmem:[%s4861 + $0xb0] sm:$0xff]
  %v4885 = vld [vmem:[%s4861 + $0xb8] sm:$0xff]
  %v4886 = vld [vmem:[%s4861 + $0xc0] sm:$0xff]
  %v4887 = vld [vmem:[%s4861 + $0xc8] sm:$0xff]
  %v4888 = vld [vmem:[%s4861 + $0xd0] sm:$0xff]
  %v4889 = vld [vmem:[%s4861 + $0xd8] sm:$0xff]
  %v4890 = vld [vmem:[%s4861 + $0xe0] sm:$0xff]
  %v4891 = vld [vmem:[%s4861 + $0xe8] sm:$0xff]
  %v4892 = vld [vmem:[%s4861 + $0xf0] sm:$0xff]
  %v4893 = vld [vmem:[%s4861 + $0xf8] sm:$0xff]
  %v4894 = vld [vmem:[%s4861 + $0x100] sm:$0xff]
  %v4895 = vld [vmem:[%s4861 + $0x108] sm:$0xff]
  %v4896 = vld [vmem:[%s4861 + $0x110] sm:$0xff]
  %v4897 = vld [vmem:[%s4861 + $0x118] sm:$0xff]
  %v4898 = vld [vmem:[%s4861 + $0x120] sm:$0xff]
  %v4899 = vld [vmem:[%s4861 + $0x128] sm:$0xff]
  %v4900 = vld [vmem:[%s4861 + $0x130] sm:$0xff]
  %v4901 = vld [vmem:[%s4861 + $0x138] sm:$0xff]
  %v4902 = vld [vmem:[%s4861 + $0x140] sm:$0xff]
  %v4903 = vld [vmem:[%s4861 + $0x148] sm:$0xff]
  %v4904 = vld [vmem:[%s4861 + $0x150] sm:$0xff]
  %v4905 = vld [vmem:[%s4861 + $0x158] sm:$0xff]
  %v4906 = vld [vmem:[%s4861 + $0x160] sm:$0xff]
  %v4907 = vld [vmem:[%s4861 + $0x168] sm:$0xff]
  %v4908 = vld [vmem:[%s4861 + $0x170] sm:$0xff]
  %v4909 = vld [vmem:[%s4861 + $0x178] sm:$0xff]
  %v4910 = vld [vmem:[%s4861 + $0x180] sm:$0xff]
  %v4911 = vld [vmem:[%s4861 + $0x188] sm:$0xff]
  %v4912 = vld [vmem:[%s4861 + $0x190] sm:$0xff]
  %v4913 = vld [vmem:[%s4861 + $0x198] sm:$0xff]
  %v4914 = vld [vmem:[%s4861 + $0x1a0] sm:$0xff]
  %v4915 = vld [vmem:[%s4861 + $0x1a8] sm:$0xff]
  %v4916 = vld [vmem:[%s4861 + $0x1b0] sm:$0xff]
  %v4917 = vld [vmem:[%s4861 + $0x1b8] sm:$0xff]
  %v4918 = vld [vmem:[%s4861 + $0x1c0] sm:$0xff]
  %v4919 = vld [vmem:[%s4861 + $0x1c8] sm:$0xff]
  %v4920 = vld [vmem:[%s4861 + $0x1d0] sm:$0xff]
  %v4921 = vld [vmem:[%s4861 + $0x1d8] sm:$0xff]
  %v4922 = vld [vmem:[%s4861 + $0x1e0] sm:$0xff]
  %v4923 = vld [vmem:[%s4861 + $0x1e8] sm:$0xff]
  %v4924 = vld [vmem:[%s4861 + $0x1f0] sm:$0xff]
  %v4925 = vld [vmem:[%s4861 + $0x1f8] sm:$0xff]
  %v4926 = vld [vmem:[%s4861 + $0x200] sm:$0xff]
  %v4927 = vld [vmem:[%s4861 + $0x208] sm:$0xff]
  %v4928 = vld [vmem:[%s4861 + $0x210] sm:$0xff]
  %v4929 = vld [vmem:[%s4861 + $0x218] sm:$0xff]
  %v4930 = vld [vmem:[%s4861 + $0x220] sm:$0xff]
  %v4931 = vld [vmem:[%s4861 + $0x228] sm:$0xff]
  %v4932 = vld [vmem:[%s4861 + $0x230] sm:$0xff]
  %v4933 = vld [vmem:[%s4861 + $0x238] sm:$0xff]
  %v4934 = vld [vmem:[%s4861 + $0x240] sm:$0xff]
  %v4935 = vld [vmem:[%s4861 + $0x248] sm:$0xff]
  %v4936 = vld [vmem:[%s4861 + $0x250] sm:$0xff]
  %v4937 = vld [vmem:[%s4861 + $0x258] sm:$0xff]
  %v4938 = vld [vmem:[%s4861 + $0x260] sm:$0xff]
  %v4939 = vld [vmem:[%s4861 + $0x268] sm:$0xff]
  %v4940 = vld [vmem:[%s4861 + $0x270] sm:$0xff]
  %v4941 = vld [vmem:[%s4861 + $0x278] sm:$0xff]
  %v4942 = vld [vmem:[%s4861 + $0x280] sm:$0xff]
  %v4943 = vld [vmem:[%s4861 + $0x288] sm:$0xff]
  %v4944 = vld [vmem:[%s4861 + $0x290] sm:$0xff]
  %v4945 = vld [vmem:[%s4861 + $0x298] sm:$0xff]
  %v4946 = vld [vmem:[%s4861 + $0x2a0] sm:$0xff]
  %v4947 = vld [vmem:[%s4861 + $0x2a8] sm:$0xff]
  %v4948 = vld [vmem:[%s4861 + $0x2b0] sm:$0xff]
  %v4949 = vld [vmem:[%s4861 + $0x2b8] sm:$0xff]
  %v4950 = vld [vmem:[%s4861 + $0x2c0] sm:$0xff]
  %v4951 = vld [vmem:[%s4861 + $0x2c8] sm:$0xff]
  %v4952 = vld [vmem:[%s4861 + $0x2d0] sm:$0xff]
  %v4953 = vld [vmem:[%s4861 + $0x2d8] sm:$0xff]
  %v4954 = vld [vmem:[%s4861 + $0x2e0] sm:$0xff]
  %v4955 = vld [vmem:[%s4861 + $0x2e8] sm:$0xff]
  %v4956 = vld [vmem:[%s4861 + $0x2f0] sm:$0xff]
  %v4957 = vld [vmem:[%s4861 + $0x2f8] sm:$0xff]
  %v4958 = vld [vmem:[%s4861 + $0x300] sm:$0xff]
  %v4959 = vld [vmem:[%s4861 + $0x308] sm:$0xff]
  %v4960 = vld [vmem:[%s4861 + $0x310] sm:$0xff]
  %v4961 = vld [vmem:[%s4861 + $0x318] sm:$0xff]
  %v4962 = vld [vmem:[%s4861 + $0x320] sm:$0xff]
  %v4963 = vld [vmem:[%s4861 + $0x328] sm:$0xff]
  %v4964 = vld [vmem:[%s4861 + $0x330] sm:$0xff]
  %v4965 = vld [vmem:[%s4861 + $0x338] sm:$0xff]
  %v4966 = vld [vmem:[%s4861 + $0x340] sm:$0xff]
  %v4967 = vld [vmem:[%s4861 + $0x348] sm:$0xff]
  %v4968 = vld [vmem:[%s4861 + $0x350] sm:$0xff]
  %v4969 = vld [vmem:[%s4861 + $0x358] sm:$0xff]
  %v4970 = vld [vmem:[%s4861 + $0x360] sm:$0xff]
  %v4971 = vld [vmem:[%s4861 + $0x368] sm:$0xff]
  %v4972 = vld [vmem:[%s4861 + $0x370] sm:$0xff]
  %v4973 = vld [vmem:[%s4861 + $0x378] sm:$0xff]
  %v4974 = vld [vmem:[%s4861 + $0x380] sm:$0xff]
  %v4975 = vld [vmem:[%s4861 + $0x388] sm:$0xff]
  %v4976 = vld [vmem:[%s4861 + $0x390] sm:$0xff]
  %v4977 = vld [vmem:[%s4861 + $0x398] sm:$0xff]
  %v4978 = vld [vmem:[%s4861 + $0x3a0] sm:$0xff]
  %v4979 = vld [vmem:[%s4861 + $0x3a8] sm:$0xff]
  %v4980 = vld [vmem:[%s4861 + $0x3b0] sm:$0xff]
  %v4981 = vld [vmem:[%s4861 + $0x3b8] sm:$0xff]
  %v4982 = vld [vmem:[%s4861 + $0x3c0] sm:$0xff]
  %v4983 = vld [vmem:[%s4861 + $0x3c8] sm:$0xff]
  %v4984 = vld [vmem:[%s4861 + $0x3d0] sm:$0xff]
  %v4985 = vld [vmem:[%s4861 + $0x3d8] sm:$0xff]
  %v4986 = vld [vmem:[%s4861 + $0x3e0] sm:$0xff]
  %v4987 = vld [vmem:[%s4861 + $0x3e8] sm:$0xff]
  %v4988 = vld [vmem:[%s4861 + $0x3f0] sm:$0xff]
  %v4989 = vld [vmem:[%s4861 + $0x3f8] sm:$0xff]
  %v4990 = vld [vmem:[%s4861 + $0x400] sm:$0xff]
  %v4991 = vld [vmem:[%s4861 + $0x408] sm:$0xff]
  %v4992 = vld [vmem:[%s4861 + $0x410] sm:$0xff]
  %v4993 = vld [vmem:[%s4861 + $0x418] sm:$0xff]
  %v4994 = vld [vmem:[%s4861 + $0x420] sm:$0xff]
  %v4995 = vld [vmem:[%s4861 + $0x428] sm:$0xff]
  %v4996 = vld [vmem:[%s4861 + $0x430] sm:$0xff]
  %v4997 = vld [vmem:[%s4861 + $0x438] sm:$0xff]
  %v4998 = vld [vmem:[%s4861 + $0x440] sm:$0xff]
  %v4999 = vld [vmem:[%s4861 + $0x448] sm:$0xff]
  %v5000 = vld [vmem:[%s4861 + $0x450] sm:$0xff]
  %v5001 = vld [vmem:[%s4861 + $0x458] sm:$0xff]
  %v5002 = vld [vmem:[%s4861 + $0x460] sm:$0xff]
  %v5003 = vld [vmem:[%s4861 + $0x468] sm:$0xff]
  %v5004 = vld [vmem:[%s4861 + $0x470] sm:$0xff]
  %v5005 = vld [vmem:[%s4861 + $0x478] sm:$0xff]
  %v5006 = vld [vmem:[%s4861 + $0x480] sm:$0xff]
  %v5007 = vld [vmem:[%s4861 + $0x488] sm:$0xff]
  %v5008 = vld [vmem:[%s4861 + $0x490] sm:$0xff]
  %v5009 = vld [vmem:[%s4861 + $0x498] sm:$0xff]
  %v5010 = vld [vmem:[%s4861 + $0x4a0] sm:$0xff]
  %v5011 = vld [vmem:[%s4861 + $0x4a8] sm:$0xff]
  %v5012 = vld [vmem:[%s4861 + $0x4b0] sm:$0x3]
  %v5013 = vld [vmem:[%s4861 + $0x4b8] sm:$0x3]
  %v5014 = vld [vmem:[%s4861 + $0x4c0] sm:$0x3]
  %v5015 = vld [vmem:[%s4861 + $0x4c8] sm:$0x3]
  %v5016 = vld [vmem:[%s4861 + $0x4d0] sm:$0x3]
  %v5017 = vld [vmem:[%s4861 + $0x4d8] sm:$0x3]
  %v5018 = vld [vmem:[%s4861 + $0x4e0] sm:$0x3]
  %v5019 = vld [vmem:[%s4861 + $0x4e8] sm:$0x3]
  %v5020 = vld [vmem:[%s4861 + $0x4f0] sm:$0x3]
  %v5021 = vld [vmem:[%s4861 + $0x4f8] sm:$0x3]
  %v5022 = vld [vmem:[%s4861 + $0x500] sm:$0x3]
  %v5023 = vld [vmem:[%s4861 + $0x508] sm:$0x3]
  %v5024 = vld [vmem:[%s4861 + $0x510] sm:$0x3]
  %v5025 = vld [vmem:[%s4861 + $0x518] sm:$0x3]
  %v5026 = vld [vmem:[%s4861 + $0x520] sm:$0x3]
  %v5027 = vld [vmem:[%s4861 + $0x528] sm:$0x3]
  %v5028 = vld [vmem:[%s4861 + $0x530] sm:$0x3]
  %v5029 = vld [vmem:[%s4861 + $0x538] sm:$0x3]
  %v5030 = vld [vmem:[%s4861 + $0x540] sm:$0x3]
  %v5031 = vld [vmem:[%s4861 + $0x548] sm:$0x3]
  %v5032 = vld [vmem:[%s4861 + $0x550] sm:$0x3]
  %v5033 = vld [vmem:[%s4861 + $0x558] sm:$0x3]
  %v5034 = vld [vmem:[%s4861 + $0x560] sm:$0x3]
  %v5035 = vld [vmem:[%s4861 + $0x568] sm:$0x3]
  %v5036 = vld [vmem:[%s4861 + $0x570] sm:$0x3]
  %5037 = vmatprep.subr.mxu0 0.0
  %5038 = vmatpush1.msra.mxu0 %v210
  %5039 = vmatprep.subr.mxu0 0.0
  %5040 = vmatpush1.msra.mxu0 %v209
  %5041 = vmatprep.subr.mxu0 0.0
  %5042 = vmatpush1.msra.mxu0 %v208
  %5043 = vmatprep.subr.mxu0 0.0
  %5044 = vmatpush1.msra.mxu0 %v207
  %5045 = vmatprep.subr.mxu0 0.0
  %5046 = vmatpush1.msra.mxu0 %v206
  %5047 = vmatprep.subr.mxu0 0.0
  %5048 = vmatpush1.msra.mxu0 %v205
  %5049 = vmatprep.subr.mxu0 0.0
  %5050 = vmatpush1.msra.mxu0 %v204
  %5051 = vmatprep.subr.mxu0 0.0
  %5052 = vmatpush1.msra.mxu0 %v203
  %5053 = vmatprep.subr.mxu0 0.0
  %5054 = vmatpush1.msra.mxu0 %v202
  %5055 = vmatprep.subr.mxu0 0.0
  %5056 = vmatpush1.msra.mxu0 %v201
  %5057 = vmatprep.subr.mxu0 0.0
  %5058 = vmatpush1.msra.mxu0 %v200
  %5059 = vmatprep.subr.mxu0 0.0
  %5060 = vmatpush1.msra.mxu0 %v199
  %5061 = vmatprep.subr.mxu0 0.0
  %5062 = vmatpush1.msra.mxu0 %v198
  %5063 = vmatprep.subr.mxu0 0.0
  %5064 = vmatpush1.msra.mxu0 %v197
  %5065 = vmatprep.subr.mxu0 0.0
  %5066 = vmatpush1.msra.mxu0 %v196
  %5067 = vmatprep.subr.mxu0 0.0
  %5068 = vmatpush1.msra.mxu0 %v195
  %5069 = vmatprep.subr.mxu0 0.0
  %5070 = vmatpush2.msra.mxu0 %v226
  %5071 = vmatprep.subr.mxu0 0.0
  %5072 = vmatpush2.msra.mxu0 %v225
  %5073 = vmatprep.subr.mxu0 0.0
  %5074 = vmatpush2.msra.mxu0 %v224
  %5075 = vmatprep.subr.mxu0 0.0
  %5076 = vmatpush2.msra.mxu0 %v223
  %5077 = vmatprep.subr.mxu0 0.0
  %5078 = vmatpush2.msra.mxu0 %v222
  %5079 = vmatprep.subr.mxu0 0.0
  %5080 = vmatpush2.msra.mxu0 %v221
  %5081 = vmatprep.subr.mxu0 0.0
  %5082 = vmatpush2.msra.mxu0 %v220
  %5083 = vmatprep.subr.mxu0 0.0
  %5084 = vmatpush2.msra.mxu0 %v219
  %5085 = vmatprep.subr.mxu0 0.0
  %5086 = vmatpush2.msra.mxu0 %v218
  %5087 = vmatprep.subr.mxu0 0.0
  %5088 = vmatpush2.msra.mxu0 %v217
  %5089 = vmatprep.subr.mxu0 0.0
  %5090 = vmatpush2.msra.mxu0 %v216
  %5091 = vmatprep.subr.mxu0 0.0
  %5092 = vmatpush2.msra.mxu0 %v215
  %5093 = vmatprep.subr.mxu0 0.0
  %5094 = vmatpush2.msra.mxu0 %v214
  %5095 = vmatprep.subr.mxu0 0.0
  %5096 = vmatpush2.msra.mxu0 %v213
  %5097 = vmatprep.subr.mxu0 0.0
  %5098 = vmatpush2.msra.mxu0 %v212
  %5099 = vmatprep.subr.mxu0 0.0
  %5100 = vmatpush2.msra.mxu0 %v211
  %5101 = vmatprep.mubr.f32.mxu0 %v4863
  %5102 = vmatmul.mubr.f32.gmra.mxu0 %v4862
  %v5103 = vpop.f32.mrf.mxu0
  %v5104 = vadd.f32 0.0, %v5103
  %v5105 = vpop.f32.mrf.mxu0
  %5106 = vmatprep.mubr.f32.mxu0 %v4888
  %5107 = vmatmul.mubr.f32.gmra.mxu0 %v4887
  %v5108 = vpop.f32.mrf.mxu0
  %v5109 = vadd.f32 0.0, %v5108
  %v5110 = vpop.f32.mrf.mxu0
  %5111 = vmatprep.mubr.f32.mxu0 %v4913
  %5112 = vmatmul.mubr.f32.gmra.mxu0 %v4912
  %v5113 = vpop.f32.mrf.mxu0
  %v5114 = vadd.f32 0.0, %v5113
  %v5115 = vpop.f32.mrf.mxu0
  %5116 = vmatprep.mubr.f32.mxu0 %v4938
  %5117 = vmatmul.mubr.f32.gmra.mxu0 %v4937
  %v5118 = vpop.f32.mrf.mxu0
  %v5119 = vadd.f32 0.0, %v5118
  %v5120 = vpop.f32.mrf.mxu0
  %5121 = vmatprep.mubr.f32.mxu0 %v4963
  %5122 = vmatmul.mubr.f32.gmra.mxu0 %v4962
  %v5123 = vpop.f32.mrf.mxu0
  %v5124 = vadd.f32 0.0, %v5123
  %v5125 = vpop.f32.mrf.mxu0
  %5126 = vmatprep.mubr.f32.mxu0 %v4988
  %5127 = vmatmul.mubr.f32.gmra.mxu0 %v4987
  %v5128 = vpop.f32.mrf.mxu0
  %v5129 = vadd.f32 0.0, %v5128
  %v5130 = vpop.f32.mrf.mxu0
  %5131 = vmatprep.mubr.f32.mxu0 %v5013
  %5132 = vmatmul.mubr.f32.gmra.mxu0 %v5012
  %v5133 = vpop.f32.mrf.mxu0
  %v5134 = vadd.f32 0.0, %v5133
  %v5135 = vpop.f32.mrf.mxu0
  %5136 = vdwg.mxu0
  %5137 = vmatprep.subr.mxu0 0.0
  %5138 = vmatpush1.msra.mxu0 %v242
  %5139 = vmatprep.subr.mxu0 0.0
  %5140 = vmatpush1.msra.mxu0 %v241
  %5141 = vmatprep.subr.mxu0 0.0
  %5142 = vmatpush1.msra.mxu0 %v240
  %5143 = vmatprep.subr.mxu0 0.0
  %5144 = vmatpush1.msra.mxu0 %v239
  %5145 = vmatprep.subr.mxu0 0.0
  %5146 = vmatpush1.msra.mxu0 %v238
  %5147 = vmatprep.subr.mxu0 0.0
  %5148 = vmatpush1.msra.mxu0 %v237
  %5149 = vmatprep.subr.mxu0 0.0
  %5150 = vmatpush1.msra.mxu0 %v236
  %5151 = vmatprep.subr.mxu0 0.0
  %5152 = vmatpush1.msra.mxu0 %v235
  %5153 = vmatprep.subr.mxu0 0.0
  %5154 = vmatpush1.msra.mxu0 %v234
  %5155 = vmatprep.subr.mxu0 0.0
  %5156 = vmatpush1.msra.mxu0 %v233
  %5157 = vmatprep.subr.mxu0 0.0
  %5158 = vmatpush1.msra.mxu0 %v232
  %5159 = vmatprep.subr.mxu0 0.0
  %5160 = vmatpush1.msra.mxu0 %v231
  %5161 = vmatprep.subr.mxu0 0.0
  %5162 = vmatpush1.msra.mxu0 %v230
  %5163 = vmatprep.subr.mxu0 0.0
  %5164 = vmatpush1.msra.mxu0 %v229
  %5165 = vmatprep.subr.mxu0 0.0
  %5166 = vmatpush1.msra.mxu0 %v228
  %5167 = vmatprep.subr.mxu0 0.0
  %5168 = vmatpush1.msra.mxu0 %v227
  %5169 = vmatprep.subr.mxu0 0.0
  %5170 = vmatpush2.msra.mxu0 %v258
  %5171 = vmatprep.subr.mxu0 0.0
  %5172 = vmatpush2.msra.mxu0 %v257
  %5173 = vmatprep.subr.mxu0 0.0
  %5174 = vmatpush2.msra.mxu0 %v256
  %5175 = vmatprep.subr.mxu0 0.0
  %5176 = vmatpush2.msra.mxu0 %v255
  %5177 = vmatprep.subr.mxu0 0.0
  %5178 = vmatpush2.msra.mxu0 %v254
  %5179 = vmatprep.subr.mxu0 0.0
  %5180 = vmatpush2.msra.mxu0 %v253
  %5181 = vmatprep.subr.mxu0 0.0
  %5182 = vmatpush2.msra.mxu0 %v252
  %5183 = vmatprep.subr.mxu0 0.0
  %5184 = vmatpush2.msra.mxu0 %v251
  %5185 = vmatprep.subr.mxu0 0.0
  %5186 = vmatpush2.msra.mxu0 %v250
  %5187 = vmatprep.subr.mxu0 0.0
  %5188 = vmatpush2.msra.mxu0 %v249
  %5189 = vmatprep.subr.mxu0 0.0
  %5190 = vmatpush2.msra.mxu0 %v248
  %5191 = vmatprep.subr.mxu0 0.0
  %5192 = vmatpush2.msra.mxu0 %v247
  %5193 = vmatprep.subr.mxu0 0.0
  %5194 = vmatpush2.msra.mxu0 %v246
  %5195 = vmatprep.subr.mxu0 0.0
  %5196 = vmatpush2.msra.mxu0 %v245
  %5197 = vmatprep.subr.mxu0 0.0
  %5198 = vmatpush2.msra.mxu0 %v244
  %5199 = vmatprep.subr.mxu0 0.0
  %5200 = vmatpush2.msra.mxu0 %v243
  %5201 = vmatprep.mubr.f32.mxu0 %v4865
  %5202 = vmatmul.mubr.f32.gmra.mxu0 %v4864
  %v5203 = vpop.f32.mrf.mxu0
  %v5204 = vadd.f32 %v5104, %v5203
  %v5205 = vpop.f32.mrf.mxu0
  %5206 = vmatprep.mubr.f32.mxu0 %v4890
  %5207 = vmatmul.mubr.f32.gmra.mxu0 %v4889
  %v5208 = vpop.f32.mrf.mxu0
  %v5209 = vadd.f32 %v5109, %v5208
  %v5210 = vpop.f32.mrf.mxu0
  %5211 = vmatprep.mubr.f32.mxu0 %v4915
  %5212 = vmatmul.mubr.f32.gmra.mxu0 %v4914
  %v5213 = vpop.f32.mrf.mxu0
  %v5214 = vadd.f32 %v5114, %v5213
  %v5215 = vpop.f32.mrf.mxu0
  %5216 = vmatprep.mubr.f32.mxu0 %v4940
  %5217 = vmatmul.mubr.f32.gmra.mxu0 %v4939
  %v5218 = vpop.f32.mrf.mxu0
  %v5219 = vadd.f32 %v5119, %v5218
  %v5220 = vpop.f32.mrf.mxu0
  %5221 = vmatprep.mubr.f32.mxu0 %v4965
  %5222 = vmatmul.mubr.f32.gmra.mxu0 %v4964
  %v5223 = vpop.f32.mrf.mxu0
  %v5224 = vadd.f32 %v5124, %v5223
  %v5225 = vpop.f32.mrf.mxu0
  %5226 = vmatprep.mubr.f32.mxu0 %v4990
  %5227 = vmatmul.mubr.f32.gmra.mxu0 %v4989
  %v5228 = vpop.f32.mrf.mxu0
  %v5229 = vadd.f32 %v5129, %v5228
  %v5230 = vpop.f32.mrf.mxu0
  %5231 = vmatprep.mubr.f32.mxu0 %v5015
  %5232 = vmatmul.mubr.f32.gmra.mxu0 %v5014
  %v5233 = vpop.f32.mrf.mxu0
  %v5234 = vadd.f32 %v5134, %v5233
  %v5235 = vpop.f32.mrf.mxu0
  %5236 = vdwg.mxu0
  %5237 = vmatprep.subr.mxu0 0.0
  %5238 = vmatpush1.msra.mxu0 %v274
  %5239 = vmatprep.subr.mxu0 0.0
  %5240 = vmatpush1.msra.mxu0 %v273
  %5241 = vmatprep.subr.mxu0 0.0
  %5242 = vmatpush1.msra.mxu0 %v272
  %5243 = vmatprep.subr.mxu0 0.0
  %5244 = vmatpush1.msra.mxu0 %v271
  %5245 = vmatprep.subr.mxu0 0.0
  %5246 = vmatpush1.msra.mxu0 %v270
  %5247 = vmatprep.subr.mxu0 0.0
  %5248 = vmatpush1.msra.mxu0 %v269
  %5249 = vmatprep.subr.mxu0 0.0
  %5250 = vmatpush1.msra.mxu0 %v268
  %5251 = vmatprep.subr.mxu0 0.0
  %5252 = vmatpush1.msra.mxu0 %v267
  %5253 = vmatprep.subr.mxu0 0.0
  %5254 = vmatpush1.msra.mxu0 %v266
  %5255 = vmatprep.subr.mxu0 0.0
  %5256 = vmatpush1.msra.mxu0 %v265
  %5257 = vmatprep.subr.mxu0 0.0
  %5258 = vmatpush1.msra.mxu0 %v264
  %5259 = vmatprep.subr.mxu0 0.0
  %5260 = vmatpush1.msra.mxu0 %v263
  %5261 = vmatprep.subr.mxu0 0.0
  %5262 = vmatpush1.msra.mxu0 %v262
  %5263 = vmatprep.subr.mxu0 0.0
  %5264 = vmatpush1.msra.mxu0 %v261
  %5265 = vmatprep.subr.mxu0 0.0
  %5266 = vmatpush1.msra.mxu0 %v260
  %5267 = vmatprep.subr.mxu0 0.0
  %5268 = vmatpush1.msra.mxu0 %v259
  %5269 = vmatprep.subr.mxu0 0.0
  %5270 = vmatpush2.msra.mxu0 %v290
  %5271 = vmatprep.subr.mxu0 0.0
  %5272 = vmatpush2.msra.mxu0 %v289
  %5273 = vmatprep.subr.mxu0 0.0
  %5274 = vmatpush2.msra.mxu0 %v288
  %5275 = vmatprep.subr.mxu0 0.0
  %5276 = vmatpush2.msra.mxu0 %v287
  %5277 = vmatprep.subr.mxu0 0.0
  %5278 = vmatpush2.msra.mxu0 %v286
  %5279 = vmatprep.subr.mxu0 0.0
  %5280 = vmatpush2.msra.mxu0 %v285
  %5281 = vmatprep.subr.mxu0 0.0
  %5282 = vmatpush2.msra.mxu0 %v284
  %5283 = vmatprep.subr.mxu0 0.0
  %5284 = vmatpush2.msra.mxu0 %v283
  %5285 = vmatprep.subr.mxu0 0.0
  %5286 = vmatpush2.msra.mxu0 %v282
  %5287 = vmatprep.subr.mxu0 0.0
  %5288 = vmatpush2.msra.mxu0 %v281
  %5289 = vmatprep.subr.mxu0 0.0
  %5290 = vmatpush2.msra.mxu0 %v280
  %5291 = vmatprep.subr.mxu0 0.0
  %5292 = vmatpush2.msra.mxu0 %v279
  %5293 = vmatprep.subr.mxu0 0.0
  %5294 = vmatpush2.msra.mxu0 %v278
  %5295 = vmatprep.subr.mxu0 0.0
  %5296 = vmatpush2.msra.mxu0 %v277
  %5297 = vmatprep.subr.mxu0 0.0
  %5298 = vmatpush2.msra.mxu0 %v276
  %5299 = vmatprep.subr.mxu0 0.0
  %5300 = vmatpush2.msra.mxu0 %v275
  %5301 = vmatprep.mubr.f32.mxu0 %v4867
  %5302 = vmatmul.mubr.f32.gmra.mxu0 %v4866
  %v5303 = vpop.f32.mrf.mxu0
  %v5304 = vadd.f32 %v5204, %v5303
  %v5305 = vpop.f32.mrf.mxu0
  %5306 = vmatprep.mubr.f32.mxu0 %v4892
  %5307 = vmatmul.mubr.f32.gmra.mxu0 %v4891
  %v5308 = vpop.f32.mrf.mxu0
  %v5309 = vadd.f32 %v5209, %v5308
  %v5310 = vpop.f32.mrf.mxu0
  %5311 = vmatprep.mubr.f32.mxu0 %v4917
  %5312 = vmatmul.mubr.f32.gmra.mxu0 %v4916
  %v5313 = vpop.f32.mrf.mxu0
  %v5314 = vadd.f32 %v5214, %v5313
  %v5315 = vpop.f32.mrf.mxu0
  %5316 = vmatprep.mubr.f32.mxu0 %v4942
  %5317 = vmatmul.mubr.f32.gmra.mxu0 %v4941
  %v5318 = vpop.f32.mrf.mxu0
  %v5319 = vadd.f32 %v5219, %v5318
  %v5320 = vpop.f32.mrf.mxu0
  %5321 = vmatprep.mubr.f32.mxu0 %v4967
  %5322 = vmatmul.mubr.f32.gmra.mxu0 %v4966
  %v5323 = vpop.f32.mrf.mxu0
  %v5324 = vadd.f32 %v5224, %v5323
  %v5325 = vpop.f32.mrf.mxu0
  %5326 = vmatprep.mubr.f32.mxu0 %v4992
  %5327 = vmatmul.mubr.f32.gmra.mxu0 %v4991
  %v5328 = vpop.f32.mrf.mxu0
  %v5329 = vadd.f32 %v5229, %v5328
  %v5330 = vpop.f32.mrf.mxu0
  %5331 = vmatprep.mubr.f32.mxu0 %v5017
  %5332 = vmatmul.mubr.f32.gmra.mxu0 %v5016
  %v5333 = vpop.f32.mrf.mxu0
  %v5334 = vadd.f32 %v5234, %v5333
  %v5335 = vpop.f32.mrf.mxu0
  %5336 = vdwg.mxu0
  %5337 = vmatprep.subr.mxu0 0.0
  %5338 = vmatpush1.msra.mxu0 %v306
  %5339 = vmatprep.subr.mxu0 0.0
  %5340 = vmatpush1.msra.mxu0 %v305
  %5341 = vmatprep.subr.mxu0 0.0
  %5342 = vmatpush1.msra.mxu0 %v304
  %5343 = vmatprep.subr.mxu0 0.0
  %5344 = vmatpush1.msra.mxu0 %v303
  %5345 = vmatprep.subr.mxu0 0.0
  %5346 = vmatpush1.msra.mxu0 %v302
  %5347 = vmatprep.subr.mxu0 0.0
  %5348 = vmatpush1.msra.mxu0 %v301
  %5349 = vmatprep.subr.mxu0 0.0
  %5350 = vmatpush1.msra.mxu0 %v300
  %5351 = vmatprep.subr.mxu0 0.0
  %5352 = vmatpush1.msra.mxu0 %v299
  %5353 = vmatprep.subr.mxu0 0.0
  %5354 = vmatpush1.msra.mxu0 %v298
  %5355 = vmatprep.subr.mxu0 0.0
  %5356 = vmatpush1.msra.mxu0 %v297
  %5357 = vmatprep.subr.mxu0 0.0
  %5358 = vmatpush1.msra.mxu0 %v296
  %5359 = vmatprep.subr.mxu0 0.0
  %5360 = vmatpush1.msra.mxu0 %v295
  %5361 = vmatprep.subr.mxu0 0.0
  %5362 = vmatpush1.msra.mxu0 %v294
  %5363 = vmatprep.subr.mxu0 0.0
  %5364 = vmatpush1.msra.mxu0 %v293
  %5365 = vmatprep.subr.mxu0 0.0
  %5366 = vmatpush1.msra.mxu0 %v292
  %5367 = vmatprep.subr.mxu0 0.0
  %5368 = vmatpush1.msra.mxu0 %v291
  %5369 = vmatprep.subr.mxu0 0.0
  %5370 = vmatpush2.msra.mxu0 %v322
  %5371 = vmatprep.subr.mxu0 0.0
  %5372 = vmatpush2.msra.mxu0 %v321
  %5373 = vmatprep.subr.mxu0 0.0
  %5374 = vmatpush2.msra.mxu0 %v320
  %5375 = vmatprep.subr.mxu0 0.0
  %5376 = vmatpush2.msra.mxu0 %v319
  %5377 = vmatprep.subr.mxu0 0.0
  %5378 = vmatpush2.msra.mxu0 %v318
  %5379 = vmatprep.subr.mxu0 0.0
  %5380 = vmatpush2.msra.mxu0 %v317
  %5381 = vmatprep.subr.mxu0 0.0
  %5382 = vmatpush2.msra.mxu0 %v316
  %5383 = vmatprep.subr.mxu0 0.0
  %5384 = vmatpush2.msra.mxu0 %v315
  %5385 = vmatprep.subr.mxu0 0.0
  %5386 = vmatpush2.msra.mxu0 %v314
  %5387 = vmatprep.subr.mxu0 0.0
  %5388 = vmatpush2.msra.mxu0 %v313
  %5389 = vmatprep.subr.mxu0 0.0
  %5390 = vmatpush2.msra.mxu0 %v312
  %5391 = vmatprep.subr.mxu0 0.0
  %5392 = vmatpush2.msra.mxu0 %v311
  %5393 = vmatprep.subr.mxu0 0.0
  %5394 = vmatpush2.msra.mxu0 %v310
  %5395 = vmatprep.subr.mxu0 0.0
  %5396 = vmatpush2.msra.mxu0 %v309
  %5397 = vmatprep.subr.mxu0 0.0
  %5398 = vmatpush2.msra.mxu0 %v308
  %5399 = vmatprep.subr.mxu0 0.0
  %5400 = vmatpush2.msra.mxu0 %v307
  %5401 = vmatprep.mubr.f32.mxu0 %v4869
  %5402 = vmatmul.mubr.f32.gmra.mxu0 %v4868
  %v5403 = vpop.f32.mrf.mxu0
  %v5404 = vadd.f32 %v5304, %v5403
  %v5405 = vpop.f32.mrf.mxu0
  %5406 = vmatprep.mubr.f32.mxu0 %v4894
  %5407 = vmatmul.mubr.f32.gmra.mxu0 %v4893
  %v5408 = vpop.f32.mrf.mxu0
  %v5409 = vadd.f32 %v5309, %v5408
  %v5410 = vpop.f32.mrf.mxu0
  %5411 = vmatprep.mubr.f32.mxu0 %v4919
  %5412 = vmatmul.mubr.f32.gmra.mxu0 %v4918
  %v5413 = vpop.f32.mrf.mxu0
  %v5414 = vadd.f32 %v5314, %v5413
  %v5415 = vpop.f32.mrf.mxu0
  %5416 = vmatprep.mubr.f32.mxu0 %v4944
  %5417 = vmatmul.mubr.f32.gmra.mxu0 %v4943
  %v5418 = vpop.f32.mrf.mxu0
  %v5419 = vadd.f32 %v5319, %v5418
  %v5420 = vpop.f32.mrf.mxu0
  %5421 = vmatprep.mubr.f32.mxu0 %v4969
  %5422 = vmatmul.mubr.f32.gmra.mxu0 %v4968
  %v5423 = vpop.f32.mrf.mxu0
  %v5424 = vadd.f32 %v5324, %v5423
  %v5425 = vpop.f32.mrf.mxu0
  %5426 = vmatprep.mubr.f32.mxu0 %v4994
  %5427 = vmatmul.mubr.f32.gmra.mxu0 %v4993
  %v5428 = vpop.f32.mrf.mxu0
  %v5429 = vadd.f32 %v5329, %v5428
  %v5430 = vpop.f32.mrf.mxu0
  %5431 = vmatprep.mubr.f32.mxu0 %v5019
  %5432 = vmatmul.mubr.f32.gmra.mxu0 %v5018
  %v5433 = vpop.f32.mrf.mxu0
  %v5434 = vadd.f32 %v5334, %v5433
  %v5435 = vpop.f32.mrf.mxu0
  %5436 = vdwg.mxu0
  %5437 = vmatprep.subr.mxu0 0.0
  %5438 = vmatpush1.msra.mxu0 %v338
  %5439 = vmatprep.subr.mxu0 0.0
  %5440 = vmatpush1.msra.mxu0 %v337
  %5441 = vmatprep.subr.mxu0 0.0
  %5442 = vmatpush1.msra.mxu0 %v336
  %5443 = vmatprep.subr.mxu0 0.0
  %5444 = vmatpush1.msra.mxu0 %v335
  %5445 = vmatprep.subr.mxu0 0.0
  %5446 = vmatpush1.msra.mxu0 %v334
  %5447 = vmatprep.subr.mxu0 0.0
  %5448 = vmatpush1.msra.mxu0 %v333
  %5449 = vmatprep.subr.mxu0 0.0
  %5450 = vmatpush1.msra.mxu0 %v332
  %5451 = vmatprep.subr.mxu0 0.0
  %5452 = vmatpush1.msra.mxu0 %v331
  %5453 = vmatprep.subr.mxu0 0.0
  %5454 = vmatpush1.msra.mxu0 %v330
  %5455 = vmatprep.subr.mxu0 0.0
  %5456 = vmatpush1.msra.mxu0 %v329
  %5457 = vmatprep.subr.mxu0 0.0
  %5458 = vmatpush1.msra.mxu0 %v328
  %5459 = vmatprep.subr.mxu0 0.0
  %5460 = vmatpush1.msra.mxu0 %v327
  %5461 = vmatprep.subr.mxu0 0.0
  %5462 = vmatpush1.msra.mxu0 %v326
  %5463 = vmatprep.subr.mxu0 0.0
  %5464 = vmatpush1.msra.mxu0 %v325
  %5465 = vmatprep.subr.mxu0 0.0
  %5466 = vmatpush1.msra.mxu0 %v324
  %5467 = vmatprep.subr.mxu0 0.0
  %5468 = vmatpush1.msra.mxu0 %v323
  %5469 = vmatprep.subr.mxu0 0.0
  %5470 = vmatpush2.msra.mxu0 %v354
  %5471 = vmatprep.subr.mxu0 0.0
  %5472 = vmatpush2.msra.mxu0 %v353
  %5473 = vmatprep.subr.mxu0 0.0
  %5474 = vmatpush2.msra.mxu0 %v352
  %5475 = vmatprep.subr.mxu0 0.0
  %5476 = vmatpush2.msra.mxu0 %v351
  %5477 = vmatprep.subr.mxu0 0.0
  %5478 = vmatpush2.msra.mxu0 %v350
  %5479 = vmatprep.subr.mxu0 0.0
  %5480 = vmatpush2.msra.mxu0 %v349
  %5481 = vmatprep.subr.mxu0 0.0
  %5482 = vmatpush2.msra.mxu0 %v348
  %5483 = vmatprep.subr.mxu0 0.0
  %5484 = vmatpush2.msra.mxu0 %v347
  %5485 = vmatprep.subr.mxu0 0.0
  %5486 = vmatpush2.msra.mxu0 %v346
  %5487 = vmatprep.subr.mxu0 0.0
  %5488 = vmatpush2.msra.mxu0 %v345
  %5489 = vmatprep.subr.mxu0 0.0
  %5490 = vmatpush2.msra.mxu0 %v344
  %5491 = vmatprep.subr.mxu0 0.0
  %5492 = vmatpush2.msra.mxu0 %v343
  %5493 = vmatprep.subr.mxu0 0.0
  %5494 = vmatpush2.msra.mxu0 %v342
  %5495 = vmatprep.subr.mxu0 0.0
  %5496 = vmatpush2.msra.mxu0 %v341
  %5497 = vmatprep.subr.mxu0 0.0
  %5498 = vmatpush2.msra.mxu0 %v340
  %5499 = vmatprep.subr.mxu0 0.0
  %5500 = vmatpush2.msra.mxu0 %v339
  %5501 = vmatprep.mubr.f32.mxu0 %v4871
  %5502 = vmatmul.mubr.f32.gmra.mxu0 %v4870
  %v5503 = vpop.f32.mrf.mxu0
  %v5504 = vadd.f32 %v5404, %v5503
  %v5505 = vpop.f32.mrf.mxu0
  %5506 = vmatprep.mubr.f32.mxu0 %v4896
  %5507 = vmatmul.mubr.f32.gmra.mxu0 %v4895
  %v5508 = vpop.f32.mrf.mxu0
  %v5509 = vadd.f32 %v5409, %v5508
  %v5510 = vpop.f32.mrf.mxu0
  %5511 = vmatprep.mubr.f32.mxu0 %v4921
  %5512 = vmatmul.mubr.f32.gmra.mxu0 %v4920
  %v5513 = vpop.f32.mrf.mxu0
  %v5514 = vadd.f32 %v5414, %v5513
  %v5515 = vpop.f32.mrf.mxu0
  %5516 = vmatprep.mubr.f32.mxu0 %v4946
  %5517 = vmatmul.mubr.f32.gmra.mxu0 %v4945
  %v5518 = vpop.f32.mrf.mxu0
  %v5519 = vadd.f32 %v5419, %v5518
  %v5520 = vpop.f32.mrf.mxu0
  %5521 = vmatprep.mubr.f32.mxu0 %v4971
  %5522 = vmatmul.mubr.f32.gmra.mxu0 %v4970
  %v5523 = vpop.f32.mrf.mxu0
  %v5524 = vadd.f32 %v5424, %v5523
  %v5525 = vpop.f32.mrf.mxu0
  %5526 = vmatprep.mubr.f32.mxu0 %v4996
  %5527 = vmatmul.mubr.f32.gmra.mxu0 %v4995
  %v5528 = vpop.f32.mrf.mxu0
  %v5529 = vadd.f32 %v5429, %v5528
  %v5530 = vpop.f32.mrf.mxu0
  %5531 = vmatprep.mubr.f32.mxu0 %v5021
  %5532 = vmatmul.mubr.f32.gmra.mxu0 %v5020
  %v5533 = vpop.f32.mrf.mxu0
  %v5534 = vadd.f32 %v5434, %v5533
  %v5535 = vpop.f32.mrf.mxu0
  %5536 = vdwg.mxu0
  %5537 = vmatprep.subr.mxu0 0.0
  %5538 = vmatpush1.msra.mxu0 %v370
  %5539 = vmatprep.subr.mxu0 0.0
  %5540 = vmatpush1.msra.mxu0 %v369
  %5541 = vmatprep.subr.mxu0 0.0
  %5542 = vmatpush1.msra.mxu0 %v368
  %5543 = vmatprep.subr.mxu0 0.0
  %5544 = vmatpush1.msra.mxu0 %v367
  %5545 = vmatprep.subr.mxu0 0.0
  %5546 = vmatpush1.msra.mxu0 %v366
  %5547 = vmatprep.subr.mxu0 0.0
  %5548 = vmatpush1.msra.mxu0 %v365
  %5549 = vmatprep.subr.mxu0 0.0
  %5550 = vmatpush1.msra.mxu0 %v364
  %5551 = vmatprep.subr.mxu0 0.0
  %5552 = vmatpush1.msra.mxu0 %v363
  %5553 = vmatprep.subr.mxu0 0.0
  %5554 = vmatpush1.msra.mxu0 %v362
  %5555 = vmatprep.subr.mxu0 0.0
  %5556 = vmatpush1.msra.mxu0 %v361
  %5557 = vmatprep.subr.mxu0 0.0
  %5558 = vmatpush1.msra.mxu0 %v360
  %5559 = vmatprep.subr.mxu0 0.0
  %5560 = vmatpush1.msra.mxu0 %v359
  %5561 = vmatprep.subr.mxu0 0.0
  %5562 = vmatpush1.msra.mxu0 %v358
  %5563 = vmatprep.subr.mxu0 0.0
  %5564 = vmatpush1.msra.mxu0 %v357
  %5565 = vmatprep.subr.mxu0 0.0
  %5566 = vmatpush1.msra.mxu0 %v356
  %5567 = vmatprep.subr.mxu0 0.0
  %5568 = vmatpush1.msra.mxu0 %v355
  %5569 = vmatprep.subr.mxu0 0.0
  %5570 = vmatpush2.msra.mxu0 %v386
  %5571 = vmatprep.subr.mxu0 0.0
  %5572 = vmatpush2.msra.mxu0 %v385
  %5573 = vmatprep.subr.mxu0 0.0
  %5574 = vmatpush2.msra.mxu0 %v384
  %5575 = vmatprep.subr.mxu0 0.0
  %5576 = vmatpush2.msra.mxu0 %v383
  %5577 = vmatprep.subr.mxu0 0.0
  %5578 = vmatpush2.msra.mxu0 %v382
  %5579 = vmatprep.subr.mxu0 0.0
  %5580 = vmatpush2.msra.mxu0 %v381
  %5581 = vmatprep.subr.mxu0 0.0
  %5582 = vmatpush2.msra.mxu0 %v380
  %5583 = vmatprep.subr.mxu0 0.0
  %5584 = vmatpush2.msra.mxu0 %v379
  %5585 = vmatprep.subr.mxu0 0.0
  %5586 = vmatpush2.msra.mxu0 %v378
  %5587 = vmatprep.subr.mxu0 0.0
  %5588 = vmatpush2.msra.mxu0 %v377
  %5589 = vmatprep.subr.mxu0 0.0
  %5590 = vmatpush2.msra.mxu0 %v376
  %5591 = vmatprep.subr.mxu0 0.0
  %5592 = vmatpush2.msra.mxu0 %v375
  %5593 = vmatprep.subr.mxu0 0.0
  %5594 = vmatpush2.msra.mxu0 %v374
  %5595 = vmatprep.subr.mxu0 0.0
  %5596 = vmatpush2.msra.mxu0 %v373
  %5597 = vmatprep.subr.mxu0 0.0
  %5598 = vmatpush2.msra.mxu0 %v372
  %5599 = vmatprep.subr.mxu0 0.0
  %5600 = vmatpush2.msra.mxu0 %v371
  %5601 = vmatprep.mubr.f32.mxu0 %v4873
  %5602 = vmatmul.mubr.f32.gmra.mxu0 %v4872
  %v5603 = vpop.f32.mrf.mxu0
  %v5604 = vadd.f32 %v5504, %v5603
  %v5605 = vpop.f32.mrf.mxu0
  %5606 = vmatprep.mubr.f32.mxu0 %v4898
  %5607 = vmatmul.mubr.f32.gmra.mxu0 %v4897
  %v5608 = vpop.f32.mrf.mxu0
  %v5609 = vadd.f32 %v5509, %v5608
  %v5610 = vpop.f32.mrf.mxu0
  %5611 = vmatprep.mubr.f32.mxu0 %v4923
  %5612 = vmatmul.mubr.f32.gmra.mxu0 %v4922
  %v5613 = vpop.f32.mrf.mxu0
  %v5614 = vadd.f32 %v5514, %v5613
  %v5615 = vpop.f32.mrf.mxu0
  %5616 = vmatprep.mubr.f32.mxu0 %v4948
  %5617 = vmatmul.mubr.f32.gmra.mxu0 %v4947
  %v5618 = vpop.f32.mrf.mxu0
  %v5619 = vadd.f32 %v5519, %v5618
  %v5620 = vpop.f32.mrf.mxu0
  %5621 = vmatprep.mubr.f32.mxu0 %v4973
  %5622 = vmatmul.mubr.f32.gmra.mxu0 %v4972
  %v5623 = vpop.f32.mrf.mxu0
  %v5624 = vadd.f32 %v5524, %v5623
  %v5625 = vpop.f32.mrf.mxu0
  %5626 = vmatprep.mubr.f32.mxu0 %v4998
  %5627 = vmatmul.mubr.f32.gmra.mxu0 %v4997
  %v5628 = vpop.f32.mrf.mxu0
  %v5629 = vadd.f32 %v5529, %v5628
  %v5630 = vpop.f32.mrf.mxu0
  %5631 = vmatprep.mubr.f32.mxu0 %v5023
  %5632 = vmatmul.mubr.f32.gmra.mxu0 %v5022
  %v5633 = vpop.f32.mrf.mxu0
  %v5634 = vadd.f32 %v5534, %v5633
  %v5635 = vpop.f32.mrf.mxu0
  %5636 = vdwg.mxu0
  %5637 = vmatprep.subr.mxu0 0.0
  %5638 = vmatpush1.msra.mxu0 %v402
  %5639 = vmatprep.subr.mxu0 0.0
  %5640 = vmatpush1.msra.mxu0 %v401
  %5641 = vmatprep.subr.mxu0 0.0
  %5642 = vmatpush1.msra.mxu0 %v400
  %5643 = vmatprep.subr.mxu0 0.0
  %5644 = vmatpush1.msra.mxu0 %v399
  %5645 = vmatprep.subr.mxu0 0.0
  %5646 = vmatpush1.msra.mxu0 %v398
  %5647 = vmatprep.subr.mxu0 0.0
  %5648 = vmatpush1.msra.mxu0 %v397
  %5649 = vmatprep.subr.mxu0 0.0
  %5650 = vmatpush1.msra.mxu0 %v396
  %5651 = vmatprep.subr.mxu0 0.0
  %5652 = vmatpush1.msra.mxu0 %v395
  %5653 = vmatprep.subr.mxu0 0.0
  %5654 = vmatpush1.msra.mxu0 %v394
  %5655 = vmatprep.subr.mxu0 0.0
  %5656 = vmatpush1.msra.mxu0 %v393
  %5657 = vmatprep.subr.mxu0 0.0
  %5658 = vmatpush1.msra.mxu0 %v392
  %5659 = vmatprep.subr.mxu0 0.0
  %5660 = vmatpush1.msra.mxu0 %v391
  %5661 = vmatprep.subr.mxu0 0.0
  %5662 = vmatpush1.msra.mxu0 %v390
  %5663 = vmatprep.subr.mxu0 0.0
  %5664 = vmatpush1.msra.mxu0 %v389
  %5665 = vmatprep.subr.mxu0 0.0
  %5666 = vmatpush1.msra.mxu0 %v388
  %5667 = vmatprep.subr.mxu0 0.0
  %5668 = vmatpush1.msra.mxu0 %v387
  %5669 = vmatprep.subr.mxu0 0.0
  %5670 = vmatpush2.msra.mxu0 %v418
  %5671 = vmatprep.subr.mxu0 0.0
  %5672 = vmatpush2.msra.mxu0 %v417
  %5673 = vmatprep.subr.mxu0 0.0
  %5674 = vmatpush2.msra.mxu0 %v416
  %5675 = vmatprep.subr.mxu0 0.0
  %5676 = vmatpush2.msra.mxu0 %v415
  %5677 = vmatprep.subr.mxu0 0.0
  %5678 = vmatpush2.msra.mxu0 %v414
  %5679 = vmatprep.subr.mxu0 0.0
  %5680 = vmatpush2.msra.mxu0 %v413
  %5681 = vmatprep.subr.mxu0 0.0
  %5682 = vmatpush2.msra.mxu0 %v412
  %5683 = vmatprep.subr.mxu0 0.0
  %5684 = vmatpush2.msra.mxu0 %v411
  %5685 = vmatprep.subr.mxu0 0.0
  %5686 = vmatpush2.msra.mxu0 %v410
  %5687 = vmatprep.subr.mxu0 0.0
  %5688 = vmatpush2.msra.mxu0 %v409
  %5689 = vmatprep.subr.mxu0 0.0
  %5690 = vmatpush2.msra.mxu0 %v408
  %5691 = vmatprep.subr.mxu0 0.0
  %5692 = vmatpush2.msra.mxu0 %v407
  %5693 = vmatprep.subr.mxu0 0.0
  %5694 = vmatpush2.msra.mxu0 %v406
  %5695 = vmatprep.subr.mxu0 0.0
  %5696 = vmatpush2.msra.mxu0 %v405
  %5697 = vmatprep.subr.mxu0 0.0
  %5698 = vmatpush2.msra.mxu0 %v404
  %5699 = vmatprep.subr.mxu0 0.0
  %5700 = vmatpush2.msra.mxu0 %v403
  %5701 = vmatprep.mubr.f32.mxu0 %v4875
  %5702 = vmatmul.mubr.f32.gmra.mxu0 %v4874
  %v5703 = vpop.f32.mrf.mxu0
  %v5704 = vadd.f32 %v5604, %v5703
  %v5705 = vpop.f32.mrf.mxu0
  %5706 = vmatprep.mubr.f32.mxu0 %v4900
  %5707 = vmatmul.mubr.f32.gmra.mxu0 %v4899
  %v5708 = vpop.f32.mrf.mxu0
  %v5709 = vadd.f32 %v5609, %v5708
  %v5710 = vpop.f32.mrf.mxu0
  %5711 = vmatprep.mubr.f32.mxu0 %v4925
  %5712 = vmatmul.mubr.f32.gmra.mxu0 %v4924
  %v5713 = vpop.f32.mrf.mxu0
  %v5714 = vadd.f32 %v5614, %v5713
  %v5715 = vpop.f32.mrf.mxu0
  %5716 = vmatprep.mubr.f32.mxu0 %v4950
  %5717 = vmatmul.mubr.f32.gmra.mxu0 %v4949
  %v5718 = vpop.f32.mrf.mxu0
  %v5719 = vadd.f32 %v5619, %v5718
  %v5720 = vpop.f32.mrf.mxu0
  %5721 = vmatprep.mubr.f32.mxu0 %v4975
  %5722 = vmatmul.mubr.f32.gmra.mxu0 %v4974
  %v5723 = vpop.f32.mrf.mxu0
  %v5724 = vadd.f32 %v5624, %v5723
  %v5725 = vpop.f32.mrf.mxu0
  %5726 = vmatprep.mubr.f32.mxu0 %v5000
  %5727 = vmatmul.mubr.f32.gmra.mxu0 %v4999
  %v5728 = vpop.f32.mrf.mxu0
  %v5729 = vadd.f32 %v5629, %v5728
  %v5730 = vpop.f32.mrf.mxu0
  %5731 = vmatprep.mubr.f32.mxu0 %v5025
  %5732 = vmatmul.mubr.f32.gmra.mxu0 %v5024
  %v5733 = vpop.f32.mrf.mxu0
  %v5734 = vadd.f32 %v5634, %v5733
  %v5735 = vpop.f32.mrf.mxu0
  %5736 = vdwg.mxu0
  %5737 = vmatprep.subr.mxu0 0.0
  %5738 = vmatpush1.msra.mxu0 %v434
  %5739 = vmatprep.subr.mxu0 0.0
  %5740 = vmatpush1.msra.mxu0 %v433
  %5741 = vmatprep.subr.mxu0 0.0
  %5742 = vmatpush1.msra.mxu0 %v432
  %5743 = vmatprep.subr.mxu0 0.0
  %5744 = vmatpush1.msra.mxu0 %v431
  %5745 = vmatprep.subr.mxu0 0.0
  %5746 = vmatpush1.msra.mxu0 %v430
  %5747 = vmatprep.subr.mxu0 0.0
  %5748 = vmatpush1.msra.mxu0 %v429
  %5749 = vmatprep.subr.mxu0 0.0
  %5750 = vmatpush1.msra.mxu0 %v428
  %5751 = vmatprep.subr.mxu0 0.0
  %5752 = vmatpush1.msra.mxu0 %v427
  %5753 = vmatprep.subr.mxu0 0.0
  %5754 = vmatpush1.msra.mxu0 %v426
  %5755 = vmatprep.subr.mxu0 0.0
  %5756 = vmatpush1.msra.mxu0 %v425
  %5757 = vmatprep.subr.mxu0 0.0
  %5758 = vmatpush1.msra.mxu0 %v424
  %5759 = vmatprep.subr.mxu0 0.0
  %5760 = vmatpush1.msra.mxu0 %v423
  %5761 = vmatprep.subr.mxu0 0.0
  %5762 = vmatpush1.msra.mxu0 %v422
  %5763 = vmatprep.subr.mxu0 0.0
  %5764 = vmatpush1.msra.mxu0 %v421
  %5765 = vmatprep.subr.mxu0 0.0
  %5766 = vmatpush1.msra.mxu0 %v420
  %5767 = vmatprep.subr.mxu0 0.0
  %5768 = vmatpush1.msra.mxu0 %v419
  %5769 = vmatprep.subr.mxu0 0.0
  %5770 = vmatpush2.msra.mxu0 %v450
  %5771 = vmatprep.subr.mxu0 0.0
  %5772 = vmatpush2.msra.mxu0 %v449
  %5773 = vmatprep.subr.mxu0 0.0
  %5774 = vmatpush2.msra.mxu0 %v448
  %5775 = vmatprep.subr.mxu0 0.0
  %5776 = vmatpush2.msra.mxu0 %v447
  %5777 = vmatprep.subr.mxu0 0.0
  %5778 = vmatpush2.msra.mxu0 %v446
  %5779 = vmatprep.subr.mxu0 0.0
  %5780 = vmatpush2.msra.mxu0 %v445
  %5781 = vmatprep.subr.mxu0 0.0
  %5782 = vmatpush2.msra.mxu0 %v444
  %5783 = vmatprep.subr.mxu0 0.0
  %5784 = vmatpush2.msra.mxu0 %v443
  %5785 = vmatprep.subr.mxu0 0.0
  %5786 = vmatpush2.msra.mxu0 %v442
  %5787 = vmatprep.subr.mxu0 0.0
  %5788 = vmatpush2.msra.mxu0 %v441
  %5789 = vmatprep.subr.mxu0 0.0
  %5790 = vmatpush2.msra.mxu0 %v440
  %5791 = vmatprep.subr.mxu0 0.0
  %5792 = vmatpush2.msra.mxu0 %v439
  %5793 = vmatprep.subr.mxu0 0.0
  %5794 = vmatpush2.msra.mxu0 %v438
  %5795 = vmatprep.subr.mxu0 0.0
  %5796 = vmatpush2.msra.mxu0 %v437
  %5797 = vmatprep.subr.mxu0 0.0
  %5798 = vmatpush2.msra.mxu0 %v436
  %5799 = vmatprep.subr.mxu0 0.0
  %5800 = vmatpush2.msra.mxu0 %v435
  %5801 = vmatprep.mubr.f32.mxu0 %v4877
  %5802 = vmatmul.mubr.f32.gmra.mxu0 %v4876
  %v5803 = vpop.f32.mrf.mxu0
  %v5804 = vadd.f32 %v5704, %v5803
  %v5805 = vpop.f32.mrf.mxu0
  %5806 = vmatprep.mubr.f32.mxu0 %v4902
  %5807 = vmatmul.mubr.f32.gmra.mxu0 %v4901
  %v5808 = vpop.f32.mrf.mxu0
  %v5809 = vadd.f32 %v5709, %v5808
  %v5810 = vpop.f32.mrf.mxu0
  %5811 = vmatprep.mubr.f32.mxu0 %v4927
  %5812 = vmatmul.mubr.f32.gmra.mxu0 %v4926
  %v5813 = vpop.f32.mrf.mxu0
  %v5814 = vadd.f32 %v5714, %v5813
  %v5815 = vpop.f32.mrf.mxu0
  %5816 = vmatprep.mubr.f32.mxu0 %v4952
  %5817 = vmatmul.mubr.f32.gmra.mxu0 %v4951
  %v5818 = vpop.f32.mrf.mxu0
  %v5819 = vadd.f32 %v5719, %v5818
  %v5820 = vpop.f32.mrf.mxu0
  %5821 = vmatprep.mubr.f32.mxu0 %v4977
  %5822 = vmatmul.mubr.f32.gmra.mxu0 %v4976
  %v5823 = vpop.f32.mrf.mxu0
  %v5824 = vadd.f32 %v5724, %v5823
  %v5825 = vpop.f32.mrf.mxu0
  %5826 = vmatprep.mubr.f32.mxu0 %v5002
  %5827 = vmatmul.mubr.f32.gmra.mxu0 %v5001
  %v5828 = vpop.f32.mrf.mxu0
  %v5829 = vadd.f32 %v5729, %v5828
  %v5830 = vpop.f32.mrf.mxu0
  %5831 = vmatprep.mubr.f32.mxu0 %v5027
  %5832 = vmatmul.mubr.f32.gmra.mxu0 %v5026
  %v5833 = vpop.f32.mrf.mxu0
  %v5834 = vadd.f32 %v5734, %v5833
  %v5835 = vpop.f32.mrf.mxu0
  %5836 = vdwg.mxu0
  %5837 = vmatprep.subr.mxu0 0.0
  %5838 = vmatpush1.msra.mxu0 %v466
  %5839 = vmatprep.subr.mxu0 0.0
  %5840 = vmatpush1.msra.mxu0 %v465
  %5841 = vmatprep.subr.mxu0 0.0
  %5842 = vmatpush1.msra.mxu0 %v464
  %5843 = vmatprep.subr.mxu0 0.0
  %5844 = vmatpush1.msra.mxu0 %v463
  %5845 = vmatprep.subr.mxu0 0.0
  %5846 = vmatpush1.msra.mxu0 %v462
  %5847 = vmatprep.subr.mxu0 0.0
  %5848 = vmatpush1.msra.mxu0 %v461
  %5849 = vmatprep.subr.mxu0 0.0
  %5850 = vmatpush1.msra.mxu0 %v460
  %5851 = vmatprep.subr.mxu0 0.0
  %5852 = vmatpush1.msra.mxu0 %v459
  %5853 = vmatprep.subr.mxu0 0.0
  %5854 = vmatpush1.msra.mxu0 %v458
  %5855 = vmatprep.subr.mxu0 0.0
  %5856 = vmatpush1.msra.mxu0 %v457
  %5857 = vmatprep.subr.mxu0 0.0
  %5858 = vmatpush1.msra.mxu0 %v456
  %5859 = vmatprep.subr.mxu0 0.0
  %5860 = vmatpush1.msra.mxu0 %v455
  %5861 = vmatprep.subr.mxu0 0.0
  %5862 = vmatpush1.msra.mxu0 %v454
  %5863 = vmatprep.subr.mxu0 0.0
  %5864 = vmatpush1.msra.mxu0 %v453
  %5865 = vmatprep.subr.mxu0 0.0
  %5866 = vmatpush1.msra.mxu0 %v452
  %5867 = vmatprep.subr.mxu0 0.0
  %5868 = vmatpush1.msra.mxu0 %v451
  %5869 = vmatprep.subr.mxu0 0.0
  %5870 = vmatpush2.msra.mxu0 %v482
  %5871 = vmatprep.subr.mxu0 0.0
  %5872 = vmatpush2.msra.mxu0 %v481
  %5873 = vmatprep.subr.mxu0 0.0
  %5874 = vmatpush2.msra.mxu0 %v480
  %5875 = vmatprep.subr.mxu0 0.0
  %5876 = vmatpush2.msra.mxu0 %v479
  %5877 = vmatprep.subr.mxu0 0.0
  %5878 = vmatpush2.msra.mxu0 %v478
  %5879 = vmatprep.subr.mxu0 0.0
  %5880 = vmatpush2.msra.mxu0 %v477
  %5881 = vmatprep.subr.mxu0 0.0
  %5882 = vmatpush2.msra.mxu0 %v476
  %5883 = vmatprep.subr.mxu0 0.0
  %5884 = vmatpush2.msra.mxu0 %v475
  %5885 = vmatprep.subr.mxu0 0.0
  %5886 = vmatpush2.msra.mxu0 %v474
  %5887 = vmatprep.subr.mxu0 0.0
  %5888 = vmatpush2.msra.mxu0 %v473
  %5889 = vmatprep.subr.mxu0 0.0
  %5890 = vmatpush2.msra.mxu0 %v472
  %5891 = vmatprep.subr.mxu0 0.0
  %5892 = vmatpush2.msra.mxu0 %v471
  %5893 = vmatprep.subr.mxu0 0.0
  %5894 = vmatpush2.msra.mxu0 %v470
  %5895 = vmatprep.subr.mxu0 0.0
  %5896 = vmatpush2.msra.mxu0 %v469
  %5897 = vmatprep.subr.mxu0 0.0
  %5898 = vmatpush2.msra.mxu0 %v468
  %5899 = vmatprep.subr.mxu0 0.0
  %5900 = vmatpush2.msra.mxu0 %v467
  %5901 = vmatprep.mubr.f32.mxu0 %v4879
  %5902 = vmatmul.mubr.f32.gmra.mxu0 %v4878
  %v5903 = vpop.f32.mrf.mxu0
  %v5904 = vadd.f32 %v5804, %v5903
  %v5905 = vpop.f32.mrf.mxu0
  %5906 = vmatprep.mubr.f32.mxu0 %v4904
  %5907 = vmatmul.mubr.f32.gmra.mxu0 %v4903
  %v5908 = vpop.f32.mrf.mxu0
  %v5909 = vadd.f32 %v5809, %v5908
  %v5910 = vpop.f32.mrf.mxu0
  %5911 = vmatprep.mubr.f32.mxu0 %v4929
  %5912 = vmatmul.mubr.f32.gmra.mxu0 %v4928
  %v5913 = vpop.f32.mrf.mxu0
  %v5914 = vadd.f32 %v5814, %v5913
  %v5915 = vpop.f32.mrf.mxu0
  %5916 = vmatprep.mubr.f32.mxu0 %v4954
  %5917 = vmatmul.mubr.f32.gmra.mxu0 %v4953
  %v5918 = vpop.f32.mrf.mxu0
  %v5919 = vadd.f32 %v5819, %v5918
  %v5920 = vpop.f32.mrf.mxu0
  %5921 = vmatprep.mubr.f32.mxu0 %v4979
  %5922 = vmatmul.mubr.f32.gmra.mxu0 %v4978
  %v5923 = vpop.f32.mrf.mxu0
  %v5924 = vadd.f32 %v5824, %v5923
  %v5925 = vpop.f32.mrf.mxu0
  %5926 = vmatprep.mubr.f32.mxu0 %v5004
  %5927 = vmatmul.mubr.f32.gmra.mxu0 %v5003
  %v5928 = vpop.f32.mrf.mxu0
  %v5929 = vadd.f32 %v5829, %v5928
  %v5930 = vpop.f32.mrf.mxu0
  %5931 = vmatprep.mubr.f32.mxu0 %v5029
  %5932 = vmatmul.mubr.f32.gmra.mxu0 %v5028
  %v5933 = vpop.f32.mrf.mxu0
  %v5934 = vadd.f32 %v5834, %v5933
  %v5935 = vpop.f32.mrf.mxu0
  %5936 = vdwg.mxu0
  %5937 = vmatprep.subr.mxu0 0.0
  %5938 = vmatpush1.msra.mxu0 %v498
  %5939 = vmatprep.subr.mxu0 0.0
  %5940 = vmatpush1.msra.mxu0 %v497
  %5941 = vmatprep.subr.mxu0 0.0
  %5942 = vmatpush1.msra.mxu0 %v496
  %5943 = vmatprep.subr.mxu0 0.0
  %5944 = vmatpush1.msra.mxu0 %v495
  %5945 = vmatprep.subr.mxu0 0.0
  %5946 = vmatpush1.msra.mxu0 %v494
  %5947 = vmatprep.subr.mxu0 0.0
  %5948 = vmatpush1.msra.mxu0 %v493
  %5949 = vmatprep.subr.mxu0 0.0
  %5950 = vmatpush1.msra.mxu0 %v492
  %5951 = vmatprep.subr.mxu0 0.0
  %5952 = vmatpush1.msra.mxu0 %v491
  %5953 = vmatprep.subr.mxu0 0.0
  %5954 = vmatpush1.msra.mxu0 %v490
  %5955 = vmatprep.subr.mxu0 0.0
  %5956 = vmatpush1.msra.mxu0 %v489
  %5957 = vmatprep.subr.mxu0 0.0
  %5958 = vmatpush1.msra.mxu0 %v488
  %5959 = vmatprep.subr.mxu0 0.0
  %5960 = vmatpush1.msra.mxu0 %v487
  %5961 = vmatprep.subr.mxu0 0.0
  %5962 = vmatpush1.msra.mxu0 %v486
  %5963 = vmatprep.subr.mxu0 0.0
  %5964 = vmatpush1.msra.mxu0 %v485
  %5965 = vmatprep.subr.mxu0 0.0
  %5966 = vmatpush1.msra.mxu0 %v484
  %5967 = vmatprep.subr.mxu0 0.0
  %5968 = vmatpush1.msra.mxu0 %v483
  %5969 = vmatprep.subr.mxu0 0.0
  %5970 = vmatpush2.msra.mxu0 %v514
  %5971 = vmatprep.subr.mxu0 0.0
  %5972 = vmatpush2.msra.mxu0 %v513
  %5973 = vmatprep.subr.mxu0 0.0
  %5974 = vmatpush2.msra.mxu0 %v512
  %5975 = vmatprep.subr.mxu0 0.0
  %5976 = vmatpush2.msra.mxu0 %v511
  %5977 = vmatprep.subr.mxu0 0.0
  %5978 = vmatpush2.msra.mxu0 %v510
  %5979 = vmatprep.subr.mxu0 0.0
  %5980 = vmatpush2.msra.mxu0 %v509
  %5981 = vmatprep.subr.mxu0 0.0
  %5982 = vmatpush2.msra.mxu0 %v508
  %5983 = vmatprep.subr.mxu0 0.0
  %5984 = vmatpush2.msra.mxu0 %v507
  %5985 = vmatprep.subr.mxu0 0.0
  %5986 = vmatpush2.msra.mxu0 %v506
  %5987 = vmatprep.subr.mxu0 0.0
  %5988 = vmatpush2.msra.mxu0 %v505
  %5989 = vmatprep.subr.mxu0 0.0
  %5990 = vmatpush2.msra.mxu0 %v504
  %5991 = vmatprep.subr.mxu0 0.0
  %5992 = vmatpush2.msra.mxu0 %v503
  %5993 = vmatprep.subr.mxu0 0.0
  %5994 = vmatpush2.msra.mxu0 %v502
  %5995 = vmatprep.subr.mxu0 0.0
  %5996 = vmatpush2.msra.mxu0 %v501
  %5997 = vmatprep.subr.mxu0 0.0
  %5998 = vmatpush2.msra.mxu0 %v500
  %5999 = vmatprep.subr.mxu0 0.0
  %6000 = vmatpush2.msra.mxu0 %v499
  %6001 = vmatprep.mubr.f32.mxu0 %v4881
  %6002 = vmatmul.mubr.f32.gmra.mxu0 %v4880
  %v6003 = vpop.f32.mrf.mxu0
  %v6004 = vadd.f32 %v5904, %v6003
  %v6005 = vpop.f32.mrf.mxu0
  %6006 = vmatprep.mubr.f32.mxu0 %v4906
  %6007 = vmatmul.mubr.f32.gmra.mxu0 %v4905
  %v6008 = vpop.f32.mrf.mxu0
  %v6009 = vadd.f32 %v5909, %v6008
  %v6010 = vpop.f32.mrf.mxu0
  %6011 = vmatprep.mubr.f32.mxu0 %v4931
  %6012 = vmatmul.mubr.f32.gmra.mxu0 %v4930
  %v6013 = vpop.f32.mrf.mxu0
  %v6014 = vadd.f32 %v5914, %v6013
  %v6015 = vpop.f32.mrf.mxu0
  %6016 = vmatprep.mubr.f32.mxu0 %v4956
  %6017 = vmatmul.mubr.f32.gmra.mxu0 %v4955
  %v6018 = vpop.f32.mrf.mxu0
  %v6019 = vadd.f32 %v5919, %v6018
  %v6020 = vpop.f32.mrf.mxu0
  %6021 = vmatprep.mubr.f32.mxu0 %v4981
  %6022 = vmatmul.mubr.f32.gmra.mxu0 %v4980
  %v6023 = vpop.f32.mrf.mxu0
  %v6024 = vadd.f32 %v5924, %v6023
  %v6025 = vpop.f32.mrf.mxu0
  %6026 = vmatprep.mubr.f32.mxu0 %v5006
  %6027 = vmatmul.mubr.f32.gmra.mxu0 %v5005
  %v6028 = vpop.f32.mrf.mxu0
  %v6029 = vadd.f32 %v5929, %v6028
  %v6030 = vpop.f32.mrf.mxu0
  %6031 = vmatprep.mubr.f32.mxu0 %v5031
  %6032 = vmatmul.mubr.f32.gmra.mxu0 %v5030
  %v6033 = vpop.f32.mrf.mxu0
  %v6034 = vadd.f32 %v5934, %v6033
  %v6035 = vpop.f32.mrf.mxu0
  %6036 = vdwg.mxu0
  %6037 = vmatprep.subr.mxu0 0.0
  %6038 = vmatpush1.msra.mxu0 %v530
  %6039 = vmatprep.subr.mxu0 0.0
  %6040 = vmatpush1.msra.mxu0 %v529
  %6041 = vmatprep.subr.mxu0 0.0
  %6042 = vmatpush1.msra.mxu0 %v528
  %6043 = vmatprep.subr.mxu0 0.0
  %6044 = vmatpush1.msra.mxu0 %v527
  %6045 = vmatprep.subr.mxu0 0.0
  %6046 = vmatpush1.msra.mxu0 %v526
  %6047 = vmatprep.subr.mxu0 0.0
  %6048 = vmatpush1.msra.mxu0 %v525
  %6049 = vmatprep.subr.mxu0 0.0
  %6050 = vmatpush1.msra.mxu0 %v524
  %6051 = vmatprep.subr.mxu0 0.0
  %6052 = vmatpush1.msra.mxu0 %v523
  %6053 = vmatprep.subr.mxu0 0.0
  %6054 = vmatpush1.msra.mxu0 %v522
  %6055 = vmatprep.subr.mxu0 0.0
  %6056 = vmatpush1.msra.mxu0 %v521
  %6057 = vmatprep.subr.mxu0 0.0
  %6058 = vmatpush1.msra.mxu0 %v520
  %6059 = vmatprep.subr.mxu0 0.0
  %6060 = vmatpush1.msra.mxu0 %v519
  %6061 = vmatprep.subr.mxu0 0.0
  %6062 = vmatpush1.msra.mxu0 %v518
  %6063 = vmatprep.subr.mxu0 0.0
  %6064 = vmatpush1.msra.mxu0 %v517
  %6065 = vmatprep.subr.mxu0 0.0
  %6066 = vmatpush1.msra.mxu0 %v516
  %6067 = vmatprep.subr.mxu0 0.0
  %6068 = vmatpush1.msra.mxu0 %v515
  %6069 = vmatprep.subr.mxu0 0.0
  %6070 = vmatpush2.msra.mxu0 %v546
  %6071 = vmatprep.subr.mxu0 0.0
  %6072 = vmatpush2.msra.mxu0 %v545
  %6073 = vmatprep.subr.mxu0 0.0
  %6074 = vmatpush2.msra.mxu0 %v544
  %6075 = vmatprep.subr.mxu0 0.0
  %6076 = vmatpush2.msra.mxu0 %v543
  %6077 = vmatprep.subr.mxu0 0.0
  %6078 = vmatpush2.msra.mxu0 %v542
  %6079 = vmatprep.subr.mxu0 0.0
  %6080 = vmatpush2.msra.mxu0 %v541
  %6081 = vmatprep.subr.mxu0 0.0
  %6082 = vmatpush2.msra.mxu0 %v540
  %6083 = vmatprep.subr.mxu0 0.0
  %6084 = vmatpush2.msra.mxu0 %v539
  %6085 = vmatprep.subr.mxu0 0.0
  %6086 = vmatpush2.msra.mxu0 %v538
  %6087 = vmatprep.subr.mxu0 0.0
  %6088 = vmatpush2.msra.mxu0 %v537
  %6089 = vmatprep.subr.mxu0 0.0
  %6090 = vmatpush2.msra.mxu0 %v536
  %6091 = vmatprep.subr.mxu0 0.0
  %6092 = vmatpush2.msra.mxu0 %v535
  %6093 = vmatprep.subr.mxu0 0.0
  %6094 = vmatpush2.msra.mxu0 %v534
  %6095 = vmatprep.subr.mxu0 0.0
  %6096 = vmatpush2.msra.mxu0 %v533
  %6097 = vmatprep.subr.mxu0 0.0
  %6098 = vmatpush2.msra.mxu0 %v532
  %6099 = vmatprep.subr.mxu0 0.0
  %6100 = vmatpush2.msra.mxu0 %v531
  %6101 = vmatprep.mubr.f32.mxu0 %v4883
  %6102 = vmatmul.mubr.f32.gmra.mxu0 %v4882
  %v6103 = vpop.f32.mrf.mxu0
  %v6104 = vadd.f32 %v6004, %v6103
  %v6105 = vpop.f32.mrf.mxu0
  %6106 = vmatprep.mubr.f32.mxu0 %v4908
  %6107 = vmatmul.mubr.f32.gmra.mxu0 %v4907
  %v6108 = vpop.f32.mrf.mxu0
  %v6109 = vadd.f32 %v6009, %v6108
  %v6110 = vpop.f32.mrf.mxu0
  %6111 = vmatprep.mubr.f32.mxu0 %v4933
  %6112 = vmatmul.mubr.f32.gmra.mxu0 %v4932
  %v6113 = vpop.f32.mrf.mxu0
  %v6114 = vadd.f32 %v6014, %v6113
  %v6115 = vpop.f32.mrf.mxu0
  %6116 = vmatprep.mubr.f32.mxu0 %v4958
  %6117 = vmatmul.mubr.f32.gmra.mxu0 %v4957
  %v6118 = vpop.f32.mrf.mxu0
  %v6119 = vadd.f32 %v6019, %v6118
  %v6120 = vpop.f32.mrf.mxu0
  %6121 = vmatprep.mubr.f32.mxu0 %v4983
  %6122 = vmatmul.mubr.f32.gmra.mxu0 %v4982
  %v6123 = vpop.f32.mrf.mxu0
  %v6124 = vadd.f32 %v6024, %v6123
  %v6125 = vpop.f32.mrf.mxu0
  %6126 = vmatprep.mubr.f32.mxu0 %v5008
  %6127 = vmatmul.mubr.f32.gmra.mxu0 %v5007
  %v6128 = vpop.f32.mrf.mxu0
  %v6129 = vadd.f32 %v6029, %v6128
  %v6130 = vpop.f32.mrf.mxu0
  %6131 = vmatprep.mubr.f32.mxu0 %v5033
  %6132 = vmatmul.mubr.f32.gmra.mxu0 %v5032
  %v6133 = vpop.f32.mrf.mxu0
  %v6134 = vadd.f32 %v6034, %v6133
  %v6135 = vpop.f32.mrf.mxu0
  %6136 = vdwg.mxu0
  %6137 = vmatprep.subr.mxu0 0.0
  %6138 = vmatpush1.msra.mxu0 %v562
  %6139 = vmatprep.subr.mxu0 0.0
  %6140 = vmatpush1.msra.mxu0 %v561
  %6141 = vmatprep.subr.mxu0 0.0
  %6142 = vmatpush1.msra.mxu0 %v560
  %6143 = vmatprep.subr.mxu0 0.0
  %6144 = vmatpush1.msra.mxu0 %v559
  %6145 = vmatprep.subr.mxu0 0.0
  %6146 = vmatpush1.msra.mxu0 %v558
  %6147 = vmatprep.subr.mxu0 0.0
  %6148 = vmatpush1.msra.mxu0 %v557
  %6149 = vmatprep.subr.mxu0 0.0
  %6150 = vmatpush1.msra.mxu0 %v556
  %6151 = vmatprep.subr.mxu0 0.0
  %6152 = vmatpush1.msra.mxu0 %v555
  %6153 = vmatprep.subr.mxu0 0.0
  %6154 = vmatpush1.msra.mxu0 %v554
  %6155 = vmatprep.subr.mxu0 0.0
  %6156 = vmatpush1.msra.mxu0 %v553
  %6157 = vmatprep.subr.mxu0 0.0
  %6158 = vmatpush1.msra.mxu0 %v552
  %6159 = vmatprep.subr.mxu0 0.0
  %6160 = vmatpush1.msra.mxu0 %v551
  %6161 = vmatprep.subr.mxu0 0.0
  %6162 = vmatpush1.msra.mxu0 %v550
  %6163 = vmatprep.subr.mxu0 0.0
  %6164 = vmatpush1.msra.mxu0 %v549
  %6165 = vmatprep.subr.mxu0 0.0
  %6166 = vmatpush1.msra.mxu0 %v548
  %6167 = vmatprep.subr.mxu0 0.0
  %6168 = vmatpush1.msra.mxu0 %v547
  %6169 = vmatprep.subr.mxu0 0.0
  %6170 = vmatpush2.msra.mxu0 %v578
  %6171 = vmatprep.subr.mxu0 0.0
  %6172 = vmatpush2.msra.mxu0 %v577
  %6173 = vmatprep.subr.mxu0 0.0
  %6174 = vmatpush2.msra.mxu0 %v576
  %6175 = vmatprep.subr.mxu0 0.0
  %6176 = vmatpush2.msra.mxu0 %v575
  %6177 = vmatprep.subr.mxu0 0.0
  %6178 = vmatpush2.msra.mxu0 %v574
  %6179 = vmatprep.subr.mxu0 0.0
  %6180 = vmatpush2.msra.mxu0 %v573
  %6181 = vmatprep.subr.mxu0 0.0
  %6182 = vmatpush2.msra.mxu0 %v572
  %6183 = vmatprep.subr.mxu0 0.0
  %6184 = vmatpush2.msra.mxu0 %v571
  %6185 = vmatprep.subr.mxu0 0.0
  %6186 = vmatpush2.msra.mxu0 %v570
  %6187 = vmatprep.subr.mxu0 0.0
  %6188 = vmatpush2.msra.mxu0 %v569
  %6189 = vmatprep.subr.mxu0 0.0
  %6190 = vmatpush2.msra.mxu0 %v568
  %6191 = vmatprep.subr.mxu0 0.0
  %6192 = vmatpush2.msra.mxu0 %v567
  %6193 = vmatprep.subr.mxu0 0.0
  %6194 = vmatpush2.msra.mxu0 %v566
  %6195 = vmatprep.subr.mxu0 0.0
  %6196 = vmatpush2.msra.mxu0 %v565
  %6197 = vmatprep.subr.mxu0 0.0
  %6198 = vmatpush2.msra.mxu0 %v564
  %6199 = vmatprep.subr.mxu0 0.0
  %6200 = vmatpush2.msra.mxu0 %v563
  %6201 = vmatprep.mubr.f32.mxu0 %v4885
  %6202 = vmatmul.mubr.f32.gmra.mxu0 %v4884
  %v6203 = vpop.f32.mrf.mxu0
  %v6204 = vadd.f32 %v6104, %v6203
  %v6205 = vpop.f32.mrf.mxu0
  %6206 = vmatprep.mubr.f32.mxu0 %v4910
  %6207 = vmatmul.mubr.f32.gmra.mxu0 %v4909
  %v6208 = vpop.f32.mrf.mxu0
  %v6209 = vadd.f32 %v6109, %v6208
  %v6210 = vpop.f32.mrf.mxu0
  %6211 = vmatprep.mubr.f32.mxu0 %v4935
  %6212 = vmatmul.mubr.f32.gmra.mxu0 %v4934
  %v6213 = vpop.f32.mrf.mxu0
  %v6214 = vadd.f32 %v6114, %v6213
  %v6215 = vpop.f32.mrf.mxu0
  %6216 = vmatprep.mubr.f32.mxu0 %v4960
  %6217 = vmatmul.mubr.f32.gmra.mxu0 %v4959
  %v6218 = vpop.f32.mrf.mxu0
  %v6219 = vadd.f32 %v6119, %v6218
  %v6220 = vpop.f32.mrf.mxu0
  %6221 = vmatprep.mubr.f32.mxu0 %v4985
  %6222 = vmatmul.mubr.f32.gmra.mxu0 %v4984
  %v6223 = vpop.f32.mrf.mxu0
  %v6224 = vadd.f32 %v6124, %v6223
  %v6225 = vpop.f32.mrf.mxu0
  %6226 = vmatprep.mubr.f32.mxu0 %v5010
  %6227 = vmatmul.mubr.f32.gmra.mxu0 %v5009
  %v6228 = vpop.f32.mrf.mxu0
  %v6229 = vadd.f32 %v6129, %v6228
  %v6230 = vpop.f32.mrf.mxu0
  %6231 = vmatprep.mubr.f32.mxu0 %v5035
  %6232 = vmatmul.mubr.f32.gmra.mxu0 %v5034
  %v6233 = vpop.f32.mrf.mxu0
  %v6234 = vadd.f32 %v6134, %v6233
  %v6235 = vpop.f32.mrf.mxu0
  %6236 = vdwg.mxu0
  %6237 = vmatprep.subr.mxu0 0.0
  %6238 = vmatpush1.msra.mxu0 %v594
  %6239 = vmatprep.subr.mxu0 0.0
  %6240 = vmatpush1.msra.mxu0 %v593
  %6241 = vmatprep.subr.mxu0 0.0
  %6242 = vmatpush1.msra.mxu0 %v592
  %6243 = vmatprep.subr.mxu0 0.0
  %6244 = vmatpush1.msra.mxu0 %v591
  %6245 = vmatprep.subr.mxu0 0.0
  %6246 = vmatpush1.msra.mxu0 %v590
  %6247 = vmatprep.subr.mxu0 0.0
  %6248 = vmatpush1.msra.mxu0 %v589
  %6249 = vmatprep.subr.mxu0 0.0
  %6250 = vmatpush1.msra.mxu0 %v588
  %6251 = vmatprep.subr.mxu0 0.0
  %6252 = vmatpush1.msra.mxu0 %v587
  %6253 = vmatprep.subr.mxu0 0.0
  %6254 = vmatpush1.msra.mxu0 %v586
  %6255 = vmatprep.subr.mxu0 0.0
  %6256 = vmatpush1.msra.mxu0 %v585
  %6257 = vmatprep.subr.mxu0 0.0
  %6258 = vmatpush1.msra.mxu0 %v584
  %6259 = vmatprep.subr.mxu0 0.0
  %6260 = vmatpush1.msra.mxu0 %v583
  %6261 = vmatprep.subr.mxu0 0.0
  %6262 = vmatpush1.msra.mxu0 %v582
  %6263 = vmatprep.subr.mxu0 0.0
  %6264 = vmatpush1.msra.mxu0 %v581
  %6265 = vmatprep.subr.mxu0 0.0
  %6266 = vmatpush1.msra.mxu0 %v580
  %6267 = vmatprep.subr.mxu0 0.0
  %6268 = vmatpush1.msra.mxu0 %v579
  %6269 = vmatprep.subr.mxu0 0.0
  %6270 = vmatpush2.msra.mxu0 0.0
  %6271 = vmatprep.subr.mxu0 0.0
  %6272 = vmatpush2.msra.mxu0 0.0
  %6273 = vmatprep.subr.mxu0 0.0
  %6274 = vmatpush2.msra.mxu0 0.0
  %6275 = vmatprep.subr.mxu0 0.0
  %6276 = vmatpush2.msra.mxu0 0.0
  %6277 = vmatprep.subr.mxu0 0.0
  %6278 = vmatpush2.msra.mxu0 0.0
  %6279 = vmatprep.subr.mxu0 0.0
  %6280 = vmatpush2.msra.mxu0 0.0
  %6281 = vmatprep.subr.mxu0 0.0
  %6282 = vmatpush2.msra.mxu0 0.0
  %6283 = vmatprep.subr.mxu0 0.0
  %6284 = vmatpush2.msra.mxu0 0.0
  %6285 = vmatprep.subr.mxu0 0.0
  %6286 = vmatpush2.msra.mxu0 0.0
  %6287 = vmatprep.subr.mxu0 0.0
  %6288 = vmatpush2.msra.mxu0 0.0
  %6289 = vmatprep.subr.mxu0 0.0
  %6290 = vmatpush2.msra.mxu0 0.0
  %6291 = vmatprep.subr.mxu0 0.0
  %6292 = vmatpush2.msra.mxu0 0.0
  %6293 = vmatprep.subr.mxu0 0.0
  %6294 = vmatpush2.msra.mxu0 0.0
  %6295 = vmatprep.subr.mxu0 0.0
  %6296 = vmatpush2.msra.mxu0 0.0
  %6297 = vmatprep.subr.mxu0 0.0
  %6298 = vmatpush2.msra.mxu0 0.0
  %6299 = vmatprep.subr.mxu0 0.0
  %6300 = vmatpush2.msra.mxu0 0.0
  %6301 = vmatprep.mubr.f32.mxu0 0.0
  %6302 = vmatmul.mubr.f32.gmra.mxu0 %v4886
  %v6303 = vpop.f32.mrf.mxu0
  %v6304 = vadd.f32 %v6204, %v6303
  %v6305 = vpop.f32.mrf.mxu0
  %6306 = vmatprep.mubr.f32.mxu0 0.0
  %6307 = vmatmul.mubr.f32.gmra.mxu0 %v4911
  %v6308 = vpop.f32.mrf.mxu0
  %v6309 = vadd.f32 %v6209, %v6308
  %v6310 = vpop.f32.mrf.mxu0
  %6311 = vmatprep.mubr.f32.mxu0 0.0
  %6312 = vmatmul.mubr.f32.gmra.mxu0 %v4936
  %v6313 = vpop.f32.mrf.mxu0
  %v6314 = vadd.f32 %v6214, %v6313
  %v6315 = vpop.f32.mrf.mxu0
  %6316 = vmatprep.mubr.f32.mxu0 0.0
  %6317 = vmatmul.mubr.f32.gmra.mxu0 %v4961
  %v6318 = vpop.f32.mrf.mxu0
  %v6319 = vadd.f32 %v6219, %v6318
  %v6320 = vpop.f32.mrf.mxu0
  %6321 = vmatprep.mubr.f32.mxu0 0.0
  %6322 = vmatmul.mubr.f32.gmra.mxu0 %v4986
  %v6323 = vpop.f32.mrf.mxu0
  %v6324 = vadd.f32 %v6224, %v6323
  %v6325 = vpop.f32.mrf.mxu0
  %6326 = vmatprep.mubr.f32.mxu0 0.0
  %6327 = vmatmul.mubr.f32.gmra.mxu0 %v5011
  %v6328 = vpop.f32.mrf.mxu0
  %v6329 = vadd.f32 %v6229, %v6328
  %v6330 = vpop.f32.mrf.mxu0
  %6331 = vmatprep.mubr.f32.mxu0 0.0
  %6332 = vmatmul.mubr.f32.gmra.mxu0 %v5036
  %v6333 = vpop.f32.mrf.mxu0
  %v6334 = vadd.f32 %v6234, %v6333
  %v6335 = vpop.f32.mrf.mxu0
  %6336 = vdwg.mxu0
  %v6337 = vmax.f32 %v4854, %v6304
  %v6338 = vmax.f32 %v4855, %v6309
  %v6339 = vmax.f32 %v4856, %v6314
  %v6340 = vmax.f32 %v4857, %v6319
  %v6341 = vmax.f32 %v4858, %v6324
  %v6342 = vmax.f32 %v4859, %v6329
  %v6343 = vmax.f32 %v4860, %v6334
  %v6344 = vld [vmem:[%s2] sm:$0x1]
  %v6346 = vlaneseq
  %v6347 = vshrl.u32 %v6346, 7
  %v6348 = vsub.s32 0, %v6347
  %v6349 = vrot.slane %v6344, %v6348
  %v6351 = vadd.f32 %v6337, %v6349
  %v6352 = vadd.f32 %v6338, %v6349
  %v6353 = vadd.f32 %v6339, %v6349
  %v6354 = vadd.f32 %v6340, %v6349
  %v6355 = vadd.f32 %v6341, %v6349
  %v6356 = vadd.f32 %v6342, %v6349
  %v6357 = vadd.f32 %v6343, %v6349
  %v6358 = vmax.f32 %v6351, 0.0
  %v6359 = vmax.f32 %v6352, 0.0
  %v6360 = vmax.f32 %v6353, 0.0
  %v6361 = vmax.f32 %v6354, 0.0
  %v6362 = vmax.f32 %v6355, 0.0
  %v6363 = vmax.f32 %v6356, 0.0
  %v6364 = vmax.f32 %v6357, 0.0
  %v6365 = vadd.f32 %v6358, %v6359
  %v6366 = vadd.f32 %v6365, %v6360
  %v6367 = vadd.f32 %v6366, %v6361
  %v6368 = vadd.f32 %v6367, %v6362
  %v6369 = vadd.f32 %v6368, %v6363
  %vm6370 = vcmask 1041408
  %v6371 = vsel %vm6370, %v6364, 0.0
  %v6372 = vadd.f32 %v6369, %v6371
  %v6373 = vrot.slane %v6372, 4
  %v6374 = vadd.f32 %v6372, %v6373
  %v6375 = vrot.slane %v6374, 2
  %v6376 = vadd.f32 %v6374, %v6375
  %v6377 = vrot.slane %v6376, 1
  %v6378 = vadd.f32 %v6376, %v6377
  %v6379 = vrcp.pop 50.0
  %v6380 = vmul.f32 %v6378, %v6379
  %v6381 = vsub.f32 %v6358, %v6380
  %v6382 = vsub.f32 %v6359, %v6380
  %v6383 = vsub.f32 %v6360, %v6380
  %v6384 = vsub.f32 %v6361, %v6380
  %v6385 = vsub.f32 %v6362, %v6380
  %v6386 = vsub.f32 %v6363, %v6380
  %v6387 = vsub.f32 %v6364, %v6380
  %v6388 = vmul.f32 %v6381, %v6381
  %v6389 = vmul.f32 %v6382, %v6382
  %v6390 = vmul.f32 %v6383, %v6383
  %v6391 = vmul.f32 %v6384, %v6384
  %v6392 = vmul.f32 %v6385, %v6385
  %v6393 = vmul.f32 %v6386, %v6386
  %v6394 = vmul.f32 %v6387, %v6387
  %v6395 = vadd.f32 %v6388, %v6389
  %v6396 = vadd.f32 %v6395, %v6390
  %v6397 = vadd.f32 %v6396, %v6391
  %v6398 = vadd.f32 %v6397, %v6392
  %v6399 = vadd.f32 %v6398, %v6393
  %v6400 = vsel %vm6370, %v6394, 0.0
  %v6401 = vadd.f32 %v6399, %v6400
  %v6402 = vrot.slane %v6401, 4
  %v6403 = vadd.f32 %v6401, %v6402
  %v6404 = vrot.slane %v6403, 2
  %v6405 = vadd.f32 %v6403, %v6404
  %v6406 = vrot.slane %v6405, 1
  %v6407 = vadd.f32 %v6405, %v6406
  %v6408 = vmul.f32 %v6407, %v6379
  %v6409 = vadd.f32 %v6408, 1e-05
  %v6410 = vrsqrt.pop %v6409
  %v6411 = vld [vmem:[%s3] sm:$0x1]
  %v6412 = vmul.f32 %v6410, %v6411
  %v6413 = vlaneseq
  %v6414 = vshrl.u32 %v6413, 7
  %v6415 = vsub.s32 0, %v6414
  %v6416 = vrot.slane %v6412, %v6415
  %v6417 = vmul.f32 %v6381, %v6416
  %v6418 = vmul.f32 %v6382, %v6416
  %v6419 = vmul.f32 %v6383, %v6416
  %v6420 = vmul.f32 %v6384, %v6416
  %v6421 = vmul.f32 %v6385, %v6416
  %v6422 = vmul.f32 %v6386, %v6416
  %v6423 = vmul.f32 %v6387, %v6416
  %v6424 = vld [vmem:[%s4] sm:$0x1]
  %v6426 = vlaneseq
  %v6427 = vshrl.u32 %v6426, 7
  %v6428 = vsub.s32 0, %v6427
  %v6429 = vrot.slane %v6424, %v6428
  %v6431 = vadd.f32 %v6417, %v6429
  %v6432 = vadd.f32 %v6418, %v6429
  %v6433 = vadd.f32 %v6419, %v6429
  %v6434 = vadd.f32 %v6420, %v6429
  %v6435 = vadd.f32 %v6421, %v6429
  %v6436 = vadd.f32 %v6422, %v6429
  %v6437 = vadd.f32 %v6423, %v6429
  %6438 = vst [vmem:[%s5] sm:$0xff] %v6431
  %6439 = vst [vmem:[%s5 + $0x8] sm:$0xff] %v6432
  %6440 = vst [vmem:[%s5 + $0x10] sm:$0xff] %v6433
  %6441 = vst [vmem:[%s5 + $0x18] sm:$0xff] %v6434
  %6442 = vst [vmem:[%s5 + $0x20] sm:$0xff] %v6435
  %6443 = vst [vmem:[%s5 + $0x28] sm:$0xff] %v6436
  %6444 = vst [vmem:[%s5 + $0x30] sm:$0x3] %v6437
  // Predicated region
  $region22: #{forward.4} parent=0 // pred_check
    _
  $region23: #{forward.4} parent=0 // pred_check_branch
    %6446 = sbr.rel (0) target = $region25
  $region24: #{forward.4} parent=0 // pred_region
    _
  $region25: #{forward.4} parent=0 // pred_fallthru
    _
  // Predicated region
  $region26: #{forward.4} parent=0 // pred_check
    _
  $region27: #{forward.4} parent=0 // pred_check_branch
    %6448 = sbr.rel (0) target = $region29
  $region28: #{forward.4} parent=0 // pred_region
    _
  $region29: #{forward.4} parent=0 // pred_fallthru
    _

</llo_original>
